<compile_context>
chip_gen: v6e
topology: v6e:2x2x1
jax: 0.10.0
libtpu: 0.0.40
codegen_flags: <defaults>
</compile_context>

<pallas_src>
import math

import numpy as np
import jax
import jax.numpy as jnp
from jax.experimental import pallas as pl
from jax.experimental.pallas import tpu as pltpu

# ---------------- module hyper-parameters (small, consistent with __init__) -----------
MODES = 4          # Fourier modes kept per spectral conv
WIDTH = 32         # channel width of the FNO trunk (d_model = d_k = width)
INPUT_SIZE = 2     # input channels of x
OUTPUT_SIZE = 1
T_RES = 8          # time resolution of x_t / y_t inputs (only first step is used)
X_RES = 16         # spatial resolution s (== sequence length)
NHEAD = 4
BATCH = 2

S = X_RES
BS = BATCH * S                 # fused batch*sequence rows
HID = X_RES // 2               # hidden size of the tiny time-embedding MLPs
DH = WIDTH // NHEAD            # per-head channel dim (attention acts over channels!)
FC_HID = 128
M2 = 2 * MODES                 # [re ; im] stacked mode rows
BM2 = BATCH * M2
MW = MODES * WIDTH

assert WIDTH % NHEAD == 0
assert MODES <= S // 2


# ------------------------------- parameter construction -------------------------------
def init_params(key):
    ks = iter(jax.random.split(key, 64))

    def unif(shape, fan_in):
        b = 1.0 / math.sqrt(fan_in)
        return jax.random.uniform(next(ks), shape, jnp.float32, -b, b)

    p = {}
    p["fc0_w"] = unif((WIDTH, INPUT_SIZE + 1), INPUT_SIZE + 1)
    p["fc0_b"] = unif((WIDTH,), INPUT_SIZE + 1)
    p["thi_w"] = unif((WIDTH, INPUT_SIZE + 1), INPUT_SIZE + 1)   # t_embed_high_in
    p["thi_b"] = unif((WIDTH,), INPUT_SIZE + 1)
    p["tho_w"] = unif((WIDTH, INPUT_SIZE + 1), INPUT_SIZE + 1)   # t_embed_high_out
    p["tho_b"] = unif((WIDTH,), INPUT_SIZE + 1)
    for nm in ("tex", "tey"):                                    # time_embed_x / _y MLPs
        p[f"{nm}_w1"] = unif((HID, 1), 1)
        p[f"{nm}_b1"] = unif((HID,), 1)
        p[f"{nm}_w2"] = unif((X_RES, HID), HID)
        p[f"{nm}_b2"] = unif((X_RES,), HID)
    scale = 1.0 / (WIDTH * WIDTH)                                # SpectralConv1d init
    p["sc_re"] = scale * jax.random.uniform(next(ks), (4, WIDTH, WIDTH, MODES), jnp.float32)
    p["sc_im"] = scale * jax.random.uniform(next(ks), (4, WIDTH, WIDTH, MODES), jnp.float32)
    p["pw_w"] = unif((4, WIDTH, WIDTH, 1), WIDTH)                # w0..w3 (Conv1d k=1)
    p["pw_b"] = unif((4, WIDTH), WIDTH)
    p["wq"] = unif((4, WIDTH, WIDTH), WIDTH)                     # attention projections
    p["wk"] = unif((4, WIDTH, WIDTH), WIDTH)
    p["wv"] = unif((4, WIDTH, WIDTH), WIDTH)
    p["fc1_w"] = unif((FC_HID, WIDTH), WIDTH)
    p["fc1_b"] = unif((FC_HID,), WIDTH)
    p["fc2_w"] = unif((OUTPUT_SIZE, FC_HID), FC_HID)
    p["fc2_b"] = unif((OUTPUT_SIZE,), FC_HID)
    return p


# ----------------------- pure-JAX reference (mirrors the PyTorch code) -----------------
def ref_forward(p, x, x_t, y_t):
    B, s, _ = x.shape
    grid = jnp.broadcast_to(
        jnp.linspace(0.0, 1.0, s, dtype=jnp.float32).reshape(1, s, 1), (B, s, 1))
    xt0 = x_t[:, :1, :]
    yt0 = y_t[:, :1, :]

    def time_embed(t0, w1, b1, w2, b2):
        t = jnp.transpose(t0, (0, 2, 1))                               # (B, C, 1)
        h = jnp.maximum(jnp.einsum("bci,hi->bch", t, w1) + b1, 0.0)    # (B, C, HID)
        h = jnp.einsum("bch,sh->bcs", h, w2) + b2                      # (B, C, s)
        return jnp.transpose(h, (0, 2, 1))                             # (B, s, C)

    def lin(z, w, b):
        return jnp.einsum("bsc,oc->bso", z, w) + b

    xt = time_embed(xt0, p["tex_w1"], p["tex_b1"], p["tex_w2"], p["tex_b2"])
    yt = time_embed(yt0, p["tey_w1"], p["tey_b1"], p["tey_w2"], p["tey_b2"])
    Xt = lin(jnp.concatenate([xt, grid], -1), p["thi_w"], p["thi_b"])  # key bias
    Yt = lin(jnp.concatenate([yt, grid], -1), p["tho_w"], p["tho_b"])  # query bias
    h = lin(jnp.concatenate([x, grid], -1), p["fc0_w"], p["fc0_b"])    # (B, s, W)

    tri = jnp.triu(jnp.ones((DH, DH), jnp.float32), k=1)               # strictly-upper
    for l in range(4):
        # SpectralConv1d (FFT over the spatial axis)
        x_ft = jnp.fft.rfft(h, axis=1)
        wc = p["sc_re"][l] + 1j * p["sc_im"][l]                        # (i, o, m)
        y = jnp.einsum("bmi,iom->bmo", x_ft[:, :MODES, :], wc)
        out_ft = jnp.zeros((B, s // 2 + 1, WIDTH), jnp.complex64).at[:, :MODES, :].set(y)
        x1 = jnp.fft.irfft(out_ft, n=s, axis=1)
        # 1x1 Conv1d
        x2 = jnp.einsum("bsi,oi->bso", h, p["pw_w"][l][:, :, 0]) + p["pw_b"][l]
        # SelfAttention (attends over per-head channel dim, causal mask)
        q = jnp.einsum("bsi,oi->bso", h + Yt, p["wq"][l])
        k = jnp.einsum("bsi,oi->bso", h + Xt, p["wk"][l])
        v = jnp.einsum("bsi,oi->bso", h, p["wv"][l])
        qh = q.reshape(B, s, NHEAD, DH).transpose(0, 2, 3, 1)
        kh = k.reshape(B, s, NHEAD, DH).transpose(0, 2, 3, 1)
        vh = v.reshape(B, s, NHEAD, DH).transpose(0, 2, 3, 1)
        scores = jnp.einsum("bhax,bhcx->bhac", qh, kh) / math.sqrt(WIDTH)
        scores = jnp.where(tri[None, None] > 0.5, -1e9, scores)
        attn = jax.nn.softmax(scores, axis=-1)
        ctx = jnp.einsum("bhac,bhcx->bhax", attn, vh)
        x3 = ctx.transpose(0, 3, 1, 2).reshape(B, s, WIDTH)
        h = x1 + x2 + x3
        if l < 3:
            h = jax.nn.gelu(h, approximate=False)
    h = jax.nn.gelu(jnp.einsum("bsw,ow->bso", h, p["fc1_w"]) + p["fc1_b"], approximate=False)
    out = jnp.einsum("bsw,ow->bso", h, p["fc2_w"]) + p["fc2_b"]
    return out[..., 0] if OUTPUT_SIZE == 1 else out


# ---------------------------- one-time operand packing --------------------------------
# Row map of the 32-lane constant slab `w32` (440 rows x 32 lanes):
#   0.. 7  fc0  [wT(2) | grid row | bias] (+pad)        24..31  pw_b (4 layers, +pad)
#   8..15  thi  segment                                  32..63  additive attention maskT
#  16..23  tho  segment                                  64..95  Lcat  (irfft combine)
#  96..111 Fbd  (block-diag truncated rfft)             112..119 tex/tey w1,b1 rows (+pad)
# 120..135 tex_w2    136..151 tey_w2                    152..183 [grid|tex_b2|tey_b2|fc2_b]
# 184..439 per-layer [wq_T ; wk_(out,in)] (64 rows / layer)
W32_QK_BASE = 184


def pack_params(p):
    """Precompute constant matrices & pack all operands into 4 constant slabs (once)."""
    f32 = jnp.float32

    # real DFT matrices of the truncated rfft / irfft (exact for modes <= S//2 + 1)
    n = np.arange(S, dtype=np.float64)
    m = np.arange(MODES, dtype=np.float64)
    ang_f = 2.0 * np.pi * np.outer(m, n) / S
    fre = np.cos(ang_f)
    fim = -np.sin(ang_f)
    wvec = np.where(np.arange(MODES) == 0, 1.0, 2.0).astype(np.float64)
    if MODES - 1 == S // 2:
        wvec[-1] = 1.0
    ang_i = 2.0 * np.pi * np.outer(n, m) / S
    ia = np.cos(ang_i) * (wvec / S)
    ib = -np.sin(ang_i) * (wvec / S)

    # block-diagonal (over batch) stacked-DFT operators
    F_half = np.concatenate([fre, fim], axis=0)                  # (2M, S)
    Fbd = np.zeros((BM2, BS))
    L1bd = np.zeros((BS, BM2))
    L2bd = np.zeros((BS, BM2))
    L1 = np.concatenate([ia, ib], axis=1)                        # coeffs for PR rows
    L2 = np.concatenate([ib, -ia], axis=1)                       # coeffs for PI rows
    for b in range(BATCH):
        Fbd[b * M2:(b + 1) * M2, b * S:(b + 1) * S] = F_half
        L1bd[b * S:(b + 1) * S, b * M2:(b + 1) * M2] = L1
        L2bd[b * S:(b + 1) * S, b * M2:(b + 1) * M2] = L2
    Lcat = np.concatenate([L1bd, L2bd], axis=1)                  # (BS, 2*BM2) = (32,32)

    # additive attention mask in TRANSPOSED layout (rows = key chan c, cols = query a)
    idx = np.arange(WIDTH)
    keep = ((idx[:, None] // DH) == (idx[None, :] // DH)) & (idx[:, None] <= idx[None, :])
    amaskT = np.where(keep, 0.0, -1e9)

    # mode-selection mask for the tiled [xr;xi] rows
    rows = np.arange(BM2)
    mode_of_row = (rows % M2) % MODES
    col_mode = np.arange(MW) // WIDTH
    modemask = (col_mode[None, :] == mode_of_row[:, None]).astype(np.float64)

    def pad_block(a, rows_to, cols_to=WIDTH):
        a = jnp.asarray(a, f32)
        return jnp.pad(a, ((0, rows_to - a.shape[0]), (0, cols_to - a.shape[1])))

    # --- slab 1 (w32): everything with <=32 lanes ---------------------------------------
    seg_fc0 = jnp.concatenate([p["fc0_w"].T, p["fc0_b"].reshape(1, WIDTH)], 0)
    seg_thi = jnp.concatenate([p["thi_w"].T, p["thi_b"].reshape(1, WIDTH)], 0)
    seg_tho = jnp.concatenate([p["tho_w"].T, p["tho_b"].reshape(1, WIDTH)], 0)
    seg_te1 = jnp.concatenate([p["tex_w1"].T, p["tex_b1"].reshape(1, HID),
                               p["tey_w1"].T, p["tey_b1"].reshape(1, HID)], 0)   # (4, HID)

    grid_col = jnp.tile(jnp.linspace(0.0, 1.0, S, dtype=f32).reshape(S, 1), (BATCH, 1))
    cols = jnp.concatenate([
        grid_col,
        jnp.pad(p["tex_b2"].reshape(S, 1), ((0, BS - S), (0, 0))),
        jnp.pad(p["tey_b2"].reshape(S, 1), ((0, BS - S), (0, 0))),
        jnp.pad(p["fc2_b"].reshape(1, 1), ((0, BS - 1), (0, 0))),
    ], axis=1)                                                     # (BS, 4)

    qk_rows = jnp.concatenate(
        [jnp.concatenate([p["wq"][l].T, p["wk"][l]], axis=0) for l in range(4)],
        axis=0)                                                    # (256, 32)

    w32 = jnp.concatenate([
        pad_block(seg_fc0, 8), pad_block(seg_thi, 8), pad_block(seg_tho, 8),
        pad_block(p["pw_b"], 8),                                   # rows 24..31
        jnp.asarray(amaskT, f32),                                  # rows 32..63
        jnp.asarray(Lcat, f32),                                    # rows 64..95
        jnp.asarray(Fbd, f32),                                     # rows 96..111
        pad_block(seg_te1, 8),                                     # rows 112..119
        pad_block(p["tex_w2"], S),                                 # rows 120..135
        pad_block(p["tey_w2"], S),                                 # rows 136..151
        pad_block(cols, BS),                                       # rows 152..183
        qk_rows,                                                   # rows 184..439
    ], axis=0)                                                     # (440, 32)

    # --- slab 2 (l128): everything with 128 lanes ---------------------------------------
    seg_b = jnp.concatenate(
        [p["fc1_b"].reshape(1, FC_HID), p["fc2_w"].reshape(1, FC_HID)], 0)       # rows 32,33
    l128 = jnp.concatenate([
        p["fc1_w"].T,                                              # rows 0..31
        jnp.pad(seg_b, ((0, 6), (0, 0))),                          # rows 32..39
        jnp.asarray(modemask, f32),                                # rows 40..55
    ], axis=0)                                                     # (56, 128)

    # --- slab 3 (pwv): lane-packed [pw_T | wv_T] per layer (shared-LHS merge) -----------
    pwv = jnp.stack([jnp.concatenate([p["pw_w"][l, :, :, 0].T, p["wv"][l].T], axis=1)
                     for l in range(4)], axis=0)                   # (4, 32, 64)

    # --- slab 4 (scstk): lane-packed [wre | wim], mode-major rows (shared-LHS merge) ----
    scstk = jnp.stack([jnp.concatenate([
        jnp.transpose(p["sc_re"][l], (2, 0, 1)).reshape(MW, WIDTH),
        jnp.transpose(p["sc_im"][l], (2, 0, 1)).reshape(MW, WIDTH)], axis=1)
        for l in range(4)], axis=0)                                # (4, 128, 64)

    return {"w32": w32, "l128": l128, "pwv": pwv, "scstk": scstk}


# ---------------------------------- Pallas kernel --------------------------------------
def _erf(z):
    # Abramowitz & Stegun 7.1.26 (max abs err ~1.5e-7); only exp/abs/select -> VPU/EUP.
    a1, a2, a3, a4, a5 = 0.254829592, -0.284496736, 1.421413741, -1.453152027, 1.061405429
    pp = 0.3275911
    sgn = jnp.where(z < 0.0, -1.0, 1.0)
    az = jnp.abs(z)
    t = 1.0 / (1.0 + pp * az)
    poly = ((((a5 * t + a4) * t + a3) * t + a2) * t + a1) * t
    return sgn * (1.0 - poly * jnp.exp(-az * az))


def _gelu(z):  # exact (erf) GELU, matching F.gelu default
    return 0.5 * z * (1.0 + _erf(z * (1.0 / math.sqrt(2.0))))


def _fno_kernel(xin_ref, w32_ref, l128_ref, pwv_ref, sc_ref, o_ref):
    f32 = jnp.float32
    C = INPUT_SIZE

    # -------- unpack the slabs (static slices of refs) --------
    fc0_wT = w32_ref[0:C, :]
    fc0_wg = w32_ref[C:C + 1, :]
    fc0_b = w32_ref[C + 1:C + 2, :]
    thi_wT = w32_ref[8:8 + C, :]
    thi_wg = w32_ref[8 + C:9 + C, :]
    thi_b = w32_ref[9 + C:10 + C, :]
    tho_wT = w32_ref[16:16 + C, :]
    tho_wg = w32_ref[16 + C:17 + C, :]
    tho_b = w32_ref[17 + C:18 + C, :]
    amaskT = w32_ref[32:64, :]                       # additive mask, (key c, query a)
    Lcat = w32_ref[64:96, :]                         # (BS, 2*BM2) irfft combine
    Fbd = w32_ref[96:96 + BM2, :]                    # (BM2, BS) block-diag [fre; fim]
    tex_w1 = w32_ref[112:113, :]                     # zero-padded to 32 lanes
    tex_b1 = w32_ref[113:114, :]
    tey_w1 = w32_ref[114:115, :]
    tey_b1 = w32_ref[115:116, :]
    tex_w2 = w32_ref[120:120 + S, :]
    tey_w2 = w32_ref[136:136 + S, :]
    grid_all = w32_ref[152:152 + BS, 0:1]            # (BS, 1)
    tex_b2 = w32_ref[152:152 + S, 1:2]               # (S, 1)
    tey_b2 = w32_ref[152:152 + S, 2:3]
    fc2_b = w32_ref[152:153, 3:4]                    # (1, 1)

    fc1_wT = l128_ref[0:WIDTH, :]                    # (32, 128)
    fc1_b = l128_ref[WIDTH:WIDTH + 1, :]
    fc2_w = l128_ref[WIDTH + 1:WIDTH + 2, :]
    modemask = l128_ref[40:40 + BM2, :]              # (16, 128)

    def lin_grid(inp, wT, wg, b, g):
        # Linear(cat([inp, grid], -1)) with weight split into (data rows, grid row)
        return jnp.dot(inp, wT, preferred_element_type=f32) + g * wg + b

    def time_embed(tcol, w1, b1, w2, b2):
        # tcol (C,1); w1/b1 (1,32 zero-padded); w2 (S,32 zero-padded); b2 (S,1)
        r = jnp.maximum(tcol * w1 + b1, 0.0)                              # (C, 32)
        emb = jax.lax.dot_general(w2, r, (((1,), (1,)), ((), ())),
                                  preferred_element_type=f32)             # (S, C)
        return emb + b2

    # -------- time-embedding biases (tiny; unrolled over B=2, projections batch-fused) --
    xe_rows, ye_rows = [], []
    for b in range(BATCH):
        tx = xin_ref[2 * C * b:2 * C * b + C, 2:3]                        # (C, 1)
        ty = xin_ref[2 * C * b + C:2 * C * b + 2 * C, 2:3]
        xe_rows.append(time_embed(tx, tex_w1, tex_b1, tex_w2, tex_b2))
        ye_rows.append(time_embed(ty, tey_w1, tey_b1, tey_w2, tey_b2))
    XE = jnp.concatenate(xe_rows, axis=0)                                  # (BS, C)
    YE = jnp.concatenate(ye_rows, axis=0)
    Xt = lin_grid(XE, thi_wT, thi_wg, thi_b, grid_all)                     # key bias
    Yt = lin_grid(YE, tho_wT, tho_wg, tho_b, grid_all)                     # query bias

    # -------- lifting layer, whole batch at once --------
    h = lin_grid(xin_ref[:, 0:C], fc0_wT, fc0_wg, fc0_b, grid_all)         # (BS, W)

    inv_sqrt_dk = 1.0 / math.sqrt(WIDTH)
    for l in range(4):
        base = W32_QK_BASE + 64 * l
        wq_T = w32_ref[base:base + WIDTH, :]                # (W, W)  in->out
        wk_oi = w32_ref[base + WIDTH:base + 2 * WIDTH, :]   # (W, W)  (out, in)
        pwv = pwv_ref[l]                                     # (W, 2W) [pw_T | wv_T]
        w_ri = sc_ref[l]                                     # (M*W, 2W) [wre | wim]
        pw_b = w32_ref[24 + l:25 + l, :]                     # (1, W)

        # ---- SpectralConv1d: rfft -> complex mode mixing -> irfft as 3 dense matmuls ----
        Z = jnp.dot(Fbd, h, preferred_element_type=f32)                    # (BM2, W)
        Zm = jnp.concatenate([Z] * MODES, axis=1) * modemask               # (BM2, M*W)
        P = jnp.dot(Zm, w_ri, preferred_element_type=f32)                  # (BM2, 2W)
        RI = jnp.concatenate([P[:, 0:WIDTH], P[:, WIDTH:2 * WIDTH]], 0)    # [PR ; PI]
        x1 = jnp.dot(Lcat, RI, preferred_element_type=f32)                 # (BS, W)

        # ---- 1x1 Conv1d + value projection share LHS h: single (BS,W)@(W,2W) dot ----
        xv = jnp.dot(h, pwv, preferred_element_type=f32)                   # (BS, 2W)
        v = xv[:, WIDTH:2 * WIDTH]

        # ---- SelfAttention over per-head channel dim (causal within head) ----
        q = jnp.dot(h + Yt, wq_T, preferred_element_type=f32)              # (BS, W)
        # key projection in (channel, position) layout, hoisted across the batch so the
        # score / context matmuls are plain NN and only one NT dot runs per layer
        kT_all = jax.lax.dot_general(wk_oi, h + Xt, (((1,), (1,)), ((), ())),
                                     preferred_element_type=f32)           # (W, BS)
        x3_rows = []
        for b in range(BATCH):                      # tiny unrolled loop: batches must
            q_b = q[b * S:(b + 1) * S, :]           # not mix in the S-contraction
            v_b = v[b * S:(b + 1) * S, :]
            kT_b = kT_all[:, b * S:(b + 1) * S]                             # (W, S)
            sT = jnp.dot(kT_b, q_b, preferred_element_type=f32) * inv_sqrt_dk  # (Wk, Wq)
            sT = sT + amaskT                                                # additive mask
            sT = sT - jnp.max(sT, axis=0, keepdims=True)
            e = jnp.exp(sT)
            den = jnp.sum(e, axis=0, keepdims=True)
            inv = pl.reciprocal(den, approx=True)
            inv = inv * (2.0 - den * inv)           # one NR step -> ~f32 accuracy
            attnT = e * inv                                                 # (Wk, Wq)
            x3_rows.append(jnp.dot(v_b, attnT, preferred_element_type=f32))  # (S, W)
        x3 = jnp.concatenate(x3_rows, axis=0)                               # (BS, W)

        h = x1 + (xv[:, 0:WIDTH] + pw_b) + x3
        if l < 3:                                  # NOTE: no GELU after the 4th layer
            h = _gelu(h)

    # -------- decoder head --------
    h1 = _gelu(jnp.dot(h, fc1_wT, preferred_element_type=f32) + fc1_b)      # (BS, 128)
    # fc2 has N=1: do it as a VPU multiply + lane reduction instead of an MXU matmul
    out = jnp.sum(h1 * fc2_w, axis=-1, keepdims=True) + fc2_b               # (BS, 1)
    o_ref[...] = out.astype(o_ref.dtype)


# ---------------------------------- wrapper / glue --------------------------------------
def _forward(packed, x, x_t, y_t):
    # pack the runtime data (x and the 8 first-step time scalars) into ONE operand
    x_data = x.reshape(BS, INPUT_SIZE)
    t0 = jnp.concatenate([x_t[:, 0, :], y_t[:, 0, :]], axis=1)              # (B, 2C)
    t0_col = jnp.pad(t0.reshape(BATCH * 2 * INPUT_SIZE, 1),
                     ((0, BS - BATCH * 2 * INPUT_SIZE), (0, 0)))
    xin = jnp.concatenate([x_data, t0_col, jnp.zeros((BS, 1), jnp.float32)], axis=1)

    operands = [xin, packed["w32"], packed["l128"], packed["pwv"], packed["scstk"]]

    def full_spec(a):
        nd = a.ndim
        return pl.BlockSpec(a.shape, lambda i, _n=nd: (0,) * _n)

    out = pl.pallas_call(
        _fno_kernel,
        out_shape=jax.ShapeDtypeStruct((BS, 1), jnp.float32),
        grid=(1,),                                   # single fused-batch invocation
        in_specs=[full_spec(a) for a in operands],
        out_specs=pl.BlockSpec((BS, 1), lambda i: (0, 0)),
        compiler_params=pltpu.CompilerParams(dimension_semantics=("arbitrary",)),
    )(*operands)
    return out.reshape(BATCH, S)


fno_forward_pallas = jax.jit(_forward)


# -------------------------------------- main --------------------------------------------
if __name__ == "__main__":
    key = jax.random.PRNGKey(0)
    pkey, k1, k2, k3 = jax.random.split(key, 4)
    params = init_params(pkey)
    packed = pack_params(params)          # constant prep hoisted out of the call path

    x = jax.random.normal(k1, (BATCH, X_RES, INPUT_SIZE), jnp.float32)
    x_t = jax.random.normal(k2, (BATCH, T_RES, INPUT_SIZE), jnp.float32)
    y_t = jax.random.normal(k3, (BATCH, T_RES, INPUT_SIZE), jnp.float32)

    out = fno_forward_pallas(packed, x, x_t, y_t)
    out = jax.block_until_ready(out)

    ref = ref_forward(params, x, x_t, y_t)
    assert out.shape == (BATCH, X_RES), out.shape
    err = float(jnp.max(jnp.abs(out - ref)))
    assert err < 2e-3, f"max abs error vs reference: {err}"
    print("KERNEL_OK")
</pallas_src>

<mosaic_0001>
module attributes {stable_mosaic.version = 11 : i64} {
  func.func @_fno_kernel(%arg0: i32, %arg1: memref<32x4xf32, #tpu.memory_space<vmem>>, %arg2: memref<440x32xf32, #tpu.memory_space<vmem>>, %arg3: memref<56x128xf32, #tpu.memory_space<vmem>>, %arg4: memref<4x32x64xf32, #tpu.memory_space<vmem>>, %arg5: memref<4x128x64xf32, #tpu.memory_space<vmem>>, %arg6: memref<32x1xf32, #tpu.memory_space<vmem>>) attributes {dimension_semantics = [#tpu.dimension_semantics<arbitrary>], iteration_bounds = array<i64: 1>, scalar_prefetch = 0 : i64, scratch_operands = 0 : i64, tpu.core_type = #tpu.core_type<tc>, window_params = [{pipeline_mode = #tpu.pipeline_mode<synchronous>, transform_indices = @transform_0, window_bounds = array<i64: 32, 4>}, {pipeline_mode = #tpu.pipeline_mode<synchronous>, transform_indices = @transform_1, window_bounds = array<i64: 440, 32>}, {pipeline_mode = #tpu.pipeline_mode<synchronous>, transform_indices = @transform_2, window_bounds = array<i64: 56, 128>}, {pipeline_mode = #tpu.pipeline_mode<synchronous>, transform_indices = @transform_3, window_bounds = array<i64: 4, 32, 64>}, {pipeline_mode = #tpu.pipeline_mode<synchronous>, transform_indices = @transform_4, window_bounds = array<i64: 4, 128, 64>}, {pipeline_mode = #tpu.pipeline_mode<synchronous>, transform_indices = @transform_5, window_bounds = array<i64: 32, 1>}]} {
    %c0 = arith.constant 0 : index
    %c0_0 = arith.constant 0 : index
    %0 = vector.load %arg2[%c0, %c0_0] : memref<440x32xf32, #tpu.memory_space<vmem>>, vector<2x32xf32>
    %c2 = arith.constant 2 : index
    %c0_1 = arith.constant 0 : index
    %1 = vector.load %arg2[%c2, %c0_1] : memref<440x32xf32, #tpu.memory_space<vmem>>, vector<1x32xf32>
    %c3 = arith.constant 3 : index
    %c0_2 = arith.constant 0 : index
    %2 = vector.load %arg2[%c3, %c0_2] : memref<440x32xf32, #tpu.memory_space<vmem>>, vector<1x32xf32>
    %c8 = arith.constant 8 : index
    %c0_3 = arith.constant 0 : index
    %3 = vector.load %arg2[%c8, %c0_3] : memref<440x32xf32, #tpu.memory_space<vmem>>, vector<2x32xf32>
    %c10 = arith.constant 10 : index
    %c0_4 = arith.constant 0 : index
    %4 = vector.load %arg2[%c10, %c0_4] : memref<440x32xf32, #tpu.memory_space<vmem>>, vector<1x32xf32>
    %c11 = arith.constant 11 : index
    %c0_5 = arith.constant 0 : index
    %5 = vector.load %arg2[%c11, %c0_5] : memref<440x32xf32, #tpu.memory_space<vmem>>, vector<1x32xf32>
    %c16 = arith.constant 16 : index
    %c0_6 = arith.constant 0 : index
    %6 = vector.load %arg2[%c16, %c0_6] : memref<440x32xf32, #tpu.memory_space<vmem>>, vector<2x32xf32>
    %c18 = arith.constant 18 : index
    %c0_7 = arith.constant 0 : index
    %7 = vector.load %arg2[%c18, %c0_7] : memref<440x32xf32, #tpu.memory_space<vmem>>, vector<1x32xf32>
    %c19 = arith.constant 19 : index
    %c0_8 = arith.constant 0 : index
    %8 = vector.load %arg2[%c19, %c0_8] : memref<440x32xf32, #tpu.memory_space<vmem>>, vector<1x32xf32>
    %c32 = arith.constant 32 : index
    %c0_9 = arith.constant 0 : index
    %9 = vector.load %arg2[%c32, %c0_9] : memref<440x32xf32, #tpu.memory_space<vmem>>, vector<32x32xf32>
    %c64 = arith.constant 64 : index
    %c0_10 = arith.constant 0 : index
    %10 = vector.load %arg2[%c64, %c0_10] : memref<440x32xf32, #tpu.memory_space<vmem>>, vector<32x32xf32>
    %c96 = arith.constant 96 : index
    %c0_11 = arith.constant 0 : index
    %11 = vector.load %arg2[%c96, %c0_11] : memref<440x32xf32, #tpu.memory_space<vmem>>, vector<16x32xf32>
    %c112 = arith.constant 112 : index
    %c0_12 = arith.constant 0 : index
    %12 = vector.load %arg2[%c112, %c0_12] : memref<440x32xf32, #tpu.memory_space<vmem>>, vector<1x32xf32>
    %c113 = arith.constant 113 : index
    %c0_13 = arith.constant 0 : index
    %13 = vector.load %arg2[%c113, %c0_13] : memref<440x32xf32, #tpu.memory_space<vmem>>, vector<1x32xf32>
    %c114 = arith.constant 114 : index
    %c0_14 = arith.constant 0 : index
    %14 = vector.load %arg2[%c114, %c0_14] : memref<440x32xf32, #tpu.memory_space<vmem>>, vector<1x32xf32>
    %c115 = arith.constant 115 : index
    %c0_15 = arith.constant 0 : index
    %15 = vector.load %arg2[%c115, %c0_15] : memref<440x32xf32, #tpu.memory_space<vmem>>, vector<1x32xf32>
    %c120 = arith.constant 120 : index
    %c0_16 = arith.constant 0 : index
    %16 = vector.load %arg2[%c120, %c0_16] : memref<440x32xf32, #tpu.memory_space<vmem>>, vector<16x32xf32>
    %c136 = arith.constant 136 : index
    %c0_17 = arith.constant 0 : index
    %17 = vector.load %arg2[%c136, %c0_17] : memref<440x32xf32, #tpu.memory_space<vmem>>, vector<16x32xf32>
    %c152 = arith.constant 152 : index
    %c0_18 = arith.constant 0 : index
    %18 = vector.load %arg2[%c152, %c0_18] : memref<440x32xf32, #tpu.memory_space<vmem>>, vector<32x1xf32>
    %c152_19 = arith.constant 152 : index
    %c1 = arith.constant 1 : index
    %19 = vector.load %arg2[%c152_19, %c1] : memref<440x32xf32, #tpu.memory_space<vmem>>, vector<16x1xf32>
    %c152_20 = arith.constant 152 : index
    %c2_21 = arith.constant 2 : index
    %20 = vector.load %arg2[%c152_20, %c2_21] : memref<440x32xf32, #tpu.memory_space<vmem>>, vector<16x1xf32>
    %c152_22 = arith.constant 152 : index
    %c3_23 = arith.constant 3 : index
    %21 = vector.load %arg2[%c152_22, %c3_23] : memref<440x32xf32, #tpu.memory_space<vmem>>, vector<1x1xf32>
    %c0_24 = arith.constant 0 : index
    %c0_25 = arith.constant 0 : index
    %22 = vector.load %arg3[%c0_24, %c0_25] : memref<56x128xf32, #tpu.memory_space<vmem>>, vector<32x128xf32>
    %c32_26 = arith.constant 32 : index
    %c0_27 = arith.constant 0 : index
    %23 = vector.load %arg3[%c32_26, %c0_27] : memref<56x128xf32, #tpu.memory_space<vmem>>, vector<1x128xf32>
    %c33 = arith.constant 33 : index
    %c0_28 = arith.constant 0 : index
    %24 = vector.load %arg3[%c33, %c0_28] : memref<56x128xf32, #tpu.memory_space<vmem>>, vector<1x128xf32>
    %c40 = arith.constant 40 : index
    %c0_29 = arith.constant 0 : index
    %25 = vector.load %arg3[%c40, %c0_29] : memref<56x128xf32, #tpu.memory_space<vmem>>, vector<16x128xf32>
    %c0_30 = arith.constant 0 : index
    %c2_31 = arith.constant 2 : index
    %26 = vector.load %arg1[%c0_30, %c2_31] : memref<32x4xf32, #tpu.memory_space<vmem>>, vector<2x1xf32>
    %c2_32 = arith.constant 2 : index
    %c2_33 = arith.constant 2 : index
    %27 = vector.load %arg1[%c2_32, %c2_33] : memref<32x4xf32, #tpu.memory_space<vmem>>, vector<2x1xf32>
    %28 = vector.broadcast %26 : vector<2x1xf32> to vector<2x32xf32>
    %29 = vector.broadcast %12 : vector<1x32xf32> to vector<2x32xf32>
    %30 = arith.mulf %28, %29 : vector<2x32xf32>
    %31 = vector.broadcast %13 : vector<1x32xf32> to vector<2x32xf32>
    %32 = arith.addf %30, %31 : vector<2x32xf32>
    %cst = arith.constant 0.000000e+00 : f32
    %33 = vector.broadcast %cst : f32 to vector<2x32xf32>
    %34 = arith.maximumf %32, %33 : vector<2x32xf32>
    %cst_34 = arith.constant dense<0.000000e+00> : vector<16x2xf32>
    %35 = tpu.matmul %16, %34, %cst_34 {dimension_numbers = #tpu.dot_dimension_numbers<[1], [1], [0], [0], [0, 0, 1, 0], [], []>} : vector<16x32xf32>, vector<2x32xf32>, vector<16x2xf32> -> vector<16x2xf32>
    %36 = vector.broadcast %19 : vector<16x1xf32> to vector<16x2xf32>
    %37 = arith.addf %35, %36 : vector<16x2xf32>
    %38 = vector.broadcast %27 : vector<2x1xf32> to vector<2x32xf32>
    %39 = vector.broadcast %14 : vector<1x32xf32> to vector<2x32xf32>
    %40 = arith.mulf %38, %39 : vector<2x32xf32>
    %41 = vector.broadcast %15 : vector<1x32xf32> to vector<2x32xf32>
    %42 = arith.addf %40, %41 : vector<2x32xf32>
    %cst_35 = arith.constant 0.000000e+00 : f32
    %43 = vector.broadcast %cst_35 : f32 to vector<2x32xf32>
    %44 = arith.maximumf %42, %43 : vector<2x32xf32>
    %cst_36 = arith.constant dense<0.000000e+00> : vector<16x2xf32>
    %45 = tpu.matmul %17, %44, %cst_36 {dimension_numbers = #tpu.dot_dimension_numbers<[1], [1], [0], [0], [0, 0, 1, 0], [], []>} : vector<16x32xf32>, vector<2x32xf32>, vector<16x2xf32> -> vector<16x2xf32>
    %46 = vector.broadcast %20 : vector<16x1xf32> to vector<16x2xf32>
    %47 = arith.addf %45, %46 : vector<16x2xf32>
    %c4 = arith.constant 4 : index
    %c2_37 = arith.constant 2 : index
    %48 = vector.load %arg1[%c4, %c2_37] : memref<32x4xf32, #tpu.memory_space<vmem>>, vector<2x1xf32>
    %c6 = arith.constant 6 : index
    %c2_38 = arith.constant 2 : index
    %49 = vector.load %arg1[%c6, %c2_38] : memref<32x4xf32, #tpu.memory_space<vmem>>, vector<2x1xf32>
    %50 = vector.broadcast %48 : vector<2x1xf32> to vector<2x32xf32>
    %51 = vector.broadcast %12 : vector<1x32xf32> to vector<2x32xf32>
    %52 = arith.mulf %50, %51 : vector<2x32xf32>
    %53 = vector.broadcast %13 : vector<1x32xf32> to vector<2x32xf32>
    %54 = arith.addf %52, %53 : vector<2x32xf32>
    %cst_39 = arith.constant 0.000000e+00 : f32
    %55 = vector.broadcast %cst_39 : f32 to vector<2x32xf32>
    %56 = arith.maximumf %54, %55 : vector<2x32xf32>
    %cst_40 = arith.constant dense<0.000000e+00> : vector<16x2xf32>
    %57 = tpu.matmul %16, %56, %cst_40 {dimension_numbers = #tpu.dot_dimension_numbers<[1], [1], [0], [0], [0, 0, 1, 0], [], []>} : vector<16x32xf32>, vector<2x32xf32>, vector<16x2xf32> -> vector<16x2xf32>
    %58 = vector.broadcast %19 : vector<16x1xf32> to vector<16x2xf32>
    %59 = arith.addf %57, %58 : vector<16x2xf32>
    %60 = vector.broadcast %49 : vector<2x1xf32> to vector<2x32xf32>
    %61 = vector.broadcast %14 : vector<1x32xf32> to vector<2x32xf32>
    %62 = arith.mulf %60, %61 : vector<2x32xf32>
    %63 = vector.broadcast %15 : vector<1x32xf32> to vector<2x32xf32>
    %64 = arith.addf %62, %63 : vector<2x32xf32>
    %cst_41 = arith.constant 0.000000e+00 : f32
    %65 = vector.broadcast %cst_41 : f32 to vector<2x32xf32>
    %66 = arith.maximumf %64, %65 : vector<2x32xf32>
    %cst_42 = arith.constant dense<0.000000e+00> : vector<16x2xf32>
    %67 = tpu.matmul %17, %66, %cst_42 {dimension_numbers = #tpu.dot_dimension_numbers<[1], [1], [0], [0], [0, 0, 1, 0], [], []>} : vector<16x32xf32>, vector<2x32xf32>, vector<16x2xf32> -> vector<16x2xf32>
    %68 = vector.broadcast %20 : vector<16x1xf32> to vector<16x2xf32>
    %69 = arith.addf %67, %68 : vector<16x2xf32>
    %70 = tpu.concatenate %37, %59 in 0 : vector<16x2xf32>, vector<16x2xf32> -> vector<32x2xf32>
    %71 = tpu.concatenate %47, %69 in 0 : vector<16x2xf32>, vector<16x2xf32> -> vector<32x2xf32>
    %cst_43 = arith.constant dense<0.000000e+00> : vector<32x32xf32>
    %72 = tpu.matmul %70, %3, %cst_43 {dimension_numbers = #tpu.dot_dimension_numbers<[1], [0], [0], [1], [0, 0, 1, 1], [], []>} : vector<32x2xf32>, vector<2x32xf32>, vector<32x32xf32> -> vector<32x32xf32>
    %73 = vector.broadcast %18 : vector<32x1xf32> to vector<32x32xf32>
    %74 = vector.broadcast %4 : vector<1x32xf32> to vector<32x32xf32>
    %75 = arith.mulf %73, %74 : vector<32x32xf32>
    %76 = arith.addf %72, %75 : vector<32x32xf32>
    %77 = vector.broadcast %5 : vector<1x32xf32> to vector<32x32xf32>
    %78 = arith.addf %76, %77 : vector<32x32xf32>
    %cst_44 = arith.constant dense<0.000000e+00> : vector<32x32xf32>
    %79 = tpu.matmul %71, %6, %cst_44 {dimension_numbers = #tpu.dot_dimension_numbers<[1], [0], [0], [1], [0, 0, 1, 1], [], []>} : vector<32x2xf32>, vector<2x32xf32>, vector<32x32xf32> -> vector<32x32xf32>
    %80 = vector.broadcast %18 : vector<32x1xf32> to vector<32x32xf32>
    %81 = vector.broadcast %7 : vector<1x32xf32> to vector<32x32xf32>
    %82 = arith.mulf %80, %81 : vector<32x32xf32>
    %83 = arith.addf %79, %82 : vector<32x32xf32>
    %84 = vector.broadcast %8 : vector<1x32xf32> to vector<32x32xf32>
    %85 = arith.addf %83, %84 : vector<32x32xf32>
    %c0_45 = arith.constant 0 : index
    %c0_46 = arith.constant 0 : index
    %86 = vector.load %arg1[%c0_45, %c0_46] : memref<32x4xf32, #tpu.memory_space<vmem>>, vector<32x2xf32>
    %cst_47 = arith.constant dense<0.000000e+00> : vector<32x32xf32>
    %87 = tpu.matmul %86, %0, %cst_47 {dimension_numbers = #tpu.dot_dimension_numbers<[1], [0], [0], [1], [0, 0, 1, 1], [], []>} : vector<32x2xf32>, vector<2x32xf32>, vector<32x32xf32> -> vector<32x32xf32>
    %88 = vector.broadcast %18 : vector<32x1xf32> to vector<32x32xf32>
    %89 = vector.broadcast %1 : vector<1x32xf32> to vector<32x32xf32>
    %90 = arith.mulf %88, %89 : vector<32x32xf32>
    %91 = arith.addf %87, %90 : vector<32x32xf32>
    %92 = vector.broadcast %2 : vector<1x32xf32> to vector<32x32xf32>
    %93 = arith.addf %91, %92 : vector<32x32xf32>
    %c184 = arith.constant 184 : index
    %c0_48 = arith.constant 0 : index
    %94 = vector.load %arg2[%c184, %c0_48] : memref<440x32xf32, #tpu.memory_space<vmem>>, vector<32x32xf32>
    %c216 = arith.constant 216 : index
    %c0_49 = arith.constant 0 : index
    %95 = vector.load %arg2[%c216, %c0_49] : memref<440x32xf32, #tpu.memory_space<vmem>>, vector<32x32xf32>
    %c0_50 = arith.constant 0 : index
    %c0_51 = arith.constant 0 : index
    %c0_52 = arith.constant 0 : index
    %96 = vector.load %arg4[%c0_50, %c0_51, %c0_52] : memref<4x32x64xf32, #tpu.memory_space<vmem>>, vector<1x32x64xf32>
    %97 = vector.shape_cast %96 : vector<1x32x64xf32> to vector<32x64xf32>
    %c0_53 = arith.constant 0 : index
    %c0_54 = arith.constant 0 : index
    %c0_55 = arith.constant 0 : index
    %98 = vector.load %arg5[%c0_53, %c0_54, %c0_55] : memref<4x128x64xf32, #tpu.memory_space<vmem>>, vector<1x128x64xf32>
    %99 = vector.shape_cast %98 : vector<1x128x64xf32> to vector<128x64xf32>
    %c24 = arith.constant 24 : index
    %c0_56 = arith.constant 0 : index
    %100 = vector.load %arg2[%c24, %c0_56] : memref<440x32xf32, #tpu.memory_space<vmem>>, vector<1x32xf32>
    %cst_57 = arith.constant dense<0.000000e+00> : vector<16x32xf32>
    %101 = tpu.matmul %11, %93, %cst_57 {dimension_numbers = #tpu.dot_dimension_numbers<[1], [0], [0], [1], [0, 0, 1, 1], [], []>} : vector<16x32xf32>, vector<32x32xf32>, vector<16x32xf32> -> vector<16x32xf32>
    %102 = tpu.concatenate %101, %101, %101, %101 in 1 : vector<16x32xf32>, vector<16x32xf32>, vector<16x32xf32>, vector<16x32xf32> -> vector<16x128xf32>
    %103 = arith.mulf %102, %25 : vector<16x128xf32>
    %cst_58 = arith.constant dense<0.000000e+00> : vector<16x64xf32>
    %104 = tpu.matmul %103, %99, %cst_58 {dimension_numbers = #tpu.dot_dimension_numbers<[1], [0], [0], [1], [0, 0, 1, 1], [], []>} : vector<16x128xf32>, vector<128x64xf32>, vector<16x64xf32> -> vector<16x64xf32>
    %105 = vector.extract_strided_slice %104 {offsets = [0, 0], sizes = [16, 32], strides = [1, 1]} : vector<16x64xf32> to vector<16x32xf32>
    %106 = vector.extract_strided_slice %104 {offsets = [0, 32], sizes = [16, 32], strides = [1, 1]} : vector<16x64xf32> to vector<16x32xf32>
    %107 = tpu.concatenate %105, %106 in 0 : vector<16x32xf32>, vector<16x32xf32> -> vector<32x32xf32>
    %cst_59 = arith.constant dense<0.000000e+00> : vector<32x32xf32>
    %108 = tpu.matmul %10, %107, %cst_59 {dimension_numbers = #tpu.dot_dimension_numbers<[1], [0], [0], [1], [0, 0, 1, 1], [], []>} : vector<32x32xf32>, vector<32x32xf32>, vector<32x32xf32> -> vector<32x32xf32>
    %cst_60 = arith.constant dense<0.000000e+00> : vector<32x64xf32>
    %109 = tpu.matmul %93, %97, %cst_60 {dimension_numbers = #tpu.dot_dimension_numbers<[1], [0], [0], [1], [0, 0, 1, 1], [], []>} : vector<32x32xf32>, vector<32x64xf32>, vector<32x64xf32> -> vector<32x64xf32>
    %110 = vector.extract_strided_slice %109 {offsets = [0, 32], sizes = [32, 32], strides = [1, 1]} : vector<32x64xf32> to vector<32x32xf32>
    %111 = arith.addf %93, %85 : vector<32x32xf32>
    %cst_61 = arith.constant dense<0.000000e+00> : vector<32x32xf32>
    %112 = tpu.matmul %111, %94, %cst_61 {dimension_numbers = #tpu.dot_dimension_numbers<[1], [0], [0], [1], [0, 0, 1, 1], [], []>} : vector<32x32xf32>, vector<32x32xf32>, vector<32x32xf32> -> vector<32x32xf32>
    %113 = arith.addf %93, %78 : vector<32x32xf32>
    %cst_62 = arith.constant dense<0.000000e+00> : vector<32x32xf32>
    %114 = tpu.matmul %95, %113, %cst_62 {dimension_numbers = #tpu.dot_dimension_numbers<[1], [1], [0], [0], [0, 0, 1, 0], [], []>} : vector<32x32xf32>, vector<32x32xf32>, vector<32x32xf32> -> vector<32x32xf32>
    %115 = vector.extract_strided_slice %112 {offsets = [0, 0], sizes = [16, 32], strides = [1, 1]} : vector<32x32xf32> to vector<16x32xf32>
    %116 = vector.extract_strided_slice %110 {offsets = [0, 0], sizes = [16, 32], strides = [1, 1]} : vector<32x32xf32> to vector<16x32xf32>
    %117 = vector.extract_strided_slice %114 {offsets = [0, 0], sizes = [32, 16], strides = [1, 1]} : vector<32x32xf32> to vector<32x16xf32>
    %cst_63 = arith.constant dense<0.000000e+00> : vector<32x32xf32>
    %118 = tpu.matmul %117, %115, %cst_63 {dimension_numbers = #tpu.dot_dimension_numbers<[1], [0], [0], [1], [0, 0, 1, 1], [], []>} : vector<32x16xf32>, vector<16x32xf32>, vector<32x32xf32> -> vector<32x32xf32>
    %cst_64 = arith.constant 0.176776692 : f32
    %119 = vector.broadcast %cst_64 : f32 to vector<32x32xf32>
    %120 = arith.mulf %118, %119 : vector<32x32xf32>
    %121 = arith.addf %120, %9 : vector<32x32xf32>
    %cst_65 = arith.constant dense<0xFF800000> : vector<32xf32>
    %122 = vector.multi_reduction <maximumf>, %121, %cst_65 [0] : vector<32x32xf32> to vector<32xf32>
    %123 = vector.shape_cast %122 : vector<32xf32> to vector<1x32xf32>
    %124 = vector.broadcast %123 : vector<1x32xf32> to vector<32x32xf32>
    %125 = arith.subf %121, %124 : vector<32x32xf32>
    %126 = math.exp %125 : vector<32x32xf32>
    %cst_66 = arith.constant dense<0.000000e+00> : vector<32xf32>
    %127 = vector.multi_reduction <add>, %126, %cst_66 [0] : vector<32x32xf32> to vector<32xf32>
    %128 = vector.shape_cast %127 : vector<32xf32> to vector<1x32xf32>
    %129 = tpu.reciprocal %128 {approx = true} : vector<1x32xf32> -> vector<1x32xf32>
    %130 = arith.mulf %128, %129 : vector<1x32xf32>
    %cst_67 = arith.constant 2.000000e+00 : f32
    %131 = vector.broadcast %cst_67 : f32 to vector<1x32xf32>
    %132 = arith.subf %131, %130 : vector<1x32xf32>
    %133 = arith.mulf %129, %132 : vector<1x32xf32>
    %134 = vector.broadcast %133 : vector<1x32xf32> to vector<32x32xf32>
    %135 = arith.mulf %126, %134 : vector<32x32xf32>
    %cst_68 = arith.constant dense<0.000000e+00> : vector<16x32xf32>
    %136 = tpu.matmul %116, %135, %cst_68 {dimension_numbers = #tpu.dot_dimension_numbers<[1], [0], [0], [1], [0, 0, 1, 1], [], []>} : vector<16x32xf32>, vector<32x32xf32>, vector<16x32xf32> -> vector<16x32xf32>
    %137 = vector.extract_strided_slice %112 {offsets = [16, 0], sizes = [16, 32], strides = [1, 1]} : vector<32x32xf32> to vector<16x32xf32>
    %138 = vector.extract_strided_slice %110 {offsets = [16, 0], sizes = [16, 32], strides = [1, 1]} : vector<32x32xf32> to vector<16x32xf32>
    %139 = vector.extract_strided_slice %114 {offsets = [0, 16], sizes = [32, 16], strides = [1, 1]} : vector<32x32xf32> to vector<32x16xf32>
    %cst_69 = arith.constant dense<0.000000e+00> : vector<32x32xf32>
    %140 = tpu.matmul %139, %137, %cst_69 {dimension_numbers = #tpu.dot_dimension_numbers<[1], [0], [0], [1], [0, 0, 1, 1], [], []>} : vector<32x16xf32>, vector<16x32xf32>, vector<32x32xf32> -> vector<32x32xf32>
    %cst_70 = arith.constant 0.176776692 : f32
    %141 = vector.broadcast %cst_70 : f32 to vector<32x32xf32>
    %142 = arith.mulf %140, %141 : vector<32x32xf32>
    %143 = arith.addf %142, %9 : vector<32x32xf32>
    %cst_71 = arith.constant dense<0xFF800000> : vector<32xf32>
    %144 = vector.multi_reduction <maximumf>, %143, %cst_71 [0] : vector<32x32xf32> to vector<32xf32>
    %145 = vector.shape_cast %144 : vector<32xf32> to vector<1x32xf32>
    %146 = vector.broadcast %145 : vector<1x32xf32> to vector<32x32xf32>
    %147 = arith.subf %143, %146 : vector<32x32xf32>
    %148 = math.exp %147 : vector<32x32xf32>
    %cst_72 = arith.constant dense<0.000000e+00> : vector<32xf32>
    %149 = vector.multi_reduction <add>, %148, %cst_72 [0] : vector<32x32xf32> to vector<32xf32>
    %150 = vector.shape_cast %149 : vector<32xf32> to vector<1x32xf32>
    %151 = tpu.reciprocal %150 {approx = true} : vector<1x32xf32> -> vector<1x32xf32>
    %152 = arith.mulf %150, %151 : vector<1x32xf32>
    %cst_73 = arith.constant 2.000000e+00 : f32
    %153 = vector.broadcast %cst_73 : f32 to vector<1x32xf32>
    %154 = arith.subf %153, %152 : vector<1x32xf32>
    %155 = arith.mulf %151, %154 : vector<1x32xf32>
    %156 = vector.broadcast %155 : vector<1x32xf32> to vector<32x32xf32>
    %157 = arith.mulf %148, %156 : vector<32x32xf32>
    %cst_74 = arith.constant dense<0.000000e+00> : vector<16x32xf32>
    %158 = tpu.matmul %138, %157, %cst_74 {dimension_numbers = #tpu.dot_dimension_numbers<[1], [0], [0], [1], [0, 0, 1, 1], [], []>} : vector<16x32xf32>, vector<32x32xf32>, vector<16x32xf32> -> vector<16x32xf32>
    %159 = tpu.concatenate %136, %158 in 0 : vector<16x32xf32>, vector<16x32xf32> -> vector<32x32xf32>
    %160 = vector.extract_strided_slice %109 {offsets = [0, 0], sizes = [32, 32], strides = [1, 1]} : vector<32x64xf32> to vector<32x32xf32>
    %161 = vector.broadcast %100 : vector<1x32xf32> to vector<32x32xf32>
    %162 = arith.addf %160, %161 : vector<32x32xf32>
    %163 = arith.addf %108, %162 : vector<32x32xf32>
    %164 = arith.addf %163, %159 : vector<32x32xf32>
    %cst_75 = arith.constant 5.000000e-01 : f32
    %165 = vector.broadcast %cst_75 : f32 to vector<32x32xf32>
    %166 = arith.mulf %165, %164 : vector<32x32xf32>
    %cst_76 = arith.constant 0.707106769 : f32
    %167 = vector.broadcast %cst_76 : f32 to vector<32x32xf32>
    %168 = arith.mulf %164, %167 : vector<32x32xf32>
    %cst_77 = arith.constant 0.000000e+00 : f32
    %169 = vector.broadcast %cst_77 : f32 to vector<32x32xf32>
    %170 = arith.cmpf olt, %168, %169 : vector<32x32xf32>
    %cst_78 = arith.constant -1.000000e+00 : f32
    %cst_79 = arith.constant 1.000000e+00 : f32
    %171 = vector.broadcast %cst_78 : f32 to vector<32x32xf32>
    %172 = vector.broadcast %cst_79 : f32 to vector<32x32xf32>
    %173 = arith.select %170, %171, %172 : vector<32x32xi1>, vector<32x32xf32>
    %174 = math.absf %168 : vector<32x32xf32>
    %cst_80 = arith.constant 0.327591091 : f32
    %175 = vector.broadcast %cst_80 : f32 to vector<32x32xf32>
    %176 = arith.mulf %175, %174 : vector<32x32xf32>
    %cst_81 = arith.constant 1.000000e+00 : f32
    %177 = vector.broadcast %cst_81 : f32 to vector<32x32xf32>
    %178 = arith.addf %177, %176 : vector<32x32xf32>
    %cst_82 = arith.constant 1.000000e+00 : f32
    %179 = vector.broadcast %cst_82 : f32 to vector<32x32xf32>
    %180 = arith.divf %179, %178 : vector<32x32xf32>
    %cst_83 = arith.constant 1.06140542 : f32
    %181 = vector.broadcast %cst_83 : f32 to vector<32x32xf32>
    %182 = arith.mulf %181, %180 : vector<32x32xf32>
    %cst_84 = arith.constant -1.45315206 : f32
    %183 = vector.broadcast %cst_84 : f32 to vector<32x32xf32>
    %184 = arith.addf %182, %183 : vector<32x32xf32>
    %185 = arith.mulf %184, %180 : vector<32x32xf32>
    %cst_85 = arith.constant 1.42141378 : f32
    %186 = vector.broadcast %cst_85 : f32 to vector<32x32xf32>
    %187 = arith.addf %185, %186 : vector<32x32xf32>
    %188 = arith.mulf %187, %180 : vector<32x32xf32>
    %cst_86 = arith.constant -0.284496725 : f32
    %189 = vector.broadcast %cst_86 : f32 to vector<32x32xf32>
    %190 = arith.addf %188, %189 : vector<32x32xf32>
    %191 = arith.mulf %190, %180 : vector<32x32xf32>
    %cst_87 = arith.constant 0.254829586 : f32
    %192 = vector.broadcast %cst_87 : f32 to vector<32x32xf32>
    %193 = arith.addf %191, %192 : vector<32x32xf32>
    %194 = arith.mulf %193, %180 : vector<32x32xf32>
    %cst_88 = arith.constant 0.000000e+00 : f32
    %195 = vector.broadcast %cst_88 : f32 to vector<32x32xf32>
    %196 = arith.subf %195, %174 : vector<32x32xf32>
    %197 = arith.mulf %196, %174 : vector<32x32xf32>
    %198 = math.exp %197 : vector<32x32xf32>
    %199 = arith.mulf %194, %198 : vector<32x32xf32>
    %cst_89 = arith.constant 1.000000e+00 : f32
    %200 = vector.broadcast %cst_89 : f32 to vector<32x32xf32>
    %201 = arith.subf %200, %199 : vector<32x32xf32>
    %202 = arith.mulf %173, %201 : vector<32x32xf32>
    %cst_90 = arith.constant 1.000000e+00 : f32
    %203 = vector.broadcast %cst_90 : f32 to vector<32x32xf32>
    %204 = arith.addf %203, %202 : vector<32x32xf32>
    %205 = arith.mulf %166, %204 : vector<32x32xf32>
    %c248 = arith.constant 248 : index
    %c0_91 = arith.constant 0 : index
    %206 = vector.load %arg2[%c248, %c0_91] : memref<440x32xf32, #tpu.memory_space<vmem>>, vector<32x32xf32>
    %c280 = arith.constant 280 : index
    %c0_92 = arith.constant 0 : index
    %207 = vector.load %arg2[%c280, %c0_92] : memref<440x32xf32, #tpu.memory_space<vmem>>, vector<32x32xf32>
    %c1_93 = arith.constant 1 : index
    %c0_94 = arith.constant 0 : index
    %c0_95 = arith.constant 0 : index
    %208 = vector.load %arg4[%c1_93, %c0_94, %c0_95] : memref<4x32x64xf32, #tpu.memory_space<vmem>>, vector<1x32x64xf32>
    %209 = vector.shape_cast %208 : vector<1x32x64xf32> to vector<32x64xf32>
    %c1_96 = arith.constant 1 : index
    %c0_97 = arith.constant 0 : index
    %c0_98 = arith.constant 0 : index
    %210 = vector.load %arg5[%c1_96, %c0_97, %c0_98] : memref<4x128x64xf32, #tpu.memory_space<vmem>>, vector<1x128x64xf32>
    %211 = vector.shape_cast %210 : vector<1x128x64xf32> to vector<128x64xf32>
    %c25 = arith.constant 25 : index
    %c0_99 = arith.constant 0 : index
    %212 = vector.load %arg2[%c25, %c0_99] : memref<440x32xf32, #tpu.memory_space<vmem>>, vector<1x32xf32>
    %cst_100 = arith.constant dense<0.000000e+00> : vector<16x32xf32>
    %213 = tpu.matmul %11, %205, %cst_100 {dimension_numbers = #tpu.dot_dimension_numbers<[1], [0], [0], [1], [0, 0, 1, 1], [], []>} : vector<16x32xf32>, vector<32x32xf32>, vector<16x32xf32> -> vector<16x32xf32>
    %214 = tpu.concatenate %213, %213, %213, %213 in 1 : vector<16x32xf32>, vector<16x32xf32>, vector<16x32xf32>, vector<16x32xf32> -> vector<16x128xf32>
    %215 = arith.mulf %214, %25 : vector<16x128xf32>
    %cst_101 = arith.constant dense<0.000000e+00> : vector<16x64xf32>
    %216 = tpu.matmul %215, %211, %cst_101 {dimension_numbers = #tpu.dot_dimension_numbers<[1], [0], [0], [1], [0, 0, 1, 1], [], []>} : vector<16x128xf32>, vector<128x64xf32>, vector<16x64xf32> -> vector<16x64xf32>
    %217 = vector.extract_strided_slice %216 {offsets = [0, 0], sizes = [16, 32], strides = [1, 1]} : vector<16x64xf32> to vector<16x32xf32>
    %218 = vector.extract_strided_slice %216 {offsets = [0, 32], sizes = [16, 32], strides = [1, 1]} : vector<16x64xf32> to vector<16x32xf32>
    %219 = tpu.concatenate %217, %218 in 0 : vector<16x32xf32>, vector<16x32xf32> -> vector<32x32xf32>
    %cst_102 = arith.constant dense<0.000000e+00> : vector<32x32xf32>
    %220 = tpu.matmul %10, %219, %cst_102 {dimension_numbers = #tpu.dot_dimension_numbers<[1], [0], [0], [1], [0, 0, 1, 1], [], []>} : vector<32x32xf32>, vector<32x32xf32>, vector<32x32xf32> -> vector<32x32xf32>
    %cst_103 = arith.constant dense<0.000000e+00> : vector<32x64xf32>
    %221 = tpu.matmul %205, %209, %cst_103 {dimension_numbers = #tpu.dot_dimension_numbers<[1], [0], [0], [1], [0, 0, 1, 1], [], []>} : vector<32x32xf32>, vector<32x64xf32>, vector<32x64xf32> -> vector<32x64xf32>
    %222 = vector.extract_strided_slice %221 {offsets = [0, 32], sizes = [32, 32], strides = [1, 1]} : vector<32x64xf32> to vector<32x32xf32>
    %223 = arith.addf %205, %85 : vector<32x32xf32>
    %cst_104 = arith.constant dense<0.000000e+00> : vector<32x32xf32>
    %224 = tpu.matmul %223, %206, %cst_104 {dimension_numbers = #tpu.dot_dimension_numbers<[1], [0], [0], [1], [0, 0, 1, 1], [], []>} : vector<32x32xf32>, vector<32x32xf32>, vector<32x32xf32> -> vector<32x32xf32>
    %225 = arith.addf %205, %78 : vector<32x32xf32>
    %cst_105 = arith.constant dense<0.000000e+00> : vector<32x32xf32>
    %226 = tpu.matmul %207, %225, %cst_105 {dimension_numbers = #tpu.dot_dimension_numbers<[1], [1], [0], [0], [0, 0, 1, 0], [], []>} : vector<32x32xf32>, vector<32x32xf32>, vector<32x32xf32> -> vector<32x32xf32>
    %227 = vector.extract_strided_slice %224 {offsets = [0, 0], sizes = [16, 32], strides = [1, 1]} : vector<32x32xf32> to vector<16x32xf32>
    %228 = vector.extract_strided_slice %222 {offsets = [0, 0], sizes = [16, 32], strides = [1, 1]} : vector<32x32xf32> to vector<16x32xf32>
    %229 = vector.extract_strided_slice %226 {offsets = [0, 0], sizes = [32, 16], strides = [1, 1]} : vector<32x32xf32> to vector<32x16xf32>
    %cst_106 = arith.constant dense<0.000000e+00> : vector<32x32xf32>
    %230 = tpu.matmul %229, %227, %cst_106 {dimension_numbers = #tpu.dot_dimension_numbers<[1], [0], [0], [1], [0, 0, 1, 1], [], []>} : vector<32x16xf32>, vector<16x32xf32>, vector<32x32xf32> -> vector<32x32xf32>
    %cst_107 = arith.constant 0.176776692 : f32
    %231 = vector.broadcast %cst_107 : f32 to vector<32x32xf32>
    %232 = arith.mulf %230, %231 : vector<32x32xf32>
    %233 = arith.addf %232, %9 : vector<32x32xf32>
    %cst_108 = arith.constant dense<0xFF800000> : vector<32xf32>
    %234 = vector.multi_reduction <maximumf>, %233, %cst_108 [0] : vector<32x32xf32> to vector<32xf32>
    %235 = vector.shape_cast %234 : vector<32xf32> to vector<1x32xf32>
    %236 = vector.broadcast %235 : vector<1x32xf32> to vector<32x32xf32>
    %237 = arith.subf %233, %236 : vector<32x32xf32>
    %238 = math.exp %237 : vector<32x32xf32>
    %cst_109 = arith.constant dense<0.000000e+00> : vector<32xf32>
    %239 = vector.multi_reduction <add>, %238, %cst_109 [0] : vector<32x32xf32> to vector<32xf32>
    %240 = vector.shape_cast %239 : vector<32xf32> to vector<1x32xf32>
    %241 = tpu.reciprocal %240 {approx = true} : vector<1x32xf32> -> vector<1x32xf32>
    %242 = arith.mulf %240, %241 : vector<1x32xf32>
    %cst_110 = arith.constant 2.000000e+00 : f32
    %243 = vector.broadcast %cst_110 : f32 to vector<1x32xf32>
    %244 = arith.subf %243, %242 : vector<1x32xf32>
    %245 = arith.mulf %241, %244 : vector<1x32xf32>
    %246 = vector.broadcast %245 : vector<1x32xf32> to vector<32x32xf32>
    %247 = arith.mulf %238, %246 : vector<32x32xf32>
    %cst_111 = arith.constant dense<0.000000e+00> : vector<16x32xf32>
    %248 = tpu.matmul %228, %247, %cst_111 {dimension_numbers = #tpu.dot_dimension_numbers<[1], [0], [0], [1], [0, 0, 1, 1], [], []>} : vector<16x32xf32>, vector<32x32xf32>, vector<16x32xf32> -> vector<16x32xf32>
    %249 = vector.extract_strided_slice %224 {offsets = [16, 0], sizes = [16, 32], strides = [1, 1]} : vector<32x32xf32> to vector<16x32xf32>
    %250 = vector.extract_strided_slice %222 {offsets = [16, 0], sizes = [16, 32], strides = [1, 1]} : vector<32x32xf32> to vector<16x32xf32>
    %251 = vector.extract_strided_slice %226 {offsets = [0, 16], sizes = [32, 16], strides = [1, 1]} : vector<32x32xf32> to vector<32x16xf32>
    %cst_112 = arith.constant dense<0.000000e+00> : vector<32x32xf32>
    %252 = tpu.matmul %251, %249, %cst_112 {dimension_numbers = #tpu.dot_dimension_numbers<[1], [0], [0], [1], [0, 0, 1, 1], [], []>} : vector<32x16xf32>, vector<16x32xf32>, vector<32x32xf32> -> vector<32x32xf32>
    %cst_113 = arith.constant 0.176776692 : f32
    %253 = vector.broadcast %cst_113 : f32 to vector<32x32xf32>
    %254 = arith.mulf %252, %253 : vector<32x32xf32>
    %255 = arith.addf %254, %9 : vector<32x32xf32>
    %cst_114 = arith.constant dense<0xFF800000> : vector<32xf32>
    %256 = vector.multi_reduction <maximumf>, %255, %cst_114 [0] : vector<32x32xf32> to vector<32xf32>
    %257 = vector.shape_cast %256 : vector<32xf32> to vector<1x32xf32>
    %258 = vector.broadcast %257 : vector<1x32xf32> to vector<32x32xf32>
    %259 = arith.subf %255, %258 : vector<32x32xf32>
    %260 = math.exp %259 : vector<32x32xf32>
    %cst_115 = arith.constant dense<0.000000e+00> : vector<32xf32>
    %261 = vector.multi_reduction <add>, %260, %cst_115 [0] : vector<32x32xf32> to vector<32xf32>
    %262 = vector.shape_cast %261 : vector<32xf32> to vector<1x32xf32>
    %263 = tpu.reciprocal %262 {approx = true} : vector<1x32xf32> -> vector<1x32xf32>
    %264 = arith.mulf %262, %263 : vector<1x32xf32>
    %cst_116 = arith.constant 2.000000e+00 : f32
    %265 = vector.broadcast %cst_116 : f32 to vector<1x32xf32>
    %266 = arith.subf %265, %264 : vector<1x32xf32>
    %267 = arith.mulf %263, %266 : vector<1x32xf32>
    %268 = vector.broadcast %267 : vector<1x32xf32> to vector<32x32xf32>
    %269 = arith.mulf %260, %268 : vector<32x32xf32>
    %cst_117 = arith.constant dense<0.000000e+00> : vector<16x32xf32>
    %270 = tpu.matmul %250, %269, %cst_117 {dimension_numbers = #tpu.dot_dimension_numbers<[1], [0], [0], [1], [0, 0, 1, 1], [], []>} : vector<16x32xf32>, vector<32x32xf32>, vector<16x32xf32> -> vector<16x32xf32>
    %271 = tpu.concatenate %248, %270 in 0 : vector<16x32xf32>, vector<16x32xf32> -> vector<32x32xf32>
    %272 = vector.extract_strided_slice %221 {offsets = [0, 0], sizes = [32, 32], strides = [1, 1]} : vector<32x64xf32> to vector<32x32xf32>
    %273 = vector.broadcast %212 : vector<1x32xf32> to vector<32x32xf32>
    %274 = arith.addf %272, %273 : vector<32x32xf32>
    %275 = arith.addf %220, %274 : vector<32x32xf32>
    %276 = arith.addf %275, %271 : vector<32x32xf32>
    %cst_118 = arith.constant 5.000000e-01 : f32
    %277 = vector.broadcast %cst_118 : f32 to vector<32x32xf32>
    %278 = arith.mulf %277, %276 : vector<32x32xf32>
    %cst_119 = arith.constant 0.707106769 : f32
    %279 = vector.broadcast %cst_119 : f32 to vector<32x32xf32>
    %280 = arith.mulf %276, %279 : vector<32x32xf32>
    %cst_120 = arith.constant 0.000000e+00 : f32
    %281 = vector.broadcast %cst_120 : f32 to vector<32x32xf32>
    %282 = arith.cmpf olt, %280, %281 : vector<32x32xf32>
    %cst_121 = arith.constant -1.000000e+00 : f32
    %cst_122 = arith.constant 1.000000e+00 : f32
    %283 = vector.broadcast %cst_121 : f32 to vector<32x32xf32>
    %284 = vector.broadcast %cst_122 : f32 to vector<32x32xf32>
    %285 = arith.select %282, %283, %284 : vector<32x32xi1>, vector<32x32xf32>
    %286 = math.absf %280 : vector<32x32xf32>
    %cst_123 = arith.constant 0.327591091 : f32
    %287 = vector.broadcast %cst_123 : f32 to vector<32x32xf32>
    %288 = arith.mulf %287, %286 : vector<32x32xf32>
    %cst_124 = arith.constant 1.000000e+00 : f32
    %289 = vector.broadcast %cst_124 : f32 to vector<32x32xf32>
    %290 = arith.addf %289, %288 : vector<32x32xf32>
    %cst_125 = arith.constant 1.000000e+00 : f32
    %291 = vector.broadcast %cst_125 : f32 to vector<32x32xf32>
    %292 = arith.divf %291, %290 : vector<32x32xf32>
    %cst_126 = arith.constant 1.06140542 : f32
    %293 = vector.broadcast %cst_126 : f32 to vector<32x32xf32>
    %294 = arith.mulf %293, %292 : vector<32x32xf32>
    %cst_127 = arith.constant -1.45315206 : f32
    %295 = vector.broadcast %cst_127 : f32 to vector<32x32xf32>
    %296 = arith.addf %294, %295 : vector<32x32xf32>
    %297 = arith.mulf %296, %292 : vector<32x32xf32>
    %cst_128 = arith.constant 1.42141378 : f32
    %298 = vector.broadcast %cst_128 : f32 to vector<32x32xf32>
    %299 = arith.addf %297, %298 : vector<32x32xf32>
    %300 = arith.mulf %299, %292 : vector<32x32xf32>
    %cst_129 = arith.constant -0.284496725 : f32
    %301 = vector.broadcast %cst_129 : f32 to vector<32x32xf32>
    %302 = arith.addf %300, %301 : vector<32x32xf32>
    %303 = arith.mulf %302, %292 : vector<32x32xf32>
    %cst_130 = arith.constant 0.254829586 : f32
    %304 = vector.broadcast %cst_130 : f32 to vector<32x32xf32>
    %305 = arith.addf %303, %304 : vector<32x32xf32>
    %306 = arith.mulf %305, %292 : vector<32x32xf32>
    %cst_131 = arith.constant 0.000000e+00 : f32
    %307 = vector.broadcast %cst_131 : f32 to vector<32x32xf32>
    %308 = arith.subf %307, %286 : vector<32x32xf32>
    %309 = arith.mulf %308, %286 : vector<32x32xf32>
    %310 = math.exp %309 : vector<32x32xf32>
    %311 = arith.mulf %306, %310 : vector<32x32xf32>
    %cst_132 = arith.constant 1.000000e+00 : f32
    %312 = vector.broadcast %cst_132 : f32 to vector<32x32xf32>
    %313 = arith.subf %312, %311 : vector<32x32xf32>
    %314 = arith.mulf %285, %313 : vector<32x32xf32>
    %cst_133 = arith.constant 1.000000e+00 : f32
    %315 = vector.broadcast %cst_133 : f32 to vector<32x32xf32>
    %316 = arith.addf %315, %314 : vector<32x32xf32>
    %317 = arith.mulf %278, %316 : vector<32x32xf32>
    %c312 = arith.constant 312 : index
    %c0_134 = arith.constant 0 : index
    %318 = vector.load %arg2[%c312, %c0_134] : memref<440x32xf32, #tpu.memory_space<vmem>>, vector<32x32xf32>
    %c344 = arith.constant 344 : index
    %c0_135 = arith.constant 0 : index
    %319 = vector.load %arg2[%c344, %c0_135] : memref<440x32xf32, #tpu.memory_space<vmem>>, vector<32x32xf32>
    %c2_136 = arith.constant 2 : index
    %c0_137 = arith.constant 0 : index
    %c0_138 = arith.constant 0 : index
    %320 = vector.load %arg4[%c2_136, %c0_137, %c0_138] : memref<4x32x64xf32, #tpu.memory_space<vmem>>, vector<1x32x64xf32>
    %321 = vector.shape_cast %320 : vector<1x32x64xf32> to vector<32x64xf32>
    %c2_139 = arith.constant 2 : index
    %c0_140 = arith.constant 0 : index
    %c0_141 = arith.constant 0 : index
    %322 = vector.load %arg5[%c2_139, %c0_140, %c0_141] : memref<4x128x64xf32, #tpu.memory_space<vmem>>, vector<1x128x64xf32>
    %323 = vector.shape_cast %322 : vector<1x128x64xf32> to vector<128x64xf32>
    %c26 = arith.constant 26 : index
    %c0_142 = arith.constant 0 : index
    %324 = vector.load %arg2[%c26, %c0_142] : memref<440x32xf32, #tpu.memory_space<vmem>>, vector<1x32xf32>
    %cst_143 = arith.constant dense<0.000000e+00> : vector<16x32xf32>
    %325 = tpu.matmul %11, %317, %cst_143 {dimension_numbers = #tpu.dot_dimension_numbers<[1], [0], [0], [1], [0, 0, 1, 1], [], []>} : vector<16x32xf32>, vector<32x32xf32>, vector<16x32xf32> -> vector<16x32xf32>
    %326 = tpu.concatenate %325, %325, %325, %325 in 1 : vector<16x32xf32>, vector<16x32xf32>, vector<16x32xf32>, vector<16x32xf32> -> vector<16x128xf32>
    %327 = arith.mulf %326, %25 : vector<16x128xf32>
    %cst_144 = arith.constant dense<0.000000e+00> : vector<16x64xf32>
    %328 = tpu.matmul %327, %323, %cst_144 {dimension_numbers = #tpu.dot_dimension_numbers<[1], [0], [0], [1], [0, 0, 1, 1], [], []>} : vector<16x128xf32>, vector<128x64xf32>, vector<16x64xf32> -> vector<16x64xf32>
    %329 = vector.extract_strided_slice %328 {offsets = [0, 0], sizes = [16, 32], strides = [1, 1]} : vector<16x64xf32> to vector<16x32xf32>
    %330 = vector.extract_strided_slice %328 {offsets = [0, 32], sizes = [16, 32], strides = [1, 1]} : vector<16x64xf32> to vector<16x32xf32>
    %331 = tpu.concatenate %329, %330 in 0 : vector<16x32xf32>, vector<16x32xf32> -> vector<32x32xf32>
    %cst_145 = arith.constant dense<0.000000e+00> : vector<32x32xf32>
    %332 = tpu.matmul %10, %331, %cst_145 {dimension_numbers = #tpu.dot_dimension_numbers<[1], [0], [0], [1], [0, 0, 1, 1], [], []>} : vector<32x32xf32>, vector<32x32xf32>, vector<32x32xf32> -> vector<32x32xf32>
    %cst_146 = arith.constant dense<0.000000e+00> : vector<32x64xf32>
    %333 = tpu.matmul %317, %321, %cst_146 {dimension_numbers = #tpu.dot_dimension_numbers<[1], [0], [0], [1], [0, 0, 1, 1], [], []>} : vector<32x32xf32>, vector<32x64xf32>, vector<32x64xf32> -> vector<32x64xf32>
    %334 = vector.extract_strided_slice %333 {offsets = [0, 32], sizes = [32, 32], strides = [1, 1]} : vector<32x64xf32> to vector<32x32xf32>
    %335 = arith.addf %317, %85 : vector<32x32xf32>
    %cst_147 = arith.constant dense<0.000000e+00> : vector<32x32xf32>
    %336 = tpu.matmul %335, %318, %cst_147 {dimension_numbers = #tpu.dot_dimension_numbers<[1], [0], [0], [1], [0, 0, 1, 1], [], []>} : vector<32x32xf32>, vector<32x32xf32>, vector<32x32xf32> -> vector<32x32xf32>
    %337 = arith.addf %317, %78 : vector<32x32xf32>
    %cst_148 = arith.constant dense<0.000000e+00> : vector<32x32xf32>
    %338 = tpu.matmul %319, %337, %cst_148 {dimension_numbers = #tpu.dot_dimension_numbers<[1], [1], [0], [0], [0, 0, 1, 0], [], []>} : vector<32x32xf32>, vector<32x32xf32>, vector<32x32xf32> -> vector<32x32xf32>
    %339 = vector.extract_strided_slice %336 {offsets = [0, 0], sizes = [16, 32], strides = [1, 1]} : vector<32x32xf32> to vector<16x32xf32>
    %340 = vector.extract_strided_slice %334 {offsets = [0, 0], sizes = [16, 32], strides = [1, 1]} : vector<32x32xf32> to vector<16x32xf32>
    %341 = vector.extract_strided_slice %338 {offsets = [0, 0], sizes = [32, 16], strides = [1, 1]} : vector<32x32xf32> to vector<32x16xf32>
    %cst_149 = arith.constant dense<0.000000e+00> : vector<32x32xf32>
    %342 = tpu.matmul %341, %339, %cst_149 {dimension_numbers = #tpu.dot_dimension_numbers<[1], [0], [0], [1], [0, 0, 1, 1], [], []>} : vector<32x16xf32>, vector<16x32xf32>, vector<32x32xf32> -> vector<32x32xf32>
    %cst_150 = arith.constant 0.176776692 : f32
    %343 = vector.broadcast %cst_150 : f32 to vector<32x32xf32>
    %344 = arith.mulf %342, %343 : vector<32x32xf32>
    %345 = arith.addf %344, %9 : vector<32x32xf32>
    %cst_151 = arith.constant dense<0xFF800000> : vector<32xf32>
    %346 = vector.multi_reduction <maximumf>, %345, %cst_151 [0] : vector<32x32xf32> to vector<32xf32>
    %347 = vector.shape_cast %346 : vector<32xf32> to vector<1x32xf32>
    %348 = vector.broadcast %347 : vector<1x32xf32> to vector<32x32xf32>
    %349 = arith.subf %345, %348 : vector<32x32xf32>
    %350 = math.exp %349 : vector<32x32xf32>
    %cst_152 = arith.constant dense<0.000000e+00> : vector<32xf32>
    %351 = vector.multi_reduction <add>, %350, %cst_152 [0] : vector<32x32xf32> to vector<32xf32>
    %352 = vector.shape_cast %351 : vector<32xf32> to vector<1x32xf32>
    %353 = tpu.reciprocal %352 {approx = true} : vector<1x32xf32> -> vector<1x32xf32>
    %354 = arith.mulf %352, %353 : vector<1x32xf32>
    %cst_153 = arith.constant 2.000000e+00 : f32
    %355 = vector.broadcast %cst_153 : f32 to vector<1x32xf32>
    %356 = arith.subf %355, %354 : vector<1x32xf32>
    %357 = arith.mulf %353, %356 : vector<1x32xf32>
    %358 = vector.broadcast %357 : vector<1x32xf32> to vector<32x32xf32>
    %359 = arith.mulf %350, %358 : vector<32x32xf32>
    %cst_154 = arith.constant dense<0.000000e+00> : vector<16x32xf32>
    %360 = tpu.matmul %340, %359, %cst_154 {dimension_numbers = #tpu.dot_dimension_numbers<[1], [0], [0], [1], [0, 0, 1, 1], [], []>} : vector<16x32xf32>, vector<32x32xf32>, vector<16x32xf32> -> vector<16x32xf32>
    %361 = vector.extract_strided_slice %336 {offsets = [16, 0], sizes = [16, 32], strides = [1, 1]} : vector<32x32xf32> to vector<16x32xf32>
    %362 = vector.extract_strided_slice %334 {offsets = [16, 0], sizes = [16, 32], strides = [1, 1]} : vector<32x32xf32> to vector<16x32xf32>
    %363 = vector.extract_strided_slice %338 {offsets = [0, 16], sizes = [32, 16], strides = [1, 1]} : vector<32x32xf32> to vector<32x16xf32>
    %cst_155 = arith.constant dense<0.000000e+00> : vector<32x32xf32>
    %364 = tpu.matmul %363, %361, %cst_155 {dimension_numbers = #tpu.dot_dimension_numbers<[1], [0], [0], [1], [0, 0, 1, 1], [], []>} : vector<32x16xf32>, vector<16x32xf32>, vector<32x32xf32> -> vector<32x32xf32>
    %cst_156 = arith.constant 0.176776692 : f32
    %365 = vector.broadcast %cst_156 : f32 to vector<32x32xf32>
    %366 = arith.mulf %364, %365 : vector<32x32xf32>
    %367 = arith.addf %366, %9 : vector<32x32xf32>
    %cst_157 = arith.constant dense<0xFF800000> : vector<32xf32>
    %368 = vector.multi_reduction <maximumf>, %367, %cst_157 [0] : vector<32x32xf32> to vector<32xf32>
    %369 = vector.shape_cast %368 : vector<32xf32> to vector<1x32xf32>
    %370 = vector.broadcast %369 : vector<1x32xf32> to vector<32x32xf32>
    %371 = arith.subf %367, %370 : vector<32x32xf32>
    %372 = math.exp %371 : vector<32x32xf32>
    %cst_158 = arith.constant dense<0.000000e+00> : vector<32xf32>
    %373 = vector.multi_reduction <add>, %372, %cst_158 [0] : vector<32x32xf32> to vector<32xf32>
    %374 = vector.shape_cast %373 : vector<32xf32> to vector<1x32xf32>
    %375 = tpu.reciprocal %374 {approx = true} : vector<1x32xf32> -> vector<1x32xf32>
    %376 = arith.mulf %374, %375 : vector<1x32xf32>
    %cst_159 = arith.constant 2.000000e+00 : f32
    %377 = vector.broadcast %cst_159 : f32 to vector<1x32xf32>
    %378 = arith.subf %377, %376 : vector<1x32xf32>
    %379 = arith.mulf %375, %378 : vector<1x32xf32>
    %380 = vector.broadcast %379 : vector<1x32xf32> to vector<32x32xf32>
    %381 = arith.mulf %372, %380 : vector<32x32xf32>
    %cst_160 = arith.constant dense<0.000000e+00> : vector<16x32xf32>
    %382 = tpu.matmul %362, %381, %cst_160 {dimension_numbers = #tpu.dot_dimension_numbers<[1], [0], [0], [1], [0, 0, 1, 1], [], []>} : vector<16x32xf32>, vector<32x32xf32>, vector<16x32xf32> -> vector<16x32xf32>
    %383 = tpu.concatenate %360, %382 in 0 : vector<16x32xf32>, vector<16x32xf32> -> vector<32x32xf32>
    %384 = vector.extract_strided_slice %333 {offsets = [0, 0], sizes = [32, 32], strides = [1, 1]} : vector<32x64xf32> to vector<32x32xf32>
    %385 = vector.broadcast %324 : vector<1x32xf32> to vector<32x32xf32>
    %386 = arith.addf %384, %385 : vector<32x32xf32>
    %387 = arith.addf %332, %386 : vector<32x32xf32>
    %388 = arith.addf %387, %383 : vector<32x32xf32>
    %cst_161 = arith.constant 5.000000e-01 : f32
    %389 = vector.broadcast %cst_161 : f32 to vector<32x32xf32>
    %390 = arith.mulf %389, %388 : vector<32x32xf32>
    %cst_162 = arith.constant 0.707106769 : f32
    %391 = vector.broadcast %cst_162 : f32 to vector<32x32xf32>
    %392 = arith.mulf %388, %391 : vector<32x32xf32>
    %cst_163 = arith.constant 0.000000e+00 : f32
    %393 = vector.broadcast %cst_163 : f32 to vector<32x32xf32>
    %394 = arith.cmpf olt, %392, %393 : vector<32x32xf32>
    %cst_164 = arith.constant -1.000000e+00 : f32
    %cst_165 = arith.constant 1.000000e+00 : f32
    %395 = vector.broadcast %cst_164 : f32 to vector<32x32xf32>
    %396 = vector.broadcast %cst_165 : f32 to vector<32x32xf32>
    %397 = arith.select %394, %395, %396 : vector<32x32xi1>, vector<32x32xf32>
    %398 = math.absf %392 : vector<32x32xf32>
    %cst_166 = arith.constant 0.327591091 : f32
    %399 = vector.broadcast %cst_166 : f32 to vector<32x32xf32>
    %400 = arith.mulf %399, %398 : vector<32x32xf32>
    %cst_167 = arith.constant 1.000000e+00 : f32
    %401 = vector.broadcast %cst_167 : f32 to vector<32x32xf32>
    %402 = arith.addf %401, %400 : vector<32x32xf32>
    %cst_168 = arith.constant 1.000000e+00 : f32
    %403 = vector.broadcast %cst_168 : f32 to vector<32x32xf32>
    %404 = arith.divf %403, %402 : vector<32x32xf32>
    %cst_169 = arith.constant 1.06140542 : f32
    %405 = vector.broadcast %cst_169 : f32 to vector<32x32xf32>
    %406 = arith.mulf %405, %404 : vector<32x32xf32>
    %cst_170 = arith.constant -1.45315206 : f32
    %407 = vector.broadcast %cst_170 : f32 to vector<32x32xf32>
    %408 = arith.addf %406, %407 : vector<32x32xf32>
    %409 = arith.mulf %408, %404 : vector<32x32xf32>
    %cst_171 = arith.constant 1.42141378 : f32
    %410 = vector.broadcast %cst_171 : f32 to vector<32x32xf32>
    %411 = arith.addf %409, %410 : vector<32x32xf32>
    %412 = arith.mulf %411, %404 : vector<32x32xf32>
    %cst_172 = arith.constant -0.284496725 : f32
    %413 = vector.broadcast %cst_172 : f32 to vector<32x32xf32>
    %414 = arith.addf %412, %413 : vector<32x32xf32>
    %415 = arith.mulf %414, %404 : vector<32x32xf32>
    %cst_173 = arith.constant 0.254829586 : f32
    %416 = vector.broadcast %cst_173 : f32 to vector<32x32xf32>
    %417 = arith.addf %415, %416 : vector<32x32xf32>
    %418 = arith.mulf %417, %404 : vector<32x32xf32>
    %cst_174 = arith.constant 0.000000e+00 : f32
    %419 = vector.broadcast %cst_174 : f32 to vector<32x32xf32>
    %420 = arith.subf %419, %398 : vector<32x32xf32>
    %421 = arith.mulf %420, %398 : vector<32x32xf32>
    %422 = math.exp %421 : vector<32x32xf32>
    %423 = arith.mulf %418, %422 : vector<32x32xf32>
    %cst_175 = arith.constant 1.000000e+00 : f32
    %424 = vector.broadcast %cst_175 : f32 to vector<32x32xf32>
    %425 = arith.subf %424, %423 : vector<32x32xf32>
    %426 = arith.mulf %397, %425 : vector<32x32xf32>
    %cst_176 = arith.constant 1.000000e+00 : f32
    %427 = vector.broadcast %cst_176 : f32 to vector<32x32xf32>
    %428 = arith.addf %427, %426 : vector<32x32xf32>
    %429 = arith.mulf %390, %428 : vector<32x32xf32>
    %c376 = arith.constant 376 : index
    %c0_177 = arith.constant 0 : index
    %430 = vector.load %arg2[%c376, %c0_177] : memref<440x32xf32, #tpu.memory_space<vmem>>, vector<32x32xf32>
    %c408 = arith.constant 408 : index
    %c0_178 = arith.constant 0 : index
    %431 = vector.load %arg2[%c408, %c0_178] : memref<440x32xf32, #tpu.memory_space<vmem>>, vector<32x32xf32>
    %c3_179 = arith.constant 3 : index
    %c0_180 = arith.constant 0 : index
    %c0_181 = arith.constant 0 : index
    %432 = vector.load %arg4[%c3_179, %c0_180, %c0_181] : memref<4x32x64xf32, #tpu.memory_space<vmem>>, vector<1x32x64xf32>
    %433 = vector.shape_cast %432 : vector<1x32x64xf32> to vector<32x64xf32>
    %c3_182 = arith.constant 3 : index
    %c0_183 = arith.constant 0 : index
    %c0_184 = arith.constant 0 : index
    %434 = vector.load %arg5[%c3_182, %c0_183, %c0_184] : memref<4x128x64xf32, #tpu.memory_space<vmem>>, vector<1x128x64xf32>
    %435 = vector.shape_cast %434 : vector<1x128x64xf32> to vector<128x64xf32>
    %c27 = arith.constant 27 : index
    %c0_185 = arith.constant 0 : index
    %436 = vector.load %arg2[%c27, %c0_185] : memref<440x32xf32, #tpu.memory_space<vmem>>, vector<1x32xf32>
    %cst_186 = arith.constant dense<0.000000e+00> : vector<16x32xf32>
    %437 = tpu.matmul %11, %429, %cst_186 {dimension_numbers = #tpu.dot_dimension_numbers<[1], [0], [0], [1], [0, 0, 1, 1], [], []>} : vector<16x32xf32>, vector<32x32xf32>, vector<16x32xf32> -> vector<16x32xf32>
    %438 = tpu.concatenate %437, %437, %437, %437 in 1 : vector<16x32xf32>, vector<16x32xf32>, vector<16x32xf32>, vector<16x32xf32> -> vector<16x128xf32>
    %439 = arith.mulf %438, %25 : vector<16x128xf32>
    %cst_187 = arith.constant dense<0.000000e+00> : vector<16x64xf32>
    %440 = tpu.matmul %439, %435, %cst_187 {dimension_numbers = #tpu.dot_dimension_numbers<[1], [0], [0], [1], [0, 0, 1, 1], [], []>} : vector<16x128xf32>, vector<128x64xf32>, vector<16x64xf32> -> vector<16x64xf32>
    %441 = vector.extract_strided_slice %440 {offsets = [0, 0], sizes = [16, 32], strides = [1, 1]} : vector<16x64xf32> to vector<16x32xf32>
    %442 = vector.extract_strided_slice %440 {offsets = [0, 32], sizes = [16, 32], strides = [1, 1]} : vector<16x64xf32> to vector<16x32xf32>
    %443 = tpu.concatenate %441, %442 in 0 : vector<16x32xf32>, vector<16x32xf32> -> vector<32x32xf32>
    %cst_188 = arith.constant dense<0.000000e+00> : vector<32x32xf32>
    %444 = tpu.matmul %10, %443, %cst_188 {dimension_numbers = #tpu.dot_dimension_numbers<[1], [0], [0], [1], [0, 0, 1, 1], [], []>} : vector<32x32xf32>, vector<32x32xf32>, vector<32x32xf32> -> vector<32x32xf32>
    %cst_189 = arith.constant dense<0.000000e+00> : vector<32x64xf32>
    %445 = tpu.matmul %429, %433, %cst_189 {dimension_numbers = #tpu.dot_dimension_numbers<[1], [0], [0], [1], [0, 0, 1, 1], [], []>} : vector<32x32xf32>, vector<32x64xf32>, vector<32x64xf32> -> vector<32x64xf32>
    %446 = vector.extract_strided_slice %445 {offsets = [0, 32], sizes = [32, 32], strides = [1, 1]} : vector<32x64xf32> to vector<32x32xf32>
    %447 = arith.addf %429, %85 : vector<32x32xf32>
    %cst_190 = arith.constant dense<0.000000e+00> : vector<32x32xf32>
    %448 = tpu.matmul %447, %430, %cst_190 {dimension_numbers = #tpu.dot_dimension_numbers<[1], [0], [0], [1], [0, 0, 1, 1], [], []>} : vector<32x32xf32>, vector<32x32xf32>, vector<32x32xf32> -> vector<32x32xf32>
    %449 = arith.addf %429, %78 : vector<32x32xf32>
    %cst_191 = arith.constant dense<0.000000e+00> : vector<32x32xf32>
    %450 = tpu.matmul %431, %449, %cst_191 {dimension_numbers = #tpu.dot_dimension_numbers<[1], [1], [0], [0], [0, 0, 1, 0], [], []>} : vector<32x32xf32>, vector<32x32xf32>, vector<32x32xf32> -> vector<32x32xf32>
    %451 = vector.extract_strided_slice %448 {offsets = [0, 0], sizes = [16, 32], strides = [1, 1]} : vector<32x32xf32> to vector<16x32xf32>
    %452 = vector.extract_strided_slice %446 {offsets = [0, 0], sizes = [16, 32], strides = [1, 1]} : vector<32x32xf32> to vector<16x32xf32>
    %453 = vector.extract_strided_slice %450 {offsets = [0, 0], sizes = [32, 16], strides = [1, 1]} : vector<32x32xf32> to vector<32x16xf32>
    %cst_192 = arith.constant dense<0.000000e+00> : vector<32x32xf32>
    %454 = tpu.matmul %453, %451, %cst_192 {dimension_numbers = #tpu.dot_dimension_numbers<[1], [0], [0], [1], [0, 0, 1, 1], [], []>} : vector<32x16xf32>, vector<16x32xf32>, vector<32x32xf32> -> vector<32x32xf32>
    %cst_193 = arith.constant 0.176776692 : f32
    %455 = vector.broadcast %cst_193 : f32 to vector<32x32xf32>
    %456 = arith.mulf %454, %455 : vector<32x32xf32>
    %457 = arith.addf %456, %9 : vector<32x32xf32>
    %cst_194 = arith.constant dense<0xFF800000> : vector<32xf32>
    %458 = vector.multi_reduction <maximumf>, %457, %cst_194 [0] : vector<32x32xf32> to vector<32xf32>
    %459 = vector.shape_cast %458 : vector<32xf32> to vector<1x32xf32>
    %460 = vector.broadcast %459 : vector<1x32xf32> to vector<32x32xf32>
    %461 = arith.subf %457, %460 : vector<32x32xf32>
    %462 = math.exp %461 : vector<32x32xf32>
    %cst_195 = arith.constant dense<0.000000e+00> : vector<32xf32>
    %463 = vector.multi_reduction <add>, %462, %cst_195 [0] : vector<32x32xf32> to vector<32xf32>
    %464 = vector.shape_cast %463 : vector<32xf32> to vector<1x32xf32>
    %465 = tpu.reciprocal %464 {approx = true} : vector<1x32xf32> -> vector<1x32xf32>
    %466 = arith.mulf %464, %465 : vector<1x32xf32>
    %cst_196 = arith.constant 2.000000e+00 : f32
    %467 = vector.broadcast %cst_196 : f32 to vector<1x32xf32>
    %468 = arith.subf %467, %466 : vector<1x32xf32>
    %469 = arith.mulf %465, %468 : vector<1x32xf32>
    %470 = vector.broadcast %469 : vector<1x32xf32> to vector<32x32xf32>
    %471 = arith.mulf %462, %470 : vector<32x32xf32>
    %cst_197 = arith.constant dense<0.000000e+00> : vector<16x32xf32>
    %472 = tpu.matmul %452, %471, %cst_197 {dimension_numbers = #tpu.dot_dimension_numbers<[1], [0], [0], [1], [0, 0, 1, 1], [], []>} : vector<16x32xf32>, vector<32x32xf32>, vector<16x32xf32> -> vector<16x32xf32>
    %473 = vector.extract_strided_slice %448 {offsets = [16, 0], sizes = [16, 32], strides = [1, 1]} : vector<32x32xf32> to vector<16x32xf32>
    %474 = vector.extract_strided_slice %446 {offsets = [16, 0], sizes = [16, 32], strides = [1, 1]} : vector<32x32xf32> to vector<16x32xf32>
    %475 = vector.extract_strided_slice %450 {offsets = [0, 16], sizes = [32, 16], strides = [1, 1]} : vector<32x32xf32> to vector<32x16xf32>
    %cst_198 = arith.constant dense<0.000000e+00> : vector<32x32xf32>
    %476 = tpu.matmul %475, %473, %cst_198 {dimension_numbers = #tpu.dot_dimension_numbers<[1], [0], [0], [1], [0, 0, 1, 1], [], []>} : vector<32x16xf32>, vector<16x32xf32>, vector<32x32xf32> -> vector<32x32xf32>
    %cst_199 = arith.constant 0.176776692 : f32
    %477 = vector.broadcast %cst_199 : f32 to vector<32x32xf32>
    %478 = arith.mulf %476, %477 : vector<32x32xf32>
    %479 = arith.addf %478, %9 : vector<32x32xf32>
    %cst_200 = arith.constant dense<0xFF800000> : vector<32xf32>
    %480 = vector.multi_reduction <maximumf>, %479, %cst_200 [0] : vector<32x32xf32> to vector<32xf32>
    %481 = vector.shape_cast %480 : vector<32xf32> to vector<1x32xf32>
    %482 = vector.broadcast %481 : vector<1x32xf32> to vector<32x32xf32>
    %483 = arith.subf %479, %482 : vector<32x32xf32>
    %484 = math.exp %483 : vector<32x32xf32>
    %cst_201 = arith.constant dense<0.000000e+00> : vector<32xf32>
    %485 = vector.multi_reduction <add>, %484, %cst_201 [0] : vector<32x32xf32> to vector<32xf32>
    %486 = vector.shape_cast %485 : vector<32xf32> to vector<1x32xf32>
    %487 = tpu.reciprocal %486 {approx = true} : vector<1x32xf32> -> vector<1x32xf32>
    %488 = arith.mulf %486, %487 : vector<1x32xf32>
    %cst_202 = arith.constant 2.000000e+00 : f32
    %489 = vector.broadcast %cst_202 : f32 to vector<1x32xf32>
    %490 = arith.subf %489, %488 : vector<1x32xf32>
    %491 = arith.mulf %487, %490 : vector<1x32xf32>
    %492 = vector.broadcast %491 : vector<1x32xf32> to vector<32x32xf32>
    %493 = arith.mulf %484, %492 : vector<32x32xf32>
    %cst_203 = arith.constant dense<0.000000e+00> : vector<16x32xf32>
    %494 = tpu.matmul %474, %493, %cst_203 {dimension_numbers = #tpu.dot_dimension_numbers<[1], [0], [0], [1], [0, 0, 1, 1], [], []>} : vector<16x32xf32>, vector<32x32xf32>, vector<16x32xf32> -> vector<16x32xf32>
    %495 = tpu.concatenate %472, %494 in 0 : vector<16x32xf32>, vector<16x32xf32> -> vector<32x32xf32>
    %496 = vector.extract_strided_slice %445 {offsets = [0, 0], sizes = [32, 32], strides = [1, 1]} : vector<32x64xf32> to vector<32x32xf32>
    %497 = vector.broadcast %436 : vector<1x32xf32> to vector<32x32xf32>
    %498 = arith.addf %496, %497 : vector<32x32xf32>
    %499 = arith.addf %444, %498 : vector<32x32xf32>
    %500 = arith.addf %499, %495 : vector<32x32xf32>
    %cst_204 = arith.constant dense<0.000000e+00> : vector<32x128xf32>
    %501 = tpu.matmul %500, %22, %cst_204 {dimension_numbers = #tpu.dot_dimension_numbers<[1], [0], [0], [1], [0, 0, 1, 1], [], []>} : vector<32x32xf32>, vector<32x128xf32>, vector<32x128xf32> -> vector<32x128xf32>
    %502 = vector.broadcast %23 : vector<1x128xf32> to vector<32x128xf32>
    %503 = arith.addf %501, %502 : vector<32x128xf32>
    %cst_205 = arith.constant 5.000000e-01 : f32
    %504 = vector.broadcast %cst_205 : f32 to vector<32x128xf32>
    %505 = arith.mulf %504, %503 : vector<32x128xf32>
    %cst_206 = arith.constant 0.707106769 : f32
    %506 = vector.broadcast %cst_206 : f32 to vector<32x128xf32>
    %507 = arith.mulf %503, %506 : vector<32x128xf32>
    %cst_207 = arith.constant 0.000000e+00 : f32
    %508 = vector.broadcast %cst_207 : f32 to vector<32x128xf32>
    %509 = arith.cmpf olt, %507, %508 : vector<32x128xf32>
    %cst_208 = arith.constant -1.000000e+00 : f32
    %cst_209 = arith.constant 1.000000e+00 : f32
    %510 = vector.broadcast %cst_208 : f32 to vector<32x128xf32>
    %511 = vector.broadcast %cst_209 : f32 to vector<32x128xf32>
    %512 = arith.select %509, %510, %511 : vector<32x128xi1>, vector<32x128xf32>
    %513 = math.absf %507 : vector<32x128xf32>
    %cst_210 = arith.constant 0.327591091 : f32
    %514 = vector.broadcast %cst_210 : f32 to vector<32x128xf32>
    %515 = arith.mulf %514, %513 : vector<32x128xf32>
    %cst_211 = arith.constant 1.000000e+00 : f32
    %516 = vector.broadcast %cst_211 : f32 to vector<32x128xf32>
    %517 = arith.addf %516, %515 : vector<32x128xf32>
    %cst_212 = arith.constant 1.000000e+00 : f32
    %518 = vector.broadcast %cst_212 : f32 to vector<32x128xf32>
    %519 = arith.divf %518, %517 : vector<32x128xf32>
    %cst_213 = arith.constant 1.06140542 : f32
    %520 = vector.broadcast %cst_213 : f32 to vector<32x128xf32>
    %521 = arith.mulf %520, %519 : vector<32x128xf32>
    %cst_214 = arith.constant -1.45315206 : f32
    %522 = vector.broadcast %cst_214 : f32 to vector<32x128xf32>
    %523 = arith.addf %521, %522 : vector<32x128xf32>
    %524 = arith.mulf %523, %519 : vector<32x128xf32>
    %cst_215 = arith.constant 1.42141378 : f32
    %525 = vector.broadcast %cst_215 : f32 to vector<32x128xf32>
    %526 = arith.addf %524, %525 : vector<32x128xf32>
    %527 = arith.mulf %526, %519 : vector<32x128xf32>
    %cst_216 = arith.constant -0.284496725 : f32
    %528 = vector.broadcast %cst_216 : f32 to vector<32x128xf32>
    %529 = arith.addf %527, %528 : vector<32x128xf32>
    %530 = arith.mulf %529, %519 : vector<32x128xf32>
    %cst_217 = arith.constant 0.254829586 : f32
    %531 = vector.broadcast %cst_217 : f32 to vector<32x128xf32>
    %532 = arith.addf %530, %531 : vector<32x128xf32>
    %533 = arith.mulf %532, %519 : vector<32x128xf32>
    %cst_218 = arith.constant 0.000000e+00 : f32
    %534 = vector.broadcast %cst_218 : f32 to vector<32x128xf32>
    %535 = arith.subf %534, %513 : vector<32x128xf32>
    %536 = arith.mulf %535, %513 : vector<32x128xf32>
    %537 = math.exp %536 : vector<32x128xf32>
    %538 = arith.mulf %533, %537 : vector<32x128xf32>
    %cst_219 = arith.constant 1.000000e+00 : f32
    %539 = vector.broadcast %cst_219 : f32 to vector<32x128xf32>
    %540 = arith.subf %539, %538 : vector<32x128xf32>
    %541 = arith.mulf %512, %540 : vector<32x128xf32>
    %cst_220 = arith.constant 1.000000e+00 : f32
    %542 = vector.broadcast %cst_220 : f32 to vector<32x128xf32>
    %543 = arith.addf %542, %541 : vector<32x128xf32>
    %544 = arith.mulf %505, %543 : vector<32x128xf32>
    %545 = vector.broadcast %24 : vector<1x128xf32> to vector<32x128xf32>
    %546 = arith.mulf %544, %545 : vector<32x128xf32>
    %cst_221 = arith.constant dense<0.000000e+00> : vector<32xf32>
    %547 = vector.multi_reduction <add>, %546, %cst_221 [1] : vector<32x128xf32> to vector<32xf32>
    %548 = vector.shape_cast %547 : vector<32xf32> to vector<32x1xf32>
    %549 = vector.broadcast %21 : vector<1x1xf32> to vector<32x1xf32>
    %550 = arith.addf %548, %549 : vector<32x1xf32>
    %c0_222 = arith.constant 0 : index
    %c0_223 = arith.constant 0 : index
    %551 = vector.load %arg6[%c0_222, %c0_223] : memref<32x1xf32, #tpu.memory_space<vmem>>, vector<32x1xf32>
    tpu.vector_store %arg6[%c0_222, %c0_223], %550 {strides = array<i32>} : memref<32x1xf32, #tpu.memory_space<vmem>>, vector<32x1xf32>,
    return
  }
  func.func @transform_0(%arg0: i32) -> (i32, i32) {
    %c0_i32 = arith.constant 0 : i32
    %c0_i32_0 = arith.constant 0 : i32
    %c0_i32_1 = arith.constant 0 : i32
    return %c0_i32, %c0_i32_0 : i32, i32
  }
  func.func @transform_1(%arg0: i32) -> (i32, i32) {
    %c0_i32 = arith.constant 0 : i32
    %c0_i32_0 = arith.constant 0 : i32
    %c0_i32_1 = arith.constant 0 : i32
    return %c0_i32, %c0_i32_0 : i32, i32
  }
  func.func @transform_2(%arg0: i32) -> (i32, i32) {
    %c0_i32 = arith.constant 0 : i32
    %c0_i32_0 = arith.constant 0 : i32
    %c0_i32_1 = arith.constant 0 : i32
    return %c0_i32, %c0_i32_0 : i32, i32
  }
  func.func @transform_3(%arg0: i32) -> (i32, i32, i32) {
    %c0_i32 = arith.constant 0 : i32
    %c0_i32_0 = arith.constant 0 : i32
    %c0_i32_1 = arith.constant 0 : i32
    %c0_i32_2 = arith.constant 0 : i32
    return %c0_i32, %c0_i32_0, %c0_i32_1 : i32, i32, i32
  }
  func.func @transform_4(%arg0: i32) -> (i32, i32, i32) {
    %c0_i32 = arith.constant 0 : i32
    %c0_i32_0 = arith.constant 0 : i32
    %c0_i32_1 = arith.constant 0 : i32
    %c0_i32_2 = arith.constant 0 : i32
    return %c0_i32, %c0_i32_0, %c0_i32_1 : i32, i32, i32
  }
  func.func @transform_5(%arg0: i32) -> (i32, i32) {
    %c0_i32 = arith.constant 0 : i32
    %c0_i32_0 = arith.constant 0 : i32
    %c0_i32_1 = arith.constant 0 : i32
    return %c0_i32, %c0_i32_0 : i32, i32
  }
}

</mosaic_0001>

<llo_original>
// kernel: _forward.1
$region0: #{_forward.1}
  #allocation0 [shape = 'u32[]', space=smem, size = 0x4, offset = 0x4, fixed_abs, tag = 'smem constant byte address 0x4 - core index']
  #allocation1 [shape = 'u32[144,128]{1,0:T(1,128)}', space=vmem, size = 0x12000, scoped, tag = 'internal scratch']
  %s0 = inlined_call_operand.vmem [shape: f32[32,4], index: 0, kind: input, shape index: {}]
  %s1 = inlined_call_operand.vmem [shape: f32[440,32], index: 1, kind: input, shape index: {}]
  %s2 = inlined_call_operand.vmem [shape: f32[56,128], index: 2, kind: input, shape index: {}]
  %s3 = inlined_call_operand.vmem [shape: f32[4,32,64], index: 3, kind: input, shape index: {}]
  %s4 = inlined_call_operand.vmem [shape: f32[4,128,64], index: 4, kind: input, shape index: {}]
  %s5 = inlined_call_operand.vmem [shape: f32[32,1], index: 5, kind: output, shape index: {}]
  %s6 = sld [smem:[#allocation0]]
  $region30: #{_forward.1} parent=0
    _
  %s8 = ssub.s32 1, %s6
  %s9 = scalar_select 0, %s8, %s6
  // Predicated region
  $region2: #{_forward.1} parent=0 // pred_check
    _
  $region3: #{_forward.1} parent=0 // pred_check_branch
    %11 = sbr.rel (0) target = $region5
  $region4: #{_forward.1} parent=0 // pred_region
    _
  $region5: #{_forward.1} parent=0 // pred_fallthru
    _
  // Predicated region
  $region6: #{_forward.1} parent=0 // pred_check
    _
  $region7: #{_forward.1} parent=0 // pred_check_branch
    %13 = sbr.rel (0) target = $region9
  $region8: #{_forward.1} parent=0 // pred_region
    _
  $region9: #{_forward.1} parent=0 // pred_fallthru
    _
  // Predicated region
  $region10: #{_forward.1} parent=0 // pred_check
    _
  $region11: #{_forward.1} parent=0 // pred_check_branch
    %15 = sbr.rel (0) target = $region13
  $region12: #{_forward.1} parent=0 // pred_region
    _
  $region13: #{_forward.1} parent=0 // pred_fallthru
    _
  // Predicated region
  $region14: #{_forward.1} parent=0 // pred_check
    _
  $region15: #{_forward.1} parent=0 // pred_check_branch
    %17 = sbr.rel (0) target = $region17
  $region16: #{_forward.1} parent=0 // pred_region
    _
  $region17: #{_forward.1} parent=0 // pred_fallthru
    _
  // Predicated region
  $region18: #{_forward.1} parent=0 // pred_check
    _
  $region19: #{_forward.1} parent=0 // pred_check_branch
    %19 = sbr.rel (0) target = $region21
  $region20: #{_forward.1} parent=0 // pred_region
    _
  $region21: #{_forward.1} parent=0 // pred_fallthru
    _
  %v20 = vld [vmem:[%s1] sm:$0x3]
  %v21 = vld [vmem:[%s1 + $0x2] sm:$0x1]
  %v22 = vld [vmem:[%s1 + $0x3] sm:$0x1]
  %v23 = vld [vmem:[%s1 + $0x8] sm:$0x3]
  %v24 = vld [vmem:[%s1 + $0xa] sm:$0x1]
  %v25 = vld [vmem:[%s1 + $0xb] sm:$0x1]
  %v26 = vld [vmem:[%s1 + $0x10] sm:$0x3]
  %v27 = vld [vmem:[%s1 + $0x12] sm:$0x1]
  %v28 = vld [vmem:[%s1 + $0x13] sm:$0x1]
  %v29 = vld [vmem:[%s1 + $0x20] sm:$0xff]
  %v30 = vld [vmem:[%s1 + $0x28] sm:$0xff]
  %v31 = vld [vmem:[%s1 + $0x30] sm:$0xff]
  %v32 = vld [vmem:[%s1 + $0x38] sm:$0xff]
  %v33 = vld [vmem:[%s1 + $0x40] sm:$0xff]
  %v34 = vld [vmem:[%s1 + $0x48] sm:$0xff]
  %v35 = vld [vmem:[%s1 + $0x50] sm:$0xff]
  %v36 = vld [vmem:[%s1 + $0x58] sm:$0xff]
  %v37 = vld [vmem:[%s1 + $0x60] sm:$0xff]
  %v38 = vld [vmem:[%s1 + $0x68] sm:$0xff]
  %v39 = vld [vmem:[%s1 + $0x70] sm:$0x1]
  %v40 = vld [vmem:[%s1 + $0x71] sm:$0x1]
  %v41 = vld [vmem:[%s1 + $0x72] sm:$0x1]
  %v42 = vld [vmem:[%s1 + $0x73] sm:$0x1]
  %v43 = vld [vmem:[%s1 + $0x78] sm:$0xff]
  %v44 = vld [vmem:[%s1 + $0x80] sm:$0xff]
  %v45 = vld [vmem:[%s1 + $0x88] sm:$0xff]
  %v46 = vld [vmem:[%s1 + $0x90] sm:$0xff]
  %v47 = vld [vmem:[%s1 + $0x98] sm:$0xff]
  %v48 = vld [vmem:[%s1 + $0xa0] sm:$0xff]
  %v49 = vld [vmem:[%s1 + $0xa8] sm:$0xff]
  %v50 = vld [vmem:[%s1 + $0xb0] sm:$0xff]
  %v51 = vld [vmem:[%s1 + $0x98] sm:$0x1]
  %v52 = vld [vmem:[%s2] sm:$0xff]
  %v53 = vld [vmem:[%s2 + $0x8] sm:$0xff]
  %v54 = vld [vmem:[%s2 + $0x10] sm:$0xff]
  %v55 = vld [vmem:[%s2 + $0x18] sm:$0xff]
  %v56 = vld [vmem:[%s2 + $0x20] sm:$0x1]
  %v57 = vld [vmem:[%s2 + $0x21] sm:$0x1]
  %v58 = vld [vmem:[%s2 + $0x28] sm:$0xff]
  %v59 = vld [vmem:[%s2 + $0x30] sm:$0xff]
  %v60 = vld [vmem:[%s0] sm:$0x3]
  %v61 = vld [vmem:[%s0 + $0x2] sm:$0x3]
  %63 = vset.pattern.permute.xlu0 2
  %64 = vperm.xlu0 %63, %v60
  %v65 = vpop.permute.xlu0 %64
  %v67 = vlaneseq
  %v68 = vshrl.u32 %v67, 7
  %v69 = vsub.s32 0, %v68
  %v70 = vrot.slane %v39, %v69
  %v71 = vmul.f32 %v65, %v70
  %v72 = vlaneseq
  %v73 = vshrl.u32 %v72, 7
  %v74 = vsub.s32 0, %v73
  %v75 = vrot.slane %v40, %v74
  %v76 = vadd.f32 %v71, %v75
  %v77 = vmax.f32 %v76, 0.0
  %79 = vset.pattern.permute.xlu0 1
  %80 = vperm.xlu0 %79, %v47
  %v81 = vpop.permute.xlu0 %80
  %84 = vset.pattern.permute.xlu0 1
  %85 = vperm.xlu0 %84, %v48
  %v86 = vpop.permute.xlu0 %85
  %vm88 = vcmask 261120
  %v90 = vsel %vm88, %v43, 0
  %v93 = vsel %vm88, %v44, 0
  %v96 = vsel %vm88, %v77, 0
  %98 = vmatprep.subr.mxu0 0.0
  %99 = vmatpush1.xpose.msra.mxu0 0.0
  %100 = vmatprep.subr.mxu0 0.0
  %101 = vmatpush1.xpose.msra.mxu0 0.0
  %102 = vmatprep.subr.mxu0 0.0
  %103 = vmatpush1.xpose.msra.mxu0 0.0
  %104 = vmatprep.subr.mxu0 0.0
  %105 = vmatpush1.xpose.msra.mxu0 0.0
  %106 = vmatprep.subr.mxu0 0.0
  %107 = vmatpush1.xpose.msra.mxu0 0.0
  %108 = vmatprep.subr.mxu0 0.0
  %109 = vmatpush1.xpose.msra.mxu0 0.0
  %110 = vmatprep.subr.mxu0 0.0
  %111 = vmatpush1.xpose.msra.mxu0 0.0
  %112 = vmatprep.subr.mxu0 0.0
  %113 = vmatpush1.xpose.msra.mxu0 0.0
  %114 = vmatprep.subr.mxu0 0.0
  %115 = vmatpush1.xpose.msra.mxu0 0.0
  %116 = vmatprep.subr.mxu0 0.0
  %117 = vmatpush1.xpose.msra.mxu0 0.0
  %118 = vmatprep.subr.mxu0 0.0
  %119 = vmatpush1.xpose.msra.mxu0 0.0
  %120 = vmatprep.subr.mxu0 0.0
  %121 = vmatpush1.xpose.msra.mxu0 0.0
  %122 = vmatprep.subr.mxu0 0.0
  %123 = vmatpush1.xpose.msra.mxu0 0.0
  %124 = vmatprep.subr.mxu0 0.0
  %125 = vmatpush1.xpose.msra.mxu0 0.0
  %126 = vmatprep.subr.mxu0 0.0
  %127 = vmatpush1.xpose.msra.mxu0 0.0
  %128 = vmatprep.subr.mxu0 0.0
  %129 = vmatpush1.xpose.msra.mxu0 %v96
  %130 = vmatprep.subr.mxu0 0.0
  %131 = vmatpush2.xpose.msra.mxu0 0.0
  %132 = vmatprep.subr.mxu0 0.0
  %133 = vmatpush2.xpose.msra.mxu0 0.0
  %134 = vmatprep.subr.mxu0 0.0
  %135 = vmatpush2.xpose.msra.mxu0 0.0
  %136 = vmatprep.subr.mxu0 0.0
  %137 = vmatpush2.xpose.msra.mxu0 0.0
  %138 = vmatprep.subr.mxu0 0.0
  %139 = vmatpush2.xpose.msra.mxu0 0.0
  %140 = vmatprep.subr.mxu0 0.0
  %141 = vmatpush2.xpose.msra.mxu0 0.0
  %142 = vmatprep.subr.mxu0 0.0
  %143 = vmatpush2.xpose.msra.mxu0 0.0
  %144 = vmatprep.subr.mxu0 0.0
  %145 = vmatpush2.xpose.msra.mxu0 0.0
  %146 = vmatprep.subr.mxu0 0.0
  %147 = vmatpush2.xpose.msra.mxu0 0.0
  %148 = vmatprep.subr.mxu0 0.0
  %149 = vmatpush2.xpose.msra.mxu0 0.0
  %150 = vmatprep.subr.mxu0 0.0
  %151 = vmatpush2.xpose.msra.mxu0 0.0
  %152 = vmatprep.subr.mxu0 0.0
  %153 = vmatpush2.xpose.msra.mxu0 0.0
  %154 = vmatprep.subr.mxu0 0.0
  %155 = vmatpush2.xpose.msra.mxu0 0.0
  %156 = vmatprep.subr.mxu0 0.0
  %157 = vmatpush2.xpose.msra.mxu0 0.0
  %158 = vmatprep.subr.mxu0 0.0
  %159 = vmatpush2.xpose.msra.mxu0 0.0
  %160 = vmatprep.subr.mxu0 0.0
  %161 = vmatpush2.xpose.msra.mxu0 0.0
  %162 = vmatprep.mubr.f32.mxu0 0.0
  %163 = vmatmul.mubr.f32.gmra.mxu0 %v90
  %v164 = vpop.f32.mrf.mxu0
  %v165 = vadd.f32 %v81, %v164
  %v166 = vpop.f32.mrf.mxu0
  %167 = vmatprep.mubr.f32.mxu0 0.0
  %168 = vmatmul.mubr.f32.gmra.mxu0 %v93
  %v169 = vpop.f32.mrf.mxu0
  %v170 = vadd.f32 %v86, %v169
  %v171 = vpop.f32.mrf.mxu0
  %172 = vdwg.mxu0
  %174 = vset.pattern.permute.xlu0 2
  %175 = vperm.xlu0 %174, %v61
  %v176 = vpop.permute.xlu0 %175
  %v178 = vlaneseq
  %v179 = vshrl.u32 %v178, 7
  %v180 = vsub.s32 0, %v179
  %v181 = vrot.slane %v41, %v180
  %v182 = vmul.f32 %v176, %v181
  %v183 = vlaneseq
  %v184 = vshrl.u32 %v183, 7
  %v185 = vsub.s32 0, %v184
  %v186 = vrot.slane %v42, %v185
  %v187 = vadd.f32 %v182, %v186
  %v188 = vmax.f32 %v187, 0.0
  %189 = vset.pattern.permute.xlu0 2
  %190 = vperm.xlu0 %189, %v47
  %v191 = vpop.permute.xlu0 %190
  %193 = vset.pattern.permute.xlu0 2
  %194 = vperm.xlu0 %193, %v48
  %v195 = vpop.permute.xlu0 %194
  %v198 = vsel %vm88, %v45, 0
  %v201 = vsel %vm88, %v46, 0
  %v204 = vsel %vm88, %v188, 0
  %206 = vmatprep.subr.mxu0 0.0
  %207 = vmatpush1.xpose.msra.mxu0 0.0
  %208 = vmatprep.subr.mxu0 0.0
  %209 = vmatpush1.xpose.msra.mxu0 0.0
  %210 = vmatprep.subr.mxu0 0.0
  %211 = vmatpush1.xpose.msra.mxu0 0.0
  %212 = vmatprep.subr.mxu0 0.0
  %213 = vmatpush1.xpose.msra.mxu0 0.0
  %214 = vmatprep.subr.mxu0 0.0
  %215 = vmatpush1.xpose.msra.mxu0 0.0
  %216 = vmatprep.subr.mxu0 0.0
  %217 = vmatpush1.xpose.msra.mxu0 0.0
  %218 = vmatprep.subr.mxu0 0.0
  %219 = vmatpush1.xpose.msra.mxu0 0.0
  %220 = vmatprep.subr.mxu0 0.0
  %221 = vmatpush1.xpose.msra.mxu0 0.0
  %222 = vmatprep.subr.mxu0 0.0
  %223 = vmatpush1.xpose.msra.mxu0 0.0
  %224 = vmatprep.subr.mxu0 0.0
  %225 = vmatpush1.xpose.msra.mxu0 0.0
  %226 = vmatprep.subr.mxu0 0.0
  %227 = vmatpush1.xpose.msra.mxu0 0.0
  %228 = vmatprep.subr.mxu0 0.0
  %229 = vmatpush1.xpose.msra.mxu0 0.0
  %230 = vmatprep.subr.mxu0 0.0
  %231 = vmatpush1.xpose.msra.mxu0 0.0
  %232 = vmatprep.subr.mxu0 0.0
  %233 = vmatpush1.xpose.msra.mxu0 0.0
  %234 = vmatprep.subr.mxu0 0.0
  %235 = vmatpush1.xpose.msra.mxu0 0.0
  %236 = vmatprep.subr.mxu0 0.0
  %237 = vmatpush1.xpose.msra.mxu0 %v204
  %238 = vmatprep.subr.mxu0 0.0
  %239 = vmatpush2.xpose.msra.mxu0 0.0
  %240 = vmatprep.subr.mxu0 0.0
  %241 = vmatpush2.xpose.msra.mxu0 0.0
  %242 = vmatprep.subr.mxu0 0.0
  %243 = vmatpush2.xpose.msra.mxu0 0.0
  %244 = vmatprep.subr.mxu0 0.0
  %245 = vmatpush2.xpose.msra.mxu0 0.0
  %246 = vmatprep.subr.mxu0 0.0
  %247 = vmatpush2.xpose.msra.mxu0 0.0
  %248 = vmatprep.subr.mxu0 0.0
  %249 = vmatpush2.xpose.msra.mxu0 0.0
  %250 = vmatprep.subr.mxu0 0.0
  %251 = vmatpush2.xpose.msra.mxu0 0.0
  %252 = vmatprep.subr.mxu0 0.0
  %253 = vmatpush2.xpose.msra.mxu0 0.0
  %254 = vmatprep.subr.mxu0 0.0
  %255 = vmatpush2.xpose.msra.mxu0 0.0
  %256 = vmatprep.subr.mxu0 0.0
  %257 = vmatpush2.xpose.msra.mxu0 0.0
  %258 = vmatprep.subr.mxu0 0.0
  %259 = vmatpush2.xpose.msra.mxu0 0.0
  %260 = vmatprep.subr.mxu0 0.0
  %261 = vmatpush2.xpose.msra.mxu0 0.0
  %262 = vmatprep.subr.mxu0 0.0
  %263 = vmatpush2.xpose.msra.mxu0 0.0
  %264 = vmatprep.subr.mxu0 0.0
  %265 = vmatpush2.xpose.msra.mxu0 0.0
  %266 = vmatprep.subr.mxu0 0.0
  %267 = vmatpush2.xpose.msra.mxu0 0.0
  %268 = vmatprep.subr.mxu0 0.0
  %269 = vmatpush2.xpose.msra.mxu0 0.0
  %270 = vmatprep.mubr.f32.mxu0 0.0
  %271 = vmatmul.mubr.f32.gmra.mxu0 %v198
  %v272 = vpop.f32.mrf.mxu0
  %v273 = vadd.f32 %v191, %v272
  %v274 = vpop.f32.mrf.mxu0
  %275 = vmatprep.mubr.f32.mxu0 0.0
  %276 = vmatmul.mubr.f32.gmra.mxu0 %v201
  %v277 = vpop.f32.mrf.mxu0
  %v278 = vadd.f32 %v195, %v277
  %v279 = vpop.f32.mrf.mxu0
  %280 = vdwg.mxu0
  %v281 = vld [vmem:[%s0 + $0x4] sm:$0x3]
  %v282 = vld [vmem:[%s0 + $0x6] sm:$0x3]
  %284 = vset.pattern.permute.xlu0 2
  %285 = vperm.xlu0 %284, %v281
  %v286 = vpop.permute.xlu0 %285
  %v288 = vmul.f32 %v286, %v70
  %v289 = vadd.f32 %v288, %v75
  %v290 = vmax.f32 %v289, 0.0
  %v292 = vsel %vm88, %v290, 0
  %294 = vmatprep.subr.mxu0 0.0
  %295 = vmatpush1.xpose.msra.mxu0 0.0
  %296 = vmatprep.subr.mxu0 0.0
  %297 = vmatpush1.xpose.msra.mxu0 0.0
  %298 = vmatprep.subr.mxu0 0.0
  %299 = vmatpush1.xpose.msra.mxu0 0.0
  %300 = vmatprep.subr.mxu0 0.0
  %301 = vmatpush1.xpose.msra.mxu0 0.0
  %302 = vmatprep.subr.mxu0 0.0
  %303 = vmatpush1.xpose.msra.mxu0 0.0
  %304 = vmatprep.subr.mxu0 0.0
  %305 = vmatpush1.xpose.msra.mxu0 0.0
  %306 = vmatprep.subr.mxu0 0.0
  %307 = vmatpush1.xpose.msra.mxu0 0.0
  %308 = vmatprep.subr.mxu0 0.0
  %309 = vmatpush1.xpose.msra.mxu0 0.0
  %310 = vmatprep.subr.mxu0 0.0
  %311 = vmatpush1.xpose.msra.mxu0 0.0
  %312 = vmatprep.subr.mxu0 0.0
  %313 = vmatpush1.xpose.msra.mxu0 0.0
  %314 = vmatprep.subr.mxu0 0.0
  %315 = vmatpush1.xpose.msra.mxu0 0.0
  %316 = vmatprep.subr.mxu0 0.0
  %317 = vmatpush1.xpose.msra.mxu0 0.0
  %318 = vmatprep.subr.mxu0 0.0
  %319 = vmatpush1.xpose.msra.mxu0 0.0
  %320 = vmatprep.subr.mxu0 0.0
  %321 = vmatpush1.xpose.msra.mxu0 0.0
  %322 = vmatprep.subr.mxu0 0.0
  %323 = vmatpush1.xpose.msra.mxu0 0.0
  %324 = vmatprep.subr.mxu0 0.0
  %325 = vmatpush1.xpose.msra.mxu0 %v292
  %326 = vmatprep.subr.mxu0 0.0
  %327 = vmatpush2.xpose.msra.mxu0 0.0
  %328 = vmatprep.subr.mxu0 0.0
  %329 = vmatpush2.xpose.msra.mxu0 0.0
  %330 = vmatprep.subr.mxu0 0.0
  %331 = vmatpush2.xpose.msra.mxu0 0.0
  %332 = vmatprep.subr.mxu0 0.0
  %333 = vmatpush2.xpose.msra.mxu0 0.0
  %334 = vmatprep.subr.mxu0 0.0
  %335 = vmatpush2.xpose.msra.mxu0 0.0
  %336 = vmatprep.subr.mxu0 0.0
  %337 = vmatpush2.xpose.msra.mxu0 0.0
  %338 = vmatprep.subr.mxu0 0.0
  %339 = vmatpush2.xpose.msra.mxu0 0.0
  %340 = vmatprep.subr.mxu0 0.0
  %341 = vmatpush2.xpose.msra.mxu0 0.0
  %342 = vmatprep.subr.mxu0 0.0
  %343 = vmatpush2.xpose.msra.mxu0 0.0
  %344 = vmatprep.subr.mxu0 0.0
  %345 = vmatpush2.xpose.msra.mxu0 0.0
  %346 = vmatprep.subr.mxu0 0.0
  %347 = vmatpush2.xpose.msra.mxu0 0.0
  %348 = vmatprep.subr.mxu0 0.0
  %349 = vmatpush2.xpose.msra.mxu0 0.0
  %350 = vmatprep.subr.mxu0 0.0
  %351 = vmatpush2.xpose.msra.mxu0 0.0
  %352 = vmatprep.subr.mxu0 0.0
  %353 = vmatpush2.xpose.msra.mxu0 0.0
  %354 = vmatprep.subr.mxu0 0.0
  %355 = vmatpush2.xpose.msra.mxu0 0.0
  %356 = vmatprep.subr.mxu0 0.0
  %357 = vmatpush2.xpose.msra.mxu0 0.0
  %358 = vmatprep.mubr.f32.mxu0 0.0
  %359 = vmatmul.mubr.f32.gmra.mxu0 %v90
  %v360 = vpop.f32.mrf.mxu0
  %v361 = vadd.f32 %v81, %v360
  %v362 = vpop.f32.mrf.mxu0
  %363 = vmatprep.mubr.f32.mxu0 0.0
  %364 = vmatmul.mubr.f32.gmra.mxu0 %v93
  %v365 = vpop.f32.mrf.mxu0
  %v366 = vadd.f32 %v86, %v365
  %v367 = vpop.f32.mrf.mxu0
  %368 = vdwg.mxu0
  %370 = vset.pattern.permute.xlu0 2
  %371 = vperm.xlu0 %370, %v282
  %v372 = vpop.permute.xlu0 %371
  %v374 = vmul.f32 %v372, %v181
  %v375 = vadd.f32 %v374, %v186
  %v376 = vmax.f32 %v375, 0.0
  %v378 = vsel %vm88, %v376, 0
  %380 = vmatprep.subr.mxu0 0.0
  %381 = vmatpush1.xpose.msra.mxu0 0.0
  %382 = vmatprep.subr.mxu0 0.0
  %383 = vmatpush1.xpose.msra.mxu0 0.0
  %384 = vmatprep.subr.mxu0 0.0
  %385 = vmatpush1.xpose.msra.mxu0 0.0
  %386 = vmatprep.subr.mxu0 0.0
  %387 = vmatpush1.xpose.msra.mxu0 0.0
  %388 = vmatprep.subr.mxu0 0.0
  %389 = vmatpush1.xpose.msra.mxu0 0.0
  %390 = vmatprep.subr.mxu0 0.0
  %391 = vmatpush1.xpose.msra.mxu0 0.0
  %392 = vmatprep.subr.mxu0 0.0
  %393 = vmatpush1.xpose.msra.mxu0 0.0
  %394 = vmatprep.subr.mxu0 0.0
  %395 = vmatpush1.xpose.msra.mxu0 0.0
  %396 = vmatprep.subr.mxu0 0.0
  %397 = vmatpush1.xpose.msra.mxu0 0.0
  %398 = vmatprep.subr.mxu0 0.0
  %399 = vmatpush1.xpose.msra.mxu0 0.0
  %400 = vmatprep.subr.mxu0 0.0
  %401 = vmatpush1.xpose.msra.mxu0 0.0
  %402 = vmatprep.subr.mxu0 0.0
  %403 = vmatpush1.xpose.msra.mxu0 0.0
  %404 = vmatprep.subr.mxu0 0.0
  %405 = vmatpush1.xpose.msra.mxu0 0.0
  %406 = vmatprep.subr.mxu0 0.0
  %407 = vmatpush1.xpose.msra.mxu0 0.0
  %408 = vmatprep.subr.mxu0 0.0
  %409 = vmatpush1.xpose.msra.mxu0 0.0
  %410 = vmatprep.subr.mxu0 0.0
  %411 = vmatpush1.xpose.msra.mxu0 %v378
  %412 = vmatprep.subr.mxu0 0.0
  %413 = vmatpush2.xpose.msra.mxu0 0.0
  %414 = vmatprep.subr.mxu0 0.0
  %415 = vmatpush2.xpose.msra.mxu0 0.0
  %416 = vmatprep.subr.mxu0 0.0
  %417 = vmatpush2.xpose.msra.mxu0 0.0
  %418 = vmatprep.subr.mxu0 0.0
  %419 = vmatpush2.xpose.msra.mxu0 0.0
  %420 = vmatprep.subr.mxu0 0.0
  %421 = vmatpush2.xpose.msra.mxu0 0.0
  %422 = vmatprep.subr.mxu0 0.0
  %423 = vmatpush2.xpose.msra.mxu0 0.0
  %424 = vmatprep.subr.mxu0 0.0
  %425 = vmatpush2.xpose.msra.mxu0 0.0
  %426 = vmatprep.subr.mxu0 0.0
  %427 = vmatpush2.xpose.msra.mxu0 0.0
  %428 = vmatprep.subr.mxu0 0.0
  %429 = vmatpush2.xpose.msra.mxu0 0.0
  %430 = vmatprep.subr.mxu0 0.0
  %431 = vmatpush2.xpose.msra.mxu0 0.0
  %432 = vmatprep.subr.mxu0 0.0
  %433 = vmatpush2.xpose.msra.mxu0 0.0
  %434 = vmatprep.subr.mxu0 0.0
  %435 = vmatpush2.xpose.msra.mxu0 0.0
  %436 = vmatprep.subr.mxu0 0.0
  %437 = vmatpush2.xpose.msra.mxu0 0.0
  %438 = vmatprep.subr.mxu0 0.0
  %439 = vmatpush2.xpose.msra.mxu0 0.0
  %440 = vmatprep.subr.mxu0 0.0
  %441 = vmatpush2.xpose.msra.mxu0 0.0
  %442 = vmatprep.subr.mxu0 0.0
  %443 = vmatpush2.xpose.msra.mxu0 0.0
  %444 = vmatprep.mubr.f32.mxu0 0.0
  %445 = vmatmul.mubr.f32.gmra.mxu0 %v198
  %v446 = vpop.f32.mrf.mxu0
  %v447 = vadd.f32 %v191, %v446
  %v448 = vpop.f32.mrf.mxu0
  %449 = vmatprep.mubr.f32.mxu0 0.0
  %450 = vmatmul.mubr.f32.gmra.mxu0 %v201
  %v451 = vpop.f32.mrf.mxu0
  %v452 = vadd.f32 %v195, %v451
  %v453 = vpop.f32.mrf.mxu0
  %454 = vdwg.mxu0
  %455 = vset.pattern.permute.xlu0 0
  %456 = vperm.xlu0 %455, %v47
  %v457 = vpop.permute.xlu0 %456
  %459 = vset.pattern.permute.xlu0 0
  %460 = vperm.xlu0 %459, %v48
  %v461 = vpop.permute.xlu0 %460
  %464 = vset.pattern.permute.xlu0 0
  %465 = vperm.xlu0 %464, %v49
  %v466 = vpop.permute.xlu0 %465
  %469 = vset.pattern.permute.xlu0 0
  %470 = vperm.xlu0 %469, %v50
  %v471 = vpop.permute.xlu0 %470
  %v473 = vlaneseq
  %v474 = vshrl.u32 %v473, 7
  %v475 = vsub.s32 0, %v474
  %v476 = vrot.slane %v24, %v475
  %v477 = vmul.f32 %v457, %v476
  %v478 = vmul.f32 %v461, %v476
  %v479 = vmul.f32 %v466, %v476
  %v480 = vmul.f32 %v471, %v476
  %vm481 = vcmask 15360
  %v483 = vsel %vm481, %v165, 0
  %v486 = vsel %vm481, %v170, 0
  %v489 = vsel %vm481, %v361, 0
  %v492 = vsel %vm481, %v366, 0
  %vm494 = vcmask 1041408
  %v496 = vsel %vm494, %v23, 0
  %498 = vmatprep.subr.mxu0 0.0
  %499 = vmatpush1.msra.mxu0 0.0
  %500 = vmatprep.subr.mxu0 0.0
  %501 = vmatpush1.msra.mxu0 0.0
  %502 = vmatprep.subr.mxu0 0.0
  %503 = vmatpush1.msra.mxu0 0.0
  %504 = vmatprep.subr.mxu0 0.0
  %505 = vmatpush1.msra.mxu0 0.0
  %506 = vmatprep.subr.mxu0 0.0
  %507 = vmatpush1.msra.mxu0 0.0
  %508 = vmatprep.subr.mxu0 0.0
  %509 = vmatpush1.msra.mxu0 0.0
  %510 = vmatprep.subr.mxu0 0.0
  %511 = vmatpush1.msra.mxu0 0.0
  %512 = vmatprep.subr.mxu0 0.0
  %513 = vmatpush1.msra.mxu0 0.0
  %514 = vmatprep.subr.mxu0 0.0
  %515 = vmatpush1.msra.mxu0 0.0
  %516 = vmatprep.subr.mxu0 0.0
  %517 = vmatpush1.msra.mxu0 0.0
  %518 = vmatprep.subr.mxu0 0.0
  %519 = vmatpush1.msra.mxu0 0.0
  %520 = vmatprep.subr.mxu0 0.0
  %521 = vmatpush1.msra.mxu0 0.0
  %522 = vmatprep.subr.mxu0 0.0
  %523 = vmatpush1.msra.mxu0 0.0
  %524 = vmatprep.subr.mxu0 0.0
  %525 = vmatpush1.msra.mxu0 0.0
  %526 = vmatprep.subr.mxu0 0.0
  %527 = vmatpush1.msra.mxu0 0.0
  %528 = vmatprep.subr.mxu0 0.0
  %529 = vmatpush1.msra.mxu0 %v496
  %530 = vmatprep.subr.mxu0 0.0
  %531 = vmatpush2.msra.mxu0 0.0
  %532 = vmatprep.subr.mxu0 0.0
  %533 = vmatpush2.msra.mxu0 0.0
  %534 = vmatprep.subr.mxu0 0.0
  %535 = vmatpush2.msra.mxu0 0.0
  %536 = vmatprep.subr.mxu0 0.0
  %537 = vmatpush2.msra.mxu0 0.0
  %538 = vmatprep.subr.mxu0 0.0
  %539 = vmatpush2.msra.mxu0 0.0
  %540 = vmatprep.subr.mxu0 0.0
  %541 = vmatpush2.msra.mxu0 0.0
  %542 = vmatprep.subr.mxu0 0.0
  %543 = vmatpush2.msra.mxu0 0.0
  %544 = vmatprep.subr.mxu0 0.0
  %545 = vmatpush2.msra.mxu0 0.0
  %546 = vmatprep.subr.mxu0 0.0
  %547 = vmatpush2.msra.mxu0 0.0
  %548 = vmatprep.subr.mxu0 0.0
  %549 = vmatpush2.msra.mxu0 0.0
  %550 = vmatprep.subr.mxu0 0.0
  %551 = vmatpush2.msra.mxu0 0.0
  %552 = vmatprep.subr.mxu0 0.0
  %553 = vmatpush2.msra.mxu0 0.0
  %554 = vmatprep.subr.mxu0 0.0
  %555 = vmatpush2.msra.mxu0 0.0
  %556 = vmatprep.subr.mxu0 0.0
  %557 = vmatpush2.msra.mxu0 0.0
  %558 = vmatprep.subr.mxu0 0.0
  %559 = vmatpush2.msra.mxu0 0.0
  %560 = vmatprep.subr.mxu0 0.0
  %561 = vmatpush2.msra.mxu0 0.0
  %562 = vmatprep.mubr.f32.mxu0 0.0
  %563 = vmatmul.mubr.f32.gmra.mxu0 %v483
  %v564 = vpop.f32.mrf.mxu0
  %v565 = vadd.f32 %v477, %v564
  %v566 = vpop.f32.mrf.mxu0
  %567 = vmatprep.mubr.f32.mxu0 0.0
  %568 = vmatmul.mubr.f32.gmra.mxu0 %v486
  %v569 = vpop.f32.mrf.mxu0
  %v570 = vadd.f32 %v478, %v569
  %v571 = vpop.f32.mrf.mxu0
  %572 = vmatprep.mubr.f32.mxu0 0.0
  %573 = vmatmul.mubr.f32.gmra.mxu0 %v489
  %v574 = vpop.f32.mrf.mxu0
  %v575 = vadd.f32 %v479, %v574
  %v576 = vpop.f32.mrf.mxu0
  %577 = vmatprep.mubr.f32.mxu0 0.0
  %578 = vmatmul.mubr.f32.gmra.mxu0 %v492
  %v579 = vpop.f32.mrf.mxu0
  %v580 = vadd.f32 %v480, %v579
  %v581 = vpop.f32.mrf.mxu0
  %582 = vdwg.mxu0
  %v583 = vlaneseq
  %v584 = vshrl.u32 %v583, 7
  %v585 = vsub.s32 0, %v584
  %v586 = vrot.slane %v25, %v585
  %v587 = vadd.f32 %v565, %v586
  %v588 = vadd.f32 %v570, %v586
  %v589 = vadd.f32 %v575, %v586
  %v590 = vadd.f32 %v580, %v586
  %v591 = vlaneseq
  %v592 = vshrl.u32 %v591, 7
  %v593 = vsub.s32 0, %v592
  %v594 = vrot.slane %v27, %v593
  %v595 = vmul.f32 %v457, %v594
  %v596 = vmul.f32 %v461, %v594
  %v597 = vmul.f32 %v466, %v594
  %v598 = vmul.f32 %v471, %v594
  %v600 = vsel %vm481, %v273, 0
  %v603 = vsel %vm481, %v278, 0
  %v606 = vsel %vm481, %v447, 0
  %v609 = vsel %vm481, %v452, 0
  %v612 = vsel %vm494, %v26, 0
  %614 = vmatprep.subr.mxu0 0.0
  %615 = vmatpush1.msra.mxu0 0.0
  %616 = vmatprep.subr.mxu0 0.0
  %617 = vmatpush1.msra.mxu0 0.0
  %618 = vmatprep.subr.mxu0 0.0
  %619 = vmatpush1.msra.mxu0 0.0
  %620 = vmatprep.subr.mxu0 0.0
  %621 = vmatpush1.msra.mxu0 0.0
  %622 = vmatprep.subr.mxu0 0.0
  %623 = vmatpush1.msra.mxu0 0.0
  %624 = vmatprep.subr.mxu0 0.0
  %625 = vmatpush1.msra.mxu0 0.0
  %626 = vmatprep.subr.mxu0 0.0
  %627 = vmatpush1.msra.mxu0 0.0
  %628 = vmatprep.subr.mxu0 0.0
  %629 = vmatpush1.msra.mxu0 0.0
  %630 = vmatprep.subr.mxu0 0.0
  %631 = vmatpush1.msra.mxu0 0.0
  %632 = vmatprep.subr.mxu0 0.0
  %633 = vmatpush1.msra.mxu0 0.0
  %634 = vmatprep.subr.mxu0 0.0
  %635 = vmatpush1.msra.mxu0 0.0
  %636 = vmatprep.subr.mxu0 0.0
  %637 = vmatpush1.msra.mxu0 0.0
  %638 = vmatprep.subr.mxu0 0.0
  %639 = vmatpush1.msra.mxu0 0.0
  %640 = vmatprep.subr.mxu0 0.0
  %641 = vmatpush1.msra.mxu0 0.0
  %642 = vmatprep.subr.mxu0 0.0
  %643 = vmatpush1.msra.mxu0 0.0
  %644 = vmatprep.subr.mxu0 0.0
  %645 = vmatpush1.msra.mxu0 %v612
  %646 = vmatprep.subr.mxu0 0.0
  %647 = vmatpush2.msra.mxu0 0.0
  %648 = vmatprep.subr.mxu0 0.0
  %649 = vmatpush2.msra.mxu0 0.0
  %650 = vmatprep.subr.mxu0 0.0
  %651 = vmatpush2.msra.mxu0 0.0
  %652 = vmatprep.subr.mxu0 0.0
  %653 = vmatpush2.msra.mxu0 0.0
  %654 = vmatprep.subr.mxu0 0.0
  %655 = vmatpush2.msra.mxu0 0.0
  %656 = vmatprep.subr.mxu0 0.0
  %657 = vmatpush2.msra.mxu0 0.0
  %658 = vmatprep.subr.mxu0 0.0
  %659 = vmatpush2.msra.mxu0 0.0
  %660 = vmatprep.subr.mxu0 0.0
  %661 = vmatpush2.msra.mxu0 0.0
  %662 = vmatprep.subr.mxu0 0.0
  %663 = vmatpush2.msra.mxu0 0.0
  %664 = vmatprep.subr.mxu0 0.0
  %665 = vmatpush2.msra.mxu0 0.0
  %666 = vmatprep.subr.mxu0 0.0
  %667 = vmatpush2.msra.mxu0 0.0
  %668 = vmatprep.subr.mxu0 0.0
  %669 = vmatpush2.msra.mxu0 0.0
  %670 = vmatprep.subr.mxu0 0.0
  %671 = vmatpush2.msra.mxu0 0.0
  %672 = vmatprep.subr.mxu0 0.0
  %673 = vmatpush2.msra.mxu0 0.0
  %674 = vmatprep.subr.mxu0 0.0
  %675 = vmatpush2.msra.mxu0 0.0
  %676 = vmatprep.subr.mxu0 0.0
  %677 = vmatpush2.msra.mxu0 0.0
  %678 = vmatprep.mubr.f32.mxu0 0.0
  %679 = vmatmul.mubr.f32.gmra.mxu0 %v600
  %v680 = vpop.f32.mrf.mxu0
  %v681 = vadd.f32 %v595, %v680
  %v682 = vpop.f32.mrf.mxu0
  %683 = vmatprep.mubr.f32.mxu0 0.0
  %684 = vmatmul.mubr.f32.gmra.mxu0 %v603
  %v685 = vpop.f32.mrf.mxu0
  %v686 = vadd.f32 %v596, %v685
  %v687 = vpop.f32.mrf.mxu0
  %688 = vmatprep.mubr.f32.mxu0 0.0
  %689 = vmatmul.mubr.f32.gmra.mxu0 %v606
  %v690 = vpop.f32.mrf.mxu0
  %v691 = vadd.f32 %v597, %v690
  %v692 = vpop.f32.mrf.mxu0
  %693 = vmatprep.mubr.f32.mxu0 0.0
  %694 = vmatmul.mubr.f32.gmra.mxu0 %v609
  %v695 = vpop.f32.mrf.mxu0
  %v696 = vadd.f32 %v598, %v695
  %v697 = vpop.f32.mrf.mxu0
  %698 = vdwg.mxu0
  %v699 = vlaneseq
  %v700 = vshrl.u32 %v699, 7
  %v701 = vsub.s32 0, %v700
  %v702 = vrot.slane %v28, %v701
  %v703 = vadd.f32 %v681, %v702
  %v704 = vadd.f32 %v686, %v702
  %v705 = vadd.f32 %v691, %v702
  %v706 = vadd.f32 %v696, %v702
  %v707 = vld [vmem:[%s0] sm:$0xff]
  %v708 = vld [vmem:[%s0 + $0x8] sm:$0xff]
  %v709 = vld [vmem:[%s0 + $0x10] sm:$0xff]
  %v710 = vld [vmem:[%s0 + $0x18] sm:$0xff]
  %v711 = vlaneseq
  %v712 = vshrl.u32 %v711, 7
  %v713 = vsub.s32 0, %v712
  %v714 = vrot.slane %v21, %v713
  %v715 = vmul.f32 %v457, %v714
  %v716 = vmul.f32 %v461, %v714
  %v717 = vmul.f32 %v466, %v714
  %v718 = vmul.f32 %v471, %v714
  %v720 = vsel %vm481, %v707, 0
  %v723 = vsel %vm481, %v708, 0
  %v726 = vsel %vm481, %v709, 0
  %v729 = vsel %vm481, %v710, 0
  %v732 = vsel %vm494, %v20, 0
  %734 = vmatprep.subr.mxu0 0.0
  %735 = vmatpush1.msra.mxu0 0.0
  %736 = vmatprep.subr.mxu0 0.0
  %737 = vmatpush1.msra.mxu0 0.0
  %738 = vmatprep.subr.mxu0 0.0
  %739 = vmatpush1.msra.mxu0 0.0
  %740 = vmatprep.subr.mxu0 0.0
  %741 = vmatpush1.msra.mxu0 0.0
  %742 = vmatprep.subr.mxu0 0.0
  %743 = vmatpush1.msra.mxu0 0.0
  %744 = vmatprep.subr.mxu0 0.0
  %745 = vmatpush1.msra.mxu0 0.0
  %746 = vmatprep.subr.mxu0 0.0
  %747 = vmatpush1.msra.mxu0 0.0
  %748 = vmatprep.subr.mxu0 0.0
  %749 = vmatpush1.msra.mxu0 0.0
  %750 = vmatprep.subr.mxu0 0.0
  %751 = vmatpush1.msra.mxu0 0.0
  %752 = vmatprep.subr.mxu0 0.0
  %753 = vmatpush1.msra.mxu0 0.0
  %754 = vmatprep.subr.mxu0 0.0
  %755 = vmatpush1.msra.mxu0 0.0
  %756 = vmatprep.subr.mxu0 0.0
  %757 = vmatpush1.msra.mxu0 0.0
  %758 = vmatprep.subr.mxu0 0.0
  %759 = vmatpush1.msra.mxu0 0.0
  %760 = vmatprep.subr.mxu0 0.0
  %761 = vmatpush1.msra.mxu0 0.0
  %762 = vmatprep.subr.mxu0 0.0
  %763 = vmatpush1.msra.mxu0 0.0
  %764 = vmatprep.subr.mxu0 0.0
  %765 = vmatpush1.msra.mxu0 %v732
  %766 = vmatprep.subr.mxu0 0.0
  %767 = vmatpush2.msra.mxu0 0.0
  %768 = vmatprep.subr.mxu0 0.0
  %769 = vmatpush2.msra.mxu0 0.0
  %770 = vmatprep.subr.mxu0 0.0
  %771 = vmatpush2.msra.mxu0 0.0
  %772 = vmatprep.subr.mxu0 0.0
  %773 = vmatpush2.msra.mxu0 0.0
  %774 = vmatprep.subr.mxu0 0.0
  %775 = vmatpush2.msra.mxu0 0.0
  %776 = vmatprep.subr.mxu0 0.0
  %777 = vmatpush2.msra.mxu0 0.0
  %778 = vmatprep.subr.mxu0 0.0
  %779 = vmatpush2.msra.mxu0 0.0
  %780 = vmatprep.subr.mxu0 0.0
  %781 = vmatpush2.msra.mxu0 0.0
  %782 = vmatprep.subr.mxu0 0.0
  %783 = vmatpush2.msra.mxu0 0.0
  %784 = vmatprep.subr.mxu0 0.0
  %785 = vmatpush2.msra.mxu0 0.0
  %786 = vmatprep.subr.mxu0 0.0
  %787 = vmatpush2.msra.mxu0 0.0
  %788 = vmatprep.subr.mxu0 0.0
  %789 = vmatpush2.msra.mxu0 0.0
  %790 = vmatprep.subr.mxu0 0.0
  %791 = vmatpush2.msra.mxu0 0.0
  %792 = vmatprep.subr.mxu0 0.0
  %793 = vmatpush2.msra.mxu0 0.0
  %794 = vmatprep.subr.mxu0 0.0
  %795 = vmatpush2.msra.mxu0 0.0
  %796 = vmatprep.subr.mxu0 0.0
  %797 = vmatpush2.msra.mxu0 0.0
  %798 = vmatprep.mubr.f32.mxu0 0.0
  %799 = vmatmul.mubr.f32.gmra.mxu0 %v720
  %v800 = vpop.f32.mrf.mxu0
  %v801 = vadd.f32 %v715, %v800
  %v802 = vpop.f32.mrf.mxu0
  %803 = vmatprep.mubr.f32.mxu0 0.0
  %804 = vmatmul.mubr.f32.gmra.mxu0 %v723
  %v805 = vpop.f32.mrf.mxu0
  %v806 = vadd.f32 %v716, %v805
  %v807 = vpop.f32.mrf.mxu0
  %808 = vmatprep.mubr.f32.mxu0 0.0
  %809 = vmatmul.mubr.f32.gmra.mxu0 %v726
  %v810 = vpop.f32.mrf.mxu0
  %v811 = vadd.f32 %v717, %v810
  %v812 = vpop.f32.mrf.mxu0
  %813 = vmatprep.mubr.f32.mxu0 0.0
  %814 = vmatmul.mubr.f32.gmra.mxu0 %v729
  %v815 = vpop.f32.mrf.mxu0
  %v816 = vadd.f32 %v718, %v815
  %v817 = vpop.f32.mrf.mxu0
  %818 = vdwg.mxu0
  %v819 = vlaneseq
  %v820 = vshrl.u32 %v819, 7
  %v821 = vsub.s32 0, %v820
  %v822 = vrot.slane %v22, %v821
  %v823 = vadd.f32 %v801, %v822
  %v824 = vadd.f32 %v806, %v822
  %v825 = vadd.f32 %v811, %v822
  %v826 = vadd.f32 %v816, %v822
  %v827 = vld [vmem:[%s1 + $0xb8] sm:$0xff]
  %v828 = vld [vmem:[%s1 + $0xc0] sm:$0xff]
  %v829 = vld [vmem:[%s1 + $0xc8] sm:$0xff]
  %v830 = vld [vmem:[%s1 + $0xd0] sm:$0xff]
  %v831 = vld [vmem:[%s1 + $0xd8] sm:$0xff]
  %v832 = vld [vmem:[%s1 + $0xe0] sm:$0xff]
  %v833 = vld [vmem:[%s1 + $0xe8] sm:$0xff]
  %v834 = vld [vmem:[%s1 + $0xf0] sm:$0xff]
  %v835 = vld [vmem:[%s3] sm:$0xff]
  %v836 = vld [vmem:[%s3 + $0x8] sm:$0xff]
  %v837 = vld [vmem:[%s3 + $0x10] sm:$0xff]
  %v838 = vld [vmem:[%s3 + $0x18] sm:$0xff]
  %v839 = vld [vmem:[%s4] sm:$0xff]
  %v840 = vld [vmem:[%s4 + $0x8] sm:$0xff]
  %v841 = vld [vmem:[%s4 + $0x10] sm:$0xff]
  %v842 = vld [vmem:[%s4 + $0x18] sm:$0xff]
  %v843 = vld [vmem:[%s4 + $0x20] sm:$0xff]
  %v844 = vld [vmem:[%s4 + $0x28] sm:$0xff]
  %v845 = vld [vmem:[%s4 + $0x30] sm:$0xff]
  %v846 = vld [vmem:[%s4 + $0x38] sm:$0xff]
  %v847 = vld [vmem:[%s4 + $0x40] sm:$0xff]
  %v848 = vld [vmem:[%s4 + $0x48] sm:$0xff]
  %v849 = vld [vmem:[%s4 + $0x50] sm:$0xff]
  %v850 = vld [vmem:[%s4 + $0x58] sm:$0xff]
  %v851 = vld [vmem:[%s4 + $0x60] sm:$0xff]
  %v852 = vld [vmem:[%s4 + $0x68] sm:$0xff]
  %v853 = vld [vmem:[%s4 + $0x70] sm:$0xff]
  %v854 = vld [vmem:[%s4 + $0x78] sm:$0xff]
  %v855 = vld [vmem:[%s1 + $0x18] sm:$0x1]
  %v857 = vsel %vm88, %v37, 0
  %v860 = vsel %vm88, %v38, 0
  %862 = vmatprep.subr.mxu0 0.0
  %863 = vmatpush1.msra.mxu0 0.0
  %864 = vmatprep.subr.mxu0 0.0
  %865 = vmatpush1.msra.mxu0 0.0
  %866 = vmatprep.subr.mxu0 0.0
  %867 = vmatpush1.msra.mxu0 0.0
  %868 = vmatprep.subr.mxu0 0.0
  %869 = vmatpush1.msra.mxu0 0.0
  %870 = vmatprep.subr.mxu0 0.0
  %871 = vmatpush1.msra.mxu0 0.0
  %872 = vmatprep.subr.mxu0 0.0
  %873 = vmatpush1.msra.mxu0 0.0
  %874 = vmatprep.subr.mxu0 0.0
  %875 = vmatpush1.msra.mxu0 0.0
  %876 = vmatprep.subr.mxu0 0.0
  %877 = vmatpush1.msra.mxu0 0.0
  %878 = vmatprep.subr.mxu0 0.0
  %879 = vmatpush1.msra.mxu0 0.0
  %880 = vmatprep.subr.mxu0 0.0
  %881 = vmatpush1.msra.mxu0 0.0
  %882 = vmatprep.subr.mxu0 0.0
  %883 = vmatpush1.msra.mxu0 0.0
  %884 = vmatprep.subr.mxu0 0.0
  %885 = vmatpush1.msra.mxu0 0.0
  %886 = vmatprep.subr.mxu0 0.0
  %887 = vmatpush1.msra.mxu0 %v826
  %888 = vmatprep.subr.mxu0 0.0
  %889 = vmatpush1.msra.mxu0 %v825
  %890 = vmatprep.subr.mxu0 0.0
  %891 = vmatpush1.msra.mxu0 %v824
  %892 = vmatprep.subr.mxu0 0.0
  %893 = vmatpush1.msra.mxu0 %v823
  %894 = vmatprep.subr.mxu0 0.0
  %895 = vmatpush2.msra.mxu0 0.0
  %896 = vmatprep.subr.mxu0 0.0
  %897 = vmatpush2.msra.mxu0 0.0
  %898 = vmatprep.subr.mxu0 0.0
  %899 = vmatpush2.msra.mxu0 0.0
  %900 = vmatprep.subr.mxu0 0.0
  %901 = vmatpush2.msra.mxu0 0.0
  %902 = vmatprep.subr.mxu0 0.0
  %903 = vmatpush2.msra.mxu0 0.0
  %904 = vmatprep.subr.mxu0 0.0
  %905 = vmatpush2.msra.mxu0 0.0
  %906 = vmatprep.subr.mxu0 0.0
  %907 = vmatpush2.msra.mxu0 0.0
  %908 = vmatprep.subr.mxu0 0.0
  %909 = vmatpush2.msra.mxu0 0.0
  %910 = vmatprep.subr.mxu0 0.0
  %911 = vmatpush2.msra.mxu0 0.0
  %912 = vmatprep.subr.mxu0 0.0
  %913 = vmatpush2.msra.mxu0 0.0
  %914 = vmatprep.subr.mxu0 0.0
  %915 = vmatpush2.msra.mxu0 0.0
  %916 = vmatprep.subr.mxu0 0.0
  %917 = vmatpush2.msra.mxu0 0.0
  %918 = vmatprep.subr.mxu0 0.0
  %919 = vmatpush2.msra.mxu0 0.0
  %920 = vmatprep.subr.mxu0 0.0
  %921 = vmatpush2.msra.mxu0 0.0
  %922 = vmatprep.subr.mxu0 0.0
  %923 = vmatpush2.msra.mxu0 0.0
  %924 = vmatprep.subr.mxu0 0.0
  %925 = vmatpush2.msra.mxu0 0.0
  %926 = vmatprep.mubr.f32.mxu0 0.0
  %927 = vmatmul.mubr.f32.gmra.mxu0 %v857
  %v928 = vpop.f32.mrf.mxu0
  %v929 = vadd.f32 0.0, %v928
  %v930 = vpop.f32.mrf.mxu0
  %931 = vmatprep.mubr.f32.mxu0 0.0
  %932 = vmatmul.mubr.f32.gmra.mxu0 %v860
  %v933 = vpop.f32.mrf.mxu0
  %v934 = vadd.f32 0.0, %v933
  %v935 = vpop.f32.mrf.mxu0
  %936 = vdwg.mxu0
  %939 = vrot.lane.b32.xlu0 %v929, 32
  %v940 = vpop.permute.xlu0 %939
  %941 = vrot.lane.b32.xlu0 %v934, 32
  %v942 = vpop.permute.xlu0 %941
  %945 = vrot.lane.b32.xlu0 %v929, 64
  %v946 = vpop.permute.xlu0 %945
  %947 = vrot.lane.b32.xlu0 %v934, 64
  %v948 = vpop.permute.xlu0 %947
  %951 = vrot.lane.b32.xlu0 %v929, 96
  %v952 = vpop.permute.xlu0 %951
  %953 = vrot.lane.b32.xlu0 %v934, 96
  %v954 = vpop.permute.xlu0 %953
  %v957 = vsel %vm88, %v929, %v940
  %v958 = vsel %vm88, %v934, %v942
  %vm959 = vcmask 523264
  %v960 = vsel %vm959, %v957, %v946
  %v961 = vsel %vm959, %v958, %v948
  %vm962 = vcmask 785408
  %v963 = vsel %vm962, %v960, %v952
  %v964 = vsel %vm962, %v961, %v954
  %v965 = vmul.f32 %v963, %v58
  %v966 = vmul.f32 %v964, %v59
  %967 = vmatprep.subr.mxu0 0.0
  %968 = vmatpush1.msra.mxu0 %v854
  %969 = vmatprep.subr.mxu0 0.0
  %970 = vmatpush1.msra.mxu0 %v853
  %971 = vmatprep.subr.mxu0 0.0
  %972 = vmatpush1.msra.mxu0 %v852
  %973 = vmatprep.subr.mxu0 0.0
  %974 = vmatpush1.msra.mxu0 %v851
  %975 = vmatprep.subr.mxu0 0.0
  %976 = vmatpush1.msra.mxu0 %v850
  %977 = vmatprep.subr.mxu0 0.0
  %978 = vmatpush1.msra.mxu0 %v849
  %979 = vmatprep.subr.mxu0 0.0
  %980 = vmatpush1.msra.mxu0 %v848
  %981 = vmatprep.subr.mxu0 0.0
  %982 = vmatpush1.msra.mxu0 %v847
  %983 = vmatprep.subr.mxu0 0.0
  %984 = vmatpush1.msra.mxu0 %v846
  %985 = vmatprep.subr.mxu0 0.0
  %986 = vmatpush1.msra.mxu0 %v845
  %987 = vmatprep.subr.mxu0 0.0
  %988 = vmatpush1.msra.mxu0 %v844
  %989 = vmatprep.subr.mxu0 0.0
  %990 = vmatpush1.msra.mxu0 %v843
  %991 = vmatprep.subr.mxu0 0.0
  %992 = vmatpush1.msra.mxu0 %v842
  %993 = vmatprep.subr.mxu0 0.0
  %994 = vmatpush1.msra.mxu0 %v841
  %995 = vmatprep.subr.mxu0 0.0
  %996 = vmatpush1.msra.mxu0 %v840
  %997 = vmatprep.subr.mxu0 0.0
  %998 = vmatpush1.msra.mxu0 %v839
  %999 = vmatprep.subr.mxu0 0.0
  %1000 = vmatpush2.msra.mxu0 0.0
  %1001 = vmatprep.subr.mxu0 0.0
  %1002 = vmatpush2.msra.mxu0 0.0
  %1003 = vmatprep.subr.mxu0 0.0
  %1004 = vmatpush2.msra.mxu0 0.0
  %1005 = vmatprep.subr.mxu0 0.0
  %1006 = vmatpush2.msra.mxu0 0.0
  %1007 = vmatprep.subr.mxu0 0.0
  %1008 = vmatpush2.msra.mxu0 0.0
  %1009 = vmatprep.subr.mxu0 0.0
  %1010 = vmatpush2.msra.mxu0 0.0
  %1011 = vmatprep.subr.mxu0 0.0
  %1012 = vmatpush2.msra.mxu0 0.0
  %1013 = vmatprep.subr.mxu0 0.0
  %1014 = vmatpush2.msra.mxu0 0.0
  %1015 = vmatprep.subr.mxu0 0.0
  %1016 = vmatpush2.msra.mxu0 0.0
  %1017 = vmatprep.subr.mxu0 0.0
  %1018 = vmatpush2.msra.mxu0 0.0
  %1019 = vmatprep.subr.mxu0 0.0
  %1020 = vmatpush2.msra.mxu0 0.0
  %1021 = vmatprep.subr.mxu0 0.0
  %1022 = vmatpush2.msra.mxu0 0.0
  %1023 = vmatprep.subr.mxu0 0.0
  %1024 = vmatpush2.msra.mxu0 0.0
  %1025 = vmatprep.subr.mxu0 0.0
  %1026 = vmatpush2.msra.mxu0 0.0
  %1027 = vmatprep.subr.mxu0 0.0
  %1028 = vmatpush2.msra.mxu0 0.0
  %1029 = vmatprep.subr.mxu0 0.0
  %1030 = vmatpush2.msra.mxu0 0.0
  %1031 = vmatprep.mubr.f32.mxu0 0.0
  %1032 = vmatmul.mubr.f32.gmra.mxu0 %v965
  %v1033 = vpop.f32.mrf.mxu0
  %v1034 = vadd.f32 0.0, %v1033
  %v1035 = vpop.f32.mrf.mxu0
  %1036 = vmatprep.mubr.f32.mxu0 0.0
  %1037 = vmatmul.mubr.f32.gmra.mxu0 %v966
  %v1038 = vpop.f32.mrf.mxu0
  %v1039 = vadd.f32 0.0, %v1038
  %v1040 = vpop.f32.mrf.mxu0
  %1041 = vdwg.mxu0
  %1044 = vrot.lane.b32.xlu0 %v1034, 96
  %v1045 = vpop.permute.xlu0 %1044
  %1046 = vrot.lane.b32.xlu0 %v1039, 96
  %v1047 = vpop.permute.xlu0 %1046
  %v1051 = vsel %vm88, %v823, 0
  %v1054 = vsel %vm88, %v824, 0
  %v1057 = vsel %vm88, %v825, 0
  %v1060 = vsel %vm88, %v826, 0
  %1062 = vmatprep.subr.mxu0 0.0
  %1063 = vmatpush1.msra.mxu0 0.0
  %1064 = vmatprep.subr.mxu0 0.0
  %1065 = vmatpush1.msra.mxu0 0.0
  %1066 = vmatprep.subr.mxu0 0.0
  %1067 = vmatpush1.msra.mxu0 0.0
  %1068 = vmatprep.subr.mxu0 0.0
  %1069 = vmatpush1.msra.mxu0 0.0
  %1070 = vmatprep.subr.mxu0 0.0
  %1071 = vmatpush1.msra.mxu0 0.0
  %1072 = vmatprep.subr.mxu0 0.0
  %1073 = vmatpush1.msra.mxu0 0.0
  %1074 = vmatprep.subr.mxu0 0.0
  %1075 = vmatpush1.msra.mxu0 0.0
  %1076 = vmatprep.subr.mxu0 0.0
  %1077 = vmatpush1.msra.mxu0 0.0
  %1078 = vmatprep.subr.mxu0 0.0
  %1079 = vmatpush1.msra.mxu0 0.0
  %1080 = vmatprep.subr.mxu0 0.0
  %1081 = vmatpush1.msra.mxu0 0.0
  %1082 = vmatprep.subr.mxu0 0.0
  %1083 = vmatpush1.msra.mxu0 0.0
  %1084 = vmatprep.subr.mxu0 0.0
  %1085 = vmatpush1.msra.mxu0 0.0
  %1086 = vmatprep.subr.mxu0 0.0
  %1087 = vmatpush1.msra.mxu0 %v838
  %1088 = vmatprep.subr.mxu0 0.0
  %1089 = vmatpush1.msra.mxu0 %v837
  %1090 = vmatprep.subr.mxu0 0.0
  %1091 = vmatpush1.msra.mxu0 %v836
  %1092 = vmatprep.subr.mxu0 0.0
  %1093 = vmatpush1.msra.mxu0 %v835
  %1094 = vmatprep.subr.mxu0 0.0
  %1095 = vmatpush2.msra.mxu0 0.0
  %1096 = vmatprep.subr.mxu0 0.0
  %1097 = vmatpush2.msra.mxu0 0.0
  %1098 = vmatprep.subr.mxu0 0.0
  %1099 = vmatpush2.msra.mxu0 0.0
  %1100 = vmatprep.subr.mxu0 0.0
  %1101 = vmatpush2.msra.mxu0 0.0
  %1102 = vmatprep.subr.mxu0 0.0
  %1103 = vmatpush2.msra.mxu0 0.0
  %1104 = vmatprep.subr.mxu0 0.0
  %1105 = vmatpush2.msra.mxu0 0.0
  %1106 = vmatprep.subr.mxu0 0.0
  %1107 = vmatpush2.msra.mxu0 0.0
  %1108 = vmatprep.subr.mxu0 0.0
  %1109 = vmatpush2.msra.mxu0 0.0
  %1110 = vmatprep.subr.mxu0 0.0
  %1111 = vmatpush2.msra.mxu0 0.0
  %1112 = vmatprep.subr.mxu0 0.0
  %1113 = vmatpush2.msra.mxu0 0.0
  %1114 = vmatprep.subr.mxu0 0.0
  %1115 = vmatpush2.msra.mxu0 0.0
  %1116 = vmatprep.subr.mxu0 0.0
  %1117 = vmatpush2.msra.mxu0 0.0
  %1118 = vmatprep.subr.mxu0 0.0
  %1119 = vmatpush2.msra.mxu0 0.0
  %1120 = vmatprep.subr.mxu0 0.0
  %1121 = vmatpush2.msra.mxu0 0.0
  %1122 = vmatprep.subr.mxu0 0.0
  %1123 = vmatpush2.msra.mxu0 0.0
  %1124 = vmatprep.subr.mxu0 0.0
  %1125 = vmatpush2.msra.mxu0 0.0
  %1126 = vmatprep.mubr.f32.mxu0 0.0
  %1127 = vmatmul.mubr.f32.gmra.mxu0 %v1051
  %v1128 = vpop.f32.mrf.mxu0
  %v1129 = vadd.f32 0.0, %v1128
  %v1130 = vpop.f32.mrf.mxu0
  %1131 = vmatprep.mubr.f32.mxu0 0.0
  %1132 = vmatmul.mubr.f32.gmra.mxu0 %v1054
  %v1133 = vpop.f32.mrf.mxu0
  %v1134 = vadd.f32 0.0, %v1133
  %v1135 = vpop.f32.mrf.mxu0
  %1136 = vmatprep.mubr.f32.mxu0 0.0
  %1137 = vmatmul.mubr.f32.gmra.mxu0 %v1057
  %v1138 = vpop.f32.mrf.mxu0
  %v1139 = vadd.f32 0.0, %v1138
  %v1140 = vpop.f32.mrf.mxu0
  %1141 = vmatprep.mubr.f32.mxu0 0.0
  %1142 = vmatmul.mubr.f32.gmra.mxu0 %v1060
  %v1143 = vpop.f32.mrf.mxu0
  %v1144 = vadd.f32 0.0, %v1143
  %v1145 = vpop.f32.mrf.mxu0
  %1146 = vdwg.mxu0
  %v1147 = vadd.f32 %v823, %v703
  %v1148 = vadd.f32 %v824, %v704
  %v1149 = vadd.f32 %v825, %v705
  %v1150 = vadd.f32 %v826, %v706
  %v1152 = vsel %vm88, %v1147, 0
  %v1155 = vsel %vm88, %v1148, 0
  %v1158 = vsel %vm88, %v1149, 0
  %v1161 = vsel %vm88, %v1150, 0
  %1163 = vmatprep.subr.mxu0 0.0
  %1164 = vmatpush1.msra.mxu0 0.0
  %1165 = vmatprep.subr.mxu0 0.0
  %1166 = vmatpush1.msra.mxu0 0.0
  %1167 = vmatprep.subr.mxu0 0.0
  %1168 = vmatpush1.msra.mxu0 0.0
  %1169 = vmatprep.subr.mxu0 0.0
  %1170 = vmatpush1.msra.mxu0 0.0
  %1171 = vmatprep.subr.mxu0 0.0
  %1172 = vmatpush1.msra.mxu0 0.0
  %1173 = vmatprep.subr.mxu0 0.0
  %1174 = vmatpush1.msra.mxu0 0.0
  %1175 = vmatprep.subr.mxu0 0.0
  %1176 = vmatpush1.msra.mxu0 0.0
  %1177 = vmatprep.subr.mxu0 0.0
  %1178 = vmatpush1.msra.mxu0 0.0
  %1179 = vmatprep.subr.mxu0 0.0
  %1180 = vmatpush1.msra.mxu0 0.0
  %1181 = vmatprep.subr.mxu0 0.0
  %1182 = vmatpush1.msra.mxu0 0.0
  %1183 = vmatprep.subr.mxu0 0.0
  %1184 = vmatpush1.msra.mxu0 0.0
  %1185 = vmatprep.subr.mxu0 0.0
  %1186 = vmatpush1.msra.mxu0 0.0
  %1187 = vmatprep.subr.mxu0 0.0
  %1188 = vmatpush1.msra.mxu0 %v830
  %1189 = vmatprep.subr.mxu0 0.0
  %1190 = vmatpush1.msra.mxu0 %v829
  %1191 = vmatprep.subr.mxu0 0.0
  %1192 = vmatpush1.msra.mxu0 %v828
  %1193 = vmatprep.subr.mxu0 0.0
  %1194 = vmatpush1.msra.mxu0 %v827
  %1195 = vmatprep.subr.mxu0 0.0
  %1196 = vmatpush2.msra.mxu0 0.0
  %1197 = vmatprep.subr.mxu0 0.0
  %1198 = vmatpush2.msra.mxu0 0.0
  %1199 = vmatprep.subr.mxu0 0.0
  %1200 = vmatpush2.msra.mxu0 0.0
  %1201 = vmatprep.subr.mxu0 0.0
  %1202 = vmatpush2.msra.mxu0 0.0
  %1203 = vmatprep.subr.mxu0 0.0
  %1204 = vmatpush2.msra.mxu0 0.0
  %1205 = vmatprep.subr.mxu0 0.0
  %1206 = vmatpush2.msra.mxu0 0.0
  %1207 = vmatprep.subr.mxu0 0.0
  %1208 = vmatpush2.msra.mxu0 0.0
  %1209 = vmatprep.subr.mxu0 0.0
  %1210 = vmatpush2.msra.mxu0 0.0
  %1211 = vmatprep.subr.mxu0 0.0
  %1212 = vmatpush2.msra.mxu0 0.0
  %1213 = vmatprep.subr.mxu0 0.0
  %1214 = vmatpush2.msra.mxu0 0.0
  %1215 = vmatprep.subr.mxu0 0.0
  %1216 = vmatpush2.msra.mxu0 0.0
  %1217 = vmatprep.subr.mxu0 0.0
  %1218 = vmatpush2.msra.mxu0 0.0
  %1219 = vmatprep.subr.mxu0 0.0
  %1220 = vmatpush2.msra.mxu0 0.0
  %1221 = vmatprep.subr.mxu0 0.0
  %1222 = vmatpush2.msra.mxu0 0.0
  %1223 = vmatprep.subr.mxu0 0.0
  %1224 = vmatpush2.msra.mxu0 0.0
  %1225 = vmatprep.subr.mxu0 0.0
  %1226 = vmatpush2.msra.mxu0 0.0
  %1227 = vmatprep.mubr.f32.mxu0 0.0
  %1228 = vmatmul.mubr.f32.gmra.mxu0 %v1152
  %v1229 = vpop.f32.mrf.mxu0
  %v1230 = vadd.f32 0.0, %v1229
  %v1231 = vpop.f32.mrf.mxu0
  %1232 = vmatprep.mubr.f32.mxu0 0.0
  %1233 = vmatmul.mubr.f32.gmra.mxu0 %v1155
  %v1234 = vpop.f32.mrf.mxu0
  %v1235 = vadd.f32 0.0, %v1234
  %v1236 = vpop.f32.mrf.mxu0
  %1237 = vmatprep.mubr.f32.mxu0 0.0
  %1238 = vmatmul.mubr.f32.gmra.mxu0 %v1158
  %v1239 = vpop.f32.mrf.mxu0
  %v1240 = vadd.f32 0.0, %v1239
  %v1241 = vpop.f32.mrf.mxu0
  %1242 = vmatprep.mubr.f32.mxu0 0.0
  %1243 = vmatmul.mubr.f32.gmra.mxu0 %v1161
  %v1244 = vpop.f32.mrf.mxu0
  %v1245 = vadd.f32 0.0, %v1244
  %v1246 = vpop.f32.mrf.mxu0
  %1247 = vdwg.mxu0
  %v1248 = vadd.f32 %v823, %v587
  %v1249 = vadd.f32 %v824, %v588
  %v1250 = vadd.f32 %v825, %v589
  %v1251 = vadd.f32 %v826, %v590
  %v1253 = vsel %vm88, %v831, 0
  %v1256 = vsel %vm88, %v832, 0
  %v1259 = vsel %vm88, %v833, 0
  %v1262 = vsel %vm88, %v834, 0
  %v1265 = vsel %vm88, %v1248, 0
  %v1268 = vsel %vm88, %v1249, 0
  %v1271 = vsel %vm88, %v1250, 0
  %v1274 = vsel %vm88, %v1251, 0
  %1276 = vmatprep.subr.mxu0 0.0
  %1277 = vmatpush1.xpose.msra.mxu0 0.0
  %1278 = vmatprep.subr.mxu0 0.0
  %1279 = vmatpush1.xpose.msra.mxu0 0.0
  %1280 = vmatprep.subr.mxu0 0.0
  %1281 = vmatpush1.xpose.msra.mxu0 0.0
  %1282 = vmatprep.subr.mxu0 0.0
  %1283 = vmatpush1.xpose.msra.mxu0 0.0
  %1284 = vmatprep.subr.mxu0 0.0
  %1285 = vmatpush1.xpose.msra.mxu0 0.0
  %1286 = vmatprep.subr.mxu0 0.0
  %1287 = vmatpush1.xpose.msra.mxu0 0.0
  %1288 = vmatprep.subr.mxu0 0.0
  %1289 = vmatpush1.xpose.msra.mxu0 0.0
  %1290 = vmatprep.subr.mxu0 0.0
  %1291 = vmatpush1.xpose.msra.mxu0 0.0
  %1292 = vmatprep.subr.mxu0 0.0
  %1293 = vmatpush1.xpose.msra.mxu0 0.0
  %1294 = vmatprep.subr.mxu0 0.0
  %1295 = vmatpush1.xpose.msra.mxu0 0.0
  %1296 = vmatprep.subr.mxu0 0.0
  %1297 = vmatpush1.xpose.msra.mxu0 0.0
  %1298 = vmatprep.subr.mxu0 0.0
  %1299 = vmatpush1.xpose.msra.mxu0 0.0
  %1300 = vmatprep.subr.mxu0 0.0
  %1301 = vmatpush1.xpose.msra.mxu0 %v1274
  %1302 = vmatprep.subr.mxu0 0.0
  %1303 = vmatpush1.xpose.msra.mxu0 %v1271
  %1304 = vmatprep.subr.mxu0 0.0
  %1305 = vmatpush1.xpose.msra.mxu0 %v1268
  %1306 = vmatprep.subr.mxu0 0.0
  %1307 = vmatpush1.xpose.msra.mxu0 %v1265
  %1308 = vmatprep.subr.mxu0 0.0
  %1309 = vmatpush2.xpose.msra.mxu0 0.0
  %1310 = vmatprep.subr.mxu0 0.0
  %1311 = vmatpush2.xpose.msra.mxu0 0.0
  %1312 = vmatprep.subr.mxu0 0.0
  %1313 = vmatpush2.xpose.msra.mxu0 0.0
  %1314 = vmatprep.subr.mxu0 0.0
  %1315 = vmatpush2.xpose.msra.mxu0 0.0
  %1316 = vmatprep.subr.mxu0 0.0
  %1317 = vmatpush2.xpose.msra.mxu0 0.0
  %1318 = vmatprep.subr.mxu0 0.0
  %1319 = vmatpush2.xpose.msra.mxu0 0.0
  %1320 = vmatprep.subr.mxu0 0.0
  %1321 = vmatpush2.xpose.msra.mxu0 0.0
  %1322 = vmatprep.subr.mxu0 0.0
  %1323 = vmatpush2.xpose.msra.mxu0 0.0
  %1324 = vmatprep.subr.mxu0 0.0
  %1325 = vmatpush2.xpose.msra.mxu0 0.0
  %1326 = vmatprep.subr.mxu0 0.0
  %1327 = vmatpush2.xpose.msra.mxu0 0.0
  %1328 = vmatprep.subr.mxu0 0.0
  %1329 = vmatpush2.xpose.msra.mxu0 0.0
  %1330 = vmatprep.subr.mxu0 0.0
  %1331 = vmatpush2.xpose.msra.mxu0 0.0
  %1332 = vmatprep.subr.mxu0 0.0
  %1333 = vmatpush2.xpose.msra.mxu0 0.0
  %1334 = vmatprep.subr.mxu0 0.0
  %1335 = vmatpush2.xpose.msra.mxu0 0.0
  %1336 = vmatprep.subr.mxu0 0.0
  %1337 = vmatpush2.xpose.msra.mxu0 0.0
  %1338 = vmatprep.subr.mxu0 0.0
  %1339 = vmatpush2.xpose.msra.mxu0 0.0
  %1340 = vmatprep.mubr.f32.mxu0 0.0
  %1341 = vmatmul.mubr.f32.gmra.mxu0 %v1253
  %v1342 = vpop.f32.mrf.mxu0
  %v1343 = vadd.f32 0.0, %v1342
  %v1344 = vpop.f32.mrf.mxu0
  %1345 = vmatprep.mubr.f32.mxu0 0.0
  %1346 = vmatmul.mubr.f32.gmra.mxu0 %v1256
  %v1347 = vpop.f32.mrf.mxu0
  %v1348 = vadd.f32 0.0, %v1347
  %v1349 = vpop.f32.mrf.mxu0
  %1350 = vmatprep.mubr.f32.mxu0 0.0
  %1351 = vmatmul.mubr.f32.gmra.mxu0 %v1259
  %v1352 = vpop.f32.mrf.mxu0
  %v1353 = vadd.f32 0.0, %v1352
  %v1354 = vpop.f32.mrf.mxu0
  %1355 = vmatprep.mubr.f32.mxu0 0.0
  %1356 = vmatmul.mubr.f32.gmra.mxu0 %v1262
  %v1357 = vpop.f32.mrf.mxu0
  %v1358 = vadd.f32 0.0, %v1357
  %v1359 = vpop.f32.mrf.mxu0
  %1360 = vdwg.mxu0
  %vm1361 = vcmask 130048
  %v1363 = vsel %vm1361, %v1343, 0
  %v1366 = vsel %vm1361, %v1348, 0
  %v1369 = vsel %vm1361, %v1353, 0
  %v1372 = vsel %vm1361, %v1358, 0
  %1374 = vmatprep.subr.mxu0 0.0
  %1375 = vmatpush1.msra.mxu0 0.0
  %1376 = vmatprep.subr.mxu0 0.0
  %1377 = vmatpush1.msra.mxu0 0.0
  %1378 = vmatprep.subr.mxu0 0.0
  %1379 = vmatpush1.msra.mxu0 0.0
  %1380 = vmatprep.subr.mxu0 0.0
  %1381 = vmatpush1.msra.mxu0 0.0
  %1382 = vmatprep.subr.mxu0 0.0
  %1383 = vmatpush1.msra.mxu0 0.0
  %1384 = vmatprep.subr.mxu0 0.0
  %1385 = vmatpush1.msra.mxu0 0.0
  %1386 = vmatprep.subr.mxu0 0.0
  %1387 = vmatpush1.msra.mxu0 0.0
  %1388 = vmatprep.subr.mxu0 0.0
  %1389 = vmatpush1.msra.mxu0 0.0
  %1390 = vmatprep.subr.mxu0 0.0
  %1391 = vmatpush1.msra.mxu0 0.0
  %1392 = vmatprep.subr.mxu0 0.0
  %1393 = vmatpush1.msra.mxu0 0.0
  %1394 = vmatprep.subr.mxu0 0.0
  %1395 = vmatpush1.msra.mxu0 0.0
  %1396 = vmatprep.subr.mxu0 0.0
  %1397 = vmatpush1.msra.mxu0 0.0
  %1398 = vmatprep.subr.mxu0 0.0
  %1399 = vmatpush1.msra.mxu0 0.0
  %1400 = vmatprep.subr.mxu0 0.0
  %1401 = vmatpush1.msra.mxu0 0.0
  %1402 = vmatprep.subr.mxu0 0.0
  %1403 = vmatpush1.msra.mxu0 %v1235
  %1404 = vmatprep.subr.mxu0 0.0
  %1405 = vmatpush1.msra.mxu0 %v1230
  %1406 = vmatprep.subr.mxu0 0.0
  %1407 = vmatpush2.msra.mxu0 0.0
  %1408 = vmatprep.subr.mxu0 0.0
  %1409 = vmatpush2.msra.mxu0 0.0
  %1410 = vmatprep.subr.mxu0 0.0
  %1411 = vmatpush2.msra.mxu0 0.0
  %1412 = vmatprep.subr.mxu0 0.0
  %1413 = vmatpush2.msra.mxu0 0.0
  %1414 = vmatprep.subr.mxu0 0.0
  %1415 = vmatpush2.msra.mxu0 0.0
  %1416 = vmatprep.subr.mxu0 0.0
  %1417 = vmatpush2.msra.mxu0 0.0
  %1418 = vmatprep.subr.mxu0 0.0
  %1419 = vmatpush2.msra.mxu0 0.0
  %1420 = vmatprep.subr.mxu0 0.0
  %1421 = vmatpush2.msra.mxu0 0.0
  %1422 = vmatprep.subr.mxu0 0.0
  %1423 = vmatpush2.msra.mxu0 0.0
  %1424 = vmatprep.subr.mxu0 0.0
  %1425 = vmatpush2.msra.mxu0 0.0
  %1426 = vmatprep.subr.mxu0 0.0
  %1427 = vmatpush2.msra.mxu0 0.0
  %1428 = vmatprep.subr.mxu0 0.0
  %1429 = vmatpush2.msra.mxu0 0.0
  %1430 = vmatprep.subr.mxu0 0.0
  %1431 = vmatpush2.msra.mxu0 0.0
  %1432 = vmatprep.subr.mxu0 0.0
  %1433 = vmatpush2.msra.mxu0 0.0
  %1434 = vmatprep.subr.mxu0 0.0
  %1435 = vmatpush2.msra.mxu0 0.0
  %1436 = vmatprep.subr.mxu0 0.0
  %1437 = vmatpush2.msra.mxu0 0.0
  %1438 = vmatprep.mubr.f32.mxu0 0.0
  %1439 = vmatmul.mubr.f32.gmra.mxu0 %v1363
  %v1440 = vpop.f32.mrf.mxu0
  %v1441 = vadd.f32 0.0, %v1440
  %v1442 = vpop.f32.mrf.mxu0
  %1443 = vmatprep.mubr.f32.mxu0 0.0
  %1444 = vmatmul.mubr.f32.gmra.mxu0 %v1366
  %v1445 = vpop.f32.mrf.mxu0
  %v1446 = vadd.f32 0.0, %v1445
  %v1447 = vpop.f32.mrf.mxu0
  %1448 = vmatprep.mubr.f32.mxu0 0.0
  %1449 = vmatmul.mubr.f32.gmra.mxu0 %v1369
  %v1450 = vpop.f32.mrf.mxu0
  %v1451 = vadd.f32 0.0, %v1450
  %v1452 = vpop.f32.mrf.mxu0
  %1453 = vmatprep.mubr.f32.mxu0 0.0
  %1454 = vmatmul.mubr.f32.gmra.mxu0 %v1372
  %v1455 = vpop.f32.mrf.mxu0
  %v1456 = vadd.f32 0.0, %v1455
  %v1457 = vpop.f32.mrf.mxu0
  %1458 = vdwg.mxu0
  %v1459 = vmul.f32 %v1441, 0.17677669
  %v1460 = vmul.f32 %v1446, 0.17677669
  %v1461 = vmul.f32 %v1451, 0.17677669
  %v1462 = vmul.f32 %v1456, 0.17677669
  %v1463 = vadd.f32 %v1459, %v29
  %v1464 = vadd.f32 %v1460, %v30
  %v1465 = vadd.f32 %v1461, %v31
  %v1466 = vadd.f32 %v1462, %v32
  %v1467 = vsel %vm88, %v1463, -inf
  %v1468 = vsel %vm88, %v1464, -inf
  %v1469 = vsel %vm88, %v1465, -inf
  %v1470 = vsel %vm88, %v1466, -inf
  %v1471 = vmax.f32 %v1467, %v1468
  %v1472 = vmax.f32 %v1469, %v1470
  %v1473 = vmax.f32 %v1471, %v1472
  %v1474 = vrot.slane %v1473, 4
  %v1475 = vmax.f32 %v1473, %v1474
  %v1476 = vrot.slane %v1475, 2
  %v1477 = vmax.f32 %v1475, %v1476
  %v1478 = vrot.slane %v1477, 1
  %v1479 = vmax.f32 %v1477, %v1478
  %v1480 = vsub.f32 %v1463, %v1479
  %v1481 = vsub.f32 %v1464, %v1479
  %v1482 = vsub.f32 %v1465, %v1479
  %v1483 = vsub.f32 %v1466, %v1479
  %v1484 = vmul.f32 %v1480, 1.442695
  %v1485 = vpow.pop %v1484
  %v1486 = vmul.f32 %v1481, 1.442695
  %v1487 = vpow.pop %v1486
  %v1488 = vmul.f32 %v1482, 1.442695
  %v1489 = vpow.pop %v1488
  %v1490 = vmul.f32 %v1483, 1.442695
  %v1491 = vpow.pop %v1490
  %v1492 = vsel %vm88, %v1485, 0.0
  %v1493 = vsel %vm88, %v1487, 0.0
  %v1494 = vadd.f32 %v1492, %v1493
  %v1495 = vsel %vm88, %v1489, 0.0
  %v1496 = vadd.f32 %v1494, %v1495
  %v1497 = vsel %vm88, %v1491, 0.0
  %v1498 = vadd.f32 %v1496, %v1497
  %v1499 = vrot.slane %v1498, 4
  %v1500 = vadd.f32 %v1498, %v1499
  %v1501 = vrot.slane %v1500, 2
  %v1502 = vadd.f32 %v1500, %v1501
  %v1503 = vrot.slane %v1502, 1
  %v1504 = vadd.f32 %v1502, %v1503
  %v1505 = vrcp.pop %v1504
  %v1506 = vmul.f32 %v1504, %v1505
  %v1507 = vsub.f32 2.0, %v1506
  %v1508 = vmul.f32 %v1505, %v1507
  %v1509 = vmul.f32 %v1485, %v1508
  %v1510 = vmul.f32 %v1487, %v1508
  %v1511 = vmul.f32 %v1489, %v1508
  %v1512 = vmul.f32 %v1491, %v1508
  %1515 = vrot.lane.b32.xlu0 %v1129, 96
  %v1516 = vpop.permute.xlu0 %1515
  %1517 = vrot.lane.b32.xlu0 %v1134, 96
  %v1518 = vpop.permute.xlu0 %1517
  %v1519 = vsel %vm88, %v1516, 0
  %v1521 = vsel %vm88, %v1518, 0
  %1523 = vmatprep.subr.mxu0 0.0
  %1524 = vmatpush1.msra.mxu0 0.0
  %1525 = vmatprep.subr.mxu0 0.0
  %1526 = vmatpush1.msra.mxu0 0.0
  %1527 = vmatprep.subr.mxu0 0.0
  %1528 = vmatpush1.msra.mxu0 0.0
  %1529 = vmatprep.subr.mxu0 0.0
  %1530 = vmatpush1.msra.mxu0 0.0
  %1531 = vmatprep.subr.mxu0 0.0
  %1532 = vmatpush1.msra.mxu0 0.0
  %1533 = vmatprep.subr.mxu0 0.0
  %1534 = vmatpush1.msra.mxu0 0.0
  %1535 = vmatprep.subr.mxu0 0.0
  %1536 = vmatpush1.msra.mxu0 0.0
  %1537 = vmatprep.subr.mxu0 0.0
  %1538 = vmatpush1.msra.mxu0 0.0
  %1539 = vmatprep.subr.mxu0 0.0
  %1540 = vmatpush1.msra.mxu0 0.0
  %1541 = vmatprep.subr.mxu0 0.0
  %1542 = vmatpush1.msra.mxu0 0.0
  %1543 = vmatprep.subr.mxu0 0.0
  %1544 = vmatpush1.msra.mxu0 0.0
  %1545 = vmatprep.subr.mxu0 0.0
  %1546 = vmatpush1.msra.mxu0 0.0
  %1547 = vmatprep.subr.mxu0 0.0
  %1548 = vmatpush1.msra.mxu0 %v1512
  %1549 = vmatprep.subr.mxu0 0.0
  %1550 = vmatpush1.msra.mxu0 %v1511
  %1551 = vmatprep.subr.mxu0 0.0
  %1552 = vmatpush1.msra.mxu0 %v1510
  %1553 = vmatprep.subr.mxu0 0.0
  %1554 = vmatpush1.msra.mxu0 %v1509
  %1555 = vmatprep.subr.mxu0 0.0
  %1556 = vmatpush2.msra.mxu0 0.0
  %1557 = vmatprep.subr.mxu0 0.0
  %1558 = vmatpush2.msra.mxu0 0.0
  %1559 = vmatprep.subr.mxu0 0.0
  %1560 = vmatpush2.msra.mxu0 0.0
  %1561 = vmatprep.subr.mxu0 0.0
  %1562 = vmatpush2.msra.mxu0 0.0
  %1563 = vmatprep.subr.mxu0 0.0
  %1564 = vmatpush2.msra.mxu0 0.0
  %1565 = vmatprep.subr.mxu0 0.0
  %1566 = vmatpush2.msra.mxu0 0.0
  %1567 = vmatprep.subr.mxu0 0.0
  %1568 = vmatpush2.msra.mxu0 0.0
  %1569 = vmatprep.subr.mxu0 0.0
  %1570 = vmatpush2.msra.mxu0 0.0
  %1571 = vmatprep.subr.mxu0 0.0
  %1572 = vmatpush2.msra.mxu0 0.0
  %1573 = vmatprep.subr.mxu0 0.0
  %1574 = vmatpush2.msra.mxu0 0.0
  %1575 = vmatprep.subr.mxu0 0.0
  %1576 = vmatpush2.msra.mxu0 0.0
  %1577 = vmatprep.subr.mxu0 0.0
  %1578 = vmatpush2.msra.mxu0 0.0
  %1579 = vmatprep.subr.mxu0 0.0
  %1580 = vmatpush2.msra.mxu0 0.0
  %1581 = vmatprep.subr.mxu0 0.0
  %1582 = vmatpush2.msra.mxu0 0.0
  %1583 = vmatprep.subr.mxu0 0.0
  %1584 = vmatpush2.msra.mxu0 0.0
  %1585 = vmatprep.subr.mxu0 0.0
  %1586 = vmatpush2.msra.mxu0 0.0
  %1587 = vmatprep.mubr.f32.mxu0 0.0
  %1588 = vmatmul.mubr.f32.gmra.mxu0 %v1519
  %v1589 = vpop.f32.mrf.mxu0
  %v1590 = vadd.f32 0.0, %v1589
  %v1591 = vpop.f32.mrf.mxu0
  %1592 = vmatprep.mubr.f32.mxu0 0.0
  %1593 = vmatmul.mubr.f32.gmra.mxu0 %v1521
  %v1594 = vpop.f32.mrf.mxu0
  %v1595 = vadd.f32 0.0, %v1594
  %v1596 = vpop.f32.mrf.mxu0
  %1597 = vdwg.mxu0
  %1598 = vrot.lane.b32.xlu0 %v1343, 112
  %v1599 = vpop.permute.xlu0 %1598
  %1600 = vrot.lane.b32.xlu0 %v1348, 112
  %v1601 = vpop.permute.xlu0 %1600
  %1602 = vrot.lane.b32.xlu0 %v1353, 112
  %v1603 = vpop.permute.xlu0 %1602
  %1604 = vrot.lane.b32.xlu0 %v1358, 112
  %v1605 = vpop.permute.xlu0 %1604
  %v1606 = vsel %vm1361, %v1599, 0
  %v1608 = vsel %vm1361, %v1601, 0
  %v1610 = vsel %vm1361, %v1603, 0
  %v1612 = vsel %vm1361, %v1605, 0
  %1614 = vmatprep.subr.mxu0 0.0
  %1615 = vmatpush1.msra.mxu0 0.0
  %1616 = vmatprep.subr.mxu0 0.0
  %1617 = vmatpush1.msra.mxu0 0.0
  %1618 = vmatprep.subr.mxu0 0.0
  %1619 = vmatpush1.msra.mxu0 0.0
  %1620 = vmatprep.subr.mxu0 0.0
  %1621 = vmatpush1.msra.mxu0 0.0
  %1622 = vmatprep.subr.mxu0 0.0
  %1623 = vmatpush1.msra.mxu0 0.0
  %1624 = vmatprep.subr.mxu0 0.0
  %1625 = vmatpush1.msra.mxu0 0.0
  %1626 = vmatprep.subr.mxu0 0.0
  %1627 = vmatpush1.msra.mxu0 0.0
  %1628 = vmatprep.subr.mxu0 0.0
  %1629 = vmatpush1.msra.mxu0 0.0
  %1630 = vmatprep.subr.mxu0 0.0
  %1631 = vmatpush1.msra.mxu0 0.0
  %1632 = vmatprep.subr.mxu0 0.0
  %1633 = vmatpush1.msra.mxu0 0.0
  %1634 = vmatprep.subr.mxu0 0.0
  %1635 = vmatpush1.msra.mxu0 0.0
  %1636 = vmatprep.subr.mxu0 0.0
  %1637 = vmatpush1.msra.mxu0 0.0
  %1638 = vmatprep.subr.mxu0 0.0
  %1639 = vmatpush1.msra.mxu0 0.0
  %1640 = vmatprep.subr.mxu0 0.0
  %1641 = vmatpush1.msra.mxu0 0.0
  %1642 = vmatprep.subr.mxu0 0.0
  %1643 = vmatpush1.msra.mxu0 %v1245
  %1644 = vmatprep.subr.mxu0 0.0
  %1645 = vmatpush1.msra.mxu0 %v1240
  %1646 = vmatprep.subr.mxu0 0.0
  %1647 = vmatpush2.msra.mxu0 0.0
  %1648 = vmatprep.subr.mxu0 0.0
  %1649 = vmatpush2.msra.mxu0 0.0
  %1650 = vmatprep.subr.mxu0 0.0
  %1651 = vmatpush2.msra.mxu0 0.0
  %1652 = vmatprep.subr.mxu0 0.0
  %1653 = vmatpush2.msra.mxu0 0.0
  %1654 = vmatprep.subr.mxu0 0.0
  %1655 = vmatpush2.msra.mxu0 0.0
  %1656 = vmatprep.subr.mxu0 0.0
  %1657 = vmatpush2.msra.mxu0 0.0
  %1658 = vmatprep.subr.mxu0 0.0
  %1659 = vmatpush2.msra.mxu0 0.0
  %1660 = vmatprep.subr.mxu0 0.0
  %1661 = vmatpush2.msra.mxu0 0.0
  %1662 = vmatprep.subr.mxu0 0.0
  %1663 = vmatpush2.msra.mxu0 0.0
  %1664 = vmatprep.subr.mxu0 0.0
  %1665 = vmatpush2.msra.mxu0 0.0
  %1666 = vmatprep.subr.mxu0 0.0
  %1667 = vmatpush2.msra.mxu0 0.0
  %1668 = vmatprep.subr.mxu0 0.0
  %1669 = vmatpush2.msra.mxu0 0.0
  %1670 = vmatprep.subr.mxu0 0.0
  %1671 = vmatpush2.msra.mxu0 0.0
  %1672 = vmatprep.subr.mxu0 0.0
  %1673 = vmatpush2.msra.mxu0 0.0
  %1674 = vmatprep.subr.mxu0 0.0
  %1675 = vmatpush2.msra.mxu0 0.0
  %1676 = vmatprep.subr.mxu0 0.0
  %1677 = vmatpush2.msra.mxu0 0.0
  %1678 = vmatprep.mubr.f32.mxu0 0.0
  %1679 = vmatmul.mubr.f32.gmra.mxu0 %v1606
  %v1680 = vpop.f32.mrf.mxu0
  %v1681 = vadd.f32 0.0, %v1680
  %v1682 = vpop.f32.mrf.mxu0
  %1683 = vmatprep.mubr.f32.mxu0 0.0
  %1684 = vmatmul.mubr.f32.gmra.mxu0 %v1608
  %v1685 = vpop.f32.mrf.mxu0
  %v1686 = vadd.f32 0.0, %v1685
  %v1687 = vpop.f32.mrf.mxu0
  %1688 = vmatprep.mubr.f32.mxu0 0.0
  %1689 = vmatmul.mubr.f32.gmra.mxu0 %v1610
  %v1690 = vpop.f32.mrf.mxu0
  %v1691 = vadd.f32 0.0, %v1690
  %v1692 = vpop.f32.mrf.mxu0
  %1693 = vmatprep.mubr.f32.mxu0 0.0
  %1694 = vmatmul.mubr.f32.gmra.mxu0 %v1612
  %v1695 = vpop.f32.mrf.mxu0
  %v1696 = vadd.f32 0.0, %v1695
  %v1697 = vpop.f32.mrf.mxu0
  %1698 = vdwg.mxu0
  %v1699 = vmul.f32 %v1681, 0.17677669
  %v1700 = vmul.f32 %v1686, 0.17677669
  %v1701 = vmul.f32 %v1691, 0.17677669
  %v1702 = vmul.f32 %v1696, 0.17677669
  %v1703 = vadd.f32 %v1699, %v29
  %v1704 = vadd.f32 %v1700, %v30
  %v1705 = vadd.f32 %v1701, %v31
  %v1706 = vadd.f32 %v1702, %v32
  %v1707 = vsel %vm88, %v1703, -inf
  %v1708 = vsel %vm88, %v1704, -inf
  %v1709 = vsel %vm88, %v1705, -inf
  %v1710 = vsel %vm88, %v1706, -inf
  %v1711 = vmax.f32 %v1707, %v1708
  %v1712 = vmax.f32 %v1709, %v1710
  %v1713 = vmax.f32 %v1711, %v1712
  %v1714 = vrot.slane %v1713, 4
  %v1715 = vmax.f32 %v1713, %v1714
  %v1716 = vrot.slane %v1715, 2
  %v1717 = vmax.f32 %v1715, %v1716
  %v1718 = vrot.slane %v1717, 1
  %v1719 = vmax.f32 %v1717, %v1718
  %v1720 = vsub.f32 %v1703, %v1719
  %v1721 = vsub.f32 %v1704, %v1719
  %v1722 = vsub.f32 %v1705, %v1719
  %v1723 = vsub.f32 %v1706, %v1719
  %v1724 = vmul.f32 %v1720, 1.442695
  %v1725 = vpow.pop %v1724
  %v1726 = vmul.f32 %v1721, 1.442695
  %v1727 = vpow.pop %v1726
  %v1728 = vmul.f32 %v1722, 1.442695
  %v1729 = vpow.pop %v1728
  %v1730 = vmul.f32 %v1723, 1.442695
  %v1731 = vpow.pop %v1730
  %v1732 = vsel %vm88, %v1725, 0.0
  %v1733 = vsel %vm88, %v1727, 0.0
  %v1734 = vadd.f32 %v1732, %v1733
  %v1735 = vsel %vm88, %v1729, 0.0
  %v1736 = vadd.f32 %v1734, %v1735
  %v1737 = vsel %vm88, %v1731, 0.0
  %v1738 = vadd.f32 %v1736, %v1737
  %v1739 = vrot.slane %v1738, 4
  %v1740 = vadd.f32 %v1738, %v1739
  %v1741 = vrot.slane %v1740, 2
  %v1742 = vadd.f32 %v1740, %v1741
  %v1743 = vrot.slane %v1742, 1
  %v1744 = vadd.f32 %v1742, %v1743
  %v1745 = vrcp.pop %v1744
  %v1746 = vmul.f32 %v1744, %v1745
  %v1747 = vsub.f32 2.0, %v1746
  %v1748 = vmul.f32 %v1745, %v1747
  %v1749 = vmul.f32 %v1725, %v1748
  %v1750 = vmul.f32 %v1727, %v1748
  %v1751 = vmul.f32 %v1729, %v1748
  %v1752 = vmul.f32 %v1731, %v1748
  %1755 = vrot.lane.b32.xlu0 %v1139, 96
  %v1756 = vpop.permute.xlu0 %1755
  %1757 = vrot.lane.b32.xlu0 %v1144, 96
  %v1758 = vpop.permute.xlu0 %1757
  %v1759 = vsel %vm88, %v1756, 0
  %v1761 = vsel %vm88, %v1758, 0
  %1763 = vmatprep.subr.mxu0 0.0
  %1764 = vmatpush1.msra.mxu0 0.0
  %1765 = vmatprep.subr.mxu0 0.0
  %1766 = vmatpush1.msra.mxu0 0.0
  %1767 = vmatprep.subr.mxu0 0.0
  %1768 = vmatpush1.msra.mxu0 0.0
  %1769 = vmatprep.subr.mxu0 0.0
  %1770 = vmatpush1.msra.mxu0 0.0
  %1771 = vmatprep.subr.mxu0 0.0
  %1772 = vmatpush1.msra.mxu0 0.0
  %1773 = vmatprep.subr.mxu0 0.0
  %1774 = vmatpush1.msra.mxu0 0.0
  %1775 = vmatprep.subr.mxu0 0.0
  %1776 = vmatpush1.msra.mxu0 0.0
  %1777 = vmatprep.subr.mxu0 0.0
  %1778 = vmatpush1.msra.mxu0 0.0
  %1779 = vmatprep.subr.mxu0 0.0
  %1780 = vmatpush1.msra.mxu0 0.0
  %1781 = vmatprep.subr.mxu0 0.0
  %1782 = vmatpush1.msra.mxu0 0.0
  %1783 = vmatprep.subr.mxu0 0.0
  %1784 = vmatpush1.msra.mxu0 0.0
  %1785 = vmatprep.subr.mxu0 0.0
  %1786 = vmatpush1.msra.mxu0 0.0
  %1787 = vmatprep.subr.mxu0 0.0
  %1788 = vmatpush1.msra.mxu0 %v1752
  %1789 = vmatprep.subr.mxu0 0.0
  %1790 = vmatpush1.msra.mxu0 %v1751
  %1791 = vmatprep.subr.mxu0 0.0
  %1792 = vmatpush1.msra.mxu0 %v1750
  %1793 = vmatprep.subr.mxu0 0.0
  %1794 = vmatpush1.msra.mxu0 %v1749
  %1795 = vmatprep.subr.mxu0 0.0
  %1796 = vmatpush2.msra.mxu0 0.0
  %1797 = vmatprep.subr.mxu0 0.0
  %1798 = vmatpush2.msra.mxu0 0.0
  %1799 = vmatprep.subr.mxu0 0.0
  %1800 = vmatpush2.msra.mxu0 0.0
  %1801 = vmatprep.subr.mxu0 0.0
  %1802 = vmatpush2.msra.mxu0 0.0
  %1803 = vmatprep.subr.mxu0 0.0
  %1804 = vmatpush2.msra.mxu0 0.0
  %1805 = vmatprep.subr.mxu0 0.0
  %1806 = vmatpush2.msra.mxu0 0.0
  %1807 = vmatprep.subr.mxu0 0.0
  %1808 = vmatpush2.msra.mxu0 0.0
  %1809 = vmatprep.subr.mxu0 0.0
  %1810 = vmatpush2.msra.mxu0 0.0
  %1811 = vmatprep.subr.mxu0 0.0
  %1812 = vmatpush2.msra.mxu0 0.0
  %1813 = vmatprep.subr.mxu0 0.0
  %1814 = vmatpush2.msra.mxu0 0.0
  %1815 = vmatprep.subr.mxu0 0.0
  %1816 = vmatpush2.msra.mxu0 0.0
  %1817 = vmatprep.subr.mxu0 0.0
  %1818 = vmatpush2.msra.mxu0 0.0
  %1819 = vmatprep.subr.mxu0 0.0
  %1820 = vmatpush2.msra.mxu0 0.0
  %1821 = vmatprep.subr.mxu0 0.0
  %1822 = vmatpush2.msra.mxu0 0.0
  %1823 = vmatprep.subr.mxu0 0.0
  %1824 = vmatpush2.msra.mxu0 0.0
  %1825 = vmatprep.subr.mxu0 0.0
  %1826 = vmatpush2.msra.mxu0 0.0
  %1827 = vmatprep.mubr.f32.mxu0 0.0
  %1828 = vmatmul.mubr.f32.gmra.mxu0 %v1759
  %v1829 = vpop.f32.mrf.mxu0
  %v1830 = vadd.f32 0.0, %v1829
  %v1831 = vpop.f32.mrf.mxu0
  %1832 = vmatprep.mubr.f32.mxu0 0.0
  %1833 = vmatmul.mubr.f32.gmra.mxu0 %v1761
  %v1834 = vpop.f32.mrf.mxu0
  %v1835 = vadd.f32 0.0, %v1834
  %v1836 = vpop.f32.mrf.mxu0
  %1837 = vdwg.mxu0
  %v1838 = vlaneseq
  %v1839 = vshrl.u32 %v1838, 7
  %v1840 = vsub.s32 0, %v1839
  %v1841 = vrot.slane %v855, %v1840
  %v1842 = vadd.f32 %v1129, %v1841
  %v1843 = vadd.f32 %v1134, %v1841
  %v1844 = vadd.f32 %v1139, %v1841
  %v1845 = vadd.f32 %v1144, %v1841
  %v1847 = vsel %vm88, %v33, 0
  %v1850 = vsel %vm88, %v34, 0
  %v1853 = vsel %vm88, %v35, 0
  %v1856 = vsel %vm88, %v36, 0
  %1858 = vmatprep.subr.mxu0 0.0
  %1859 = vmatpush1.msra.mxu0 0.0
  %1860 = vmatprep.subr.mxu0 0.0
  %1861 = vmatpush1.msra.mxu0 0.0
  %1862 = vmatprep.subr.mxu0 0.0
  %1863 = vmatpush1.msra.mxu0 0.0
  %1864 = vmatprep.subr.mxu0 0.0
  %1865 = vmatpush1.msra.mxu0 0.0
  %1866 = vmatprep.subr.mxu0 0.0
  %1867 = vmatpush1.msra.mxu0 0.0
  %1868 = vmatprep.subr.mxu0 0.0
  %1869 = vmatpush1.msra.mxu0 0.0
  %1870 = vmatprep.subr.mxu0 0.0
  %1871 = vmatpush1.msra.mxu0 0.0
  %1872 = vmatprep.subr.mxu0 0.0
  %1873 = vmatpush1.msra.mxu0 0.0
  %1874 = vmatprep.subr.mxu0 0.0
  %1875 = vmatpush1.msra.mxu0 0.0
  %1876 = vmatprep.subr.mxu0 0.0
  %1877 = vmatpush1.msra.mxu0 0.0
  %1878 = vmatprep.subr.mxu0 0.0
  %1879 = vmatpush1.msra.mxu0 0.0
  %1880 = vmatprep.subr.mxu0 0.0
  %1881 = vmatpush1.msra.mxu0 0.0
  %1882 = vmatprep.subr.mxu0 0.0
  %1883 = vmatpush1.msra.mxu0 %v1047
  %1884 = vmatprep.subr.mxu0 0.0
  %1885 = vmatpush1.msra.mxu0 %v1045
  %1886 = vmatprep.subr.mxu0 0.0
  %1887 = vmatpush1.msra.mxu0 %v1039
  %1888 = vmatprep.subr.mxu0 0.0
  %1889 = vmatpush1.msra.mxu0 %v1034
  %1890 = vmatprep.subr.mxu0 0.0
  %1891 = vmatpush2.msra.mxu0 0.0
  %1892 = vmatprep.subr.mxu0 0.0
  %1893 = vmatpush2.msra.mxu0 0.0
  %1894 = vmatprep.subr.mxu0 0.0
  %1895 = vmatpush2.msra.mxu0 0.0
  %1896 = vmatprep.subr.mxu0 0.0
  %1897 = vmatpush2.msra.mxu0 0.0
  %1898 = vmatprep.subr.mxu0 0.0
  %1899 = vmatpush2.msra.mxu0 0.0
  %1900 = vmatprep.subr.mxu0 0.0
  %1901 = vmatpush2.msra.mxu0 0.0
  %1902 = vmatprep.subr.mxu0 0.0
  %1903 = vmatpush2.msra.mxu0 0.0
  %1904 = vmatprep.subr.mxu0 0.0
  %1905 = vmatpush2.msra.mxu0 0.0
  %1906 = vmatprep.subr.mxu0 0.0
  %1907 = vmatpush2.msra.mxu0 0.0
  %1908 = vmatprep.subr.mxu0 0.0
  %1909 = vmatpush2.msra.mxu0 0.0
  %1910 = vmatprep.subr.mxu0 0.0
  %1911 = vmatpush2.msra.mxu0 0.0
  %1912 = vmatprep.subr.mxu0 0.0
  %1913 = vmatpush2.msra.mxu0 0.0
  %1914 = vmatprep.subr.mxu0 0.0
  %1915 = vmatpush2.msra.mxu0 0.0
  %1916 = vmatprep.subr.mxu0 0.0
  %1917 = vmatpush2.msra.mxu0 0.0
  %1918 = vmatprep.subr.mxu0 0.0
  %1919 = vmatpush2.msra.mxu0 0.0
  %1920 = vmatprep.subr.mxu0 0.0
  %1921 = vmatpush2.msra.mxu0 0.0
  %1922 = vmatprep.mubr.f32.mxu0 0.0
  %1923 = vmatmul.mubr.f32.gmra.mxu0 %v1847
  %v1924 = vpop.f32.mrf.mxu0
  %v1925 = vadd.f32 %v1842, %v1924
  %v1926 = vpop.f32.mrf.mxu0
  %1927 = vmatprep.mubr.f32.mxu0 0.0
  %1928 = vmatmul.mubr.f32.gmra.mxu0 %v1850
  %v1929 = vpop.f32.mrf.mxu0
  %v1930 = vadd.f32 %v1843, %v1929
  %v1931 = vpop.f32.mrf.mxu0
  %1932 = vmatprep.mubr.f32.mxu0 0.0
  %1933 = vmatmul.mubr.f32.gmra.mxu0 %v1853
  %v1934 = vpop.f32.mrf.mxu0
  %v1935 = vadd.f32 %v1844, %v1934
  %v1936 = vpop.f32.mrf.mxu0
  %1937 = vmatprep.mubr.f32.mxu0 0.0
  %1938 = vmatmul.mubr.f32.gmra.mxu0 %v1856
  %v1939 = vpop.f32.mrf.mxu0
  %v1940 = vadd.f32 %v1845, %v1939
  %v1941 = vpop.f32.mrf.mxu0
  %1942 = vdwg.mxu0
  %v1943 = vadd.f32 %v1925, %v1590
  %v1944 = vadd.f32 %v1930, %v1595
  %v1945 = vadd.f32 %v1935, %v1830
  %v1946 = vadd.f32 %v1940, %v1835
  %v1947 = vmul.f32 %v1943, 0.5
  %v1948 = vmul.f32 %v1944, 0.5
  %v1949 = vmul.f32 %v1945, 0.5
  %v1950 = vmul.f32 %v1946, 0.5
  %v1951 = vmul.f32 %v1943, 0.70710677
  %v1952 = vmul.f32 %v1944, 0.70710677
  %v1953 = vmul.f32 %v1945, 0.70710677
  %v1954 = vmul.f32 %v1946, 0.70710677
  %vm1955 = vcmp.lt.f32.partialorder %v1951, 0.0
  %vm1956 = vcmp.lt.f32.partialorder %v1952, 0.0
  %vm1957 = vcmp.lt.f32.partialorder %v1953, 0.0
  %vm1958 = vcmp.lt.f32.partialorder %v1954, 0.0
  %v1959 = vsel %vm1955, -1.0, 1.0
  %v1960 = vsel %vm1956, -1.0, 1.0
  %v1961 = vsel %vm1957, -1.0, 1.0
  %v1962 = vsel %vm1958, -1.0, 1.0
  %v1963 = vand.u32 2147483647, %v1951
  %v1964 = vand.u32 2147483647, %v1952
  %v1965 = vand.u32 2147483647, %v1953
  %v1966 = vand.u32 2147483647, %v1954
  %v1967 = vmul.f32 %v1963, 0.3275911
  %v1968 = vmul.f32 %v1964, 0.3275911
  %v1969 = vmul.f32 %v1965, 0.3275911
  %v1970 = vmul.f32 %v1966, 0.3275911
  %v1971 = vadd.f32 %v1967, 1.0
  %v1972 = vadd.f32 %v1968, 1.0
  %v1973 = vadd.f32 %v1969, 1.0
  %v1974 = vadd.f32 %v1970, 1.0
  %v1975 = vrcp.pop %v1971
  %v1976 = vmul.f32 1.0, %v1975
  %v1977 = vrcp.pop %v1972
  %v1978 = vmul.f32 1.0, %v1977
  %v1979 = vrcp.pop %v1973
  %v1980 = vmul.f32 1.0, %v1979
  %v1981 = vrcp.pop %v1974
  %v1982 = vmul.f32 1.0, %v1981
  %v1983 = vmul.f32 %v1976, 1.0614054
  %v1984 = vmul.f32 %v1978, 1.0614054
  %v1985 = vmul.f32 %v1980, 1.0614054
  %v1986 = vmul.f32 %v1982, 1.0614054
  %v1987 = vadd.f32 %v1983, -1.4531521
  %v1988 = vadd.f32 %v1984, -1.4531521
  %v1989 = vadd.f32 %v1985, -1.4531521
  %v1990 = vadd.f32 %v1986, -1.4531521
  %v1991 = vmul.f32 %v1987, %v1976
  %v1992 = vmul.f32 %v1988, %v1978
  %v1993 = vmul.f32 %v1989, %v1980
  %v1994 = vmul.f32 %v1990, %v1982
  %v1995 = vadd.f32 %v1991, 1.4214138
  %v1996 = vadd.f32 %v1992, 1.4214138
  %v1997 = vadd.f32 %v1993, 1.4214138
  %v1998 = vadd.f32 %v1994, 1.4214138
  %v1999 = vmul.f32 %v1995, %v1976
  %v2000 = vmul.f32 %v1996, %v1978
  %v2001 = vmul.f32 %v1997, %v1980
  %v2002 = vmul.f32 %v1998, %v1982
  %v2003 = vadd.f32 %v1999, -0.28449672
  %v2004 = vadd.f32 %v2000, -0.28449672
  %v2005 = vadd.f32 %v2001, -0.28449672
  %v2006 = vadd.f32 %v2002, -0.28449672
  %v2007 = vmul.f32 %v2003, %v1976
  %v2008 = vmul.f32 %v2004, %v1978
  %v2009 = vmul.f32 %v2005, %v1980
  %v2010 = vmul.f32 %v2006, %v1982
  %v2011 = vadd.f32 %v2007, 0.2548296
  %v2012 = vadd.f32 %v2008, 0.2548296
  %v2013 = vadd.f32 %v2009, 0.2548296
  %v2014 = vadd.f32 %v2010, 0.2548296
  %v2015 = vmul.f32 %v2011, %v1976
  %v2016 = vmul.f32 %v2012, %v1978
  %v2017 = vmul.f32 %v2013, %v1980
  %v2018 = vmul.f32 %v2014, %v1982
  %v2019 = vsub.f32 0.0, %v1963
  %v2020 = vsub.f32 0.0, %v1964
  %v2021 = vsub.f32 0.0, %v1965
  %v2022 = vsub.f32 0.0, %v1966
  %v2023 = vmul.f32 %v2019, %v1963
  %v2024 = vmul.f32 %v2020, %v1964
  %v2025 = vmul.f32 %v2021, %v1965
  %v2026 = vmul.f32 %v2022, %v1966
  %v2027 = vmul.f32 %v2023, 1.442695
  %v2028 = vpow.pop %v2027
  %v2029 = vmul.f32 %v2024, 1.442695
  %v2030 = vpow.pop %v2029
  %v2031 = vmul.f32 %v2025, 1.442695
  %v2032 = vpow.pop %v2031
  %v2033 = vmul.f32 %v2026, 1.442695
  %v2034 = vpow.pop %v2033
  %v2035 = vmul.f32 %v2015, %v2028
  %v2036 = vmul.f32 %v2016, %v2030
  %v2037 = vmul.f32 %v2017, %v2032
  %v2038 = vmul.f32 %v2018, %v2034
  %v2039 = vsub.f32 1.0, %v2035
  %v2040 = vsub.f32 1.0, %v2036
  %v2041 = vsub.f32 1.0, %v2037
  %v2042 = vsub.f32 1.0, %v2038
  %v2043 = vmul.f32 %v1959, %v2039
  %v2044 = vmul.f32 %v1960, %v2040
  %v2045 = vmul.f32 %v1961, %v2041
  %v2046 = vmul.f32 %v1962, %v2042
  %v2047 = vadd.f32 %v2043, 1.0
  %v2048 = vadd.f32 %v2044, 1.0
  %v2049 = vadd.f32 %v2045, 1.0
  %v2050 = vadd.f32 %v2046, 1.0
  %v2051 = vmul.f32 %v1947, %v2047
  %v2052 = vmul.f32 %v1948, %v2048
  %v2053 = vmul.f32 %v1949, %v2049
  %v2054 = vmul.f32 %v1950, %v2050
  %v2055 = vld [vmem:[%s1 + $0xf8] sm:$0xff]
  %v2056 = vld [vmem:[%s1 + $0x100] sm:$0xff]
  %v2057 = vld [vmem:[%s1 + $0x108] sm:$0xff]
  %v2058 = vld [vmem:[%s1 + $0x110] sm:$0xff]
  %v2059 = vld [vmem:[%s1 + $0x118] sm:$0xff]
  %v2060 = vld [vmem:[%s1 + $0x120] sm:$0xff]
  %v2061 = vld [vmem:[%s1 + $0x128] sm:$0xff]
  %v2062 = vld [vmem:[%s1 + $0x130] sm:$0xff]
  %s2063 = scalar_lea.vmem %s3, 32
  %v2064 = vld [vmem:[%s2063] sm:$0xff]
  %v2065 = vld [vmem:[%s2063 + $0x8] sm:$0xff]
  %v2066 = vld [vmem:[%s2063 + $0x10] sm:$0xff]
  %v2067 = vld [vmem:[%s2063 + $0x18] sm:$0xff]
  %s2068 = scalar_lea.vmem %s4, 128
  %v2069 = vld [vmem:[%s2068] sm:$0xff]
  %v2070 = vld [vmem:[%s2068 + $0x8] sm:$0xff]
  %v2071 = vld [vmem:[%s2068 + $0x10] sm:$0xff]
  %v2072 = vld [vmem:[%s2068 + $0x18] sm:$0xff]
  %v2073 = vld [vmem:[%s2068 + $0x20] sm:$0xff]
  %v2074 = vld [vmem:[%s2068 + $0x28] sm:$0xff]
  %v2075 = vld [vmem:[%s2068 + $0x30] sm:$0xff]
  %v2076 = vld [vmem:[%s2068 + $0x38] sm:$0xff]
  %v2077 = vld [vmem:[%s2068 + $0x40] sm:$0xff]
  %v2078 = vld [vmem:[%s2068 + $0x48] sm:$0xff]
  %v2079 = vld [vmem:[%s2068 + $0x50] sm:$0xff]
  %v2080 = vld [vmem:[%s2068 + $0x58] sm:$0xff]
  %v2081 = vld [vmem:[%s2068 + $0x60] sm:$0xff]
  %v2082 = vld [vmem:[%s2068 + $0x68] sm:$0xff]
  %v2083 = vld [vmem:[%s2068 + $0x70] sm:$0xff]
  %v2084 = vld [vmem:[%s2068 + $0x78] sm:$0xff]
  %v2085 = vld [vmem:[%s1 + $0x19] sm:$0x1]
  %2086 = vmatprep.subr.mxu0 0.0
  %2087 = vmatpush1.msra.mxu0 0.0
  %2088 = vmatprep.subr.mxu0 0.0
  %2089 = vmatpush1.msra.mxu0 0.0
  %2090 = vmatprep.subr.mxu0 0.0
  %2091 = vmatpush1.msra.mxu0 0.0
  %2092 = vmatprep.subr.mxu0 0.0
  %2093 = vmatpush1.msra.mxu0 0.0
  %2094 = vmatprep.subr.mxu0 0.0
  %2095 = vmatpush1.msra.mxu0 0.0
  %2096 = vmatprep.subr.mxu0 0.0
  %2097 = vmatpush1.msra.mxu0 0.0
  %2098 = vmatprep.subr.mxu0 0.0
  %2099 = vmatpush1.msra.mxu0 0.0
  %2100 = vmatprep.subr.mxu0 0.0
  %2101 = vmatpush1.msra.mxu0 0.0
  %2102 = vmatprep.subr.mxu0 0.0
  %2103 = vmatpush1.msra.mxu0 0.0
  %2104 = vmatprep.subr.mxu0 0.0
  %2105 = vmatpush1.msra.mxu0 0.0
  %2106 = vmatprep.subr.mxu0 0.0
  %2107 = vmatpush1.msra.mxu0 0.0
  %2108 = vmatprep.subr.mxu0 0.0
  %2109 = vmatpush1.msra.mxu0 0.0
  %2110 = vmatprep.subr.mxu0 0.0
  %2111 = vmatpush1.msra.mxu0 %v2054
  %2112 = vmatprep.subr.mxu0 0.0
  %2113 = vmatpush1.msra.mxu0 %v2053
  %2114 = vmatprep.subr.mxu0 0.0
  %2115 = vmatpush1.msra.mxu0 %v2052
  %2116 = vmatprep.subr.mxu0 0.0
  %2117 = vmatpush1.msra.mxu0 %v2051
  %2118 = vmatprep.subr.mxu0 0.0
  %2119 = vmatpush2.msra.mxu0 0.0
  %2120 = vmatprep.subr.mxu0 0.0
  %2121 = vmatpush2.msra.mxu0 0.0
  %2122 = vmatprep.subr.mxu0 0.0
  %2123 = vmatpush2.msra.mxu0 0.0
  %2124 = vmatprep.subr.mxu0 0.0
  %2125 = vmatpush2.msra.mxu0 0.0
  %2126 = vmatprep.subr.mxu0 0.0
  %2127 = vmatpush2.msra.mxu0 0.0
  %2128 = vmatprep.subr.mxu0 0.0
  %2129 = vmatpush2.msra.mxu0 0.0
  %2130 = vmatprep.subr.mxu0 0.0
  %2131 = vmatpush2.msra.mxu0 0.0
  %2132 = vmatprep.subr.mxu0 0.0
  %2133 = vmatpush2.msra.mxu0 0.0
  %2134 = vmatprep.subr.mxu0 0.0
  %2135 = vmatpush2.msra.mxu0 0.0
  %2136 = vmatprep.subr.mxu0 0.0
  %2137 = vmatpush2.msra.mxu0 0.0
  %2138 = vmatprep.subr.mxu0 0.0
  %2139 = vmatpush2.msra.mxu0 0.0
  %2140 = vmatprep.subr.mxu0 0.0
  %2141 = vmatpush2.msra.mxu0 0.0
  %2142 = vmatprep.subr.mxu0 0.0
  %2143 = vmatpush2.msra.mxu0 0.0
  %2144 = vmatprep.subr.mxu0 0.0
  %2145 = vmatpush2.msra.mxu0 0.0
  %2146 = vmatprep.subr.mxu0 0.0
  %2147 = vmatpush2.msra.mxu0 0.0
  %2148 = vmatprep.subr.mxu0 0.0
  %2149 = vmatpush2.msra.mxu0 0.0
  %2150 = vmatprep.mubr.f32.mxu0 0.0
  %2151 = vmatmul.mubr.f32.gmra.mxu0 %v857
  %v2152 = vpop.f32.mrf.mxu0
  %v2153 = vadd.f32 0.0, %v2152
  %v2154 = vpop.f32.mrf.mxu0
  %2155 = vmatprep.mubr.f32.mxu0 0.0
  %2156 = vmatmul.mubr.f32.gmra.mxu0 %v860
  %v2157 = vpop.f32.mrf.mxu0
  %v2158 = vadd.f32 0.0, %v2157
  %v2159 = vpop.f32.mrf.mxu0
  %2160 = vdwg.mxu0
  %2163 = vrot.lane.b32.xlu0 %v2153, 32
  %v2164 = vpop.permute.xlu0 %2163
  %2165 = vrot.lane.b32.xlu0 %v2158, 32
  %v2166 = vpop.permute.xlu0 %2165
  %2169 = vrot.lane.b32.xlu0 %v2153, 64
  %v2170 = vpop.permute.xlu0 %2169
  %2171 = vrot.lane.b32.xlu0 %v2158, 64
  %v2172 = vpop.permute.xlu0 %2171
  %2175 = vrot.lane.b32.xlu0 %v2153, 96
  %v2176 = vpop.permute.xlu0 %2175
  %2177 = vrot.lane.b32.xlu0 %v2158, 96
  %v2178 = vpop.permute.xlu0 %2177
  %v2181 = vsel %vm88, %v2153, %v2164
  %v2182 = vsel %vm88, %v2158, %v2166
  %v2183 = vsel %vm959, %v2181, %v2170
  %v2184 = vsel %vm959, %v2182, %v2172
  %v2185 = vsel %vm962, %v2183, %v2176
  %v2186 = vsel %vm962, %v2184, %v2178
  %v2187 = vmul.f32 %v2185, %v58
  %v2188 = vmul.f32 %v2186, %v59
  %2189 = vmatprep.subr.mxu0 0.0
  %2190 = vmatpush1.msra.mxu0 %v2084
  %2191 = vmatprep.subr.mxu0 0.0
  %2192 = vmatpush1.msra.mxu0 %v2083
  %2193 = vmatprep.subr.mxu0 0.0
  %2194 = vmatpush1.msra.mxu0 %v2082
  %2195 = vmatprep.subr.mxu0 0.0
  %2196 = vmatpush1.msra.mxu0 %v2081
  %2197 = vmatprep.subr.mxu0 0.0
  %2198 = vmatpush1.msra.mxu0 %v2080
  %2199 = vmatprep.subr.mxu0 0.0
  %2200 = vmatpush1.msra.mxu0 %v2079
  %2201 = vmatprep.subr.mxu0 0.0
  %2202 = vmatpush1.msra.mxu0 %v2078
  %2203 = vmatprep.subr.mxu0 0.0
  %2204 = vmatpush1.msra.mxu0 %v2077
  %2205 = vmatprep.subr.mxu0 0.0
  %2206 = vmatpush1.msra.mxu0 %v2076
  %2207 = vmatprep.subr.mxu0 0.0
  %2208 = vmatpush1.msra.mxu0 %v2075
  %2209 = vmatprep.subr.mxu0 0.0
  %2210 = vmatpush1.msra.mxu0 %v2074
  %2211 = vmatprep.subr.mxu0 0.0
  %2212 = vmatpush1.msra.mxu0 %v2073
  %2213 = vmatprep.subr.mxu0 0.0
  %2214 = vmatpush1.msra.mxu0 %v2072
  %2215 = vmatprep.subr.mxu0 0.0
  %2216 = vmatpush1.msra.mxu0 %v2071
  %2217 = vmatprep.subr.mxu0 0.0
  %2218 = vmatpush1.msra.mxu0 %v2070
  %2219 = vmatprep.subr.mxu0 0.0
  %2220 = vmatpush1.msra.mxu0 %v2069
  %2221 = vmatprep.subr.mxu0 0.0
  %2222 = vmatpush2.msra.mxu0 0.0
  %2223 = vmatprep.subr.mxu0 0.0
  %2224 = vmatpush2.msra.mxu0 0.0
  %2225 = vmatprep.subr.mxu0 0.0
  %2226 = vmatpush2.msra.mxu0 0.0
  %2227 = vmatprep.subr.mxu0 0.0
  %2228 = vmatpush2.msra.mxu0 0.0
  %2229 = vmatprep.subr.mxu0 0.0
  %2230 = vmatpush2.msra.mxu0 0.0
  %2231 = vmatprep.subr.mxu0 0.0
  %2232 = vmatpush2.msra.mxu0 0.0
  %2233 = vmatprep.subr.mxu0 0.0
  %2234 = vmatpush2.msra.mxu0 0.0
  %2235 = vmatprep.subr.mxu0 0.0
  %2236 = vmatpush2.msra.mxu0 0.0
  %2237 = vmatprep.subr.mxu0 0.0
  %2238 = vmatpush2.msra.mxu0 0.0
  %2239 = vmatprep.subr.mxu0 0.0
  %2240 = vmatpush2.msra.mxu0 0.0
  %2241 = vmatprep.subr.mxu0 0.0
  %2242 = vmatpush2.msra.mxu0 0.0
  %2243 = vmatprep.subr.mxu0 0.0
  %2244 = vmatpush2.msra.mxu0 0.0
  %2245 = vmatprep.subr.mxu0 0.0
  %2246 = vmatpush2.msra.mxu0 0.0
  %2247 = vmatprep.subr.mxu0 0.0
  %2248 = vmatpush2.msra.mxu0 0.0
  %2249 = vmatprep.subr.mxu0 0.0
  %2250 = vmatpush2.msra.mxu0 0.0
  %2251 = vmatprep.subr.mxu0 0.0
  %2252 = vmatpush2.msra.mxu0 0.0
  %2253 = vmatprep.mubr.f32.mxu0 0.0
  %2254 = vmatmul.mubr.f32.gmra.mxu0 %v2187
  %v2255 = vpop.f32.mrf.mxu0
  %v2256 = vadd.f32 0.0, %v2255
  %v2257 = vpop.f32.mrf.mxu0
  %2258 = vmatprep.mubr.f32.mxu0 0.0
  %2259 = vmatmul.mubr.f32.gmra.mxu0 %v2188
  %v2260 = vpop.f32.mrf.mxu0
  %v2261 = vadd.f32 0.0, %v2260
  %v2262 = vpop.f32.mrf.mxu0
  %2263 = vdwg.mxu0
  %2266 = vrot.lane.b32.xlu0 %v2256, 96
  %v2267 = vpop.permute.xlu0 %2266
  %2268 = vrot.lane.b32.xlu0 %v2261, 96
  %v2269 = vpop.permute.xlu0 %2268
  %v2273 = vsel %vm88, %v2051, 0
  %v2276 = vsel %vm88, %v2052, 0
  %v2279 = vsel %vm88, %v2053, 0
  %v2282 = vsel %vm88, %v2054, 0
  %2284 = vmatprep.subr.mxu0 0.0
  %2285 = vmatpush1.msra.mxu0 0.0
  %2286 = vmatprep.subr.mxu0 0.0
  %2287 = vmatpush1.msra.mxu0 0.0
  %2288 = vmatprep.subr.mxu0 0.0
  %2289 = vmatpush1.msra.mxu0 0.0
  %2290 = vmatprep.subr.mxu0 0.0
  %2291 = vmatpush1.msra.mxu0 0.0
  %2292 = vmatprep.subr.mxu0 0.0
  %2293 = vmatpush1.msra.mxu0 0.0
  %2294 = vmatprep.subr.mxu0 0.0
  %2295 = vmatpush1.msra.mxu0 0.0
  %2296 = vmatprep.subr.mxu0 0.0
  %2297 = vmatpush1.msra.mxu0 0.0
  %2298 = vmatprep.subr.mxu0 0.0
  %2299 = vmatpush1.msra.mxu0 0.0
  %2300 = vmatprep.subr.mxu0 0.0
  %2301 = vmatpush1.msra.mxu0 0.0
  %2302 = vmatprep.subr.mxu0 0.0
  %2303 = vmatpush1.msra.mxu0 0.0
  %2304 = vmatprep.subr.mxu0 0.0
  %2305 = vmatpush1.msra.mxu0 0.0
  %2306 = vmatprep.subr.mxu0 0.0
  %2307 = vmatpush1.msra.mxu0 0.0
  %2308 = vmatprep.subr.mxu0 0.0
  %2309 = vmatpush1.msra.mxu0 %v2067
  %2310 = vmatprep.subr.mxu0 0.0
  %2311 = vmatpush1.msra.mxu0 %v2066
  %2312 = vmatprep.subr.mxu0 0.0
  %2313 = vmatpush1.msra.mxu0 %v2065
  %2314 = vmatprep.subr.mxu0 0.0
  %2315 = vmatpush1.msra.mxu0 %v2064
  %2316 = vmatprep.subr.mxu0 0.0
  %2317 = vmatpush2.msra.mxu0 0.0
  %2318 = vmatprep.subr.mxu0 0.0
  %2319 = vmatpush2.msra.mxu0 0.0
  %2320 = vmatprep.subr.mxu0 0.0
  %2321 = vmatpush2.msra.mxu0 0.0
  %2322 = vmatprep.subr.mxu0 0.0
  %2323 = vmatpush2.msra.mxu0 0.0
  %2324 = vmatprep.subr.mxu0 0.0
  %2325 = vmatpush2.msra.mxu0 0.0
  %2326 = vmatprep.subr.mxu0 0.0
  %2327 = vmatpush2.msra.mxu0 0.0
  %2328 = vmatprep.subr.mxu0 0.0
  %2329 = vmatpush2.msra.mxu0 0.0
  %2330 = vmatprep.subr.mxu0 0.0
  %2331 = vmatpush2.msra.mxu0 0.0
  %2332 = vmatprep.subr.mxu0 0.0
  %2333 = vmatpush2.msra.mxu0 0.0
  %2334 = vmatprep.subr.mxu0 0.0
  %2335 = vmatpush2.msra.mxu0 0.0
  %2336 = vmatprep.subr.mxu0 0.0
  %2337 = vmatpush2.msra.mxu0 0.0
  %2338 = vmatprep.subr.mxu0 0.0
  %2339 = vmatpush2.msra.mxu0 0.0
  %2340 = vmatprep.subr.mxu0 0.0
  %2341 = vmatpush2.msra.mxu0 0.0
  %2342 = vmatprep.subr.mxu0 0.0
  %2343 = vmatpush2.msra.mxu0 0.0
  %2344 = vmatprep.subr.mxu0 0.0
  %2345 = vmatpush2.msra.mxu0 0.0
  %2346 = vmatprep.subr.mxu0 0.0
  %2347 = vmatpush2.msra.mxu0 0.0
  %2348 = vmatprep.mubr.f32.mxu0 0.0
  %2349 = vmatmul.mubr.f32.gmra.mxu0 %v2273
  %v2350 = vpop.f32.mrf.mxu0
  %v2351 = vadd.f32 0.0, %v2350
  %v2352 = vpop.f32.mrf.mxu0
  %2353 = vmatprep.mubr.f32.mxu0 0.0
  %2354 = vmatmul.mubr.f32.gmra.mxu0 %v2276
  %v2355 = vpop.f32.mrf.mxu0
  %v2356 = vadd.f32 0.0, %v2355
  %v2357 = vpop.f32.mrf.mxu0
  %2358 = vmatprep.mubr.f32.mxu0 0.0
  %2359 = vmatmul.mubr.f32.gmra.mxu0 %v2279
  %v2360 = vpop.f32.mrf.mxu0
  %v2361 = vadd.f32 0.0, %v2360
  %v2362 = vpop.f32.mrf.mxu0
  %2363 = vmatprep.mubr.f32.mxu0 0.0
  %2364 = vmatmul.mubr.f32.gmra.mxu0 %v2282
  %v2365 = vpop.f32.mrf.mxu0
  %v2366 = vadd.f32 0.0, %v2365
  %v2367 = vpop.f32.mrf.mxu0
  %2368 = vdwg.mxu0
  %v2369 = vadd.f32 %v2051, %v703
  %v2370 = vadd.f32 %v2052, %v704
  %v2371 = vadd.f32 %v2053, %v705
  %v2372 = vadd.f32 %v2054, %v706
  %v2374 = vsel %vm88, %v2369, 0
  %v2377 = vsel %vm88, %v2370, 0
  %v2380 = vsel %vm88, %v2371, 0
  %v2383 = vsel %vm88, %v2372, 0
  %2385 = vmatprep.subr.mxu0 0.0
  %2386 = vmatpush1.msra.mxu0 0.0
  %2387 = vmatprep.subr.mxu0 0.0
  %2388 = vmatpush1.msra.mxu0 0.0
  %2389 = vmatprep.subr.mxu0 0.0
  %2390 = vmatpush1.msra.mxu0 0.0
  %2391 = vmatprep.subr.mxu0 0.0
  %2392 = vmatpush1.msra.mxu0 0.0
  %2393 = vmatprep.subr.mxu0 0.0
  %2394 = vmatpush1.msra.mxu0 0.0
  %2395 = vmatprep.subr.mxu0 0.0
  %2396 = vmatpush1.msra.mxu0 0.0
  %2397 = vmatprep.subr.mxu0 0.0
  %2398 = vmatpush1.msra.mxu0 0.0
  %2399 = vmatprep.subr.mxu0 0.0
  %2400 = vmatpush1.msra.mxu0 0.0
  %2401 = vmatprep.subr.mxu0 0.0
  %2402 = vmatpush1.msra.mxu0 0.0
  %2403 = vmatprep.subr.mxu0 0.0
  %2404 = vmatpush1.msra.mxu0 0.0
  %2405 = vmatprep.subr.mxu0 0.0
  %2406 = vmatpush1.msra.mxu0 0.0
  %2407 = vmatprep.subr.mxu0 0.0
  %2408 = vmatpush1.msra.mxu0 0.0
  %2409 = vmatprep.subr.mxu0 0.0
  %2410 = vmatpush1.msra.mxu0 %v2058
  %2411 = vmatprep.subr.mxu0 0.0
  %2412 = vmatpush1.msra.mxu0 %v2057
  %2413 = vmatprep.subr.mxu0 0.0
  %2414 = vmatpush1.msra.mxu0 %v2056
  %2415 = vmatprep.subr.mxu0 0.0
  %2416 = vmatpush1.msra.mxu0 %v2055
  %2417 = vmatprep.subr.mxu0 0.0
  %2418 = vmatpush2.msra.mxu0 0.0
  %2419 = vmatprep.subr.mxu0 0.0
  %2420 = vmatpush2.msra.mxu0 0.0
  %2421 = vmatprep.subr.mxu0 0.0
  %2422 = vmatpush2.msra.mxu0 0.0
  %2423 = vmatprep.subr.mxu0 0.0
  %2424 = vmatpush2.msra.mxu0 0.0
  %2425 = vmatprep.subr.mxu0 0.0
  %2426 = vmatpush2.msra.mxu0 0.0
  %2427 = vmatprep.subr.mxu0 0.0
  %2428 = vmatpush2.msra.mxu0 0.0
  %2429 = vmatprep.subr.mxu0 0.0
  %2430 = vmatpush2.msra.mxu0 0.0
  %2431 = vmatprep.subr.mxu0 0.0
  %2432 = vmatpush2.msra.mxu0 0.0
  %2433 = vmatprep.subr.mxu0 0.0
  %2434 = vmatpush2.msra.mxu0 0.0
  %2435 = vmatprep.subr.mxu0 0.0
  %2436 = vmatpush2.msra.mxu0 0.0
  %2437 = vmatprep.subr.mxu0 0.0
  %2438 = vmatpush2.msra.mxu0 0.0
  %2439 = vmatprep.subr.mxu0 0.0
  %2440 = vmatpush2.msra.mxu0 0.0
  %2441 = vmatprep.subr.mxu0 0.0
  %2442 = vmatpush2.msra.mxu0 0.0
  %2443 = vmatprep.subr.mxu0 0.0
  %2444 = vmatpush2.msra.mxu0 0.0
  %2445 = vmatprep.subr.mxu0 0.0
  %2446 = vmatpush2.msra.mxu0 0.0
  %2447 = vmatprep.subr.mxu0 0.0
  %2448 = vmatpush2.msra.mxu0 0.0
  %2449 = vmatprep.mubr.f32.mxu0 0.0
  %2450 = vmatmul.mubr.f32.gmra.mxu0 %v2374
  %v2451 = vpop.f32.mrf.mxu0
  %v2452 = vadd.f32 0.0, %v2451
  %v2453 = vpop.f32.mrf.mxu0
  %2454 = vmatprep.mubr.f32.mxu0 0.0
  %2455 = vmatmul.mubr.f32.gmra.mxu0 %v2377
  %v2456 = vpop.f32.mrf.mxu0
  %v2457 = vadd.f32 0.0, %v2456
  %v2458 = vpop.f32.mrf.mxu0
  %2459 = vmatprep.mubr.f32.mxu0 0.0
  %2460 = vmatmul.mubr.f32.gmra.mxu0 %v2380
  %v2461 = vpop.f32.mrf.mxu0
  %v2462 = vadd.f32 0.0, %v2461
  %v2463 = vpop.f32.mrf.mxu0
  %2464 = vmatprep.mubr.f32.mxu0 0.0
  %2465 = vmatmul.mubr.f32.gmra.mxu0 %v2383
  %v2466 = vpop.f32.mrf.mxu0
  %v2467 = vadd.f32 0.0, %v2466
  %v2468 = vpop.f32.mrf.mxu0
  %2469 = vdwg.mxu0
  %v2470 = vadd.f32 %v2051, %v587
  %v2471 = vadd.f32 %v2052, %v588
  %v2472 = vadd.f32 %v2053, %v589
  %v2473 = vadd.f32 %v2054, %v590
  %v2475 = vsel %vm88, %v2059, 0
  %v2478 = vsel %vm88, %v2060, 0
  %v2481 = vsel %vm88, %v2061, 0
  %v2484 = vsel %vm88, %v2062, 0
  %v2487 = vsel %vm88, %v2470, 0
  %v2490 = vsel %vm88, %v2471, 0
  %v2493 = vsel %vm88, %v2472, 0
  %v2496 = vsel %vm88, %v2473, 0
  %2498 = vmatprep.subr.mxu0 0.0
  %2499 = vmatpush1.xpose.msra.mxu0 0.0
  %2500 = vmatprep.subr.mxu0 0.0
  %2501 = vmatpush1.xpose.msra.mxu0 0.0
  %2502 = vmatprep.subr.mxu0 0.0
  %2503 = vmatpush1.xpose.msra.mxu0 0.0
  %2504 = vmatprep.subr.mxu0 0.0
  %2505 = vmatpush1.xpose.msra.mxu0 0.0
  %2506 = vmatprep.subr.mxu0 0.0
  %2507 = vmatpush1.xpose.msra.mxu0 0.0
  %2508 = vmatprep.subr.mxu0 0.0
  %2509 = vmatpush1.xpose.msra.mxu0 0.0
  %2510 = vmatprep.subr.mxu0 0.0
  %2511 = vmatpush1.xpose.msra.mxu0 0.0
  %2512 = vmatprep.subr.mxu0 0.0
  %2513 = vmatpush1.xpose.msra.mxu0 0.0
  %2514 = vmatprep.subr.mxu0 0.0
  %2515 = vmatpush1.xpose.msra.mxu0 0.0
  %2516 = vmatprep.subr.mxu0 0.0
  %2517 = vmatpush1.xpose.msra.mxu0 0.0
  %2518 = vmatprep.subr.mxu0 0.0
  %2519 = vmatpush1.xpose.msra.mxu0 0.0
  %2520 = vmatprep.subr.mxu0 0.0
  %2521 = vmatpush1.xpose.msra.mxu0 0.0
  %2522 = vmatprep.subr.mxu0 0.0
  %2523 = vmatpush1.xpose.msra.mxu0 %v2496
  %2524 = vmatprep.subr.mxu0 0.0
  %2525 = vmatpush1.xpose.msra.mxu0 %v2493
  %2526 = vmatprep.subr.mxu0 0.0
  %2527 = vmatpush1.xpose.msra.mxu0 %v2490
  %2528 = vmatprep.subr.mxu0 0.0
  %2529 = vmatpush1.xpose.msra.mxu0 %v2487
  %2530 = vmatprep.subr.mxu0 0.0
  %2531 = vmatpush2.xpose.msra.mxu0 0.0
  %2532 = vmatprep.subr.mxu0 0.0
  %2533 = vmatpush2.xpose.msra.mxu0 0.0
  %2534 = vmatprep.subr.mxu0 0.0
  %2535 = vmatpush2.xpose.msra.mxu0 0.0
  %2536 = vmatprep.subr.mxu0 0.0
  %2537 = vmatpush2.xpose.msra.mxu0 0.0
  %2538 = vmatprep.subr.mxu0 0.0
  %2539 = vmatpush2.xpose.msra.mxu0 0.0
  %2540 = vmatprep.subr.mxu0 0.0
  %2541 = vmatpush2.xpose.msra.mxu0 0.0
  %2542 = vmatprep.subr.mxu0 0.0
  %2543 = vmatpush2.xpose.msra.mxu0 0.0
  %2544 = vmatprep.subr.mxu0 0.0
  %2545 = vmatpush2.xpose.msra.mxu0 0.0
  %2546 = vmatprep.subr.mxu0 0.0
  %2547 = vmatpush2.xpose.msra.mxu0 0.0
  %2548 = vmatprep.subr.mxu0 0.0
  %2549 = vmatpush2.xpose.msra.mxu0 0.0
  %2550 = vmatprep.subr.mxu0 0.0
  %2551 = vmatpush2.xpose.msra.mxu0 0.0
  %2552 = vmatprep.subr.mxu0 0.0
  %2553 = vmatpush2.xpose.msra.mxu0 0.0
  %2554 = vmatprep.subr.mxu0 0.0
  %2555 = vmatpush2.xpose.msra.mxu0 0.0
  %2556 = vmatprep.subr.mxu0 0.0
  %2557 = vmatpush2.xpose.msra.mxu0 0.0
  %2558 = vmatprep.subr.mxu0 0.0
  %2559 = vmatpush2.xpose.msra.mxu0 0.0
  %2560 = vmatprep.subr.mxu0 0.0
  %2561 = vmatpush2.xpose.msra.mxu0 0.0
  %2562 = vmatprep.mubr.f32.mxu0 0.0
  %2563 = vmatmul.mubr.f32.gmra.mxu0 %v2475
  %v2564 = vpop.f32.mrf.mxu0
  %v2565 = vadd.f32 0.0, %v2564
  %v2566 = vpop.f32.mrf.mxu0
  %2567 = vmatprep.mubr.f32.mxu0 0.0
  %2568 = vmatmul.mubr.f32.gmra.mxu0 %v2478
  %v2569 = vpop.f32.mrf.mxu0
  %v2570 = vadd.f32 0.0, %v2569
  %v2571 = vpop.f32.mrf.mxu0
  %2572 = vmatprep.mubr.f32.mxu0 0.0
  %2573 = vmatmul.mubr.f32.gmra.mxu0 %v2481
  %v2574 = vpop.f32.mrf.mxu0
  %v2575 = vadd.f32 0.0, %v2574
  %v2576 = vpop.f32.mrf.mxu0
  %2577 = vmatprep.mubr.f32.mxu0 0.0
  %2578 = vmatmul.mubr.f32.gmra.mxu0 %v2484
  %v2579 = vpop.f32.mrf.mxu0
  %v2580 = vadd.f32 0.0, %v2579
  %v2581 = vpop.f32.mrf.mxu0
  %2582 = vdwg.mxu0
  %v2584 = vsel %vm1361, %v2565, 0
  %v2587 = vsel %vm1361, %v2570, 0
  %v2590 = vsel %vm1361, %v2575, 0
  %v2593 = vsel %vm1361, %v2580, 0
  %2595 = vmatprep.subr.mxu0 0.0
  %2596 = vmatpush1.msra.mxu0 0.0
  %2597 = vmatprep.subr.mxu0 0.0
  %2598 = vmatpush1.msra.mxu0 0.0
  %2599 = vmatprep.subr.mxu0 0.0
  %2600 = vmatpush1.msra.mxu0 0.0
  %2601 = vmatprep.subr.mxu0 0.0
  %2602 = vmatpush1.msra.mxu0 0.0
  %2603 = vmatprep.subr.mxu0 0.0
  %2604 = vmatpush1.msra.mxu0 0.0
  %2605 = vmatprep.subr.mxu0 0.0
  %2606 = vmatpush1.msra.mxu0 0.0
  %2607 = vmatprep.subr.mxu0 0.0
  %2608 = vmatpush1.msra.mxu0 0.0
  %2609 = vmatprep.subr.mxu0 0.0
  %2610 = vmatpush1.msra.mxu0 0.0
  %2611 = vmatprep.subr.mxu0 0.0
  %2612 = vmatpush1.msra.mxu0 0.0
  %2613 = vmatprep.subr.mxu0 0.0
  %2614 = vmatpush1.msra.mxu0 0.0
  %2615 = vmatprep.subr.mxu0 0.0
  %2616 = vmatpush1.msra.mxu0 0.0
  %2617 = vmatprep.subr.mxu0 0.0
  %2618 = vmatpush1.msra.mxu0 0.0
  %2619 = vmatprep.subr.mxu0 0.0
  %2620 = vmatpush1.msra.mxu0 0.0
  %2621 = vmatprep.subr.mxu0 0.0
  %2622 = vmatpush1.msra.mxu0 0.0
  %2623 = vmatprep.subr.mxu0 0.0
  %2624 = vmatpush1.msra.mxu0 %v2457
  %2625 = vmatprep.subr.mxu0 0.0
  %2626 = vmatpush1.msra.mxu0 %v2452
  %2627 = vmatprep.subr.mxu0 0.0
  %2628 = vmatpush2.msra.mxu0 0.0
  %2629 = vmatprep.subr.mxu0 0.0
  %2630 = vmatpush2.msra.mxu0 0.0
  %2631 = vmatprep.subr.mxu0 0.0
  %2632 = vmatpush2.msra.mxu0 0.0
  %2633 = vmatprep.subr.mxu0 0.0
  %2634 = vmatpush2.msra.mxu0 0.0
  %2635 = vmatprep.subr.mxu0 0.0
  %2636 = vmatpush2.msra.mxu0 0.0
  %2637 = vmatprep.subr.mxu0 0.0
  %2638 = vmatpush2.msra.mxu0 0.0
  %2639 = vmatprep.subr.mxu0 0.0
  %2640 = vmatpush2.msra.mxu0 0.0
  %2641 = vmatprep.subr.mxu0 0.0
  %2642 = vmatpush2.msra.mxu0 0.0
  %2643 = vmatprep.subr.mxu0 0.0
  %2644 = vmatpush2.msra.mxu0 0.0
  %2645 = vmatprep.subr.mxu0 0.0
  %2646 = vmatpush2.msra.mxu0 0.0
  %2647 = vmatprep.subr.mxu0 0.0
  %2648 = vmatpush2.msra.mxu0 0.0
  %2649 = vmatprep.subr.mxu0 0.0
  %2650 = vmatpush2.msra.mxu0 0.0
  %2651 = vmatprep.subr.mxu0 0.0
  %2652 = vmatpush2.msra.mxu0 0.0
  %2653 = vmatprep.subr.mxu0 0.0
  %2654 = vmatpush2.msra.mxu0 0.0
  %2655 = vmatprep.subr.mxu0 0.0
  %2656 = vmatpush2.msra.mxu0 0.0
  %2657 = vmatprep.subr.mxu0 0.0
  %2658 = vmatpush2.msra.mxu0 0.0
  %2659 = vmatprep.mubr.f32.mxu0 0.0
  %2660 = vmatmul.mubr.f32.gmra.mxu0 %v2584
  %v2661 = vpop.f32.mrf.mxu0
  %v2662 = vadd.f32 0.0, %v2661
  %v2663 = vpop.f32.mrf.mxu0
  %2664 = vmatprep.mubr.f32.mxu0 0.0
  %2665 = vmatmul.mubr.f32.gmra.mxu0 %v2587
  %v2666 = vpop.f32.mrf.mxu0
  %v2667 = vadd.f32 0.0, %v2666
  %v2668 = vpop.f32.mrf.mxu0
  %2669 = vmatprep.mubr.f32.mxu0 0.0
  %2670 = vmatmul.mubr.f32.gmra.mxu0 %v2590
  %v2671 = vpop.f32.mrf.mxu0
  %v2672 = vadd.f32 0.0, %v2671
  %v2673 = vpop.f32.mrf.mxu0
  %2674 = vmatprep.mubr.f32.mxu0 0.0
  %2675 = vmatmul.mubr.f32.gmra.mxu0 %v2593
  %v2676 = vpop.f32.mrf.mxu0
  %v2677 = vadd.f32 0.0, %v2676
  %v2678 = vpop.f32.mrf.mxu0
  %2679 = vdwg.mxu0
  %v2680 = vmul.f32 %v2662, 0.17677669
  %v2681 = vmul.f32 %v2667, 0.17677669
  %v2682 = vmul.f32 %v2672, 0.17677669
  %v2683 = vmul.f32 %v2677, 0.17677669
  %v2684 = vadd.f32 %v2680, %v29
  %v2685 = vadd.f32 %v2681, %v30
  %v2686 = vadd.f32 %v2682, %v31
  %v2687 = vadd.f32 %v2683, %v32
  %v2688 = vsel %vm88, %v2684, -inf
  %v2689 = vsel %vm88, %v2685, -inf
  %v2690 = vsel %vm88, %v2686, -inf
  %v2691 = vsel %vm88, %v2687, -inf
  %v2692 = vmax.f32 %v2688, %v2689
  %v2693 = vmax.f32 %v2690, %v2691
  %v2694 = vmax.f32 %v2692, %v2693
  %v2695 = vrot.slane %v2694, 4
  %v2696 = vmax.f32 %v2694, %v2695
  %v2697 = vrot.slane %v2696, 2
  %v2698 = vmax.f32 %v2696, %v2697
  %v2699 = vrot.slane %v2698, 1
  %v2700 = vmax.f32 %v2698, %v2699
  %v2701 = vsub.f32 %v2684, %v2700
  %v2702 = vsub.f32 %v2685, %v2700
  %v2703 = vsub.f32 %v2686, %v2700
  %v2704 = vsub.f32 %v2687, %v2700
  %v2705 = vmul.f32 %v2701, 1.442695
  %v2706 = vpow.pop %v2705
  %v2707 = vmul.f32 %v2702, 1.442695
  %v2708 = vpow.pop %v2707
  %v2709 = vmul.f32 %v2703, 1.442695
  %v2710 = vpow.pop %v2709
  %v2711 = vmul.f32 %v2704, 1.442695
  %v2712 = vpow.pop %v2711
  %v2713 = vsel %vm88, %v2706, 0.0
  %v2714 = vsel %vm88, %v2708, 0.0
  %v2715 = vadd.f32 %v2713, %v2714
  %v2716 = vsel %vm88, %v2710, 0.0
  %v2717 = vadd.f32 %v2715, %v2716
  %v2718 = vsel %vm88, %v2712, 0.0
  %v2719 = vadd.f32 %v2717, %v2718
  %v2720 = vrot.slane %v2719, 4
  %v2721 = vadd.f32 %v2719, %v2720
  %v2722 = vrot.slane %v2721, 2
  %v2723 = vadd.f32 %v2721, %v2722
  %v2724 = vrot.slane %v2723, 1
  %v2725 = vadd.f32 %v2723, %v2724
  %v2726 = vrcp.pop %v2725
  %v2727 = vmul.f32 %v2725, %v2726
  %v2728 = vsub.f32 2.0, %v2727
  %v2729 = vmul.f32 %v2726, %v2728
  %v2730 = vmul.f32 %v2706, %v2729
  %v2731 = vmul.f32 %v2708, %v2729
  %v2732 = vmul.f32 %v2710, %v2729
  %v2733 = vmul.f32 %v2712, %v2729
  %2736 = vrot.lane.b32.xlu0 %v2351, 96
  %v2737 = vpop.permute.xlu0 %2736
  %2738 = vrot.lane.b32.xlu0 %v2356, 96
  %v2739 = vpop.permute.xlu0 %2738
  %v2740 = vsel %vm88, %v2737, 0
  %v2742 = vsel %vm88, %v2739, 0
  %2744 = vmatprep.subr.mxu0 0.0
  %2745 = vmatpush1.msra.mxu0 0.0
  %2746 = vmatprep.subr.mxu0 0.0
  %2747 = vmatpush1.msra.mxu0 0.0
  %2748 = vmatprep.subr.mxu0 0.0
  %2749 = vmatpush1.msra.mxu0 0.0
  %2750 = vmatprep.subr.mxu0 0.0
  %2751 = vmatpush1.msra.mxu0 0.0
  %2752 = vmatprep.subr.mxu0 0.0
  %2753 = vmatpush1.msra.mxu0 0.0
  %2754 = vmatprep.subr.mxu0 0.0
  %2755 = vmatpush1.msra.mxu0 0.0
  %2756 = vmatprep.subr.mxu0 0.0
  %2757 = vmatpush1.msra.mxu0 0.0
  %2758 = vmatprep.subr.mxu0 0.0
  %2759 = vmatpush1.msra.mxu0 0.0
  %2760 = vmatprep.subr.mxu0 0.0
  %2761 = vmatpush1.msra.mxu0 0.0
  %2762 = vmatprep.subr.mxu0 0.0
  %2763 = vmatpush1.msra.mxu0 0.0
  %2764 = vmatprep.subr.mxu0 0.0
  %2765 = vmatpush1.msra.mxu0 0.0
  %2766 = vmatprep.subr.mxu0 0.0
  %2767 = vmatpush1.msra.mxu0 0.0
  %2768 = vmatprep.subr.mxu0 0.0
  %2769 = vmatpush1.msra.mxu0 %v2733
  %2770 = vmatprep.subr.mxu0 0.0
  %2771 = vmatpush1.msra.mxu0 %v2732
  %2772 = vmatprep.subr.mxu0 0.0
  %2773 = vmatpush1.msra.mxu0 %v2731
  %2774 = vmatprep.subr.mxu0 0.0
  %2775 = vmatpush1.msra.mxu0 %v2730
  %2776 = vmatprep.subr.mxu0 0.0
  %2777 = vmatpush2.msra.mxu0 0.0
  %2778 = vmatprep.subr.mxu0 0.0
  %2779 = vmatpush2.msra.mxu0 0.0
  %2780 = vmatprep.subr.mxu0 0.0
  %2781 = vmatpush2.msra.mxu0 0.0
  %2782 = vmatprep.subr.mxu0 0.0
  %2783 = vmatpush2.msra.mxu0 0.0
  %2784 = vmatprep.subr.mxu0 0.0
  %2785 = vmatpush2.msra.mxu0 0.0
  %2786 = vmatprep.subr.mxu0 0.0
  %2787 = vmatpush2.msra.mxu0 0.0
  %2788 = vmatprep.subr.mxu0 0.0
  %2789 = vmatpush2.msra.mxu0 0.0
  %2790 = vmatprep.subr.mxu0 0.0
  %2791 = vmatpush2.msra.mxu0 0.0
  %2792 = vmatprep.subr.mxu0 0.0
  %2793 = vmatpush2.msra.mxu0 0.0
  %2794 = vmatprep.subr.mxu0 0.0
  %2795 = vmatpush2.msra.mxu0 0.0
  %2796 = vmatprep.subr.mxu0 0.0
  %2797 = vmatpush2.msra.mxu0 0.0
  %2798 = vmatprep.subr.mxu0 0.0
  %2799 = vmatpush2.msra.mxu0 0.0
  %2800 = vmatprep.subr.mxu0 0.0
  %2801 = vmatpush2.msra.mxu0 0.0
  %2802 = vmatprep.subr.mxu0 0.0
  %2803 = vmatpush2.msra.mxu0 0.0
  %2804 = vmatprep.subr.mxu0 0.0
  %2805 = vmatpush2.msra.mxu0 0.0
  %2806 = vmatprep.subr.mxu0 0.0
  %2807 = vmatpush2.msra.mxu0 0.0
  %2808 = vmatprep.mubr.f32.mxu0 0.0
  %2809 = vmatmul.mubr.f32.gmra.mxu0 %v2740
  %v2810 = vpop.f32.mrf.mxu0
  %v2811 = vadd.f32 0.0, %v2810
  %v2812 = vpop.f32.mrf.mxu0
  %2813 = vmatprep.mubr.f32.mxu0 0.0
  %2814 = vmatmul.mubr.f32.gmra.mxu0 %v2742
  %v2815 = vpop.f32.mrf.mxu0
  %v2816 = vadd.f32 0.0, %v2815
  %v2817 = vpop.f32.mrf.mxu0
  %2818 = vdwg.mxu0
  %2819 = vrot.lane.b32.xlu0 %v2565, 112
  %v2820 = vpop.permute.xlu0 %2819
  %2821 = vrot.lane.b32.xlu0 %v2570, 112
  %v2822 = vpop.permute.xlu0 %2821
  %2823 = vrot.lane.b32.xlu0 %v2575, 112
  %v2824 = vpop.permute.xlu0 %2823
  %2825 = vrot.lane.b32.xlu0 %v2580, 112
  %v2826 = vpop.permute.xlu0 %2825
  %v2827 = vsel %vm1361, %v2820, 0
  %v2829 = vsel %vm1361, %v2822, 0
  %v2831 = vsel %vm1361, %v2824, 0
  %v2833 = vsel %vm1361, %v2826, 0
  %2835 = vmatprep.subr.mxu0 0.0
  %2836 = vmatpush1.msra.mxu0 0.0
  %2837 = vmatprep.subr.mxu0 0.0
  %2838 = vmatpush1.msra.mxu0 0.0
  %2839 = vmatprep.subr.mxu0 0.0
  %2840 = vmatpush1.msra.mxu0 0.0
  %2841 = vmatprep.subr.mxu0 0.0
  %2842 = vmatpush1.msra.mxu0 0.0
  %2843 = vmatprep.subr.mxu0 0.0
  %2844 = vmatpush1.msra.mxu0 0.0
  %2845 = vmatprep.subr.mxu0 0.0
  %2846 = vmatpush1.msra.mxu0 0.0
  %2847 = vmatprep.subr.mxu0 0.0
  %2848 = vmatpush1.msra.mxu0 0.0
  %2849 = vmatprep.subr.mxu0 0.0
  %2850 = vmatpush1.msra.mxu0 0.0
  %2851 = vmatprep.subr.mxu0 0.0
  %2852 = vmatpush1.msra.mxu0 0.0
  %2853 = vmatprep.subr.mxu0 0.0
  %2854 = vmatpush1.msra.mxu0 0.0
  %2855 = vmatprep.subr.mxu0 0.0
  %2856 = vmatpush1.msra.mxu0 0.0
  %2857 = vmatprep.subr.mxu0 0.0
  %2858 = vmatpush1.msra.mxu0 0.0
  %2859 = vmatprep.subr.mxu0 0.0
  %2860 = vmatpush1.msra.mxu0 0.0
  %2861 = vmatprep.subr.mxu0 0.0
  %2862 = vmatpush1.msra.mxu0 0.0
  %2863 = vmatprep.subr.mxu0 0.0
  %2864 = vmatpush1.msra.mxu0 %v2467
  %2865 = vmatprep.subr.mxu0 0.0
  %2866 = vmatpush1.msra.mxu0 %v2462
  %2867 = vmatprep.subr.mxu0 0.0
  %2868 = vmatpush2.msra.mxu0 0.0
  %2869 = vmatprep.subr.mxu0 0.0
  %2870 = vmatpush2.msra.mxu0 0.0
  %2871 = vmatprep.subr.mxu0 0.0
  %2872 = vmatpush2.msra.mxu0 0.0
  %2873 = vmatprep.subr.mxu0 0.0
  %2874 = vmatpush2.msra.mxu0 0.0
  %2875 = vmatprep.subr.mxu0 0.0
  %2876 = vmatpush2.msra.mxu0 0.0
  %2877 = vmatprep.subr.mxu0 0.0
  %2878 = vmatpush2.msra.mxu0 0.0
  %2879 = vmatprep.subr.mxu0 0.0
  %2880 = vmatpush2.msra.mxu0 0.0
  %2881 = vmatprep.subr.mxu0 0.0
  %2882 = vmatpush2.msra.mxu0 0.0
  %2883 = vmatprep.subr.mxu0 0.0
  %2884 = vmatpush2.msra.mxu0 0.0
  %2885 = vmatprep.subr.mxu0 0.0
  %2886 = vmatpush2.msra.mxu0 0.0
  %2887 = vmatprep.subr.mxu0 0.0
  %2888 = vmatpush2.msra.mxu0 0.0
  %2889 = vmatprep.subr.mxu0 0.0
  %2890 = vmatpush2.msra.mxu0 0.0
  %2891 = vmatprep.subr.mxu0 0.0
  %2892 = vmatpush2.msra.mxu0 0.0
  %2893 = vmatprep.subr.mxu0 0.0
  %2894 = vmatpush2.msra.mxu0 0.0
  %2895 = vmatprep.subr.mxu0 0.0
  %2896 = vmatpush2.msra.mxu0 0.0
  %2897 = vmatprep.subr.mxu0 0.0
  %2898 = vmatpush2.msra.mxu0 0.0
  %2899 = vmatprep.mubr.f32.mxu0 0.0
  %2900 = vmatmul.mubr.f32.gmra.mxu0 %v2827
  %v2901 = vpop.f32.mrf.mxu0
  %v2902 = vadd.f32 0.0, %v2901
  %v2903 = vpop.f32.mrf.mxu0
  %2904 = vmatprep.mubr.f32.mxu0 0.0
  %2905 = vmatmul.mubr.f32.gmra.mxu0 %v2829
  %v2906 = vpop.f32.mrf.mxu0
  %v2907 = vadd.f32 0.0, %v2906
  %v2908 = vpop.f32.mrf.mxu0
  %2909 = vmatprep.mubr.f32.mxu0 0.0
  %2910 = vmatmul.mubr.f32.gmra.mxu0 %v2831
  %v2911 = vpop.f32.mrf.mxu0
  %v2912 = vadd.f32 0.0, %v2911
  %v2913 = vpop.f32.mrf.mxu0
  %2914 = vmatprep.mubr.f32.mxu0 0.0
  %2915 = vmatmul.mubr.f32.gmra.mxu0 %v2833
  %v2916 = vpop.f32.mrf.mxu0
  %v2917 = vadd.f32 0.0, %v2916
  %v2918 = vpop.f32.mrf.mxu0
  %2919 = vdwg.mxu0
  %v2920 = vmul.f32 %v2902, 0.17677669
  %v2921 = vmul.f32 %v2907, 0.17677669
  %v2922 = vmul.f32 %v2912, 0.17677669
  %v2923 = vmul.f32 %v2917, 0.17677669
  %v2924 = vadd.f32 %v2920, %v29
  %v2925 = vadd.f32 %v2921, %v30
  %v2926 = vadd.f32 %v2922, %v31
  %v2927 = vadd.f32 %v2923, %v32
  %v2928 = vsel %vm88, %v2924, -inf
  %v2929 = vsel %vm88, %v2925, -inf
  %v2930 = vsel %vm88, %v2926, -inf
  %v2931 = vsel %vm88, %v2927, -inf
  %v2932 = vmax.f32 %v2928, %v2929
  %v2933 = vmax.f32 %v2930, %v2931
  %v2934 = vmax.f32 %v2932, %v2933
  %v2935 = vrot.slane %v2934, 4
  %v2936 = vmax.f32 %v2934, %v2935
  %v2937 = vrot.slane %v2936, 2
  %v2938 = vmax.f32 %v2936, %v2937
  %v2939 = vrot.slane %v2938, 1
  %v2940 = vmax.f32 %v2938, %v2939
  %v2941 = vsub.f32 %v2924, %v2940
  %v2942 = vsub.f32 %v2925, %v2940
  %v2943 = vsub.f32 %v2926, %v2940
  %v2944 = vsub.f32 %v2927, %v2940
  %v2945 = vmul.f32 %v2941, 1.442695
  %v2946 = vpow.pop %v2945
  %v2947 = vmul.f32 %v2942, 1.442695
  %v2948 = vpow.pop %v2947
  %v2949 = vmul.f32 %v2943, 1.442695
  %v2950 = vpow.pop %v2949
  %v2951 = vmul.f32 %v2944, 1.442695
  %v2952 = vpow.pop %v2951
  %v2953 = vsel %vm88, %v2946, 0.0
  %v2954 = vsel %vm88, %v2948, 0.0
  %v2955 = vadd.f32 %v2953, %v2954
  %v2956 = vsel %vm88, %v2950, 0.0
  %v2957 = vadd.f32 %v2955, %v2956
  %v2958 = vsel %vm88, %v2952, 0.0
  %v2959 = vadd.f32 %v2957, %v2958
  %v2960 = vrot.slane %v2959, 4
  %v2961 = vadd.f32 %v2959, %v2960
  %v2962 = vrot.slane %v2961, 2
  %v2963 = vadd.f32 %v2961, %v2962
  %v2964 = vrot.slane %v2963, 1
  %v2965 = vadd.f32 %v2963, %v2964
  %v2966 = vrcp.pop %v2965
  %v2967 = vmul.f32 %v2965, %v2966
  %v2968 = vsub.f32 2.0, %v2967
  %v2969 = vmul.f32 %v2966, %v2968
  %v2970 = vmul.f32 %v2946, %v2969
  %v2971 = vmul.f32 %v2948, %v2969
  %v2972 = vmul.f32 %v2950, %v2969
  %v2973 = vmul.f32 %v2952, %v2969
  %2976 = vrot.lane.b32.xlu0 %v2361, 96
  %v2977 = vpop.permute.xlu0 %2976
  %2978 = vrot.lane.b32.xlu0 %v2366, 96
  %v2979 = vpop.permute.xlu0 %2978
  %v2980 = vsel %vm88, %v2977, 0
  %v2982 = vsel %vm88, %v2979, 0
  %2984 = vmatprep.subr.mxu0 0.0
  %2985 = vmatpush1.msra.mxu0 0.0
  %2986 = vmatprep.subr.mxu0 0.0
  %2987 = vmatpush1.msra.mxu0 0.0
  %2988 = vmatprep.subr.mxu0 0.0
  %2989 = vmatpush1.msra.mxu0 0.0
  %2990 = vmatprep.subr.mxu0 0.0
  %2991 = vmatpush1.msra.mxu0 0.0
  %2992 = vmatprep.subr.mxu0 0.0
  %2993 = vmatpush1.msra.mxu0 0.0
  %2994 = vmatprep.subr.mxu0 0.0
  %2995 = vmatpush1.msra.mxu0 0.0
  %2996 = vmatprep.subr.mxu0 0.0
  %2997 = vmatpush1.msra.mxu0 0.0
  %2998 = vmatprep.subr.mxu0 0.0
  %2999 = vmatpush1.msra.mxu0 0.0
  %3000 = vmatprep.subr.mxu0 0.0
  %3001 = vmatpush1.msra.mxu0 0.0
  %3002 = vmatprep.subr.mxu0 0.0
  %3003 = vmatpush1.msra.mxu0 0.0
  %3004 = vmatprep.subr.mxu0 0.0
  %3005 = vmatpush1.msra.mxu0 0.0
  %3006 = vmatprep.subr.mxu0 0.0
  %3007 = vmatpush1.msra.mxu0 0.0
  %3008 = vmatprep.subr.mxu0 0.0
  %3009 = vmatpush1.msra.mxu0 %v2973
  %3010 = vmatprep.subr.mxu0 0.0
  %3011 = vmatpush1.msra.mxu0 %v2972
  %3012 = vmatprep.subr.mxu0 0.0
  %3013 = vmatpush1.msra.mxu0 %v2971
  %3014 = vmatprep.subr.mxu0 0.0
  %3015 = vmatpush1.msra.mxu0 %v2970
  %3016 = vmatprep.subr.mxu0 0.0
  %3017 = vmatpush2.msra.mxu0 0.0
  %3018 = vmatprep.subr.mxu0 0.0
  %3019 = vmatpush2.msra.mxu0 0.0
  %3020 = vmatprep.subr.mxu0 0.0
  %3021 = vmatpush2.msra.mxu0 0.0
  %3022 = vmatprep.subr.mxu0 0.0
  %3023 = vmatpush2.msra.mxu0 0.0
  %3024 = vmatprep.subr.mxu0 0.0
  %3025 = vmatpush2.msra.mxu0 0.0
  %3026 = vmatprep.subr.mxu0 0.0
  %3027 = vmatpush2.msra.mxu0 0.0
  %3028 = vmatprep.subr.mxu0 0.0
  %3029 = vmatpush2.msra.mxu0 0.0
  %3030 = vmatprep.subr.mxu0 0.0
  %3031 = vmatpush2.msra.mxu0 0.0
  %3032 = vmatprep.subr.mxu0 0.0
  %3033 = vmatpush2.msra.mxu0 0.0
  %3034 = vmatprep.subr.mxu0 0.0
  %3035 = vmatpush2.msra.mxu0 0.0
  %3036 = vmatprep.subr.mxu0 0.0
  %3037 = vmatpush2.msra.mxu0 0.0
  %3038 = vmatprep.subr.mxu0 0.0
  %3039 = vmatpush2.msra.mxu0 0.0
  %3040 = vmatprep.subr.mxu0 0.0
  %3041 = vmatpush2.msra.mxu0 0.0
  %3042 = vmatprep.subr.mxu0 0.0
  %3043 = vmatpush2.msra.mxu0 0.0
  %3044 = vmatprep.subr.mxu0 0.0
  %3045 = vmatpush2.msra.mxu0 0.0
  %3046 = vmatprep.subr.mxu0 0.0
  %3047 = vmatpush2.msra.mxu0 0.0
  %3048 = vmatprep.mubr.f32.mxu0 0.0
  %3049 = vmatmul.mubr.f32.gmra.mxu0 %v2980
  %v3050 = vpop.f32.mrf.mxu0
  %v3051 = vadd.f32 0.0, %v3050
  %v3052 = vpop.f32.mrf.mxu0
  %3053 = vmatprep.mubr.f32.mxu0 0.0
  %3054 = vmatmul.mubr.f32.gmra.mxu0 %v2982
  %v3055 = vpop.f32.mrf.mxu0
  %v3056 = vadd.f32 0.0, %v3055
  %v3057 = vpop.f32.mrf.mxu0
  %3058 = vdwg.mxu0
  %v3059 = vlaneseq
  %v3060 = vshrl.u32 %v3059, 7
  %v3061 = vsub.s32 0, %v3060
  %v3062 = vrot.slane %v2085, %v3061
  %v3063 = vadd.f32 %v2351, %v3062
  %v3064 = vadd.f32 %v2356, %v3062
  %v3065 = vadd.f32 %v2361, %v3062
  %v3066 = vadd.f32 %v2366, %v3062
  %3067 = vmatprep.subr.mxu0 0.0
  %3068 = vmatpush1.msra.mxu0 0.0
  %3069 = vmatprep.subr.mxu0 0.0
  %3070 = vmatpush1.msra.mxu0 0.0
  %3071 = vmatprep.subr.mxu0 0.0
  %3072 = vmatpush1.msra.mxu0 0.0
  %3073 = vmatprep.subr.mxu0 0.0
  %3074 = vmatpush1.msra.mxu0 0.0
  %3075 = vmatprep.subr.mxu0 0.0
  %3076 = vmatpush1.msra.mxu0 0.0
  %3077 = vmatprep.subr.mxu0 0.0
  %3078 = vmatpush1.msra.mxu0 0.0
  %3079 = vmatprep.subr.mxu0 0.0
  %3080 = vmatpush1.msra.mxu0 0.0
  %3081 = vmatprep.subr.mxu0 0.0
  %3082 = vmatpush1.msra.mxu0 0.0
  %3083 = vmatprep.subr.mxu0 0.0
  %3084 = vmatpush1.msra.mxu0 0.0
  %3085 = vmatprep.subr.mxu0 0.0
  %3086 = vmatpush1.msra.mxu0 0.0
  %3087 = vmatprep.subr.mxu0 0.0
  %3088 = vmatpush1.msra.mxu0 0.0
  %3089 = vmatprep.subr.mxu0 0.0
  %3090 = vmatpush1.msra.mxu0 0.0
  %3091 = vmatprep.subr.mxu0 0.0
  %3092 = vmatpush1.msra.mxu0 %v2269
  %3093 = vmatprep.subr.mxu0 0.0
  %3094 = vmatpush1.msra.mxu0 %v2267
  %3095 = vmatprep.subr.mxu0 0.0
  %3096 = vmatpush1.msra.mxu0 %v2261
  %3097 = vmatprep.subr.mxu0 0.0
  %3098 = vmatpush1.msra.mxu0 %v2256
  %3099 = vmatprep.subr.mxu0 0.0
  %3100 = vmatpush2.msra.mxu0 0.0
  %3101 = vmatprep.subr.mxu0 0.0
  %3102 = vmatpush2.msra.mxu0 0.0
  %3103 = vmatprep.subr.mxu0 0.0
  %3104 = vmatpush2.msra.mxu0 0.0
  %3105 = vmatprep.subr.mxu0 0.0
  %3106 = vmatpush2.msra.mxu0 0.0
  %3107 = vmatprep.subr.mxu0 0.0
  %3108 = vmatpush2.msra.mxu0 0.0
  %3109 = vmatprep.subr.mxu0 0.0
  %3110 = vmatpush2.msra.mxu0 0.0
  %3111 = vmatprep.subr.mxu0 0.0
  %3112 = vmatpush2.msra.mxu0 0.0
  %3113 = vmatprep.subr.mxu0 0.0
  %3114 = vmatpush2.msra.mxu0 0.0
  %3115 = vmatprep.subr.mxu0 0.0
  %3116 = vmatpush2.msra.mxu0 0.0
  %3117 = vmatprep.subr.mxu0 0.0
  %3118 = vmatpush2.msra.mxu0 0.0
  %3119 = vmatprep.subr.mxu0 0.0
  %3120 = vmatpush2.msra.mxu0 0.0
  %3121 = vmatprep.subr.mxu0 0.0
  %3122 = vmatpush2.msra.mxu0 0.0
  %3123 = vmatprep.subr.mxu0 0.0
  %3124 = vmatpush2.msra.mxu0 0.0
  %3125 = vmatprep.subr.mxu0 0.0
  %3126 = vmatpush2.msra.mxu0 0.0
  %3127 = vmatprep.subr.mxu0 0.0
  %3128 = vmatpush2.msra.mxu0 0.0
  %3129 = vmatprep.subr.mxu0 0.0
  %3130 = vmatpush2.msra.mxu0 0.0
  %3131 = vmatprep.mubr.f32.mxu0 0.0
  %3132 = vmatmul.mubr.f32.gmra.mxu0 %v1847
  %v3133 = vpop.f32.mrf.mxu0
  %v3134 = vadd.f32 %v3063, %v3133
  %v3135 = vpop.f32.mrf.mxu0
  %3136 = vmatprep.mubr.f32.mxu0 0.0
  %3137 = vmatmul.mubr.f32.gmra.mxu0 %v1850
  %v3138 = vpop.f32.mrf.mxu0
  %v3139 = vadd.f32 %v3064, %v3138
  %v3140 = vpop.f32.mrf.mxu0
  %3141 = vmatprep.mubr.f32.mxu0 0.0
  %3142 = vmatmul.mubr.f32.gmra.mxu0 %v1853
  %v3143 = vpop.f32.mrf.mxu0
  %v3144 = vadd.f32 %v3065, %v3143
  %v3145 = vpop.f32.mrf.mxu0
  %3146 = vmatprep.mubr.f32.mxu0 0.0
  %3147 = vmatmul.mubr.f32.gmra.mxu0 %v1856
  %v3148 = vpop.f32.mrf.mxu0
  %v3149 = vadd.f32 %v3066, %v3148
  %v3150 = vpop.f32.mrf.mxu0
  %3151 = vdwg.mxu0
  %v3152 = vadd.f32 %v3134, %v2811
  %v3153 = vadd.f32 %v3139, %v2816
  %v3154 = vadd.f32 %v3144, %v3051
  %v3155 = vadd.f32 %v3149, %v3056
  %v3156 = vmul.f32 %v3152, 0.5
  %v3157 = vmul.f32 %v3153, 0.5
  %v3158 = vmul.f32 %v3154, 0.5
  %v3159 = vmul.f32 %v3155, 0.5
  %v3160 = vmul.f32 %v3152, 0.70710677
  %v3161 = vmul.f32 %v3153, 0.70710677
  %v3162 = vmul.f32 %v3154, 0.70710677
  %v3163 = vmul.f32 %v3155, 0.70710677
  %vm3164 = vcmp.lt.f32.partialorder %v3160, 0.0
  %vm3165 = vcmp.lt.f32.partialorder %v3161, 0.0
  %vm3166 = vcmp.lt.f32.partialorder %v3162, 0.0
  %vm3167 = vcmp.lt.f32.partialorder %v3163, 0.0
  %v3168 = vsel %vm3164, -1.0, 1.0
  %v3169 = vsel %vm3165, -1.0, 1.0
  %v3170 = vsel %vm3166, -1.0, 1.0
  %v3171 = vsel %vm3167, -1.0, 1.0
  %v3172 = vand.u32 2147483647, %v3160
  %v3173 = vand.u32 2147483647, %v3161
  %v3174 = vand.u32 2147483647, %v3162
  %v3175 = vand.u32 2147483647, %v3163
  %v3176 = vmul.f32 %v3172, 0.3275911
  %v3177 = vmul.f32 %v3173, 0.3275911
  %v3178 = vmul.f32 %v3174, 0.3275911
  %v3179 = vmul.f32 %v3175, 0.3275911
  %v3180 = vadd.f32 %v3176, 1.0
  %v3181 = vadd.f32 %v3177, 1.0
  %v3182 = vadd.f32 %v3178, 1.0
  %v3183 = vadd.f32 %v3179, 1.0
  %v3184 = vrcp.pop %v3180
  %v3185 = vmul.f32 1.0, %v3184
  %v3186 = vrcp.pop %v3181
  %v3187 = vmul.f32 1.0, %v3186
  %v3188 = vrcp.pop %v3182
  %v3189 = vmul.f32 1.0, %v3188
  %v3190 = vrcp.pop %v3183
  %v3191 = vmul.f32 1.0, %v3190
  %v3192 = vmul.f32 %v3185, 1.0614054
  %v3193 = vmul.f32 %v3187, 1.0614054
  %v3194 = vmul.f32 %v3189, 1.0614054
  %v3195 = vmul.f32 %v3191, 1.0614054
  %v3196 = vadd.f32 %v3192, -1.4531521
  %v3197 = vadd.f32 %v3193, -1.4531521
  %v3198 = vadd.f32 %v3194, -1.4531521
  %v3199 = vadd.f32 %v3195, -1.4531521
  %v3200 = vmul.f32 %v3196, %v3185
  %v3201 = vmul.f32 %v3197, %v3187
  %v3202 = vmul.f32 %v3198, %v3189
  %v3203 = vmul.f32 %v3199, %v3191
  %v3204 = vadd.f32 %v3200, 1.4214138
  %v3205 = vadd.f32 %v3201, 1.4214138
  %v3206 = vadd.f32 %v3202, 1.4214138
  %v3207 = vadd.f32 %v3203, 1.4214138
  %v3208 = vmul.f32 %v3204, %v3185
  %v3209 = vmul.f32 %v3205, %v3187
  %v3210 = vmul.f32 %v3206, %v3189
  %v3211 = vmul.f32 %v3207, %v3191
  %v3212 = vadd.f32 %v3208, -0.28449672
  %v3213 = vadd.f32 %v3209, -0.28449672
  %v3214 = vadd.f32 %v3210, -0.28449672
  %v3215 = vadd.f32 %v3211, -0.28449672
  %v3216 = vmul.f32 %v3212, %v3185
  %v3217 = vmul.f32 %v3213, %v3187
  %v3218 = vmul.f32 %v3214, %v3189
  %v3219 = vmul.f32 %v3215, %v3191
  %v3220 = vadd.f32 %v3216, 0.2548296
  %v3221 = vadd.f32 %v3217, 0.2548296
  %v3222 = vadd.f32 %v3218, 0.2548296
  %v3223 = vadd.f32 %v3219, 0.2548296
  %v3224 = vmul.f32 %v3220, %v3185
  %v3225 = vmul.f32 %v3221, %v3187
  %v3226 = vmul.f32 %v3222, %v3189
  %v3227 = vmul.f32 %v3223, %v3191
  %v3228 = vsub.f32 0.0, %v3172
  %v3229 = vsub.f32 0.0, %v3173
  %v3230 = vsub.f32 0.0, %v3174
  %v3231 = vsub.f32 0.0, %v3175
  %v3232 = vmul.f32 %v3228, %v3172
  %v3233 = vmul.f32 %v3229, %v3173
  %v3234 = vmul.f32 %v3230, %v3174
  %v3235 = vmul.f32 %v3231, %v3175
  %v3236 = vmul.f32 %v3232, 1.442695
  %v3237 = vpow.pop %v3236
  %v3238 = vmul.f32 %v3233, 1.442695
  %v3239 = vpow.pop %v3238
  %v3240 = vmul.f32 %v3234, 1.442695
  %v3241 = vpow.pop %v3240
  %v3242 = vmul.f32 %v3235, 1.442695
  %v3243 = vpow.pop %v3242
  %v3244 = vmul.f32 %v3224, %v3237
  %v3245 = vmul.f32 %v3225, %v3239
  %v3246 = vmul.f32 %v3226, %v3241
  %v3247 = vmul.f32 %v3227, %v3243
  %v3248 = vsub.f32 1.0, %v3244
  %v3249 = vsub.f32 1.0, %v3245
  %v3250 = vsub.f32 1.0, %v3246
  %v3251 = vsub.f32 1.0, %v3247
  %v3252 = vmul.f32 %v3168, %v3248
  %v3253 = vmul.f32 %v3169, %v3249
  %v3254 = vmul.f32 %v3170, %v3250
  %v3255 = vmul.f32 %v3171, %v3251
  %v3256 = vadd.f32 %v3252, 1.0
  %v3257 = vadd.f32 %v3253, 1.0
  %v3258 = vadd.f32 %v3254, 1.0
  %v3259 = vadd.f32 %v3255, 1.0
  %v3260 = vmul.f32 %v3156, %v3256
  %v3261 = vmul.f32 %v3157, %v3257
  %v3262 = vmul.f32 %v3158, %v3258
  %v3263 = vmul.f32 %v3159, %v3259
  %v3264 = vld [vmem:[%s1 + $0x138] sm:$0xff]
  %v3265 = vld [vmem:[%s1 + $0x140] sm:$0xff]
  %v3266 = vld [vmem:[%s1 + $0x148] sm:$0xff]
  %v3267 = vld [vmem:[%s1 + $0x150] sm:$0xff]
  %v3268 = vld [vmem:[%s1 + $0x158] sm:$0xff]
  %v3269 = vld [vmem:[%s1 + $0x160] sm:$0xff]
  %v3270 = vld [vmem:[%s1 + $0x168] sm:$0xff]
  %v3271 = vld [vmem:[%s1 + $0x170] sm:$0xff]
  %s3272 = scalar_lea.vmem %s3, 64
  %v3273 = vld [vmem:[%s3272] sm:$0xff]
  %v3274 = vld [vmem:[%s3272 + $0x8] sm:$0xff]
  %v3275 = vld [vmem:[%s3272 + $0x10] sm:$0xff]
  %v3276 = vld [vmem:[%s3272 + $0x18] sm:$0xff]
  %s3277 = scalar_lea.vmem %s4, 256
  %v3278 = vld [vmem:[%s3277] sm:$0xff]
  %v3279 = vld [vmem:[%s3277 + $0x8] sm:$0xff]
  %v3280 = vld [vmem:[%s3277 + $0x10] sm:$0xff]
  %v3281 = vld [vmem:[%s3277 + $0x18] sm:$0xff]
  %v3282 = vld [vmem:[%s3277 + $0x20] sm:$0xff]
  %v3283 = vld [vmem:[%s3277 + $0x28] sm:$0xff]
  %v3284 = vld [vmem:[%s3277 + $0x30] sm:$0xff]
  %v3285 = vld [vmem:[%s3277 + $0x38] sm:$0xff]
  %v3286 = vld [vmem:[%s3277 + $0x40] sm:$0xff]
  %v3287 = vld [vmem:[%s3277 + $0x48] sm:$0xff]
  %v3288 = vld [vmem:[%s3277 + $0x50] sm:$0xff]
  %v3289 = vld [vmem:[%s3277 + $0x58] sm:$0xff]
  %v3290 = vld [vmem:[%s3277 + $0x60] sm:$0xff]
  %v3291 = vld [vmem:[%s3277 + $0x68] sm:$0xff]
  %v3292 = vld [vmem:[%s3277 + $0x70] sm:$0xff]
  %v3293 = vld [vmem:[%s3277 + $0x78] sm:$0xff]
  %v3294 = vld [vmem:[%s1 + $0x1a] sm:$0x1]
  %3295 = vmatprep.subr.mxu0 0.0
  %3296 = vmatpush1.msra.mxu0 0.0
  %3297 = vmatprep.subr.mxu0 0.0
  %3298 = vmatpush1.msra.mxu0 0.0
  %3299 = vmatprep.subr.mxu0 0.0
  %3300 = vmatpush1.msra.mxu0 0.0
  %3301 = vmatprep.subr.mxu0 0.0
  %3302 = vmatpush1.msra.mxu0 0.0
  %3303 = vmatprep.subr.mxu0 0.0
  %3304 = vmatpush1.msra.mxu0 0.0
  %3305 = vmatprep.subr.mxu0 0.0
  %3306 = vmatpush1.msra.mxu0 0.0
  %3307 = vmatprep.subr.mxu0 0.0
  %3308 = vmatpush1.msra.mxu0 0.0
  %3309 = vmatprep.subr.mxu0 0.0
  %3310 = vmatpush1.msra.mxu0 0.0
  %3311 = vmatprep.subr.mxu0 0.0
  %3312 = vmatpush1.msra.mxu0 0.0
  %3313 = vmatprep.subr.mxu0 0.0
  %3314 = vmatpush1.msra.mxu0 0.0
  %3315 = vmatprep.subr.mxu0 0.0
  %3316 = vmatpush1.msra.mxu0 0.0
  %3317 = vmatprep.subr.mxu0 0.0
  %3318 = vmatpush1.msra.mxu0 0.0
  %3319 = vmatprep.subr.mxu0 0.0
  %3320 = vmatpush1.msra.mxu0 %v3263
  %3321 = vmatprep.subr.mxu0 0.0
  %3322 = vmatpush1.msra.mxu0 %v3262
  %3323 = vmatprep.subr.mxu0 0.0
  %3324 = vmatpush1.msra.mxu0 %v3261
  %3325 = vmatprep.subr.mxu0 0.0
  %3326 = vmatpush1.msra.mxu0 %v3260
  %3327 = vmatprep.subr.mxu0 0.0
  %3328 = vmatpush2.msra.mxu0 0.0
  %3329 = vmatprep.subr.mxu0 0.0
  %3330 = vmatpush2.msra.mxu0 0.0
  %3331 = vmatprep.subr.mxu0 0.0
  %3332 = vmatpush2.msra.mxu0 0.0
  %3333 = vmatprep.subr.mxu0 0.0
  %3334 = vmatpush2.msra.mxu0 0.0
  %3335 = vmatprep.subr.mxu0 0.0
  %3336 = vmatpush2.msra.mxu0 0.0
  %3337 = vmatprep.subr.mxu0 0.0
  %3338 = vmatpush2.msra.mxu0 0.0
  %3339 = vmatprep.subr.mxu0 0.0
  %3340 = vmatpush2.msra.mxu0 0.0
  %3341 = vmatprep.subr.mxu0 0.0
  %3342 = vmatpush2.msra.mxu0 0.0
  %3343 = vmatprep.subr.mxu0 0.0
  %3344 = vmatpush2.msra.mxu0 0.0
  %3345 = vmatprep.subr.mxu0 0.0
  %3346 = vmatpush2.msra.mxu0 0.0
  %3347 = vmatprep.subr.mxu0 0.0
  %3348 = vmatpush2.msra.mxu0 0.0
  %3349 = vmatprep.subr.mxu0 0.0
  %3350 = vmatpush2.msra.mxu0 0.0
  %3351 = vmatprep.subr.mxu0 0.0
  %3352 = vmatpush2.msra.mxu0 0.0
  %3353 = vmatprep.subr.mxu0 0.0
  %3354 = vmatpush2.msra.mxu0 0.0
  %3355 = vmatprep.subr.mxu0 0.0
  %3356 = vmatpush2.msra.mxu0 0.0
  %3357 = vmatprep.subr.mxu0 0.0
  %3358 = vmatpush2.msra.mxu0 0.0
  %3359 = vmatprep.mubr.f32.mxu0 0.0
  %3360 = vmatmul.mubr.f32.gmra.mxu0 %v857
  %v3361 = vpop.f32.mrf.mxu0
  %v3362 = vadd.f32 0.0, %v3361
  %v3363 = vpop.f32.mrf.mxu0
  %3364 = vmatprep.mubr.f32.mxu0 0.0
  %3365 = vmatmul.mubr.f32.gmra.mxu0 %v860
  %v3366 = vpop.f32.mrf.mxu0
  %v3367 = vadd.f32 0.0, %v3366
  %v3368 = vpop.f32.mrf.mxu0
  %3369 = vdwg.mxu0
  %3372 = vrot.lane.b32.xlu0 %v3362, 32
  %v3373 = vpop.permute.xlu0 %3372
  %3374 = vrot.lane.b32.xlu0 %v3367, 32
  %v3375 = vpop.permute.xlu0 %3374
  %3378 = vrot.lane.b32.xlu0 %v3362, 64
  %v3379 = vpop.permute.xlu0 %3378
  %3380 = vrot.lane.b32.xlu0 %v3367, 64
  %v3381 = vpop.permute.xlu0 %3380
  %3384 = vrot.lane.b32.xlu0 %v3362, 96
  %v3385 = vpop.permute.xlu0 %3384
  %3386 = vrot.lane.b32.xlu0 %v3367, 96
  %v3387 = vpop.permute.xlu0 %3386
  %v3390 = vsel %vm88, %v3362, %v3373
  %v3391 = vsel %vm88, %v3367, %v3375
  %v3392 = vsel %vm959, %v3390, %v3379
  %v3393 = vsel %vm959, %v3391, %v3381
  %v3394 = vsel %vm962, %v3392, %v3385
  %v3395 = vsel %vm962, %v3393, %v3387
  %v3396 = vmul.f32 %v3394, %v58
  %v3397 = vmul.f32 %v3395, %v59
  %3398 = vmatprep.subr.mxu0 0.0
  %3399 = vmatpush1.msra.mxu0 %v3293
  %3400 = vmatprep.subr.mxu0 0.0
  %3401 = vmatpush1.msra.mxu0 %v3292
  %3402 = vmatprep.subr.mxu0 0.0
  %3403 = vmatpush1.msra.mxu0 %v3291
  %3404 = vmatprep.subr.mxu0 0.0
  %3405 = vmatpush1.msra.mxu0 %v3290
  %3406 = vmatprep.subr.mxu0 0.0
  %3407 = vmatpush1.msra.mxu0 %v3289
  %3408 = vmatprep.subr.mxu0 0.0
  %3409 = vmatpush1.msra.mxu0 %v3288
  %3410 = vmatprep.subr.mxu0 0.0
  %3411 = vmatpush1.msra.mxu0 %v3287
  %3412 = vmatprep.subr.mxu0 0.0
  %3413 = vmatpush1.msra.mxu0 %v3286
  %3414 = vmatprep.subr.mxu0 0.0
  %3415 = vmatpush1.msra.mxu0 %v3285
  %3416 = vmatprep.subr.mxu0 0.0
  %3417 = vmatpush1.msra.mxu0 %v3284
  %3418 = vmatprep.subr.mxu0 0.0
  %3419 = vmatpush1.msra.mxu0 %v3283
  %3420 = vmatprep.subr.mxu0 0.0
  %3421 = vmatpush1.msra.mxu0 %v3282
  %3422 = vmatprep.subr.mxu0 0.0
  %3423 = vmatpush1.msra.mxu0 %v3281
  %3424 = vmatprep.subr.mxu0 0.0
  %3425 = vmatpush1.msra.mxu0 %v3280
  %3426 = vmatprep.subr.mxu0 0.0
  %3427 = vmatpush1.msra.mxu0 %v3279
  %3428 = vmatprep.subr.mxu0 0.0
  %3429 = vmatpush1.msra.mxu0 %v3278
  %3430 = vmatprep.subr.mxu0 0.0
  %3431 = vmatpush2.msra.mxu0 0.0
  %3432 = vmatprep.subr.mxu0 0.0
  %3433 = vmatpush2.msra.mxu0 0.0
  %3434 = vmatprep.subr.mxu0 0.0
  %3435 = vmatpush2.msra.mxu0 0.0
  %3436 = vmatprep.subr.mxu0 0.0
  %3437 = vmatpush2.msra.mxu0 0.0
  %3438 = vmatprep.subr.mxu0 0.0
  %3439 = vmatpush2.msra.mxu0 0.0
  %3440 = vmatprep.subr.mxu0 0.0
  %3441 = vmatpush2.msra.mxu0 0.0
  %3442 = vmatprep.subr.mxu0 0.0
  %3443 = vmatpush2.msra.mxu0 0.0
  %3444 = vmatprep.subr.mxu0 0.0
  %3445 = vmatpush2.msra.mxu0 0.0
  %3446 = vmatprep.subr.mxu0 0.0
  %3447 = vmatpush2.msra.mxu0 0.0
  %3448 = vmatprep.subr.mxu0 0.0
  %3449 = vmatpush2.msra.mxu0 0.0
  %3450 = vmatprep.subr.mxu0 0.0
  %3451 = vmatpush2.msra.mxu0 0.0
  %3452 = vmatprep.subr.mxu0 0.0
  %3453 = vmatpush2.msra.mxu0 0.0
  %3454 = vmatprep.subr.mxu0 0.0
  %3455 = vmatpush2.msra.mxu0 0.0
  %3456 = vmatprep.subr.mxu0 0.0
  %3457 = vmatpush2.msra.mxu0 0.0
  %3458 = vmatprep.subr.mxu0 0.0
  %3459 = vmatpush2.msra.mxu0 0.0
  %3460 = vmatprep.subr.mxu0 0.0
  %3461 = vmatpush2.msra.mxu0 0.0
  %3462 = vmatprep.mubr.f32.mxu0 0.0
  %3463 = vmatmul.mubr.f32.gmra.mxu0 %v3396
  %v3464 = vpop.f32.mrf.mxu0
  %v3465 = vadd.f32 0.0, %v3464
  %v3466 = vpop.f32.mrf.mxu0
  %3467 = vmatprep.mubr.f32.mxu0 0.0
  %3468 = vmatmul.mubr.f32.gmra.mxu0 %v3397
  %v3469 = vpop.f32.mrf.mxu0
  %v3470 = vadd.f32 0.0, %v3469
  %v3471 = vpop.f32.mrf.mxu0
  %3472 = vdwg.mxu0
  %3475 = vrot.lane.b32.xlu0 %v3465, 96
  %v3476 = vpop.permute.xlu0 %3475
  %3477 = vrot.lane.b32.xlu0 %v3470, 96
  %v3478 = vpop.permute.xlu0 %3477
  %v3482 = vsel %vm88, %v3260, 0
  %v3485 = vsel %vm88, %v3261, 0
  %v3488 = vsel %vm88, %v3262, 0
  %v3491 = vsel %vm88, %v3263, 0
  %3493 = vmatprep.subr.mxu0 0.0
  %3494 = vmatpush1.msra.mxu0 0.0
  %3495 = vmatprep.subr.mxu0 0.0
  %3496 = vmatpush1.msra.mxu0 0.0
  %3497 = vmatprep.subr.mxu0 0.0
  %3498 = vmatpush1.msra.mxu0 0.0
  %3499 = vmatprep.subr.mxu0 0.0
  %3500 = vmatpush1.msra.mxu0 0.0
  %3501 = vmatprep.subr.mxu0 0.0
  %3502 = vmatpush1.msra.mxu0 0.0
  %3503 = vmatprep.subr.mxu0 0.0
  %3504 = vmatpush1.msra.mxu0 0.0
  %3505 = vmatprep.subr.mxu0 0.0
  %3506 = vmatpush1.msra.mxu0 0.0
  %3507 = vmatprep.subr.mxu0 0.0
  %3508 = vmatpush1.msra.mxu0 0.0
  %3509 = vmatprep.subr.mxu0 0.0
  %3510 = vmatpush1.msra.mxu0 0.0
  %3511 = vmatprep.subr.mxu0 0.0
  %3512 = vmatpush1.msra.mxu0 0.0
  %3513 = vmatprep.subr.mxu0 0.0
  %3514 = vmatpush1.msra.mxu0 0.0
  %3515 = vmatprep.subr.mxu0 0.0
  %3516 = vmatpush1.msra.mxu0 0.0
  %3517 = vmatprep.subr.mxu0 0.0
  %3518 = vmatpush1.msra.mxu0 %v3276
  %3519 = vmatprep.subr.mxu0 0.0
  %3520 = vmatpush1.msra.mxu0 %v3275
  %3521 = vmatprep.subr.mxu0 0.0
  %3522 = vmatpush1.msra.mxu0 %v3274
  %3523 = vmatprep.subr.mxu0 0.0
  %3524 = vmatpush1.msra.mxu0 %v3273
  %3525 = vmatprep.subr.mxu0 0.0
  %3526 = vmatpush2.msra.mxu0 0.0
  %3527 = vmatprep.subr.mxu0 0.0
  %3528 = vmatpush2.msra.mxu0 0.0
  %3529 = vmatprep.subr.mxu0 0.0
  %3530 = vmatpush2.msra.mxu0 0.0
  %3531 = vmatprep.subr.mxu0 0.0
  %3532 = vmatpush2.msra.mxu0 0.0
  %3533 = vmatprep.subr.mxu0 0.0
  %3534 = vmatpush2.msra.mxu0 0.0
  %3535 = vmatprep.subr.mxu0 0.0
  %3536 = vmatpush2.msra.mxu0 0.0
  %3537 = vmatprep.subr.mxu0 0.0
  %3538 = vmatpush2.msra.mxu0 0.0
  %3539 = vmatprep.subr.mxu0 0.0
  %3540 = vmatpush2.msra.mxu0 0.0
  %3541 = vmatprep.subr.mxu0 0.0
  %3542 = vmatpush2.msra.mxu0 0.0
  %3543 = vmatprep.subr.mxu0 0.0
  %3544 = vmatpush2.msra.mxu0 0.0
  %3545 = vmatprep.subr.mxu0 0.0
  %3546 = vmatpush2.msra.mxu0 0.0
  %3547 = vmatprep.subr.mxu0 0.0
  %3548 = vmatpush2.msra.mxu0 0.0
  %3549 = vmatprep.subr.mxu0 0.0
  %3550 = vmatpush2.msra.mxu0 0.0
  %3551 = vmatprep.subr.mxu0 0.0
  %3552 = vmatpush2.msra.mxu0 0.0
  %3553 = vmatprep.subr.mxu0 0.0
  %3554 = vmatpush2.msra.mxu0 0.0
  %3555 = vmatprep.subr.mxu0 0.0
  %3556 = vmatpush2.msra.mxu0 0.0
  %3557 = vmatprep.mubr.f32.mxu0 0.0
  %3558 = vmatmul.mubr.f32.gmra.mxu0 %v3482
  %v3559 = vpop.f32.mrf.mxu0
  %v3560 = vadd.f32 0.0, %v3559
  %v3561 = vpop.f32.mrf.mxu0
  %3562 = vmatprep.mubr.f32.mxu0 0.0
  %3563 = vmatmul.mubr.f32.gmra.mxu0 %v3485
  %v3564 = vpop.f32.mrf.mxu0
  %v3565 = vadd.f32 0.0, %v3564
  %v3566 = vpop.f32.mrf.mxu0
  %3567 = vmatprep.mubr.f32.mxu0 0.0
  %3568 = vmatmul.mubr.f32.gmra.mxu0 %v3488
  %v3569 = vpop.f32.mrf.mxu0
  %v3570 = vadd.f32 0.0, %v3569
  %v3571 = vpop.f32.mrf.mxu0
  %3572 = vmatprep.mubr.f32.mxu0 0.0
  %3573 = vmatmul.mubr.f32.gmra.mxu0 %v3491
  %v3574 = vpop.f32.mrf.mxu0
  %v3575 = vadd.f32 0.0, %v3574
  %v3576 = vpop.f32.mrf.mxu0
  %3577 = vdwg.mxu0
  %v3578 = vadd.f32 %v3260, %v703
  %v3579 = vadd.f32 %v3261, %v704
  %v3580 = vadd.f32 %v3262, %v705
  %v3581 = vadd.f32 %v3263, %v706
  %v3583 = vsel %vm88, %v3578, 0
  %v3586 = vsel %vm88, %v3579, 0
  %v3589 = vsel %vm88, %v3580, 0
  %v3592 = vsel %vm88, %v3581, 0
  %3594 = vmatprep.subr.mxu0 0.0
  %3595 = vmatpush1.msra.mxu0 0.0
  %3596 = vmatprep.subr.mxu0 0.0
  %3597 = vmatpush1.msra.mxu0 0.0
  %3598 = vmatprep.subr.mxu0 0.0
  %3599 = vmatpush1.msra.mxu0 0.0
  %3600 = vmatprep.subr.mxu0 0.0
  %3601 = vmatpush1.msra.mxu0 0.0
  %3602 = vmatprep.subr.mxu0 0.0
  %3603 = vmatpush1.msra.mxu0 0.0
  %3604 = vmatprep.subr.mxu0 0.0
  %3605 = vmatpush1.msra.mxu0 0.0
  %3606 = vmatprep.subr.mxu0 0.0
  %3607 = vmatpush1.msra.mxu0 0.0
  %3608 = vmatprep.subr.mxu0 0.0
  %3609 = vmatpush1.msra.mxu0 0.0
  %3610 = vmatprep.subr.mxu0 0.0
  %3611 = vmatpush1.msra.mxu0 0.0
  %3612 = vmatprep.subr.mxu0 0.0
  %3613 = vmatpush1.msra.mxu0 0.0
  %3614 = vmatprep.subr.mxu0 0.0
  %3615 = vmatpush1.msra.mxu0 0.0
  %3616 = vmatprep.subr.mxu0 0.0
  %3617 = vmatpush1.msra.mxu0 0.0
  %3618 = vmatprep.subr.mxu0 0.0
  %3619 = vmatpush1.msra.mxu0 %v3267
  %3620 = vmatprep.subr.mxu0 0.0
  %3621 = vmatpush1.msra.mxu0 %v3266
  %3622 = vmatprep.subr.mxu0 0.0
  %3623 = vmatpush1.msra.mxu0 %v3265
  %3624 = vmatprep.subr.mxu0 0.0
  %3625 = vmatpush1.msra.mxu0 %v3264
  %3626 = vmatprep.subr.mxu0 0.0
  %3627 = vmatpush2.msra.mxu0 0.0
  %3628 = vmatprep.subr.mxu0 0.0
  %3629 = vmatpush2.msra.mxu0 0.0
  %3630 = vmatprep.subr.mxu0 0.0
  %3631 = vmatpush2.msra.mxu0 0.0
  %3632 = vmatprep.subr.mxu0 0.0
  %3633 = vmatpush2.msra.mxu0 0.0
  %3634 = vmatprep.subr.mxu0 0.0
  %3635 = vmatpush2.msra.mxu0 0.0
  %3636 = vmatprep.subr.mxu0 0.0
  %3637 = vmatpush2.msra.mxu0 0.0
  %3638 = vmatprep.subr.mxu0 0.0
  %3639 = vmatpush2.msra.mxu0 0.0
  %3640 = vmatprep.subr.mxu0 0.0
  %3641 = vmatpush2.msra.mxu0 0.0
  %3642 = vmatprep.subr.mxu0 0.0
  %3643 = vmatpush2.msra.mxu0 0.0
  %3644 = vmatprep.subr.mxu0 0.0
  %3645 = vmatpush2.msra.mxu0 0.0
  %3646 = vmatprep.subr.mxu0 0.0
  %3647 = vmatpush2.msra.mxu0 0.0
  %3648 = vmatprep.subr.mxu0 0.0
  %3649 = vmatpush2.msra.mxu0 0.0
  %3650 = vmatprep.subr.mxu0 0.0
  %3651 = vmatpush2.msra.mxu0 0.0
  %3652 = vmatprep.subr.mxu0 0.0
  %3653 = vmatpush2.msra.mxu0 0.0
  %3654 = vmatprep.subr.mxu0 0.0
  %3655 = vmatpush2.msra.mxu0 0.0
  %3656 = vmatprep.subr.mxu0 0.0
  %3657 = vmatpush2.msra.mxu0 0.0
  %3658 = vmatprep.mubr.f32.mxu0 0.0
  %3659 = vmatmul.mubr.f32.gmra.mxu0 %v3583
  %v3660 = vpop.f32.mrf.mxu0
  %v3661 = vadd.f32 0.0, %v3660
  %v3662 = vpop.f32.mrf.mxu0
  %3663 = vmatprep.mubr.f32.mxu0 0.0
  %3664 = vmatmul.mubr.f32.gmra.mxu0 %v3586
  %v3665 = vpop.f32.mrf.mxu0
  %v3666 = vadd.f32 0.0, %v3665
  %v3667 = vpop.f32.mrf.mxu0
  %3668 = vmatprep.mubr.f32.mxu0 0.0
  %3669 = vmatmul.mubr.f32.gmra.mxu0 %v3589
  %v3670 = vpop.f32.mrf.mxu0
  %v3671 = vadd.f32 0.0, %v3670
  %v3672 = vpop.f32.mrf.mxu0
  %3673 = vmatprep.mubr.f32.mxu0 0.0
  %3674 = vmatmul.mubr.f32.gmra.mxu0 %v3592
  %v3675 = vpop.f32.mrf.mxu0
  %v3676 = vadd.f32 0.0, %v3675
  %v3677 = vpop.f32.mrf.mxu0
  %3678 = vdwg.mxu0
  %v3679 = vadd.f32 %v3260, %v587
  %v3680 = vadd.f32 %v3261, %v588
  %v3681 = vadd.f32 %v3262, %v589
  %v3682 = vadd.f32 %v3263, %v590
  %v3684 = vsel %vm88, %v3268, 0
  %v3687 = vsel %vm88, %v3269, 0
  %v3690 = vsel %vm88, %v3270, 0
  %v3693 = vsel %vm88, %v3271, 0
  %v3696 = vsel %vm88, %v3679, 0
  %v3699 = vsel %vm88, %v3680, 0
  %v3702 = vsel %vm88, %v3681, 0
  %v3705 = vsel %vm88, %v3682, 0
  %3707 = vmatprep.subr.mxu0 0.0
  %3708 = vmatpush1.xpose.msra.mxu0 0.0
  %3709 = vmatprep.subr.mxu0 0.0
  %3710 = vmatpush1.xpose.msra.mxu0 0.0
  %3711 = vmatprep.subr.mxu0 0.0
  %3712 = vmatpush1.xpose.msra.mxu0 0.0
  %3713 = vmatprep.subr.mxu0 0.0
  %3714 = vmatpush1.xpose.msra.mxu0 0.0
  %3715 = vmatprep.subr.mxu0 0.0
  %3716 = vmatpush1.xpose.msra.mxu0 0.0
  %3717 = vmatprep.subr.mxu0 0.0
  %3718 = vmatpush1.xpose.msra.mxu0 0.0
  %3719 = vmatprep.subr.mxu0 0.0
  %3720 = vmatpush1.xpose.msra.mxu0 0.0
  %3721 = vmatprep.subr.mxu0 0.0
  %3722 = vmatpush1.xpose.msra.mxu0 0.0
  %3723 = vmatprep.subr.mxu0 0.0
  %3724 = vmatpush1.xpose.msra.mxu0 0.0
  %3725 = vmatprep.subr.mxu0 0.0
  %3726 = vmatpush1.xpose.msra.mxu0 0.0
  %3727 = vmatprep.subr.mxu0 0.0
  %3728 = vmatpush1.xpose.msra.mxu0 0.0
  %3729 = vmatprep.subr.mxu0 0.0
  %3730 = vmatpush1.xpose.msra.mxu0 0.0
  %3731 = vmatprep.subr.mxu0 0.0
  %3732 = vmatpush1.xpose.msra.mxu0 %v3705
  %3733 = vmatprep.subr.mxu0 0.0
  %3734 = vmatpush1.xpose.msra.mxu0 %v3702
  %3735 = vmatprep.subr.mxu0 0.0
  %3736 = vmatpush1.xpose.msra.mxu0 %v3699
  %3737 = vmatprep.subr.mxu0 0.0
  %3738 = vmatpush1.xpose.msra.mxu0 %v3696
  %3739 = vmatprep.subr.mxu0 0.0
  %3740 = vmatpush2.xpose.msra.mxu0 0.0
  %3741 = vmatprep.subr.mxu0 0.0
  %3742 = vmatpush2.xpose.msra.mxu0 0.0
  %3743 = vmatprep.subr.mxu0 0.0
  %3744 = vmatpush2.xpose.msra.mxu0 0.0
  %3745 = vmatprep.subr.mxu0 0.0
  %3746 = vmatpush2.xpose.msra.mxu0 0.0
  %3747 = vmatprep.subr.mxu0 0.0
  %3748 = vmatpush2.xpose.msra.mxu0 0.0
  %3749 = vmatprep.subr.mxu0 0.0
  %3750 = vmatpush2.xpose.msra.mxu0 0.0
  %3751 = vmatprep.subr.mxu0 0.0
  %3752 = vmatpush2.xpose.msra.mxu0 0.0
  %3753 = vmatprep.subr.mxu0 0.0
  %3754 = vmatpush2.xpose.msra.mxu0 0.0
  %3755 = vmatprep.subr.mxu0 0.0
  %3756 = vmatpush2.xpose.msra.mxu0 0.0
  %3757 = vmatprep.subr.mxu0 0.0
  %3758 = vmatpush2.xpose.msra.mxu0 0.0
  %3759 = vmatprep.subr.mxu0 0.0
  %3760 = vmatpush2.xpose.msra.mxu0 0.0
  %3761 = vmatprep.subr.mxu0 0.0
  %3762 = vmatpush2.xpose.msra.mxu0 0.0
  %3763 = vmatprep.subr.mxu0 0.0
  %3764 = vmatpush2.xpose.msra.mxu0 0.0
  %3765 = vmatprep.subr.mxu0 0.0
  %3766 = vmatpush2.xpose.msra.mxu0 0.0
  %3767 = vmatprep.subr.mxu0 0.0
  %3768 = vmatpush2.xpose.msra.mxu0 0.0
  %3769 = vmatprep.subr.mxu0 0.0
  %3770 = vmatpush2.xpose.msra.mxu0 0.0
  %3771 = vmatprep.mubr.f32.mxu0 0.0
  %3772 = vmatmul.mubr.f32.gmra.mxu0 %v3684
  %v3773 = vpop.f32.mrf.mxu0
  %v3774 = vadd.f32 0.0, %v3773
  %v3775 = vpop.f32.mrf.mxu0
  %3776 = vmatprep.mubr.f32.mxu0 0.0
  %3777 = vmatmul.mubr.f32.gmra.mxu0 %v3687
  %v3778 = vpop.f32.mrf.mxu0
  %v3779 = vadd.f32 0.0, %v3778
  %v3780 = vpop.f32.mrf.mxu0
  %3781 = vmatprep.mubr.f32.mxu0 0.0
  %3782 = vmatmul.mubr.f32.gmra.mxu0 %v3690
  %v3783 = vpop.f32.mrf.mxu0
  %v3784 = vadd.f32 0.0, %v3783
  %v3785 = vpop.f32.mrf.mxu0
  %3786 = vmatprep.mubr.f32.mxu0 0.0
  %3787 = vmatmul.mubr.f32.gmra.mxu0 %v3693
  %v3788 = vpop.f32.mrf.mxu0
  %v3789 = vadd.f32 0.0, %v3788
  %v3790 = vpop.f32.mrf.mxu0
  %3791 = vdwg.mxu0
  %v3793 = vsel %vm1361, %v3774, 0
  %v3796 = vsel %vm1361, %v3779, 0
  %v3799 = vsel %vm1361, %v3784, 0
  %v3802 = vsel %vm1361, %v3789, 0
  %3804 = vmatprep.subr.mxu0 0.0
  %3805 = vmatpush1.msra.mxu0 0.0
  %3806 = vmatprep.subr.mxu0 0.0
  %3807 = vmatpush1.msra.mxu0 0.0
  %3808 = vmatprep.subr.mxu0 0.0
  %3809 = vmatpush1.msra.mxu0 0.0
  %3810 = vmatprep.subr.mxu0 0.0
  %3811 = vmatpush1.msra.mxu0 0.0
  %3812 = vmatprep.subr.mxu0 0.0
  %3813 = vmatpush1.msra.mxu0 0.0
  %3814 = vmatprep.subr.mxu0 0.0
  %3815 = vmatpush1.msra.mxu0 0.0
  %3816 = vmatprep.subr.mxu0 0.0
  %3817 = vmatpush1.msra.mxu0 0.0
  %3818 = vmatprep.subr.mxu0 0.0
  %3819 = vmatpush1.msra.mxu0 0.0
  %3820 = vmatprep.subr.mxu0 0.0
  %3821 = vmatpush1.msra.mxu0 0.0
  %3822 = vmatprep.subr.mxu0 0.0
  %3823 = vmatpush1.msra.mxu0 0.0
  %3824 = vmatprep.subr.mxu0 0.0
  %3825 = vmatpush1.msra.mxu0 0.0
  %3826 = vmatprep.subr.mxu0 0.0
  %3827 = vmatpush1.msra.mxu0 0.0
  %3828 = vmatprep.subr.mxu0 0.0
  %3829 = vmatpush1.msra.mxu0 0.0
  %3830 = vmatprep.subr.mxu0 0.0
  %3831 = vmatpush1.msra.mxu0 0.0
  %3832 = vmatprep.subr.mxu0 0.0
  %3833 = vmatpush1.msra.mxu0 %v3666
  %3834 = vmatprep.subr.mxu0 0.0
  %3835 = vmatpush1.msra.mxu0 %v3661
  %3836 = vmatprep.subr.mxu0 0.0
  %3837 = vmatpush2.msra.mxu0 0.0
  %3838 = vmatprep.subr.mxu0 0.0
  %3839 = vmatpush2.msra.mxu0 0.0
  %3840 = vmatprep.subr.mxu0 0.0
  %3841 = vmatpush2.msra.mxu0 0.0
  %3842 = vmatprep.subr.mxu0 0.0
  %3843 = vmatpush2.msra.mxu0 0.0
  %3844 = vmatprep.subr.mxu0 0.0
  %3845 = vmatpush2.msra.mxu0 0.0
  %3846 = vmatprep.subr.mxu0 0.0
  %3847 = vmatpush2.msra.mxu0 0.0
  %3848 = vmatprep.subr.mxu0 0.0
  %3849 = vmatpush2.msra.mxu0 0.0
  %3850 = vmatprep.subr.mxu0 0.0
  %3851 = vmatpush2.msra.mxu0 0.0
  %3852 = vmatprep.subr.mxu0 0.0
  %3853 = vmatpush2.msra.mxu0 0.0
  %3854 = vmatprep.subr.mxu0 0.0
  %3855 = vmatpush2.msra.mxu0 0.0
  %3856 = vmatprep.subr.mxu0 0.0
  %3857 = vmatpush2.msra.mxu0 0.0
  %3858 = vmatprep.subr.mxu0 0.0
  %3859 = vmatpush2.msra.mxu0 0.0
  %3860 = vmatprep.subr.mxu0 0.0
  %3861 = vmatpush2.msra.mxu0 0.0
  %3862 = vmatprep.subr.mxu0 0.0
  %3863 = vmatpush2.msra.mxu0 0.0
  %3864 = vmatprep.subr.mxu0 0.0
  %3865 = vmatpush2.msra.mxu0 0.0
  %3866 = vmatprep.subr.mxu0 0.0
  %3867 = vmatpush2.msra.mxu0 0.0
  %3868 = vmatprep.mubr.f32.mxu0 0.0
  %3869 = vmatmul.mubr.f32.gmra.mxu0 %v3793
  %v3870 = vpop.f32.mrf.mxu0
  %v3871 = vadd.f32 0.0, %v3870
  %v3872 = vpop.f32.mrf.mxu0
  %3873 = vmatprep.mubr.f32.mxu0 0.0
  %3874 = vmatmul.mubr.f32.gmra.mxu0 %v3796
  %v3875 = vpop.f32.mrf.mxu0
  %v3876 = vadd.f32 0.0, %v3875
  %v3877 = vpop.f32.mrf.mxu0
  %3878 = vmatprep.mubr.f32.mxu0 0.0
  %3879 = vmatmul.mubr.f32.gmra.mxu0 %v3799
  %v3880 = vpop.f32.mrf.mxu0
  %v3881 = vadd.f32 0.0, %v3880
  %v3882 = vpop.f32.mrf.mxu0
  %3883 = vmatprep.mubr.f32.mxu0 0.0
  %3884 = vmatmul.mubr.f32.gmra.mxu0 %v3802
  %v3885 = vpop.f32.mrf.mxu0
  %v3886 = vadd.f32 0.0, %v3885
  %v3887 = vpop.f32.mrf.mxu0
  %3888 = vdwg.mxu0
  %v3889 = vmul.f32 %v3871, 0.17677669
  %v3890 = vmul.f32 %v3876, 0.17677669
  %v3891 = vmul.f32 %v3881, 0.17677669
  %v3892 = vmul.f32 %v3886, 0.17677669
  %v3893 = vadd.f32 %v3889, %v29
  %v3894 = vadd.f32 %v3890, %v30
  %v3895 = vadd.f32 %v3891, %v31
  %v3896 = vadd.f32 %v3892, %v32
  %v3897 = vsel %vm88, %v3893, -inf
  %v3898 = vsel %vm88, %v3894, -inf
  %v3899 = vsel %vm88, %v3895, -inf
  %v3900 = vsel %vm88, %v3896, -inf
  %v3901 = vmax.f32 %v3897, %v3898
  %v3902 = vmax.f32 %v3899, %v3900
  %v3903 = vmax.f32 %v3901, %v3902
  %v3904 = vrot.slane %v3903, 4
  %v3905 = vmax.f32 %v3903, %v3904
  %v3906 = vrot.slane %v3905, 2
  %v3907 = vmax.f32 %v3905, %v3906
  %v3908 = vrot.slane %v3907, 1
  %v3909 = vmax.f32 %v3907, %v3908
  %v3910 = vsub.f32 %v3893, %v3909
  %v3911 = vsub.f32 %v3894, %v3909
  %v3912 = vsub.f32 %v3895, %v3909
  %v3913 = vsub.f32 %v3896, %v3909
  %v3914 = vmul.f32 %v3910, 1.442695
  %v3915 = vpow.pop %v3914
  %v3916 = vmul.f32 %v3911, 1.442695
  %v3917 = vpow.pop %v3916
  %v3918 = vmul.f32 %v3912, 1.442695
  %v3919 = vpow.pop %v3918
  %v3920 = vmul.f32 %v3913, 1.442695
  %v3921 = vpow.pop %v3920
  %v3922 = vsel %vm88, %v3915, 0.0
  %v3923 = vsel %vm88, %v3917, 0.0
  %v3924 = vadd.f32 %v3922, %v3923
  %v3925 = vsel %vm88, %v3919, 0.0
  %v3926 = vadd.f32 %v3924, %v3925
  %v3927 = vsel %vm88, %v3921, 0.0
  %v3928 = vadd.f32 %v3926, %v3927
  %v3929 = vrot.slane %v3928, 4
  %v3930 = vadd.f32 %v3928, %v3929
  %v3931 = vrot.slane %v3930, 2
  %v3932 = vadd.f32 %v3930, %v3931
  %v3933 = vrot.slane %v3932, 1
  %v3934 = vadd.f32 %v3932, %v3933
  %v3935 = vrcp.pop %v3934
  %v3936 = vmul.f32 %v3934, %v3935
  %v3937 = vsub.f32 2.0, %v3936
  %v3938 = vmul.f32 %v3935, %v3937
  %v3939 = vmul.f32 %v3915, %v3938
  %v3940 = vmul.f32 %v3917, %v3938
  %v3941 = vmul.f32 %v3919, %v3938
  %v3942 = vmul.f32 %v3921, %v3938
  %3945 = vrot.lane.b32.xlu0 %v3560, 96
  %v3946 = vpop.permute.xlu0 %3945
  %3947 = vrot.lane.b32.xlu0 %v3565, 96
  %v3948 = vpop.permute.xlu0 %3947
  %v3949 = vsel %vm88, %v3946, 0
  %v3951 = vsel %vm88, %v3948, 0
  %3953 = vmatprep.subr.mxu0 0.0
  %3954 = vmatpush1.msra.mxu0 0.0
  %3955 = vmatprep.subr.mxu0 0.0
  %3956 = vmatpush1.msra.mxu0 0.0
  %3957 = vmatprep.subr.mxu0 0.0
  %3958 = vmatpush1.msra.mxu0 0.0
  %3959 = vmatprep.subr.mxu0 0.0
  %3960 = vmatpush1.msra.mxu0 0.0
  %3961 = vmatprep.subr.mxu0 0.0
  %3962 = vmatpush1.msra.mxu0 0.0
  %3963 = vmatprep.subr.mxu0 0.0
  %3964 = vmatpush1.msra.mxu0 0.0
  %3965 = vmatprep.subr.mxu0 0.0
  %3966 = vmatpush1.msra.mxu0 0.0
  %3967 = vmatprep.subr.mxu0 0.0
  %3968 = vmatpush1.msra.mxu0 0.0
  %3969 = vmatprep.subr.mxu0 0.0
  %3970 = vmatpush1.msra.mxu0 0.0
  %3971 = vmatprep.subr.mxu0 0.0
  %3972 = vmatpush1.msra.mxu0 0.0
  %3973 = vmatprep.subr.mxu0 0.0
  %3974 = vmatpush1.msra.mxu0 0.0
  %3975 = vmatprep.subr.mxu0 0.0
  %3976 = vmatpush1.msra.mxu0 0.0
  %3977 = vmatprep.subr.mxu0 0.0
  %3978 = vmatpush1.msra.mxu0 %v3942
  %3979 = vmatprep.subr.mxu0 0.0
  %3980 = vmatpush1.msra.mxu0 %v3941
  %3981 = vmatprep.subr.mxu0 0.0
  %3982 = vmatpush1.msra.mxu0 %v3940
  %3983 = vmatprep.subr.mxu0 0.0
  %3984 = vmatpush1.msra.mxu0 %v3939
  %3985 = vmatprep.subr.mxu0 0.0
  %3986 = vmatpush2.msra.mxu0 0.0
  %3987 = vmatprep.subr.mxu0 0.0
  %3988 = vmatpush2.msra.mxu0 0.0
  %3989 = vmatprep.subr.mxu0 0.0
  %3990 = vmatpush2.msra.mxu0 0.0
  %3991 = vmatprep.subr.mxu0 0.0
  %3992 = vmatpush2.msra.mxu0 0.0
  %3993 = vmatprep.subr.mxu0 0.0
  %3994 = vmatpush2.msra.mxu0 0.0
  %3995 = vmatprep.subr.mxu0 0.0
  %3996 = vmatpush2.msra.mxu0 0.0
  %3997 = vmatprep.subr.mxu0 0.0
  %3998 = vmatpush2.msra.mxu0 0.0
  %3999 = vmatprep.subr.mxu0 0.0
  %4000 = vmatpush2.msra.mxu0 0.0
  %4001 = vmatprep.subr.mxu0 0.0
  %4002 = vmatpush2.msra.mxu0 0.0
  %4003 = vmatprep.subr.mxu0 0.0
  %4004 = vmatpush2.msra.mxu0 0.0
  %4005 = vmatprep.subr.mxu0 0.0
  %4006 = vmatpush2.msra.mxu0 0.0
  %4007 = vmatprep.subr.mxu0 0.0
  %4008 = vmatpush2.msra.mxu0 0.0
  %4009 = vmatprep.subr.mxu0 0.0
  %4010 = vmatpush2.msra.mxu0 0.0
  %4011 = vmatprep.subr.mxu0 0.0
  %4012 = vmatpush2.msra.mxu0 0.0
  %4013 = vmatprep.subr.mxu0 0.0
  %4014 = vmatpush2.msra.mxu0 0.0
  %4015 = vmatprep.subr.mxu0 0.0
  %4016 = vmatpush2.msra.mxu0 0.0
  %4017 = vmatprep.mubr.f32.mxu0 0.0
  %4018 = vmatmul.mubr.f32.gmra.mxu0 %v3949
  %v4019 = vpop.f32.mrf.mxu0
  %v4020 = vadd.f32 0.0, %v4019
  %v4021 = vpop.f32.mrf.mxu0
  %4022 = vmatprep.mubr.f32.mxu0 0.0
  %4023 = vmatmul.mubr.f32.gmra.mxu0 %v3951
  %v4024 = vpop.f32.mrf.mxu0
  %v4025 = vadd.f32 0.0, %v4024
  %v4026 = vpop.f32.mrf.mxu0
  %4027 = vdwg.mxu0
  %4028 = vrot.lane.b32.xlu0 %v3774, 112
  %v4029 = vpop.permute.xlu0 %4028
  %4030 = vrot.lane.b32.xlu0 %v3779, 112
  %v4031 = vpop.permute.xlu0 %4030
  %4032 = vrot.lane.b32.xlu0 %v3784, 112
  %v4033 = vpop.permute.xlu0 %4032
  %4034 = vrot.lane.b32.xlu0 %v3789, 112
  %v4035 = vpop.permute.xlu0 %4034
  %v4036 = vsel %vm1361, %v4029, 0
  %v4038 = vsel %vm1361, %v4031, 0
  %v4040 = vsel %vm1361, %v4033, 0
  %v4042 = vsel %vm1361, %v4035, 0
  %4044 = vmatprep.subr.mxu0 0.0
  %4045 = vmatpush1.msra.mxu0 0.0
  %4046 = vmatprep.subr.mxu0 0.0
  %4047 = vmatpush1.msra.mxu0 0.0
  %4048 = vmatprep.subr.mxu0 0.0
  %4049 = vmatpush1.msra.mxu0 0.0
  %4050 = vmatprep.subr.mxu0 0.0
  %4051 = vmatpush1.msra.mxu0 0.0
  %4052 = vmatprep.subr.mxu0 0.0
  %4053 = vmatpush1.msra.mxu0 0.0
  %4054 = vmatprep.subr.mxu0 0.0
  %4055 = vmatpush1.msra.mxu0 0.0
  %4056 = vmatprep.subr.mxu0 0.0
  %4057 = vmatpush1.msra.mxu0 0.0
  %4058 = vmatprep.subr.mxu0 0.0
  %4059 = vmatpush1.msra.mxu0 0.0
  %4060 = vmatprep.subr.mxu0 0.0
  %4061 = vmatpush1.msra.mxu0 0.0
  %4062 = vmatprep.subr.mxu0 0.0
  %4063 = vmatpush1.msra.mxu0 0.0
  %4064 = vmatprep.subr.mxu0 0.0
  %4065 = vmatpush1.msra.mxu0 0.0
  %4066 = vmatprep.subr.mxu0 0.0
  %4067 = vmatpush1.msra.mxu0 0.0
  %4068 = vmatprep.subr.mxu0 0.0
  %4069 = vmatpush1.msra.mxu0 0.0
  %4070 = vmatprep.subr.mxu0 0.0
  %4071 = vmatpush1.msra.mxu0 0.0
  %4072 = vmatprep.subr.mxu0 0.0
  %4073 = vmatpush1.msra.mxu0 %v3676
  %4074 = vmatprep.subr.mxu0 0.0
  %4075 = vmatpush1.msra.mxu0 %v3671
  %4076 = vmatprep.subr.mxu0 0.0
  %4077 = vmatpush2.msra.mxu0 0.0
  %4078 = vmatprep.subr.mxu0 0.0
  %4079 = vmatpush2.msra.mxu0 0.0
  %4080 = vmatprep.subr.mxu0 0.0
  %4081 = vmatpush2.msra.mxu0 0.0
  %4082 = vmatprep.subr.mxu0 0.0
  %4083 = vmatpush2.msra.mxu0 0.0
  %4084 = vmatprep.subr.mxu0 0.0
  %4085 = vmatpush2.msra.mxu0 0.0
  %4086 = vmatprep.subr.mxu0 0.0
  %4087 = vmatpush2.msra.mxu0 0.0
  %4088 = vmatprep.subr.mxu0 0.0
  %4089 = vmatpush2.msra.mxu0 0.0
  %4090 = vmatprep.subr.mxu0 0.0
  %4091 = vmatpush2.msra.mxu0 0.0
  %4092 = vmatprep.subr.mxu0 0.0
  %4093 = vmatpush2.msra.mxu0 0.0
  %4094 = vmatprep.subr.mxu0 0.0
  %4095 = vmatpush2.msra.mxu0 0.0
  %4096 = vmatprep.subr.mxu0 0.0
  %4097 = vmatpush2.msra.mxu0 0.0
  %4098 = vmatprep.subr.mxu0 0.0
  %4099 = vmatpush2.msra.mxu0 0.0
  %4100 = vmatprep.subr.mxu0 0.0
  %4101 = vmatpush2.msra.mxu0 0.0
  %4102 = vmatprep.subr.mxu0 0.0
  %4103 = vmatpush2.msra.mxu0 0.0
  %4104 = vmatprep.subr.mxu0 0.0
  %4105 = vmatpush2.msra.mxu0 0.0
  %4106 = vmatprep.subr.mxu0 0.0
  %4107 = vmatpush2.msra.mxu0 0.0
  %4108 = vmatprep.mubr.f32.mxu0 0.0
  %4109 = vmatmul.mubr.f32.gmra.mxu0 %v4036
  %v4110 = vpop.f32.mrf.mxu0
  %v4111 = vadd.f32 0.0, %v4110
  %v4112 = vpop.f32.mrf.mxu0
  %4113 = vmatprep.mubr.f32.mxu0 0.0
  %4114 = vmatmul.mubr.f32.gmra.mxu0 %v4038
  %v4115 = vpop.f32.mrf.mxu0
  %v4116 = vadd.f32 0.0, %v4115
  %v4117 = vpop.f32.mrf.mxu0
  %4118 = vmatprep.mubr.f32.mxu0 0.0
  %4119 = vmatmul.mubr.f32.gmra.mxu0 %v4040
  %v4120 = vpop.f32.mrf.mxu0
  %v4121 = vadd.f32 0.0, %v4120
  %v4122 = vpop.f32.mrf.mxu0
  %4123 = vmatprep.mubr.f32.mxu0 0.0
  %4124 = vmatmul.mubr.f32.gmra.mxu0 %v4042
  %v4125 = vpop.f32.mrf.mxu0
  %v4126 = vadd.f32 0.0, %v4125
  %v4127 = vpop.f32.mrf.mxu0
  %4128 = vdwg.mxu0
  %v4129 = vmul.f32 %v4111, 0.17677669
  %v4130 = vmul.f32 %v4116, 0.17677669
  %v4131 = vmul.f32 %v4121, 0.17677669
  %v4132 = vmul.f32 %v4126, 0.17677669
  %v4133 = vadd.f32 %v4129, %v29
  %v4134 = vadd.f32 %v4130, %v30
  %v4135 = vadd.f32 %v4131, %v31
  %v4136 = vadd.f32 %v4132, %v32
  %v4137 = vsel %vm88, %v4133, -inf
  %v4138 = vsel %vm88, %v4134, -inf
  %v4139 = vsel %vm88, %v4135, -inf
  %v4140 = vsel %vm88, %v4136, -inf
  %v4141 = vmax.f32 %v4137, %v4138
  %v4142 = vmax.f32 %v4139, %v4140
  %v4143 = vmax.f32 %v4141, %v4142
  %v4144 = vrot.slane %v4143, 4
  %v4145 = vmax.f32 %v4143, %v4144
  %v4146 = vrot.slane %v4145, 2
  %v4147 = vmax.f32 %v4145, %v4146
  %v4148 = vrot.slane %v4147, 1
  %v4149 = vmax.f32 %v4147, %v4148
  %v4150 = vsub.f32 %v4133, %v4149
  %v4151 = vsub.f32 %v4134, %v4149
  %v4152 = vsub.f32 %v4135, %v4149
  %v4153 = vsub.f32 %v4136, %v4149
  %v4154 = vmul.f32 %v4150, 1.442695
  %v4155 = vpow.pop %v4154
  %v4156 = vmul.f32 %v4151, 1.442695
  %v4157 = vpow.pop %v4156
  %v4158 = vmul.f32 %v4152, 1.442695
  %v4159 = vpow.pop %v4158
  %v4160 = vmul.f32 %v4153, 1.442695
  %v4161 = vpow.pop %v4160
  %v4162 = vsel %vm88, %v4155, 0.0
  %v4163 = vsel %vm88, %v4157, 0.0
  %v4164 = vadd.f32 %v4162, %v4163
  %v4165 = vsel %vm88, %v4159, 0.0
  %v4166 = vadd.f32 %v4164, %v4165
  %v4167 = vsel %vm88, %v4161, 0.0
  %v4168 = vadd.f32 %v4166, %v4167
  %v4169 = vrot.slane %v4168, 4
  %v4170 = vadd.f32 %v4168, %v4169
  %v4171 = vrot.slane %v4170, 2
  %v4172 = vadd.f32 %v4170, %v4171
  %v4173 = vrot.slane %v4172, 1
  %v4174 = vadd.f32 %v4172, %v4173
  %v4175 = vrcp.pop %v4174
  %v4176 = vmul.f32 %v4174, %v4175
  %v4177 = vsub.f32 2.0, %v4176
  %v4178 = vmul.f32 %v4175, %v4177
  %v4179 = vmul.f32 %v4155, %v4178
  %v4180 = vmul.f32 %v4157, %v4178
  %v4181 = vmul.f32 %v4159, %v4178
  %v4182 = vmul.f32 %v4161, %v4178
  %4185 = vrot.lane.b32.xlu0 %v3570, 96
  %v4186 = vpop.permute.xlu0 %4185
  %4187 = vrot.lane.b32.xlu0 %v3575, 96
  %v4188 = vpop.permute.xlu0 %4187
  %v4189 = vsel %vm88, %v4186, 0
  %v4191 = vsel %vm88, %v4188, 0
  %4193 = vmatprep.subr.mxu0 0.0
  %4194 = vmatpush1.msra.mxu0 0.0
  %4195 = vmatprep.subr.mxu0 0.0
  %4196 = vmatpush1.msra.mxu0 0.0
  %4197 = vmatprep.subr.mxu0 0.0
  %4198 = vmatpush1.msra.mxu0 0.0
  %4199 = vmatprep.subr.mxu0 0.0
  %4200 = vmatpush1.msra.mxu0 0.0
  %4201 = vmatprep.subr.mxu0 0.0
  %4202 = vmatpush1.msra.mxu0 0.0
  %4203 = vmatprep.subr.mxu0 0.0
  %4204 = vmatpush1.msra.mxu0 0.0
  %4205 = vmatprep.subr.mxu0 0.0
  %4206 = vmatpush1.msra.mxu0 0.0
  %4207 = vmatprep.subr.mxu0 0.0
  %4208 = vmatpush1.msra.mxu0 0.0
  %4209 = vmatprep.subr.mxu0 0.0
  %4210 = vmatpush1.msra.mxu0 0.0
  %4211 = vmatprep.subr.mxu0 0.0
  %4212 = vmatpush1.msra.mxu0 0.0
  %4213 = vmatprep.subr.mxu0 0.0
  %4214 = vmatpush1.msra.mxu0 0.0
  %4215 = vmatprep.subr.mxu0 0.0
  %4216 = vmatpush1.msra.mxu0 0.0
  %4217 = vmatprep.subr.mxu0 0.0
  %4218 = vmatpush1.msra.mxu0 %v4182
  %4219 = vmatprep.subr.mxu0 0.0
  %4220 = vmatpush1.msra.mxu0 %v4181
  %4221 = vmatprep.subr.mxu0 0.0
  %4222 = vmatpush1.msra.mxu0 %v4180
  %4223 = vmatprep.subr.mxu0 0.0
  %4224 = vmatpush1.msra.mxu0 %v4179
  %4225 = vmatprep.subr.mxu0 0.0
  %4226 = vmatpush2.msra.mxu0 0.0
  %4227 = vmatprep.subr.mxu0 0.0
  %4228 = vmatpush2.msra.mxu0 0.0
  %4229 = vmatprep.subr.mxu0 0.0
  %4230 = vmatpush2.msra.mxu0 0.0
  %4231 = vmatprep.subr.mxu0 0.0
  %4232 = vmatpush2.msra.mxu0 0.0
  %4233 = vmatprep.subr.mxu0 0.0
  %4234 = vmatpush2.msra.mxu0 0.0
  %4235 = vmatprep.subr.mxu0 0.0
  %4236 = vmatpush2.msra.mxu0 0.0
  %4237 = vmatprep.subr.mxu0 0.0
  %4238 = vmatpush2.msra.mxu0 0.0
  %4239 = vmatprep.subr.mxu0 0.0
  %4240 = vmatpush2.msra.mxu0 0.0
  %4241 = vmatprep.subr.mxu0 0.0
  %4242 = vmatpush2.msra.mxu0 0.0
  %4243 = vmatprep.subr.mxu0 0.0
  %4244 = vmatpush2.msra.mxu0 0.0
  %4245 = vmatprep.subr.mxu0 0.0
  %4246 = vmatpush2.msra.mxu0 0.0
  %4247 = vmatprep.subr.mxu0 0.0
  %4248 = vmatpush2.msra.mxu0 0.0
  %4249 = vmatprep.subr.mxu0 0.0
  %4250 = vmatpush2.msra.mxu0 0.0
  %4251 = vmatprep.subr.mxu0 0.0
  %4252 = vmatpush2.msra.mxu0 0.0
  %4253 = vmatprep.subr.mxu0 0.0
  %4254 = vmatpush2.msra.mxu0 0.0
  %4255 = vmatprep.subr.mxu0 0.0
  %4256 = vmatpush2.msra.mxu0 0.0
  %4257 = vmatprep.mubr.f32.mxu0 0.0
  %4258 = vmatmul.mubr.f32.gmra.mxu0 %v4189
  %v4259 = vpop.f32.mrf.mxu0
  %v4260 = vadd.f32 0.0, %v4259
  %v4261 = vpop.f32.mrf.mxu0
  %4262 = vmatprep.mubr.f32.mxu0 0.0
  %4263 = vmatmul.mubr.f32.gmra.mxu0 %v4191
  %v4264 = vpop.f32.mrf.mxu0
  %v4265 = vadd.f32 0.0, %v4264
  %v4266 = vpop.f32.mrf.mxu0
  %4267 = vdwg.mxu0
  %v4268 = vlaneseq
  %v4269 = vshrl.u32 %v4268, 7
  %v4270 = vsub.s32 0, %v4269
  %v4271 = vrot.slane %v3294, %v4270
  %v4272 = vadd.f32 %v3560, %v4271
  %v4273 = vadd.f32 %v3565, %v4271
  %v4274 = vadd.f32 %v3570, %v4271
  %v4275 = vadd.f32 %v3575, %v4271
  %4276 = vmatprep.subr.mxu0 0.0
  %4277 = vmatpush1.msra.mxu0 0.0
  %4278 = vmatprep.subr.mxu0 0.0
  %4279 = vmatpush1.msra.mxu0 0.0
  %4280 = vmatprep.subr.mxu0 0.0
  %4281 = vmatpush1.msra.mxu0 0.0
  %4282 = vmatprep.subr.mxu0 0.0
  %4283 = vmatpush1.msra.mxu0 0.0
  %4284 = vmatprep.subr.mxu0 0.0
  %4285 = vmatpush1.msra.mxu0 0.0
  %4286 = vmatprep.subr.mxu0 0.0
  %4287 = vmatpush1.msra.mxu0 0.0
  %4288 = vmatprep.subr.mxu0 0.0
  %4289 = vmatpush1.msra.mxu0 0.0
  %4290 = vmatprep.subr.mxu0 0.0
  %4291 = vmatpush1.msra.mxu0 0.0
  %4292 = vmatprep.subr.mxu0 0.0
  %4293 = vmatpush1.msra.mxu0 0.0
  %4294 = vmatprep.subr.mxu0 0.0
  %4295 = vmatpush1.msra.mxu0 0.0
  %4296 = vmatprep.subr.mxu0 0.0
  %4297 = vmatpush1.msra.mxu0 0.0
  %4298 = vmatprep.subr.mxu0 0.0
  %4299 = vmatpush1.msra.mxu0 0.0
  %4300 = vmatprep.subr.mxu0 0.0
  %4301 = vmatpush1.msra.mxu0 %v3478
  %4302 = vmatprep.subr.mxu0 0.0
  %4303 = vmatpush1.msra.mxu0 %v3476
  %4304 = vmatprep.subr.mxu0 0.0
  %4305 = vmatpush1.msra.mxu0 %v3470
  %4306 = vmatprep.subr.mxu0 0.0
  %4307 = vmatpush1.msra.mxu0 %v3465
  %4308 = vmatprep.subr.mxu0 0.0
  %4309 = vmatpush2.msra.mxu0 0.0
  %4310 = vmatprep.subr.mxu0 0.0
  %4311 = vmatpush2.msra.mxu0 0.0
  %4312 = vmatprep.subr.mxu0 0.0
  %4313 = vmatpush2.msra.mxu0 0.0
  %4314 = vmatprep.subr.mxu0 0.0
  %4315 = vmatpush2.msra.mxu0 0.0
  %4316 = vmatprep.subr.mxu0 0.0
  %4317 = vmatpush2.msra.mxu0 0.0
  %4318 = vmatprep.subr.mxu0 0.0
  %4319 = vmatpush2.msra.mxu0 0.0
  %4320 = vmatprep.subr.mxu0 0.0
  %4321 = vmatpush2.msra.mxu0 0.0
  %4322 = vmatprep.subr.mxu0 0.0
  %4323 = vmatpush2.msra.mxu0 0.0
  %4324 = vmatprep.subr.mxu0 0.0
  %4325 = vmatpush2.msra.mxu0 0.0
  %4326 = vmatprep.subr.mxu0 0.0
  %4327 = vmatpush2.msra.mxu0 0.0
  %4328 = vmatprep.subr.mxu0 0.0
  %4329 = vmatpush2.msra.mxu0 0.0
  %4330 = vmatprep.subr.mxu0 0.0
  %4331 = vmatpush2.msra.mxu0 0.0
  %4332 = vmatprep.subr.mxu0 0.0
  %4333 = vmatpush2.msra.mxu0 0.0
  %4334 = vmatprep.subr.mxu0 0.0
  %4335 = vmatpush2.msra.mxu0 0.0
  %4336 = vmatprep.subr.mxu0 0.0
  %4337 = vmatpush2.msra.mxu0 0.0
  %4338 = vmatprep.subr.mxu0 0.0
  %4339 = vmatpush2.msra.mxu0 0.0
  %4340 = vmatprep.mubr.f32.mxu0 0.0
  %4341 = vmatmul.mubr.f32.gmra.mxu0 %v1847
  %v4342 = vpop.f32.mrf.mxu0
  %v4343 = vadd.f32 %v4272, %v4342
  %v4344 = vpop.f32.mrf.mxu0
  %4345 = vmatprep.mubr.f32.mxu0 0.0
  %4346 = vmatmul.mubr.f32.gmra.mxu0 %v1850
  %v4347 = vpop.f32.mrf.mxu0
  %v4348 = vadd.f32 %v4273, %v4347
  %v4349 = vpop.f32.mrf.mxu0
  %4350 = vmatprep.mubr.f32.mxu0 0.0
  %4351 = vmatmul.mubr.f32.gmra.mxu0 %v1853
  %v4352 = vpop.f32.mrf.mxu0
  %v4353 = vadd.f32 %v4274, %v4352
  %v4354 = vpop.f32.mrf.mxu0
  %4355 = vmatprep.mubr.f32.mxu0 0.0
  %4356 = vmatmul.mubr.f32.gmra.mxu0 %v1856
  %v4357 = vpop.f32.mrf.mxu0
  %v4358 = vadd.f32 %v4275, %v4357
  %v4359 = vpop.f32.mrf.mxu0
  %4360 = vdwg.mxu0
  %v4361 = vadd.f32 %v4343, %v4020
  %v4362 = vadd.f32 %v4348, %v4025
  %v4363 = vadd.f32 %v4353, %v4260
  %v4364 = vadd.f32 %v4358, %v4265
  %v4365 = vmul.f32 %v4361, 0.5
  %v4366 = vmul.f32 %v4362, 0.5
  %v4367 = vmul.f32 %v4363, 0.5
  %v4368 = vmul.f32 %v4364, 0.5
  %v4369 = vmul.f32 %v4361, 0.70710677
  %v4370 = vmul.f32 %v4362, 0.70710677
  %v4371 = vmul.f32 %v4363, 0.70710677
  %v4372 = vmul.f32 %v4364, 0.70710677
  %vm4373 = vcmp.lt.f32.partialorder %v4369, 0.0
  %vm4374 = vcmp.lt.f32.partialorder %v4370, 0.0
  %vm4375 = vcmp.lt.f32.partialorder %v4371, 0.0
  %vm4376 = vcmp.lt.f32.partialorder %v4372, 0.0
  %v4377 = vsel %vm4373, -1.0, 1.0
  %v4378 = vsel %vm4374, -1.0, 1.0
  %v4379 = vsel %vm4375, -1.0, 1.0
  %v4380 = vsel %vm4376, -1.0, 1.0
  %v4381 = vand.u32 2147483647, %v4369
  %v4382 = vand.u32 2147483647, %v4370
  %v4383 = vand.u32 2147483647, %v4371
  %v4384 = vand.u32 2147483647, %v4372
  %v4385 = vmul.f32 %v4381, 0.3275911
  %v4386 = vmul.f32 %v4382, 0.3275911
  %v4387 = vmul.f32 %v4383, 0.3275911
  %v4388 = vmul.f32 %v4384, 0.3275911
  %v4389 = vadd.f32 %v4385, 1.0
  %v4390 = vadd.f32 %v4386, 1.0
  %v4391 = vadd.f32 %v4387, 1.0
  %v4392 = vadd.f32 %v4388, 1.0
  %v4393 = vrcp.pop %v4389
  %v4394 = vmul.f32 1.0, %v4393
  %v4395 = vrcp.pop %v4390
  %v4396 = vmul.f32 1.0, %v4395
  %v4397 = vrcp.pop %v4391
  %v4398 = vmul.f32 1.0, %v4397
  %v4399 = vrcp.pop %v4392
  %v4400 = vmul.f32 1.0, %v4399
  %v4401 = vmul.f32 %v4394, 1.0614054
  %v4402 = vmul.f32 %v4396, 1.0614054
  %v4403 = vmul.f32 %v4398, 1.0614054
  %v4404 = vmul.f32 %v4400, 1.0614054
  %v4405 = vadd.f32 %v4401, -1.4531521
  %v4406 = vadd.f32 %v4402, -1.4531521
  %v4407 = vadd.f32 %v4403, -1.4531521
  %v4408 = vadd.f32 %v4404, -1.4531521
  %v4409 = vmul.f32 %v4405, %v4394
  %v4410 = vmul.f32 %v4406, %v4396
  %v4411 = vmul.f32 %v4407, %v4398
  %v4412 = vmul.f32 %v4408, %v4400
  %v4413 = vadd.f32 %v4409, 1.4214138
  %v4414 = vadd.f32 %v4410, 1.4214138
  %v4415 = vadd.f32 %v4411, 1.4214138
  %v4416 = vadd.f32 %v4412, 1.4214138
  %v4417 = vmul.f32 %v4413, %v4394
  %v4418 = vmul.f32 %v4414, %v4396
  %v4419 = vmul.f32 %v4415, %v4398
  %v4420 = vmul.f32 %v4416, %v4400
  %v4421 = vadd.f32 %v4417, -0.28449672
  %v4422 = vadd.f32 %v4418, -0.28449672
  %v4423 = vadd.f32 %v4419, -0.28449672
  %v4424 = vadd.f32 %v4420, -0.28449672
  %v4425 = vmul.f32 %v4421, %v4394
  %v4426 = vmul.f32 %v4422, %v4396
  %v4427 = vmul.f32 %v4423, %v4398
  %v4428 = vmul.f32 %v4424, %v4400
  %v4429 = vadd.f32 %v4425, 0.2548296
  %v4430 = vadd.f32 %v4426, 0.2548296
  %v4431 = vadd.f32 %v4427, 0.2548296
  %v4432 = vadd.f32 %v4428, 0.2548296
  %v4433 = vmul.f32 %v4429, %v4394
  %v4434 = vmul.f32 %v4430, %v4396
  %v4435 = vmul.f32 %v4431, %v4398
  %v4436 = vmul.f32 %v4432, %v4400
  %v4437 = vsub.f32 0.0, %v4381
  %v4438 = vsub.f32 0.0, %v4382
  %v4439 = vsub.f32 0.0, %v4383
  %v4440 = vsub.f32 0.0, %v4384
  %v4441 = vmul.f32 %v4437, %v4381
  %v4442 = vmul.f32 %v4438, %v4382
  %v4443 = vmul.f32 %v4439, %v4383
  %v4444 = vmul.f32 %v4440, %v4384
  %v4445 = vmul.f32 %v4441, 1.442695
  %v4446 = vpow.pop %v4445
  %v4447 = vmul.f32 %v4442, 1.442695
  %v4448 = vpow.pop %v4447
  %v4449 = vmul.f32 %v4443, 1.442695
  %v4450 = vpow.pop %v4449
  %v4451 = vmul.f32 %v4444, 1.442695
  %v4452 = vpow.pop %v4451
  %v4453 = vmul.f32 %v4433, %v4446
  %v4454 = vmul.f32 %v4434, %v4448
  %v4455 = vmul.f32 %v4435, %v4450
  %v4456 = vmul.f32 %v4436, %v4452
  %v4457 = vsub.f32 1.0, %v4453
  %v4458 = vsub.f32 1.0, %v4454
  %v4459 = vsub.f32 1.0, %v4455
  %v4460 = vsub.f32 1.0, %v4456
  %v4461 = vmul.f32 %v4377, %v4457
  %v4462 = vmul.f32 %v4378, %v4458
  %v4463 = vmul.f32 %v4379, %v4459
  %v4464 = vmul.f32 %v4380, %v4460
  %v4465 = vadd.f32 %v4461, 1.0
  %v4466 = vadd.f32 %v4462, 1.0
  %v4467 = vadd.f32 %v4463, 1.0
  %v4468 = vadd.f32 %v4464, 1.0
  %v4469 = vmul.f32 %v4365, %v4465
  %v4470 = vmul.f32 %v4366, %v4466
  %v4471 = vmul.f32 %v4367, %v4467
  %v4472 = vmul.f32 %v4368, %v4468
  %v4473 = vld [vmem:[%s1 + $0x178] sm:$0xff]
  %v4474 = vld [vmem:[%s1 + $0x180] sm:$0xff]
  %v4475 = vld [vmem:[%s1 + $0x188] sm:$0xff]
  %v4476 = vld [vmem:[%s1 + $0x190] sm:$0xff]
  %v4477 = vld [vmem:[%s1 + $0x198] sm:$0xff]
  %v4478 = vld [vmem:[%s1 + $0x1a0] sm:$0xff]
  %v4479 = vld [vmem:[%s1 + $0x1a8] sm:$0xff]
  %v4480 = vld [vmem:[%s1 + $0x1b0] sm:$0xff]
  %s4481 = scalar_lea.vmem %s3, 96
  %v4482 = vld [vmem:[%s4481] sm:$0xff]
  %v4483 = vld [vmem:[%s4481 + $0x8] sm:$0xff]
  %v4484 = vld [vmem:[%s4481 + $0x10] sm:$0xff]
  %v4485 = vld [vmem:[%s4481 + $0x18] sm:$0xff]
  %s4486 = scalar_lea.vmem %s4, 384
  %v4487 = vld [vmem:[%s4486] sm:$0xff]
  %v4488 = vld [vmem:[%s4486 + $0x8] sm:$0xff]
  %v4489 = vld [vmem:[%s4486 + $0x10] sm:$0xff]
  %v4490 = vld [vmem:[%s4486 + $0x18] sm:$0xff]
  %v4491 = vld [vmem:[%s4486 + $0x20] sm:$0xff]
  %v4492 = vld [vmem:[%s4486 + $0x28] sm:$0xff]
  %v4493 = vld [vmem:[%s4486 + $0x30] sm:$0xff]
  %v4494 = vld [vmem:[%s4486 + $0x38] sm:$0xff]
  %v4495 = vld [vmem:[%s4486 + $0x40] sm:$0xff]
  %v4496 = vld [vmem:[%s4486 + $0x48] sm:$0xff]
  %v4497 = vld [vmem:[%s4486 + $0x50] sm:$0xff]
  %v4498 = vld [vmem:[%s4486 + $0x58] sm:$0xff]
  %v4499 = vld [vmem:[%s4486 + $0x60] sm:$0xff]
  %v4500 = vld [vmem:[%s4486 + $0x68] sm:$0xff]
  %v4501 = vld [vmem:[%s4486 + $0x70] sm:$0xff]
  %v4502 = vld [vmem:[%s4486 + $0x78] sm:$0xff]
  %v4503 = vld [vmem:[%s1 + $0x1b] sm:$0x1]
  %4504 = vmatprep.subr.mxu0 0.0
  %4505 = vmatpush1.msra.mxu0 0.0
  %4506 = vmatprep.subr.mxu0 0.0
  %4507 = vmatpush1.msra.mxu0 0.0
  %4508 = vmatprep.subr.mxu0 0.0
  %4509 = vmatpush1.msra.mxu0 0.0
  %4510 = vmatprep.subr.mxu0 0.0
  %4511 = vmatpush1.msra.mxu0 0.0
  %4512 = vmatprep.subr.mxu0 0.0
  %4513 = vmatpush1.msra.mxu0 0.0
  %4514 = vmatprep.subr.mxu0 0.0
  %4515 = vmatpush1.msra.mxu0 0.0
  %4516 = vmatprep.subr.mxu0 0.0
  %4517 = vmatpush1.msra.mxu0 0.0
  %4518 = vmatprep.subr.mxu0 0.0
  %4519 = vmatpush1.msra.mxu0 0.0
  %4520 = vmatprep.subr.mxu0 0.0
  %4521 = vmatpush1.msra.mxu0 0.0
  %4522 = vmatprep.subr.mxu0 0.0
  %4523 = vmatpush1.msra.mxu0 0.0
  %4524 = vmatprep.subr.mxu0 0.0
  %4525 = vmatpush1.msra.mxu0 0.0
  %4526 = vmatprep.subr.mxu0 0.0
  %4527 = vmatpush1.msra.mxu0 0.0
  %4528 = vmatprep.subr.mxu0 0.0
  %4529 = vmatpush1.msra.mxu0 %v4472
  %4530 = vmatprep.subr.mxu0 0.0
  %4531 = vmatpush1.msra.mxu0 %v4471
  %4532 = vmatprep.subr.mxu0 0.0
  %4533 = vmatpush1.msra.mxu0 %v4470
  %4534 = vmatprep.subr.mxu0 0.0
  %4535 = vmatpush1.msra.mxu0 %v4469
  %4536 = vmatprep.subr.mxu0 0.0
  %4537 = vmatpush2.msra.mxu0 0.0
  %4538 = vmatprep.subr.mxu0 0.0
  %4539 = vmatpush2.msra.mxu0 0.0
  %4540 = vmatprep.subr.mxu0 0.0
  %4541 = vmatpush2.msra.mxu0 0.0
  %4542 = vmatprep.subr.mxu0 0.0
  %4543 = vmatpush2.msra.mxu0 0.0
  %4544 = vmatprep.subr.mxu0 0.0
  %4545 = vmatpush2.msra.mxu0 0.0
  %4546 = vmatprep.subr.mxu0 0.0
  %4547 = vmatpush2.msra.mxu0 0.0
  %4548 = vmatprep.subr.mxu0 0.0
  %4549 = vmatpush2.msra.mxu0 0.0
  %4550 = vmatprep.subr.mxu0 0.0
  %4551 = vmatpush2.msra.mxu0 0.0
  %4552 = vmatprep.subr.mxu0 0.0
  %4553 = vmatpush2.msra.mxu0 0.0
  %4554 = vmatprep.subr.mxu0 0.0
  %4555 = vmatpush2.msra.mxu0 0.0
  %4556 = vmatprep.subr.mxu0 0.0
  %4557 = vmatpush2.msra.mxu0 0.0
  %4558 = vmatprep.subr.mxu0 0.0
  %4559 = vmatpush2.msra.mxu0 0.0
  %4560 = vmatprep.subr.mxu0 0.0
  %4561 = vmatpush2.msra.mxu0 0.0
  %4562 = vmatprep.subr.mxu0 0.0
  %4563 = vmatpush2.msra.mxu0 0.0
  %4564 = vmatprep.subr.mxu0 0.0
  %4565 = vmatpush2.msra.mxu0 0.0
  %4566 = vmatprep.subr.mxu0 0.0
  %4567 = vmatpush2.msra.mxu0 0.0
  %4568 = vmatprep.mubr.f32.mxu0 0.0
  %4569 = vmatmul.mubr.f32.gmra.mxu0 %v857
  %v4570 = vpop.f32.mrf.mxu0
  %v4571 = vadd.f32 0.0, %v4570
  %v4572 = vpop.f32.mrf.mxu0
  %4573 = vmatprep.mubr.f32.mxu0 0.0
  %4574 = vmatmul.mubr.f32.gmra.mxu0 %v860
  %v4575 = vpop.f32.mrf.mxu0
  %v4576 = vadd.f32 0.0, %v4575
  %v4577 = vpop.f32.mrf.mxu0
  %4578 = vdwg.mxu0
  %4581 = vrot.lane.b32.xlu0 %v4571, 32
  %v4582 = vpop.permute.xlu0 %4581
  %4583 = vrot.lane.b32.xlu0 %v4576, 32
  %v4584 = vpop.permute.xlu0 %4583
  %4587 = vrot.lane.b32.xlu0 %v4571, 64
  %v4588 = vpop.permute.xlu0 %4587
  %4589 = vrot.lane.b32.xlu0 %v4576, 64
  %v4590 = vpop.permute.xlu0 %4589
  %4593 = vrot.lane.b32.xlu0 %v4571, 96
  %v4594 = vpop.permute.xlu0 %4593
  %4595 = vrot.lane.b32.xlu0 %v4576, 96
  %v4596 = vpop.permute.xlu0 %4595
  %v4599 = vsel %vm88, %v4571, %v4582
  %v4600 = vsel %vm88, %v4576, %v4584
  %v4601 = vsel %vm959, %v4599, %v4588
  %v4602 = vsel %vm959, %v4600, %v4590
  %v4603 = vsel %vm962, %v4601, %v4594
  %v4604 = vsel %vm962, %v4602, %v4596
  %v4605 = vmul.f32 %v4603, %v58
  %v4606 = vmul.f32 %v4604, %v59
  %4607 = vmatprep.subr.mxu0 0.0
  %4608 = vmatpush1.msra.mxu0 %v4502
  %4609 = vmatprep.subr.mxu0 0.0
  %4610 = vmatpush1.msra.mxu0 %v4501
  %4611 = vmatprep.subr.mxu0 0.0
  %4612 = vmatpush1.msra.mxu0 %v4500
  %4613 = vmatprep.subr.mxu0 0.0
  %4614 = vmatpush1.msra.mxu0 %v4499
  %4615 = vmatprep.subr.mxu0 0.0
  %4616 = vmatpush1.msra.mxu0 %v4498
  %4617 = vmatprep.subr.mxu0 0.0
  %4618 = vmatpush1.msra.mxu0 %v4497
  %4619 = vmatprep.subr.mxu0 0.0
  %4620 = vmatpush1.msra.mxu0 %v4496
  %4621 = vmatprep.subr.mxu0 0.0
  %4622 = vmatpush1.msra.mxu0 %v4495
  %4623 = vmatprep.subr.mxu0 0.0
  %4624 = vmatpush1.msra.mxu0 %v4494
  %4625 = vmatprep.subr.mxu0 0.0
  %4626 = vmatpush1.msra.mxu0 %v4493
  %4627 = vmatprep.subr.mxu0 0.0
  %4628 = vmatpush1.msra.mxu0 %v4492
  %4629 = vmatprep.subr.mxu0 0.0
  %4630 = vmatpush1.msra.mxu0 %v4491
  %4631 = vmatprep.subr.mxu0 0.0
  %4632 = vmatpush1.msra.mxu0 %v4490
  %4633 = vmatprep.subr.mxu0 0.0
  %4634 = vmatpush1.msra.mxu0 %v4489
  %4635 = vmatprep.subr.mxu0 0.0
  %4636 = vmatpush1.msra.mxu0 %v4488
  %4637 = vmatprep.subr.mxu0 0.0
  %4638 = vmatpush1.msra.mxu0 %v4487
  %4639 = vmatprep.subr.mxu0 0.0
  %4640 = vmatpush2.msra.mxu0 0.0
  %4641 = vmatprep.subr.mxu0 0.0
  %4642 = vmatpush2.msra.mxu0 0.0
  %4643 = vmatprep.subr.mxu0 0.0
  %4644 = vmatpush2.msra.mxu0 0.0
  %4645 = vmatprep.subr.mxu0 0.0
  %4646 = vmatpush2.msra.mxu0 0.0
  %4647 = vmatprep.subr.mxu0 0.0
  %4648 = vmatpush2.msra.mxu0 0.0
  %4649 = vmatprep.subr.mxu0 0.0
  %4650 = vmatpush2.msra.mxu0 0.0
  %4651 = vmatprep.subr.mxu0 0.0
  %4652 = vmatpush2.msra.mxu0 0.0
  %4653 = vmatprep.subr.mxu0 0.0
  %4654 = vmatpush2.msra.mxu0 0.0
  %4655 = vmatprep.subr.mxu0 0.0
  %4656 = vmatpush2.msra.mxu0 0.0
  %4657 = vmatprep.subr.mxu0 0.0
  %4658 = vmatpush2.msra.mxu0 0.0
  %4659 = vmatprep.subr.mxu0 0.0
  %4660 = vmatpush2.msra.mxu0 0.0
  %4661 = vmatprep.subr.mxu0 0.0
  %4662 = vmatpush2.msra.mxu0 0.0
  %4663 = vmatprep.subr.mxu0 0.0
  %4664 = vmatpush2.msra.mxu0 0.0
  %4665 = vmatprep.subr.mxu0 0.0
  %4666 = vmatpush2.msra.mxu0 0.0
  %4667 = vmatprep.subr.mxu0 0.0
  %4668 = vmatpush2.msra.mxu0 0.0
  %4669 = vmatprep.subr.mxu0 0.0
  %4670 = vmatpush2.msra.mxu0 0.0
  %4671 = vmatprep.mubr.f32.mxu0 0.0
  %4672 = vmatmul.mubr.f32.gmra.mxu0 %v4605
  %v4673 = vpop.f32.mrf.mxu0
  %v4674 = vadd.f32 0.0, %v4673
  %v4675 = vpop.f32.mrf.mxu0
  %4676 = vmatprep.mubr.f32.mxu0 0.0
  %4677 = vmatmul.mubr.f32.gmra.mxu0 %v4606
  %v4678 = vpop.f32.mrf.mxu0
  %v4679 = vadd.f32 0.0, %v4678
  %v4680 = vpop.f32.mrf.mxu0
  %4681 = vdwg.mxu0
  %4684 = vrot.lane.b32.xlu0 %v4674, 96
  %v4685 = vpop.permute.xlu0 %4684
  %4686 = vrot.lane.b32.xlu0 %v4679, 96
  %v4687 = vpop.permute.xlu0 %4686
  %v4691 = vsel %vm88, %v4469, 0
  %v4694 = vsel %vm88, %v4470, 0
  %v4697 = vsel %vm88, %v4471, 0
  %v4700 = vsel %vm88, %v4472, 0
  %4702 = vmatprep.subr.mxu0 0.0
  %4703 = vmatpush1.msra.mxu0 0.0
  %4704 = vmatprep.subr.mxu0 0.0
  %4705 = vmatpush1.msra.mxu0 0.0
  %4706 = vmatprep.subr.mxu0 0.0
  %4707 = vmatpush1.msra.mxu0 0.0
  %4708 = vmatprep.subr.mxu0 0.0
  %4709 = vmatpush1.msra.mxu0 0.0
  %4710 = vmatprep.subr.mxu0 0.0
  %4711 = vmatpush1.msra.mxu0 0.0
  %4712 = vmatprep.subr.mxu0 0.0
  %4713 = vmatpush1.msra.mxu0 0.0
  %4714 = vmatprep.subr.mxu0 0.0
  %4715 = vmatpush1.msra.mxu0 0.0
  %4716 = vmatprep.subr.mxu0 0.0
  %4717 = vmatpush1.msra.mxu0 0.0
  %4718 = vmatprep.subr.mxu0 0.0
  %4719 = vmatpush1.msra.mxu0 0.0
  %4720 = vmatprep.subr.mxu0 0.0
  %4721 = vmatpush1.msra.mxu0 0.0
  %4722 = vmatprep.subr.mxu0 0.0
  %4723 = vmatpush1.msra.mxu0 0.0
  %4724 = vmatprep.subr.mxu0 0.0
  %4725 = vmatpush1.msra.mxu0 0.0
  %4726 = vmatprep.subr.mxu0 0.0
  %4727 = vmatpush1.msra.mxu0 %v4485
  %4728 = vmatprep.subr.mxu0 0.0
  %4729 = vmatpush1.msra.mxu0 %v4484
  %4730 = vmatprep.subr.mxu0 0.0
  %4731 = vmatpush1.msra.mxu0 %v4483
  %4732 = vmatprep.subr.mxu0 0.0
  %4733 = vmatpush1.msra.mxu0 %v4482
  %4734 = vmatprep.subr.mxu0 0.0
  %4735 = vmatpush2.msra.mxu0 0.0
  %4736 = vmatprep.subr.mxu0 0.0
  %4737 = vmatpush2.msra.mxu0 0.0
  %4738 = vmatprep.subr.mxu0 0.0
  %4739 = vmatpush2.msra.mxu0 0.0
  %4740 = vmatprep.subr.mxu0 0.0
  %4741 = vmatpush2.msra.mxu0 0.0
  %4742 = vmatprep.subr.mxu0 0.0
  %4743 = vmatpush2.msra.mxu0 0.0
  %4744 = vmatprep.subr.mxu0 0.0
  %4745 = vmatpush2.msra.mxu0 0.0
  %4746 = vmatprep.subr.mxu0 0.0
  %4747 = vmatpush2.msra.mxu0 0.0
  %4748 = vmatprep.subr.mxu0 0.0
  %4749 = vmatpush2.msra.mxu0 0.0
  %4750 = vmatprep.subr.mxu0 0.0
  %4751 = vmatpush2.msra.mxu0 0.0
  %4752 = vmatprep.subr.mxu0 0.0
  %4753 = vmatpush2.msra.mxu0 0.0
  %4754 = vmatprep.subr.mxu0 0.0
  %4755 = vmatpush2.msra.mxu0 0.0
  %4756 = vmatprep.subr.mxu0 0.0
  %4757 = vmatpush2.msra.mxu0 0.0
  %4758 = vmatprep.subr.mxu0 0.0
  %4759 = vmatpush2.msra.mxu0 0.0
  %4760 = vmatprep.subr.mxu0 0.0
  %4761 = vmatpush2.msra.mxu0 0.0
  %4762 = vmatprep.subr.mxu0 0.0
  %4763 = vmatpush2.msra.mxu0 0.0
  %4764 = vmatprep.subr.mxu0 0.0
  %4765 = vmatpush2.msra.mxu0 0.0
  %4766 = vmatprep.mubr.f32.mxu0 0.0
  %4767 = vmatmul.mubr.f32.gmra.mxu0 %v4691
  %v4768 = vpop.f32.mrf.mxu0
  %v4769 = vadd.f32 0.0, %v4768
  %v4770 = vpop.f32.mrf.mxu0
  %4771 = vmatprep.mubr.f32.mxu0 0.0
  %4772 = vmatmul.mubr.f32.gmra.mxu0 %v4694
  %v4773 = vpop.f32.mrf.mxu0
  %v4774 = vadd.f32 0.0, %v4773
  %v4775 = vpop.f32.mrf.mxu0
  %4776 = vmatprep.mubr.f32.mxu0 0.0
  %4777 = vmatmul.mubr.f32.gmra.mxu0 %v4697
  %v4778 = vpop.f32.mrf.mxu0
  %v4779 = vadd.f32 0.0, %v4778
  %v4780 = vpop.f32.mrf.mxu0
  %4781 = vmatprep.mubr.f32.mxu0 0.0
  %4782 = vmatmul.mubr.f32.gmra.mxu0 %v4700
  %v4783 = vpop.f32.mrf.mxu0
  %v4784 = vadd.f32 0.0, %v4783
  %v4785 = vpop.f32.mrf.mxu0
  %4786 = vdwg.mxu0
  %v4787 = vadd.f32 %v4469, %v703
  %v4788 = vadd.f32 %v4470, %v704
  %v4789 = vadd.f32 %v4471, %v705
  %v4790 = vadd.f32 %v4472, %v706
  %v4792 = vsel %vm88, %v4787, 0
  %v4795 = vsel %vm88, %v4788, 0
  %v4798 = vsel %vm88, %v4789, 0
  %v4801 = vsel %vm88, %v4790, 0
  %4803 = vmatprep.subr.mxu0 0.0
  %4804 = vmatpush1.msra.mxu0 0.0
  %4805 = vmatprep.subr.mxu0 0.0
  %4806 = vmatpush1.msra.mxu0 0.0
  %4807 = vmatprep.subr.mxu0 0.0
  %4808 = vmatpush1.msra.mxu0 0.0
  %4809 = vmatprep.subr.mxu0 0.0
  %4810 = vmatpush1.msra.mxu0 0.0
  %4811 = vmatprep.subr.mxu0 0.0
  %4812 = vmatpush1.msra.mxu0 0.0
  %4813 = vmatprep.subr.mxu0 0.0
  %4814 = vmatpush1.msra.mxu0 0.0
  %4815 = vmatprep.subr.mxu0 0.0
  %4816 = vmatpush1.msra.mxu0 0.0
  %4817 = vmatprep.subr.mxu0 0.0
  %4818 = vmatpush1.msra.mxu0 0.0
  %4819 = vmatprep.subr.mxu0 0.0
  %4820 = vmatpush1.msra.mxu0 0.0
  %4821 = vmatprep.subr.mxu0 0.0
  %4822 = vmatpush1.msra.mxu0 0.0
  %4823 = vmatprep.subr.mxu0 0.0
  %4824 = vmatpush1.msra.mxu0 0.0
  %4825 = vmatprep.subr.mxu0 0.0
  %4826 = vmatpush1.msra.mxu0 0.0
  %4827 = vmatprep.subr.mxu0 0.0
  %4828 = vmatpush1.msra.mxu0 %v4476
  %4829 = vmatprep.subr.mxu0 0.0
  %4830 = vmatpush1.msra.mxu0 %v4475
  %4831 = vmatprep.subr.mxu0 0.0
  %4832 = vmatpush1.msra.mxu0 %v4474
  %4833 = vmatprep.subr.mxu0 0.0
  %4834 = vmatpush1.msra.mxu0 %v4473
  %4835 = vmatprep.subr.mxu0 0.0
  %4836 = vmatpush2.msra.mxu0 0.0
  %4837 = vmatprep.subr.mxu0 0.0
  %4838 = vmatpush2.msra.mxu0 0.0
  %4839 = vmatprep.subr.mxu0 0.0
  %4840 = vmatpush2.msra.mxu0 0.0
  %4841 = vmatprep.subr.mxu0 0.0
  %4842 = vmatpush2.msra.mxu0 0.0
  %4843 = vmatprep.subr.mxu0 0.0
  %4844 = vmatpush2.msra.mxu0 0.0
  %4845 = vmatprep.subr.mxu0 0.0
  %4846 = vmatpush2.msra.mxu0 0.0
  %4847 = vmatprep.subr.mxu0 0.0
  %4848 = vmatpush2.msra.mxu0 0.0
  %4849 = vmatprep.subr.mxu0 0.0
  %4850 = vmatpush2.msra.mxu0 0.0
  %4851 = vmatprep.subr.mxu0 0.0
  %4852 = vmatpush2.msra.mxu0 0.0
  %4853 = vmatprep.subr.mxu0 0.0
  %4854 = vmatpush2.msra.mxu0 0.0
  %4855 = vmatprep.subr.mxu0 0.0
  %4856 = vmatpush2.msra.mxu0 0.0
  %4857 = vmatprep.subr.mxu0 0.0
  %4858 = vmatpush2.msra.mxu0 0.0
  %4859 = vmatprep.subr.mxu0 0.0
  %4860 = vmatpush2.msra.mxu0 0.0
  %4861 = vmatprep.subr.mxu0 0.0
  %4862 = vmatpush2.msra.mxu0 0.0
  %4863 = vmatprep.subr.mxu0 0.0
  %4864 = vmatpush2.msra.mxu0 0.0
  %4865 = vmatprep.subr.mxu0 0.0
  %4866 = vmatpush2.msra.mxu0 0.0
  %4867 = vmatprep.mubr.f32.mxu0 0.0
  %4868 = vmatmul.mubr.f32.gmra.mxu0 %v4792
  %v4869 = vpop.f32.mrf.mxu0
  %v4870 = vadd.f32 0.0, %v4869
  %v4871 = vpop.f32.mrf.mxu0
  %4872 = vmatprep.mubr.f32.mxu0 0.0
  %4873 = vmatmul.mubr.f32.gmra.mxu0 %v4795
  %v4874 = vpop.f32.mrf.mxu0
  %v4875 = vadd.f32 0.0, %v4874
  %v4876 = vpop.f32.mrf.mxu0
  %4877 = vmatprep.mubr.f32.mxu0 0.0
  %4878 = vmatmul.mubr.f32.gmra.mxu0 %v4798
  %v4879 = vpop.f32.mrf.mxu0
  %v4880 = vadd.f32 0.0, %v4879
  %v4881 = vpop.f32.mrf.mxu0
  %4882 = vmatprep.mubr.f32.mxu0 0.0
  %4883 = vmatmul.mubr.f32.gmra.mxu0 %v4801
  %v4884 = vpop.f32.mrf.mxu0
  %v4885 = vadd.f32 0.0, %v4884
  %v4886 = vpop.f32.mrf.mxu0
  %4887 = vdwg.mxu0
  %v4888 = vadd.f32 %v4469, %v587
  %v4889 = vadd.f32 %v4470, %v588
  %v4890 = vadd.f32 %v4471, %v589
  %v4891 = vadd.f32 %v4472, %v590
  %v4893 = vsel %vm88, %v4477, 0
  %v4896 = vsel %vm88, %v4478, 0
  %v4899 = vsel %vm88, %v4479, 0
  %v4902 = vsel %vm88, %v4480, 0
  %v4905 = vsel %vm88, %v4888, 0
  %v4908 = vsel %vm88, %v4889, 0
  %v4911 = vsel %vm88, %v4890, 0
  %v4914 = vsel %vm88, %v4891, 0
  %4916 = vmatprep.subr.mxu0 0.0
  %4917 = vmatpush1.xpose.msra.mxu0 0.0
  %4918 = vmatprep.subr.mxu0 0.0
  %4919 = vmatpush1.xpose.msra.mxu0 0.0
  %4920 = vmatprep.subr.mxu0 0.0
  %4921 = vmatpush1.xpose.msra.mxu0 0.0
  %4922 = vmatprep.subr.mxu0 0.0
  %4923 = vmatpush1.xpose.msra.mxu0 0.0
  %4924 = vmatprep.subr.mxu0 0.0
  %4925 = vmatpush1.xpose.msra.mxu0 0.0
  %4926 = vmatprep.subr.mxu0 0.0
  %4927 = vmatpush1.xpose.msra.mxu0 0.0
  %4928 = vmatprep.subr.mxu0 0.0
  %4929 = vmatpush1.xpose.msra.mxu0 0.0
  %4930 = vmatprep.subr.mxu0 0.0
  %4931 = vmatpush1.xpose.msra.mxu0 0.0
  %4932 = vmatprep.subr.mxu0 0.0
  %4933 = vmatpush1.xpose.msra.mxu0 0.0
  %4934 = vmatprep.subr.mxu0 0.0
  %4935 = vmatpush1.xpose.msra.mxu0 0.0
  %4936 = vmatprep.subr.mxu0 0.0
  %4937 = vmatpush1.xpose.msra.mxu0 0.0
  %4938 = vmatprep.subr.mxu0 0.0
  %4939 = vmatpush1.xpose.msra.mxu0 0.0
  %4940 = vmatprep.subr.mxu0 0.0
  %4941 = vmatpush1.xpose.msra.mxu0 %v4914
  %4942 = vmatprep.subr.mxu0 0.0
  %4943 = vmatpush1.xpose.msra.mxu0 %v4911
  %4944 = vmatprep.subr.mxu0 0.0
  %4945 = vmatpush1.xpose.msra.mxu0 %v4908
  %4946 = vmatprep.subr.mxu0 0.0
  %4947 = vmatpush1.xpose.msra.mxu0 %v4905
  %4948 = vmatprep.subr.mxu0 0.0
  %4949 = vmatpush2.xpose.msra.mxu0 0.0
  %4950 = vmatprep.subr.mxu0 0.0
  %4951 = vmatpush2.xpose.msra.mxu0 0.0
  %4952 = vmatprep.subr.mxu0 0.0
  %4953 = vmatpush2.xpose.msra.mxu0 0.0
  %4954 = vmatprep.subr.mxu0 0.0
  %4955 = vmatpush2.xpose.msra.mxu0 0.0
  %4956 = vmatprep.subr.mxu0 0.0
  %4957 = vmatpush2.xpose.msra.mxu0 0.0
  %4958 = vmatprep.subr.mxu0 0.0
  %4959 = vmatpush2.xpose.msra.mxu0 0.0
  %4960 = vmatprep.subr.mxu0 0.0
  %4961 = vmatpush2.xpose.msra.mxu0 0.0
  %4962 = vmatprep.subr.mxu0 0.0
  %4963 = vmatpush2.xpose.msra.mxu0 0.0
  %4964 = vmatprep.subr.mxu0 0.0
  %4965 = vmatpush2.xpose.msra.mxu0 0.0
  %4966 = vmatprep.subr.mxu0 0.0
  %4967 = vmatpush2.xpose.msra.mxu0 0.0
  %4968 = vmatprep.subr.mxu0 0.0
  %4969 = vmatpush2.xpose.msra.mxu0 0.0
  %4970 = vmatprep.subr.mxu0 0.0
  %4971 = vmatpush2.xpose.msra.mxu0 0.0
  %4972 = vmatprep.subr.mxu0 0.0
  %4973 = vmatpush2.xpose.msra.mxu0 0.0
  %4974 = vmatprep.subr.mxu0 0.0
  %4975 = vmatpush2.xpose.msra.mxu0 0.0
  %4976 = vmatprep.subr.mxu0 0.0
  %4977 = vmatpush2.xpose.msra.mxu0 0.0
  %4978 = vmatprep.subr.mxu0 0.0
  %4979 = vmatpush2.xpose.msra.mxu0 0.0
  %4980 = vmatprep.mubr.f32.mxu0 0.0
  %4981 = vmatmul.mubr.f32.gmra.mxu0 %v4893
  %v4982 = vpop.f32.mrf.mxu0
  %v4983 = vadd.f32 0.0, %v4982
  %v4984 = vpop.f32.mrf.mxu0
  %4985 = vmatprep.mubr.f32.mxu0 0.0
  %4986 = vmatmul.mubr.f32.gmra.mxu0 %v4896
  %v4987 = vpop.f32.mrf.mxu0
  %v4988 = vadd.f32 0.0, %v4987
  %v4989 = vpop.f32.mrf.mxu0
  %4990 = vmatprep.mubr.f32.mxu0 0.0
  %4991 = vmatmul.mubr.f32.gmra.mxu0 %v4899
  %v4992 = vpop.f32.mrf.mxu0
  %v4993 = vadd.f32 0.0, %v4992
  %v4994 = vpop.f32.mrf.mxu0
  %4995 = vmatprep.mubr.f32.mxu0 0.0
  %4996 = vmatmul.mubr.f32.gmra.mxu0 %v4902
  %v4997 = vpop.f32.mrf.mxu0
  %v4998 = vadd.f32 0.0, %v4997
  %v4999 = vpop.f32.mrf.mxu0
  %5000 = vdwg.mxu0
  %v5002 = vsel %vm1361, %v4983, 0
  %v5005 = vsel %vm1361, %v4988, 0
  %v5008 = vsel %vm1361, %v4993, 0
  %v5011 = vsel %vm1361, %v4998, 0
  %5013 = vmatprep.subr.mxu0 0.0
  %5014 = vmatpush1.msra.mxu0 0.0
  %5015 = vmatprep.subr.mxu0 0.0
  %5016 = vmatpush1.msra.mxu0 0.0
  %5017 = vmatprep.subr.mxu0 0.0
  %5018 = vmatpush1.msra.mxu0 0.0
  %5019 = vmatprep.subr.mxu0 0.0
  %5020 = vmatpush1.msra.mxu0 0.0
  %5021 = vmatprep.subr.mxu0 0.0
  %5022 = vmatpush1.msra.mxu0 0.0
  %5023 = vmatprep.subr.mxu0 0.0
  %5024 = vmatpush1.msra.mxu0 0.0
  %5025 = vmatprep.subr.mxu0 0.0
  %5026 = vmatpush1.msra.mxu0 0.0
  %5027 = vmatprep.subr.mxu0 0.0
  %5028 = vmatpush1.msra.mxu0 0.0
  %5029 = vmatprep.subr.mxu0 0.0
  %5030 = vmatpush1.msra.mxu0 0.0
  %5031 = vmatprep.subr.mxu0 0.0
  %5032 = vmatpush1.msra.mxu0 0.0
  %5033 = vmatprep.subr.mxu0 0.0
  %5034 = vmatpush1.msra.mxu0 0.0
  %5035 = vmatprep.subr.mxu0 0.0
  %5036 = vmatpush1.msra.mxu0 0.0
  %5037 = vmatprep.subr.mxu0 0.0
  %5038 = vmatpush1.msra.mxu0 0.0
  %5039 = vmatprep.subr.mxu0 0.0
  %5040 = vmatpush1.msra.mxu0 0.0
  %5041 = vmatprep.subr.mxu0 0.0
  %5042 = vmatpush1.msra.mxu0 %v4875
  %5043 = vmatprep.subr.mxu0 0.0
  %5044 = vmatpush1.msra.mxu0 %v4870
  %5045 = vmatprep.subr.mxu0 0.0
  %5046 = vmatpush2.msra.mxu0 0.0
  %5047 = vmatprep.subr.mxu0 0.0
  %5048 = vmatpush2.msra.mxu0 0.0
  %5049 = vmatprep.subr.mxu0 0.0
  %5050 = vmatpush2.msra.mxu0 0.0
  %5051 = vmatprep.subr.mxu0 0.0
  %5052 = vmatpush2.msra.mxu0 0.0
  %5053 = vmatprep.subr.mxu0 0.0
  %5054 = vmatpush2.msra.mxu0 0.0
  %5055 = vmatprep.subr.mxu0 0.0
  %5056 = vmatpush2.msra.mxu0 0.0
  %5057 = vmatprep.subr.mxu0 0.0
  %5058 = vmatpush2.msra.mxu0 0.0
  %5059 = vmatprep.subr.mxu0 0.0
  %5060 = vmatpush2.msra.mxu0 0.0
  %5061 = vmatprep.subr.mxu0 0.0
  %5062 = vmatpush2.msra.mxu0 0.0
  %5063 = vmatprep.subr.mxu0 0.0
  %5064 = vmatpush2.msra.mxu0 0.0
  %5065 = vmatprep.subr.mxu0 0.0
  %5066 = vmatpush2.msra.mxu0 0.0
  %5067 = vmatprep.subr.mxu0 0.0
  %5068 = vmatpush2.msra.mxu0 0.0
  %5069 = vmatprep.subr.mxu0 0.0
  %5070 = vmatpush2.msra.mxu0 0.0
  %5071 = vmatprep.subr.mxu0 0.0
  %5072 = vmatpush2.msra.mxu0 0.0
  %5073 = vmatprep.subr.mxu0 0.0
  %5074 = vmatpush2.msra.mxu0 0.0
  %5075 = vmatprep.subr.mxu0 0.0
  %5076 = vmatpush2.msra.mxu0 0.0
  %5077 = vmatprep.mubr.f32.mxu0 0.0
  %5078 = vmatmul.mubr.f32.gmra.mxu0 %v5002
  %v5079 = vpop.f32.mrf.mxu0
  %v5080 = vadd.f32 0.0, %v5079
  %v5081 = vpop.f32.mrf.mxu0
  %5082 = vmatprep.mubr.f32.mxu0 0.0
  %5083 = vmatmul.mubr.f32.gmra.mxu0 %v5005
  %v5084 = vpop.f32.mrf.mxu0
  %v5085 = vadd.f32 0.0, %v5084
  %v5086 = vpop.f32.mrf.mxu0
  %5087 = vmatprep.mubr.f32.mxu0 0.0
  %5088 = vmatmul.mubr.f32.gmra.mxu0 %v5008
  %v5089 = vpop.f32.mrf.mxu0
  %v5090 = vadd.f32 0.0, %v5089
  %v5091 = vpop.f32.mrf.mxu0
  %5092 = vmatprep.mubr.f32.mxu0 0.0
  %5093 = vmatmul.mubr.f32.gmra.mxu0 %v5011
  %v5094 = vpop.f32.mrf.mxu0
  %v5095 = vadd.f32 0.0, %v5094
  %v5096 = vpop.f32.mrf.mxu0
  %5097 = vdwg.mxu0
  %v5098 = vmul.f32 %v5080, 0.17677669
  %v5099 = vmul.f32 %v5085, 0.17677669
  %v5100 = vmul.f32 %v5090, 0.17677669
  %v5101 = vmul.f32 %v5095, 0.17677669
  %v5102 = vadd.f32 %v5098, %v29
  %v5103 = vadd.f32 %v5099, %v30
  %v5104 = vadd.f32 %v5100, %v31
  %v5105 = vadd.f32 %v5101, %v32
  %v5106 = vsel %vm88, %v5102, -inf
  %v5107 = vsel %vm88, %v5103, -inf
  %v5108 = vsel %vm88, %v5104, -inf
  %v5109 = vsel %vm88, %v5105, -inf
  %v5110 = vmax.f32 %v5106, %v5107
  %v5111 = vmax.f32 %v5108, %v5109
  %v5112 = vmax.f32 %v5110, %v5111
  %v5113 = vrot.slane %v5112, 4
  %v5114 = vmax.f32 %v5112, %v5113
  %v5115 = vrot.slane %v5114, 2
  %v5116 = vmax.f32 %v5114, %v5115
  %v5117 = vrot.slane %v5116, 1
  %v5118 = vmax.f32 %v5116, %v5117
  %v5119 = vsub.f32 %v5102, %v5118
  %v5120 = vsub.f32 %v5103, %v5118
  %v5121 = vsub.f32 %v5104, %v5118
  %v5122 = vsub.f32 %v5105, %v5118
  %v5123 = vmul.f32 %v5119, 1.442695
  %v5124 = vpow.pop %v5123
  %v5125 = vmul.f32 %v5120, 1.442695
  %v5126 = vpow.pop %v5125
  %v5127 = vmul.f32 %v5121, 1.442695
  %v5128 = vpow.pop %v5127
  %v5129 = vmul.f32 %v5122, 1.442695
  %v5130 = vpow.pop %v5129
  %v5131 = vsel %vm88, %v5124, 0.0
  %v5132 = vsel %vm88, %v5126, 0.0
  %v5133 = vadd.f32 %v5131, %v5132
  %v5134 = vsel %vm88, %v5128, 0.0
  %v5135 = vadd.f32 %v5133, %v5134
  %v5136 = vsel %vm88, %v5130, 0.0
  %v5137 = vadd.f32 %v5135, %v5136
  %v5138 = vrot.slane %v5137, 4
  %v5139 = vadd.f32 %v5137, %v5138
  %v5140 = vrot.slane %v5139, 2
  %v5141 = vadd.f32 %v5139, %v5140
  %v5142 = vrot.slane %v5141, 1
  %v5143 = vadd.f32 %v5141, %v5142
  %v5144 = vrcp.pop %v5143
  %v5145 = vmul.f32 %v5143, %v5144
  %v5146 = vsub.f32 2.0, %v5145
  %v5147 = vmul.f32 %v5144, %v5146
  %v5148 = vmul.f32 %v5124, %v5147
  %v5149 = vmul.f32 %v5126, %v5147
  %v5150 = vmul.f32 %v5128, %v5147
  %v5151 = vmul.f32 %v5130, %v5147
  %5154 = vrot.lane.b32.xlu0 %v4769, 96
  %v5155 = vpop.permute.xlu0 %5154
  %5156 = vrot.lane.b32.xlu0 %v4774, 96
  %v5157 = vpop.permute.xlu0 %5156
  %v5158 = vsel %vm88, %v5155, 0
  %v5160 = vsel %vm88, %v5157, 0
  %5162 = vmatprep.subr.mxu0 0.0
  %5163 = vmatpush1.msra.mxu0 0.0
  %5164 = vmatprep.subr.mxu0 0.0
  %5165 = vmatpush1.msra.mxu0 0.0
  %5166 = vmatprep.subr.mxu0 0.0
  %5167 = vmatpush1.msra.mxu0 0.0
  %5168 = vmatprep.subr.mxu0 0.0
  %5169 = vmatpush1.msra.mxu0 0.0
  %5170 = vmatprep.subr.mxu0 0.0
  %5171 = vmatpush1.msra.mxu0 0.0
  %5172 = vmatprep.subr.mxu0 0.0
  %5173 = vmatpush1.msra.mxu0 0.0
  %5174 = vmatprep.subr.mxu0 0.0
  %5175 = vmatpush1.msra.mxu0 0.0
  %5176 = vmatprep.subr.mxu0 0.0
  %5177 = vmatpush1.msra.mxu0 0.0
  %5178 = vmatprep.subr.mxu0 0.0
  %5179 = vmatpush1.msra.mxu0 0.0
  %5180 = vmatprep.subr.mxu0 0.0
  %5181 = vmatpush1.msra.mxu0 0.0
  %5182 = vmatprep.subr.mxu0 0.0
  %5183 = vmatpush1.msra.mxu0 0.0
  %5184 = vmatprep.subr.mxu0 0.0
  %5185 = vmatpush1.msra.mxu0 0.0
  %5186 = vmatprep.subr.mxu0 0.0
  %5187 = vmatpush1.msra.mxu0 %v5151
  %5188 = vmatprep.subr.mxu0 0.0
  %5189 = vmatpush1.msra.mxu0 %v5150
  %5190 = vmatprep.subr.mxu0 0.0
  %5191 = vmatpush1.msra.mxu0 %v5149
  %5192 = vmatprep.subr.mxu0 0.0
  %5193 = vmatpush1.msra.mxu0 %v5148
  %5194 = vmatprep.subr.mxu0 0.0
  %5195 = vmatpush2.msra.mxu0 0.0
  %5196 = vmatprep.subr.mxu0 0.0
  %5197 = vmatpush2.msra.mxu0 0.0
  %5198 = vmatprep.subr.mxu0 0.0
  %5199 = vmatpush2.msra.mxu0 0.0
  %5200 = vmatprep.subr.mxu0 0.0
  %5201 = vmatpush2.msra.mxu0 0.0
  %5202 = vmatprep.subr.mxu0 0.0
  %5203 = vmatpush2.msra.mxu0 0.0
  %5204 = vmatprep.subr.mxu0 0.0
  %5205 = vmatpush2.msra.mxu0 0.0
  %5206 = vmatprep.subr.mxu0 0.0
  %5207 = vmatpush2.msra.mxu0 0.0
  %5208 = vmatprep.subr.mxu0 0.0
  %5209 = vmatpush2.msra.mxu0 0.0
  %5210 = vmatprep.subr.mxu0 0.0
  %5211 = vmatpush2.msra.mxu0 0.0
  %5212 = vmatprep.subr.mxu0 0.0
  %5213 = vmatpush2.msra.mxu0 0.0
  %5214 = vmatprep.subr.mxu0 0.0
  %5215 = vmatpush2.msra.mxu0 0.0
  %5216 = vmatprep.subr.mxu0 0.0
  %5217 = vmatpush2.msra.mxu0 0.0
  %5218 = vmatprep.subr.mxu0 0.0
  %5219 = vmatpush2.msra.mxu0 0.0
  %5220 = vmatprep.subr.mxu0 0.0
  %5221 = vmatpush2.msra.mxu0 0.0
  %5222 = vmatprep.subr.mxu0 0.0
  %5223 = vmatpush2.msra.mxu0 0.0
  %5224 = vmatprep.subr.mxu0 0.0
  %5225 = vmatpush2.msra.mxu0 0.0
  %5226 = vmatprep.mubr.f32.mxu0 0.0
  %5227 = vmatmul.mubr.f32.gmra.mxu0 %v5158
  %v5228 = vpop.f32.mrf.mxu0
  %v5229 = vadd.f32 0.0, %v5228
  %v5230 = vpop.f32.mrf.mxu0
  %5231 = vmatprep.mubr.f32.mxu0 0.0
  %5232 = vmatmul.mubr.f32.gmra.mxu0 %v5160
  %v5233 = vpop.f32.mrf.mxu0
  %v5234 = vadd.f32 0.0, %v5233
  %v5235 = vpop.f32.mrf.mxu0
  %5236 = vdwg.mxu0
  %5237 = vrot.lane.b32.xlu0 %v4983, 112
  %v5238 = vpop.permute.xlu0 %5237
  %5239 = vrot.lane.b32.xlu0 %v4988, 112
  %v5240 = vpop.permute.xlu0 %5239
  %5241 = vrot.lane.b32.xlu0 %v4993, 112
  %v5242 = vpop.permute.xlu0 %5241
  %5243 = vrot.lane.b32.xlu0 %v4998, 112
  %v5244 = vpop.permute.xlu0 %5243
  %v5245 = vsel %vm1361, %v5238, 0
  %v5247 = vsel %vm1361, %v5240, 0
  %v5249 = vsel %vm1361, %v5242, 0
  %v5251 = vsel %vm1361, %v5244, 0
  %5253 = vmatprep.subr.mxu0 0.0
  %5254 = vmatpush1.msra.mxu0 0.0
  %5255 = vmatprep.subr.mxu0 0.0
  %5256 = vmatpush1.msra.mxu0 0.0
  %5257 = vmatprep.subr.mxu0 0.0
  %5258 = vmatpush1.msra.mxu0 0.0
  %5259 = vmatprep.subr.mxu0 0.0
  %5260 = vmatpush1.msra.mxu0 0.0
  %5261 = vmatprep.subr.mxu0 0.0
  %5262 = vmatpush1.msra.mxu0 0.0
  %5263 = vmatprep.subr.mxu0 0.0
  %5264 = vmatpush1.msra.mxu0 0.0
  %5265 = vmatprep.subr.mxu0 0.0
  %5266 = vmatpush1.msra.mxu0 0.0
  %5267 = vmatprep.subr.mxu0 0.0
  %5268 = vmatpush1.msra.mxu0 0.0
  %5269 = vmatprep.subr.mxu0 0.0
  %5270 = vmatpush1.msra.mxu0 0.0
  %5271 = vmatprep.subr.mxu0 0.0
  %5272 = vmatpush1.msra.mxu0 0.0
  %5273 = vmatprep.subr.mxu0 0.0
  %5274 = vmatpush1.msra.mxu0 0.0
  %5275 = vmatprep.subr.mxu0 0.0
  %5276 = vmatpush1.msra.mxu0 0.0
  %5277 = vmatprep.subr.mxu0 0.0
  %5278 = vmatpush1.msra.mxu0 0.0
  %5279 = vmatprep.subr.mxu0 0.0
  %5280 = vmatpush1.msra.mxu0 0.0
  %5281 = vmatprep.subr.mxu0 0.0
  %5282 = vmatpush1.msra.mxu0 %v4885
  %5283 = vmatprep.subr.mxu0 0.0
  %5284 = vmatpush1.msra.mxu0 %v4880
  %5285 = vmatprep.subr.mxu0 0.0
  %5286 = vmatpush2.msra.mxu0 0.0
  %5287 = vmatprep.subr.mxu0 0.0
  %5288 = vmatpush2.msra.mxu0 0.0
  %5289 = vmatprep.subr.mxu0 0.0
  %5290 = vmatpush2.msra.mxu0 0.0
  %5291 = vmatprep.subr.mxu0 0.0
  %5292 = vmatpush2.msra.mxu0 0.0
  %5293 = vmatprep.subr.mxu0 0.0
  %5294 = vmatpush2.msra.mxu0 0.0
  %5295 = vmatprep.subr.mxu0 0.0
  %5296 = vmatpush2.msra.mxu0 0.0
  %5297 = vmatprep.subr.mxu0 0.0
  %5298 = vmatpush2.msra.mxu0 0.0
  %5299 = vmatprep.subr.mxu0 0.0
  %5300 = vmatpush2.msra.mxu0 0.0
  %5301 = vmatprep.subr.mxu0 0.0
  %5302 = vmatpush2.msra.mxu0 0.0
  %5303 = vmatprep.subr.mxu0 0.0
  %5304 = vmatpush2.msra.mxu0 0.0
  %5305 = vmatprep.subr.mxu0 0.0
  %5306 = vmatpush2.msra.mxu0 0.0
  %5307 = vmatprep.subr.mxu0 0.0
  %5308 = vmatpush2.msra.mxu0 0.0
  %5309 = vmatprep.subr.mxu0 0.0
  %5310 = vmatpush2.msra.mxu0 0.0
  %5311 = vmatprep.subr.mxu0 0.0
  %5312 = vmatpush2.msra.mxu0 0.0
  %5313 = vmatprep.subr.mxu0 0.0
  %5314 = vmatpush2.msra.mxu0 0.0
  %5315 = vmatprep.subr.mxu0 0.0
  %5316 = vmatpush2.msra.mxu0 0.0
  %5317 = vmatprep.mubr.f32.mxu0 0.0
  %5318 = vmatmul.mubr.f32.gmra.mxu0 %v5245
  %v5319 = vpop.f32.mrf.mxu0
  %v5320 = vadd.f32 0.0, %v5319
  %v5321 = vpop.f32.mrf.mxu0
  %5322 = vmatprep.mubr.f32.mxu0 0.0
  %5323 = vmatmul.mubr.f32.gmra.mxu0 %v5247
  %v5324 = vpop.f32.mrf.mxu0
  %v5325 = vadd.f32 0.0, %v5324
  %v5326 = vpop.f32.mrf.mxu0
  %5327 = vmatprep.mubr.f32.mxu0 0.0
  %5328 = vmatmul.mubr.f32.gmra.mxu0 %v5249
  %v5329 = vpop.f32.mrf.mxu0
  %v5330 = vadd.f32 0.0, %v5329
  %v5331 = vpop.f32.mrf.mxu0
  %5332 = vmatprep.mubr.f32.mxu0 0.0
  %5333 = vmatmul.mubr.f32.gmra.mxu0 %v5251
  %v5334 = vpop.f32.mrf.mxu0
  %v5335 = vadd.f32 0.0, %v5334
  %v5336 = vpop.f32.mrf.mxu0
  %5337 = vdwg.mxu0
  %v5338 = vmul.f32 %v5320, 0.17677669
  %v5339 = vmul.f32 %v5325, 0.17677669
  %v5340 = vmul.f32 %v5330, 0.17677669
  %v5341 = vmul.f32 %v5335, 0.17677669
  %v5342 = vadd.f32 %v5338, %v29
  %v5343 = vadd.f32 %v5339, %v30
  %v5344 = vadd.f32 %v5340, %v31
  %v5345 = vadd.f32 %v5341, %v32
  %v5346 = vsel %vm88, %v5342, -inf
  %v5347 = vsel %vm88, %v5343, -inf
  %v5348 = vsel %vm88, %v5344, -inf
  %v5349 = vsel %vm88, %v5345, -inf
  %v5350 = vmax.f32 %v5346, %v5347
  %v5351 = vmax.f32 %v5348, %v5349
  %v5352 = vmax.f32 %v5350, %v5351
  %v5353 = vrot.slane %v5352, 4
  %v5354 = vmax.f32 %v5352, %v5353
  %v5355 = vrot.slane %v5354, 2
  %v5356 = vmax.f32 %v5354, %v5355
  %v5357 = vrot.slane %v5356, 1
  %v5358 = vmax.f32 %v5356, %v5357
  %v5359 = vsub.f32 %v5342, %v5358
  %v5360 = vsub.f32 %v5343, %v5358
  %v5361 = vsub.f32 %v5344, %v5358
  %v5362 = vsub.f32 %v5345, %v5358
  %v5363 = vmul.f32 %v5359, 1.442695
  %v5364 = vpow.pop %v5363
  %v5365 = vmul.f32 %v5360, 1.442695
  %v5366 = vpow.pop %v5365
  %v5367 = vmul.f32 %v5361, 1.442695
  %v5368 = vpow.pop %v5367
  %v5369 = vmul.f32 %v5362, 1.442695
  %v5370 = vpow.pop %v5369
  %v5371 = vsel %vm88, %v5364, 0.0
  %v5372 = vsel %vm88, %v5366, 0.0
  %v5373 = vadd.f32 %v5371, %v5372
  %v5374 = vsel %vm88, %v5368, 0.0
  %v5375 = vadd.f32 %v5373, %v5374
  %v5376 = vsel %vm88, %v5370, 0.0
  %v5377 = vadd.f32 %v5375, %v5376
  %v5378 = vrot.slane %v5377, 4
  %v5379 = vadd.f32 %v5377, %v5378
  %v5380 = vrot.slane %v5379, 2
  %v5381 = vadd.f32 %v5379, %v5380
  %v5382 = vrot.slane %v5381, 1
  %v5383 = vadd.f32 %v5381, %v5382
  %v5384 = vrcp.pop %v5383
  %v5385 = vmul.f32 %v5383, %v5384
  %v5386 = vsub.f32 2.0, %v5385
  %v5387 = vmul.f32 %v5384, %v5386
  %v5388 = vmul.f32 %v5364, %v5387
  %v5389 = vmul.f32 %v5366, %v5387
  %v5390 = vmul.f32 %v5368, %v5387
  %v5391 = vmul.f32 %v5370, %v5387
  %5394 = vrot.lane.b32.xlu0 %v4779, 96
  %v5395 = vpop.permute.xlu0 %5394
  %5396 = vrot.lane.b32.xlu0 %v4784, 96
  %v5397 = vpop.permute.xlu0 %5396
  %v5398 = vsel %vm88, %v5395, 0
  %v5400 = vsel %vm88, %v5397, 0
  %5402 = vmatprep.subr.mxu0 0.0
  %5403 = vmatpush1.msra.mxu0 0.0
  %5404 = vmatprep.subr.mxu0 0.0
  %5405 = vmatpush1.msra.mxu0 0.0
  %5406 = vmatprep.subr.mxu0 0.0
  %5407 = vmatpush1.msra.mxu0 0.0
  %5408 = vmatprep.subr.mxu0 0.0
  %5409 = vmatpush1.msra.mxu0 0.0
  %5410 = vmatprep.subr.mxu0 0.0
  %5411 = vmatpush1.msra.mxu0 0.0
  %5412 = vmatprep.subr.mxu0 0.0
  %5413 = vmatpush1.msra.mxu0 0.0
  %5414 = vmatprep.subr.mxu0 0.0
  %5415 = vmatpush1.msra.mxu0 0.0
  %5416 = vmatprep.subr.mxu0 0.0
  %5417 = vmatpush1.msra.mxu0 0.0
  %5418 = vmatprep.subr.mxu0 0.0
  %5419 = vmatpush1.msra.mxu0 0.0
  %5420 = vmatprep.subr.mxu0 0.0
  %5421 = vmatpush1.msra.mxu0 0.0
  %5422 = vmatprep.subr.mxu0 0.0
  %5423 = vmatpush1.msra.mxu0 0.0
  %5424 = vmatprep.subr.mxu0 0.0
  %5425 = vmatpush1.msra.mxu0 0.0
  %5426 = vmatprep.subr.mxu0 0.0
  %5427 = vmatpush1.msra.mxu0 %v5391
  %5428 = vmatprep.subr.mxu0 0.0
  %5429 = vmatpush1.msra.mxu0 %v5390
  %5430 = vmatprep.subr.mxu0 0.0
  %5431 = vmatpush1.msra.mxu0 %v5389
  %5432 = vmatprep.subr.mxu0 0.0
  %5433 = vmatpush1.msra.mxu0 %v5388
  %5434 = vmatprep.subr.mxu0 0.0
  %5435 = vmatpush2.msra.mxu0 0.0
  %5436 = vmatprep.subr.mxu0 0.0
  %5437 = vmatpush2.msra.mxu0 0.0
  %5438 = vmatprep.subr.mxu0 0.0
  %5439 = vmatpush2.msra.mxu0 0.0
  %5440 = vmatprep.subr.mxu0 0.0
  %5441 = vmatpush2.msra.mxu0 0.0
  %5442 = vmatprep.subr.mxu0 0.0
  %5443 = vmatpush2.msra.mxu0 0.0
  %5444 = vmatprep.subr.mxu0 0.0
  %5445 = vmatpush2.msra.mxu0 0.0
  %5446 = vmatprep.subr.mxu0 0.0
  %5447 = vmatpush2.msra.mxu0 0.0
  %5448 = vmatprep.subr.mxu0 0.0
  %5449 = vmatpush2.msra.mxu0 0.0
  %5450 = vmatprep.subr.mxu0 0.0
  %5451 = vmatpush2.msra.mxu0 0.0
  %5452 = vmatprep.subr.mxu0 0.0
  %5453 = vmatpush2.msra.mxu0 0.0
  %5454 = vmatprep.subr.mxu0 0.0
  %5455 = vmatpush2.msra.mxu0 0.0
  %5456 = vmatprep.subr.mxu0 0.0
  %5457 = vmatpush2.msra.mxu0 0.0
  %5458 = vmatprep.subr.mxu0 0.0
  %5459 = vmatpush2.msra.mxu0 0.0
  %5460 = vmatprep.subr.mxu0 0.0
  %5461 = vmatpush2.msra.mxu0 0.0
  %5462 = vmatprep.subr.mxu0 0.0
  %5463 = vmatpush2.msra.mxu0 0.0
  %5464 = vmatprep.subr.mxu0 0.0
  %5465 = vmatpush2.msra.mxu0 0.0
  %5466 = vmatprep.mubr.f32.mxu0 0.0
  %5467 = vmatmul.mubr.f32.gmra.mxu0 %v5398
  %v5468 = vpop.f32.mrf.mxu0
  %v5469 = vadd.f32 0.0, %v5468
  %v5470 = vpop.f32.mrf.mxu0
  %5471 = vmatprep.mubr.f32.mxu0 0.0
  %5472 = vmatmul.mubr.f32.gmra.mxu0 %v5400
  %v5473 = vpop.f32.mrf.mxu0
  %v5474 = vadd.f32 0.0, %v5473
  %v5475 = vpop.f32.mrf.mxu0
  %5476 = vdwg.mxu0
  %v5477 = vlaneseq
  %v5478 = vshrl.u32 %v5477, 7
  %v5479 = vsub.s32 0, %v5478
  %v5480 = vrot.slane %v4503, %v5479
  %v5481 = vadd.f32 %v4769, %v5480
  %v5482 = vadd.f32 %v4774, %v5480
  %v5483 = vadd.f32 %v4779, %v5480
  %v5484 = vadd.f32 %v4784, %v5480
  %5485 = vmatprep.subr.mxu0 0.0
  %5486 = vmatpush1.msra.mxu0 0.0
  %5487 = vmatprep.subr.mxu0 0.0
  %5488 = vmatpush1.msra.mxu0 0.0
  %5489 = vmatprep.subr.mxu0 0.0
  %5490 = vmatpush1.msra.mxu0 0.0
  %5491 = vmatprep.subr.mxu0 0.0
  %5492 = vmatpush1.msra.mxu0 0.0
  %5493 = vmatprep.subr.mxu0 0.0
  %5494 = vmatpush1.msra.mxu0 0.0
  %5495 = vmatprep.subr.mxu0 0.0
  %5496 = vmatpush1.msra.mxu0 0.0
  %5497 = vmatprep.subr.mxu0 0.0
  %5498 = vmatpush1.msra.mxu0 0.0
  %5499 = vmatprep.subr.mxu0 0.0
  %5500 = vmatpush1.msra.mxu0 0.0
  %5501 = vmatprep.subr.mxu0 0.0
  %5502 = vmatpush1.msra.mxu0 0.0
  %5503 = vmatprep.subr.mxu0 0.0
  %5504 = vmatpush1.msra.mxu0 0.0
  %5505 = vmatprep.subr.mxu0 0.0
  %5506 = vmatpush1.msra.mxu0 0.0
  %5507 = vmatprep.subr.mxu0 0.0
  %5508 = vmatpush1.msra.mxu0 0.0
  %5509 = vmatprep.subr.mxu0 0.0
  %5510 = vmatpush1.msra.mxu0 %v4687
  %5511 = vmatprep.subr.mxu0 0.0
  %5512 = vmatpush1.msra.mxu0 %v4685
  %5513 = vmatprep.subr.mxu0 0.0
  %5514 = vmatpush1.msra.mxu0 %v4679
  %5515 = vmatprep.subr.mxu0 0.0
  %5516 = vmatpush1.msra.mxu0 %v4674
  %5517 = vmatprep.subr.mxu0 0.0
  %5518 = vmatpush2.msra.mxu0 0.0
  %5519 = vmatprep.subr.mxu0 0.0
  %5520 = vmatpush2.msra.mxu0 0.0
  %5521 = vmatprep.subr.mxu0 0.0
  %5522 = vmatpush2.msra.mxu0 0.0
  %5523 = vmatprep.subr.mxu0 0.0
  %5524 = vmatpush2.msra.mxu0 0.0
  %5525 = vmatprep.subr.mxu0 0.0
  %5526 = vmatpush2.msra.mxu0 0.0
  %5527 = vmatprep.subr.mxu0 0.0
  %5528 = vmatpush2.msra.mxu0 0.0
  %5529 = vmatprep.subr.mxu0 0.0
  %5530 = vmatpush2.msra.mxu0 0.0
  %5531 = vmatprep.subr.mxu0 0.0
  %5532 = vmatpush2.msra.mxu0 0.0
  %5533 = vmatprep.subr.mxu0 0.0
  %5534 = vmatpush2.msra.mxu0 0.0
  %5535 = vmatprep.subr.mxu0 0.0
  %5536 = vmatpush2.msra.mxu0 0.0
  %5537 = vmatprep.subr.mxu0 0.0
  %5538 = vmatpush2.msra.mxu0 0.0
  %5539 = vmatprep.subr.mxu0 0.0
  %5540 = vmatpush2.msra.mxu0 0.0
  %5541 = vmatprep.subr.mxu0 0.0
  %5542 = vmatpush2.msra.mxu0 0.0
  %5543 = vmatprep.subr.mxu0 0.0
  %5544 = vmatpush2.msra.mxu0 0.0
  %5545 = vmatprep.subr.mxu0 0.0
  %5546 = vmatpush2.msra.mxu0 0.0
  %5547 = vmatprep.subr.mxu0 0.0
  %5548 = vmatpush2.msra.mxu0 0.0
  %5549 = vmatprep.mubr.f32.mxu0 0.0
  %5550 = vmatmul.mubr.f32.gmra.mxu0 %v1847
  %v5551 = vpop.f32.mrf.mxu0
  %v5552 = vadd.f32 %v5481, %v5551
  %v5553 = vpop.f32.mrf.mxu0
  %5554 = vmatprep.mubr.f32.mxu0 0.0
  %5555 = vmatmul.mubr.f32.gmra.mxu0 %v1850
  %v5556 = vpop.f32.mrf.mxu0
  %v5557 = vadd.f32 %v5482, %v5556
  %v5558 = vpop.f32.mrf.mxu0
  %5559 = vmatprep.mubr.f32.mxu0 0.0
  %5560 = vmatmul.mubr.f32.gmra.mxu0 %v1853
  %v5561 = vpop.f32.mrf.mxu0
  %v5562 = vadd.f32 %v5483, %v5561
  %v5563 = vpop.f32.mrf.mxu0
  %5564 = vmatprep.mubr.f32.mxu0 0.0
  %5565 = vmatmul.mubr.f32.gmra.mxu0 %v1856
  %v5566 = vpop.f32.mrf.mxu0
  %v5567 = vadd.f32 %v5484, %v5566
  %v5568 = vpop.f32.mrf.mxu0
  %5569 = vdwg.mxu0
  %v5570 = vadd.f32 %v5552, %v5229
  %v5571 = vadd.f32 %v5557, %v5234
  %v5572 = vadd.f32 %v5562, %v5469
  %v5573 = vadd.f32 %v5567, %v5474
  %v5574 = vlaneseq
  %v5575 = vshrl.u32 %v5574, 7
  %v5576 = vsub.s32 0, %v5575
  %v5577 = vrot.slane %v56, %v5576
  %v5579 = vsel %vm88, %v5570, 0
  %v5582 = vsel %vm88, %v5571, 0
  %v5585 = vsel %vm88, %v5572, 0
  %v5588 = vsel %vm88, %v5573, 0
  %5590 = vmatprep.subr.mxu0 0.0
  %5591 = vmatpush1.msra.mxu0 0.0
  %5592 = vmatprep.subr.mxu0 0.0
  %5593 = vmatpush1.msra.mxu0 0.0
  %5594 = vmatprep.subr.mxu0 0.0
  %5595 = vmatpush1.msra.mxu0 0.0
  %5596 = vmatprep.subr.mxu0 0.0
  %5597 = vmatpush1.msra.mxu0 0.0
  %5598 = vmatprep.subr.mxu0 0.0
  %5599 = vmatpush1.msra.mxu0 0.0
  %5600 = vmatprep.subr.mxu0 0.0
  %5601 = vmatpush1.msra.mxu0 0.0
  %5602 = vmatprep.subr.mxu0 0.0
  %5603 = vmatpush1.msra.mxu0 0.0
  %5604 = vmatprep.subr.mxu0 0.0
  %5605 = vmatpush1.msra.mxu0 0.0
  %5606 = vmatprep.subr.mxu0 0.0
  %5607 = vmatpush1.msra.mxu0 0.0
  %5608 = vmatprep.subr.mxu0 0.0
  %5609 = vmatpush1.msra.mxu0 0.0
  %5610 = vmatprep.subr.mxu0 0.0
  %5611 = vmatpush1.msra.mxu0 0.0
  %5612 = vmatprep.subr.mxu0 0.0
  %5613 = vmatpush1.msra.mxu0 0.0
  %5614 = vmatprep.subr.mxu0 0.0
  %5615 = vmatpush1.msra.mxu0 %v55
  %5616 = vmatprep.subr.mxu0 0.0
  %5617 = vmatpush1.msra.mxu0 %v54
  %5618 = vmatprep.subr.mxu0 0.0
  %5619 = vmatpush1.msra.mxu0 %v53
  %5620 = vmatprep.subr.mxu0 0.0
  %5621 = vmatpush1.msra.mxu0 %v52
  %5622 = vmatprep.subr.mxu0 0.0
  %5623 = vmatpush2.msra.mxu0 0.0
  %5624 = vmatprep.subr.mxu0 0.0
  %5625 = vmatpush2.msra.mxu0 0.0
  %5626 = vmatprep.subr.mxu0 0.0
  %5627 = vmatpush2.msra.mxu0 0.0
  %5628 = vmatprep.subr.mxu0 0.0
  %5629 = vmatpush2.msra.mxu0 0.0
  %5630 = vmatprep.subr.mxu0 0.0
  %5631 = vmatpush2.msra.mxu0 0.0
  %5632 = vmatprep.subr.mxu0 0.0
  %5633 = vmatpush2.msra.mxu0 0.0
  %5634 = vmatprep.subr.mxu0 0.0
  %5635 = vmatpush2.msra.mxu0 0.0
  %5636 = vmatprep.subr.mxu0 0.0
  %5637 = vmatpush2.msra.mxu0 0.0
  %5638 = vmatprep.subr.mxu0 0.0
  %5639 = vmatpush2.msra.mxu0 0.0
  %5640 = vmatprep.subr.mxu0 0.0
  %5641 = vmatpush2.msra.mxu0 0.0
  %5642 = vmatprep.subr.mxu0 0.0
  %5643 = vmatpush2.msra.mxu0 0.0
  %5644 = vmatprep.subr.mxu0 0.0
  %5645 = vmatpush2.msra.mxu0 0.0
  %5646 = vmatprep.subr.mxu0 0.0
  %5647 = vmatpush2.msra.mxu0 0.0
  %5648 = vmatprep.subr.mxu0 0.0
  %5649 = vmatpush2.msra.mxu0 0.0
  %5650 = vmatprep.subr.mxu0 0.0
  %5651 = vmatpush2.msra.mxu0 0.0
  %5652 = vmatprep.subr.mxu0 0.0
  %5653 = vmatpush2.msra.mxu0 0.0
  %5654 = vmatprep.mubr.f32.mxu0 0.0
  %5655 = vmatmul.mubr.f32.gmra.mxu0 %v5579
  %v5656 = vpop.f32.mrf.mxu0
  %v5657 = vadd.f32 %v5577, %v5656
  %v5658 = vpop.f32.mrf.mxu0
  %5659 = vmatprep.mubr.f32.mxu0 0.0
  %5660 = vmatmul.mubr.f32.gmra.mxu0 %v5582
  %v5661 = vpop.f32.mrf.mxu0
  %v5662 = vadd.f32 %v5577, %v5661
  %v5663 = vpop.f32.mrf.mxu0
  %5664 = vmatprep.mubr.f32.mxu0 0.0
  %5665 = vmatmul.mubr.f32.gmra.mxu0 %v5585
  %v5666 = vpop.f32.mrf.mxu0
  %v5667 = vadd.f32 %v5577, %v5666
  %v5668 = vpop.f32.mrf.mxu0
  %5669 = vmatprep.mubr.f32.mxu0 0.0
  %5670 = vmatmul.mubr.f32.gmra.mxu0 %v5588
  %v5671 = vpop.f32.mrf.mxu0
  %v5672 = vadd.f32 %v5577, %v5671
  %v5673 = vpop.f32.mrf.mxu0
  %5674 = vdwg.mxu0
  %v5675 = vmul.f32 %v5657, 0.5
  %v5676 = vmul.f32 %v5662, 0.5
  %v5677 = vmul.f32 %v5667, 0.5
  %v5678 = vmul.f32 %v5672, 0.5
  %v5679 = vmul.f32 %v5657, 0.70710677
  %v5680 = vmul.f32 %v5662, 0.70710677
  %v5681 = vmul.f32 %v5667, 0.70710677
  %v5682 = vmul.f32 %v5672, 0.70710677
  %vm5683 = vcmp.lt.f32.partialorder %v5679, 0.0
  %vm5684 = vcmp.lt.f32.partialorder %v5680, 0.0
  %vm5685 = vcmp.lt.f32.partialorder %v5681, 0.0
  %vm5686 = vcmp.lt.f32.partialorder %v5682, 0.0
  %v5687 = vsel %vm5683, -1.0, 1.0
  %v5688 = vsel %vm5684, -1.0, 1.0
  %v5689 = vsel %vm5685, -1.0, 1.0
  %v5690 = vsel %vm5686, -1.0, 1.0
  %v5691 = vand.u32 2147483647, %v5679
  %v5692 = vand.u32 2147483647, %v5680
  %v5693 = vand.u32 2147483647, %v5681
  %v5694 = vand.u32 2147483647, %v5682
  %v5695 = vmul.f32 %v5691, 0.3275911
  %v5696 = vmul.f32 %v5692, 0.3275911
  %v5697 = vmul.f32 %v5693, 0.3275911
  %v5698 = vmul.f32 %v5694, 0.3275911
  %v5699 = vadd.f32 %v5695, 1.0
  %v5700 = vadd.f32 %v5696, 1.0
  %v5701 = vadd.f32 %v5697, 1.0
  %v5702 = vadd.f32 %v5698, 1.0
  %v5703 = vrcp.pop %v5699
  %v5704 = vmul.f32 1.0, %v5703
  %v5705 = vrcp.pop %v5700
  %v5706 = vmul.f32 1.0, %v5705
  %v5707 = vrcp.pop %v5701
  %v5708 = vmul.f32 1.0, %v5707
  %v5709 = vrcp.pop %v5702
  %v5710 = vmul.f32 1.0, %v5709
  %v5711 = vmul.f32 %v5704, 1.0614054
  %v5712 = vmul.f32 %v5706, 1.0614054
  %v5713 = vmul.f32 %v5708, 1.0614054
  %v5714 = vmul.f32 %v5710, 1.0614054
  %v5715 = vadd.f32 %v5711, -1.4531521
  %v5716 = vadd.f32 %v5712, -1.4531521
  %v5717 = vadd.f32 %v5713, -1.4531521
  %v5718 = vadd.f32 %v5714, -1.4531521
  %v5719 = vmul.f32 %v5715, %v5704
  %v5720 = vmul.f32 %v5716, %v5706
  %v5721 = vmul.f32 %v5717, %v5708
  %v5722 = vmul.f32 %v5718, %v5710
  %v5723 = vadd.f32 %v5719, 1.4214138
  %v5724 = vadd.f32 %v5720, 1.4214138
  %v5725 = vadd.f32 %v5721, 1.4214138
  %v5726 = vadd.f32 %v5722, 1.4214138
  %v5727 = vmul.f32 %v5723, %v5704
  %v5728 = vmul.f32 %v5724, %v5706
  %v5729 = vmul.f32 %v5725, %v5708
  %v5730 = vmul.f32 %v5726, %v5710
  %v5731 = vadd.f32 %v5727, -0.28449672
  %v5732 = vadd.f32 %v5728, -0.28449672
  %v5733 = vadd.f32 %v5729, -0.28449672
  %v5734 = vadd.f32 %v5730, -0.28449672
  %v5735 = vmul.f32 %v5731, %v5704
  %v5736 = vmul.f32 %v5732, %v5706
  %v5737 = vmul.f32 %v5733, %v5708
  %v5738 = vmul.f32 %v5734, %v5710
  %v5739 = vadd.f32 %v5735, 0.2548296
  %v5740 = vadd.f32 %v5736, 0.2548296
  %v5741 = vadd.f32 %v5737, 0.2548296
  %v5742 = vadd.f32 %v5738, 0.2548296
  %v5743 = vmul.f32 %v5739, %v5704
  %v5744 = vmul.f32 %v5740, %v5706
  %v5745 = vmul.f32 %v5741, %v5708
  %v5746 = vmul.f32 %v5742, %v5710
  %v5747 = vsub.f32 0.0, %v5691
  %v5748 = vsub.f32 0.0, %v5692
  %v5749 = vsub.f32 0.0, %v5693
  %v5750 = vsub.f32 0.0, %v5694
  %v5751 = vmul.f32 %v5747, %v5691
  %v5752 = vmul.f32 %v5748, %v5692
  %v5753 = vmul.f32 %v5749, %v5693
  %v5754 = vmul.f32 %v5750, %v5694
  %v5755 = vmul.f32 %v5751, 1.442695
  %v5756 = vpow.pop %v5755
  %v5757 = vmul.f32 %v5752, 1.442695
  %v5758 = vpow.pop %v5757
  %v5759 = vmul.f32 %v5753, 1.442695
  %v5760 = vpow.pop %v5759
  %v5761 = vmul.f32 %v5754, 1.442695
  %v5762 = vpow.pop %v5761
  %v5763 = vmul.f32 %v5743, %v5756
  %v5764 = vmul.f32 %v5744, %v5758
  %v5765 = vmul.f32 %v5745, %v5760
  %v5766 = vmul.f32 %v5746, %v5762
  %v5767 = vsub.f32 1.0, %v5763
  %v5768 = vsub.f32 1.0, %v5764
  %v5769 = vsub.f32 1.0, %v5765
  %v5770 = vsub.f32 1.0, %v5766
  %v5771 = vmul.f32 %v5687, %v5767
  %v5772 = vmul.f32 %v5688, %v5768
  %v5773 = vmul.f32 %v5689, %v5769
  %v5774 = vmul.f32 %v5690, %v5770
  %v5775 = vadd.f32 %v5771, 1.0
  %v5776 = vadd.f32 %v5772, 1.0
  %v5777 = vadd.f32 %v5773, 1.0
  %v5778 = vadd.f32 %v5774, 1.0
  %v5779 = vmul.f32 %v5675, %v5775
  %v5780 = vmul.f32 %v5676, %v5776
  %v5781 = vmul.f32 %v5677, %v5777
  %v5782 = vmul.f32 %v5678, %v5778
  %v5783 = vlaneseq
  %v5784 = vshrl.u32 %v5783, 7
  %v5785 = vsub.s32 0, %v5784
  %v5786 = vrot.slane %v57, %v5785
  %v5787 = vmul.f32 %v5779, %v5786
  %v5788 = vmul.f32 %v5780, %v5786
  %v5789 = vmul.f32 %v5781, %v5786
  %v5790 = vmul.f32 %v5782, %v5786
  %5791 = vadd.xlane.f32.xlu0 %v5787
  %v5792 = vpop.xlane.xlu0 %5791
  %5793 = vadd.xlane.f32.xlu0 %v5788
  %v5794 = vpop.xlane.xlu0 %5793
  %5795 = vadd.xlane.f32.xlu0 %v5789
  %v5796 = vpop.xlane.xlu0 %5795
  %5797 = vadd.xlane.f32.xlu0 %v5790
  %v5798 = vpop.xlane.xlu0 %5797
  %v5799 = vlaneseq
  %v5800 = vshrl.u32 %v5799, 7
  %v5801 = vsub.s32 0, %v5800
  %v5802 = vrot.slane %v51, %v5801
  %v5803 = vadd.f32 %v5792, %v5802
  %v5804 = vadd.f32 %v5794, %v5802
  %v5805 = vadd.f32 %v5796, %v5802
  %v5806 = vadd.f32 %v5798, %v5802
  %5811 = vrot.lane.b32.xlu0 %v5803, 125
  %v5812 = vpop.permute.xlu0 %5811
  %5813 = vrot.lane.b32.xlu0 %v5804, 125
  %v5814 = vpop.permute.xlu0 %5813
  %5815 = vrot.lane.b32.xlu0 %v5805, 125
  %v5816 = vpop.permute.xlu0 %5815
  %5817 = vrot.lane.b32.xlu0 %v5806, 125
  %v5818 = vpop.permute.xlu0 %5817
  %vm5823 = vcmask 7168
  %5824 = vst.msk [vmem:[%s5] sm:$0xff] %vm5823, %v5812
  %5825 = vst.msk [vmem:[%s5 + $0x8] sm:$0xff] %vm5823, %v5814
  %5826 = vst.msk [vmem:[%s5 + $0x10] sm:$0xff] %vm5823, %v5816
  %5827 = vst.msk [vmem:[%s5 + $0x18] sm:$0xff] %vm5823, %v5818
  // Predicated region
  $region22: #{_forward.1} parent=0 // pred_check
    _
  $region23: #{_forward.1} parent=0 // pred_check_branch
    %5829 = sbr.rel (0) target = $region25
  $region24: #{_forward.1} parent=0 // pred_region
    _
  $region25: #{_forward.1} parent=0 // pred_fallthru
    _
  // Predicated region
  $region26: #{_forward.1} parent=0 // pred_check
    _
  $region27: #{_forward.1} parent=0 // pred_check_branch
    %5831 = sbr.rel (0) target = $region29
  $region28: #{_forward.1} parent=0 // pred_region
    _
  $region29: #{_forward.1} parent=0 // pred_fallthru
    _

</llo_original>
